<compile_context>
chip_gen: v5e
topology: v5e:2x2
jax: 0.10.0
libtpu: 0.0.40
codegen_flags: <defaults>
</compile_context>

<pallas_src>
import functools
import math

import jax
import jax.numpy as jnp
from jax import lax
from jax.experimental import pallas as pl
from jax.experimental.pallas import tpu as pltpu

TITLE_LEN = 30   # real title length used by the module (news[:, :30])
SEQ_PAD = 32     # padded to a sublane multiple of 8 (free reshapes in-kernel)
D_K = 16
D_V = 16


def _attn_news_kernel(x_ref, wqkv_ref, bqkv_ref, fc1w_ref, fc1b_ref,
                      fc2w_ref, fc2b_ref, out_ref, *, n_heads, seq_real):
    tb, s_pad, emb = x_ref.shape
    tbs = tb * s_pad
    hk = n_heads * D_K
    qdim = fc1w_ref.shape[1]

    # ---- fused Q/K/V projection over all TB*S rows (single big MXU matmul)
    xf = x_ref[...].reshape(tbs, emb)               # layout-preserving (32 % 8 == 0)
    qkv = jnp.dot(xf, wqkv_ref[...],
                  preferred_element_type=jnp.float32) + bqkv_ref[...]

    # key mask: padded key columns must not contribute (exp(.) != 0 there)
    key_ids = lax.broadcasted_iota(jnp.int32, (1, 1, s_pad), 2)
    key_mask = (key_ids < seq_real).astype(jnp.float32)

    scale = jnp.float32(1.0 / math.sqrt(D_K))

    ctx_heads = []
    h1_acc = None
    for h in range(n_heads):                        # static unroll, TB-batched MXU
        qh = qkv[:, h * D_K:(h + 1) * D_K].reshape(tb, s_pad, D_K)
        kh = qkv[:, hk + h * D_K: hk + (h + 1) * D_K].reshape(tb, s_pad, D_K)
        vh = qkv[:, 2 * hk + h * D_V: 2 * hk + (h + 1) * D_V].reshape(
            tb, s_pad, D_V)
        scores = jnp.einsum('bqd,bkd->bqk', qh, kh,
                            preferred_element_type=jnp.float32) * scale
        # exact module semantics: exp (no max-subtraction), /(sum + 1e-8);
        # key mask makes the padded-seq result identical to the unpadded one
        scores = jnp.exp(scores) * key_mask
        attn = scores / (jnp.sum(scores, axis=-1, keepdims=True) + 1e-8)
        ctx_h = jnp.einsum('bqk,bkd->bqd', attn, vh,
                           preferred_element_type=jnp.float32)   # (tb, S, d_v)
        ctx_heads.append(ctx_h)
        # per-head slice of fc1 -> no (tb, S, n_heads*d_v) concat needed
        contrib = jnp.dot(ctx_h.reshape(tbs, D_V),
                          fc1w_ref[h * D_V:(h + 1) * D_V, :],
                          preferred_element_type=jnp.float32)
        h1_acc = contrib if h1_acc is None else h1_acc + contrib

    # ---- AttentionPooling: a = fc2(tanh(fc1(ctx)))
    h1 = jnp.tanh(h1_acc + fc1b_ref[...])                        # (tbs, qdim)
    # fc2 (output width 1) on the VPU instead of a degenerate MXU matmul
    a = jnp.sum(h1.reshape(tb, s_pad, qdim) * fc2w_ref[...],
                axis=-1, keepdims=True) + fc2b_ref[...]          # (tb, S, 1)

    # softmax over the real sequence positions only
    row_ids = lax.broadcasted_iota(jnp.int32, (1, s_pad, 1), 1)
    a = jnp.where(row_ids < seq_real, a, jnp.float32(-1e9))
    a = a - jnp.max(a, axis=1, keepdims=True)
    e = jnp.exp(a)
    alpha = e / jnp.sum(e, axis=1, keepdims=True)                # (tb, S, 1)

    # weighted sum over seq (sublane reduce), per head; small final concat
    pooled = [jnp.sum(alpha * ctx_h, axis=1) for ctx_h in ctx_heads]
    out_ref[...] = jnp.concatenate(pooled, axis=-1)              # (tb, H*d_v)


@functools.partial(jax.jit, static_argnames=("n_heads", "tb"))
def attn_news_encoder(news, word_emb, params, *, n_heads, tb=128):
    """news: (B, L_total) int32 tokens. Returns (B, n_heads * D_V) float32."""
    title = news[:, :TITLE_LEN]
    x = jnp.take(word_emb, title, axis=0).astype(jnp.float32)    # (B, 30, E)
    B, S, E = x.shape
    news_dim = n_heads * D_V

    # pad seq 30 -> 32 so the in-kernel (TB, 32, E) -> (TB*32, E) reshape is free
    x = jnp.pad(x, ((0, 0), (0, SEQ_PAD - S), (0, 0)))

    (wq, bq, wk, bk, wv, bv, fc1w, fc1b, fc2w, fc2b) = params
    wqkv = jnp.concatenate([wq, wk, wv], axis=1)                 # (E, 3*H*D_K)
    bqkv = jnp.concatenate([bq, bk, bv], axis=1)                 # (1, 3*H*D_K)
    fc2w_row = fc2w.reshape(1, -1)                               # (1, query_dim)

    # batch tile: multiple of 8, no larger than needed
    tb = min(tb, B)
    tb = ((tb + 7) // 8) * 8
    n_blocks = pl.cdiv(B, tb)
    b_pad = n_blocks * tb
    if b_pad != B:
        x = jnp.pad(x, ((0, b_pad - B), (0, 0), (0, 0)))

    kernel = functools.partial(_attn_news_kernel, n_heads=n_heads, seq_real=S)

    def whole(arr):
        zeros = (0,) * arr.ndim
        return pl.BlockSpec(arr.shape, lambda b: zeros)

    out = pl.pallas_call(
        kernel,
        out_shape=jax.ShapeDtypeStruct((b_pad, news_dim), jnp.float32),
        grid=(n_blocks,),
        in_specs=[
            pl.BlockSpec((tb, SEQ_PAD, E), lambda b: (b, 0, 0)),   # x tile
            whole(wqkv), whole(bqkv),
            whole(fc1w), whole(fc1b),
            whole(fc2w_row), whole(fc2b),
        ],
        out_specs=pl.BlockSpec((tb, news_dim), lambda b: (b, 0)),
        compiler_params=pltpu.CompilerParams(
            dimension_semantics=("parallel",)),
    )(x, wqkv, bqkv, fc1w, fc1b, fc2w_row, fc2b)
    return out[:B]


def reference_forward(news, word_emb, params, *, n_heads):
    """Pure-JAX reference mirroring the PyTorch module (for verification)."""
    (wq, bq, wk, bk, wv, bv, fc1w, fc1b, fc2w, fc2b) = params
    title = news[:, :TITLE_LEN]
    x = jnp.take(word_emb, title, axis=0).astype(jnp.float32)
    B, S, E = x.shape
    q = (x @ wq + bq).reshape(B, S, n_heads, D_K).transpose(0, 2, 1, 3)
    k = (x @ wk + bk).reshape(B, S, n_heads, D_K).transpose(0, 2, 1, 3)
    v = (x @ wv + bv).reshape(B, S, n_heads, D_V).transpose(0, 2, 1, 3)
    scores = jnp.exp(jnp.einsum('bhqd,bhkd->bhqk', q, k) / jnp.sqrt(D_K))
    attn = scores / (jnp.sum(scores, axis=-1, keepdims=True) + 1e-8)
    ctx = jnp.einsum('bhqk,bhkd->bhqd', attn, v)
    ctx = ctx.transpose(0, 2, 1, 3).reshape(B, S, n_heads * D_V)
    a = jnp.tanh(ctx @ fc1w + fc1b) @ fc2w + fc2b
    alpha = jax.nn.softmax(a, axis=-2)
    return jnp.einsum('bsi,bsd->bd', alpha, ctx)


def make_params(key, emb_dim, n_heads, news_dim, query_dim):
    ks = jax.random.split(key, 10)

    def xavier(k, fan_in, fan_out):
        lim = jnp.sqrt(6.0 / (fan_in + fan_out))
        # stored as (in, out) i.e. already transposed relative to nn.Linear
        return jax.random.uniform(k, (fan_in, fan_out), jnp.float32, -lim, lim)

    wq = xavier(ks[0], emb_dim, n_heads * D_K)
    wk = xavier(ks[1], emb_dim, n_heads * D_K)
    wv = xavier(ks[2], emb_dim, n_heads * D_V)
    bq = jax.random.uniform(ks[3], (1, n_heads * D_K), jnp.float32, -0.1, 0.1)
    bk = jax.random.uniform(ks[4], (1, n_heads * D_K), jnp.float32, -0.1, 0.1)
    bv = jax.random.uniform(ks[5], (1, n_heads * D_V), jnp.float32, -0.1, 0.1)
    fc1w = xavier(ks[6], news_dim, query_dim)
    fc1b = jax.random.uniform(ks[7], (1, query_dim), jnp.float32, -0.1, 0.1)
    fc2w = xavier(ks[8], query_dim, 1)
    fc2b = jax.random.uniform(ks[9], (1, 1), jnp.float32, -0.1, 0.1)
    return (wq, bq, wk, bk, wv, bv, fc1w, fc1b, fc2w, fc2b)


if __name__ == "__main__":
    B = 16
    VOCAB = 50
    EMB_DIM = 32          # word embedding dim (d_model)
    N_HEADS = 4
    NEWS_DIM = N_HEADS * D_V   # 64, output dim of the self-attention
    QUERY_DIM = 32
    BODY_LEN = 8
    L_TOTAL = TITLE_LEN + BODY_LEN + 2   # title + body + cate + subcate

    key = jax.random.PRNGKey(0)
    k_emb, k_news, k_par = jax.random.split(key, 3)

    word_emb = jax.random.normal(k_emb, (VOCAB, EMB_DIM), jnp.float32) * 0.5
    news = jax.random.randint(k_news, (B, L_TOTAL), 0, VOCAB, jnp.int32)
    params = make_params(k_par, EMB_DIM, N_HEADS, NEWS_DIM, QUERY_DIM)

    # tb=8 -> grid of 2 steps (exercises pipelining / megacore sharding)
    out = attn_news_encoder(news, word_emb, params, n_heads=N_HEADS, tb=8)
    out = jax.block_until_ready(out)

    ref = reference_forward(news, word_emb, params, n_heads=N_HEADS)
    assert out.shape == (B, NEWS_DIM)
    assert jnp.allclose(out, ref, atol=1e-4, rtol=1e-4), "mismatch vs reference"

    print("KERNEL_OK")
</pallas_src>

<mosaic_0001>
module attributes {stable_mosaic.version = 11 : i64} {
  func.func @_attn_news_kernel(%arg0: i32, %arg1: memref<8x32x32xf32, #tpu.memory_space<vmem>>, %arg2: memref<32x192xf32, #tpu.memory_space<vmem>>, %arg3: memref<1x192xf32, #tpu.memory_space<vmem>>, %arg4: memref<64x32xf32, #tpu.memory_space<vmem>>, %arg5: memref<1x32xf32, #tpu.memory_space<vmem>>, %arg6: memref<1x32xf32, #tpu.memory_space<vmem>>, %arg7: memref<1x1xf32, #tpu.memory_space<vmem>>, %arg8: memref<8x64xf32, #tpu.memory_space<vmem>>) attributes {dimension_semantics = [#tpu.dimension_semantics<parallel>], iteration_bounds = array<i64: 2>, scalar_prefetch = 0 : i64, scratch_operands = 0 : i64, tpu.core_type = #tpu.core_type<tc>, window_params = [{transform_indices = @transform_0, window_bounds = array<i64: 8, 32, 32>}, {pipeline_mode = #tpu.pipeline_mode<synchronous>, transform_indices = @transform_1, window_bounds = array<i64: 32, 192>}, {pipeline_mode = #tpu.pipeline_mode<synchronous>, transform_indices = @transform_2, window_bounds = array<i64: 1, 192>}, {pipeline_mode = #tpu.pipeline_mode<synchronous>, transform_indices = @transform_3, window_bounds = array<i64: 64, 32>}, {pipeline_mode = #tpu.pipeline_mode<synchronous>, transform_indices = @transform_4, window_bounds = array<i64: 1, 32>}, {pipeline_mode = #tpu.pipeline_mode<synchronous>, transform_indices = @transform_5, window_bounds = array<i64: 1, 32>}, {pipeline_mode = #tpu.pipeline_mode<synchronous>, transform_indices = @transform_6, window_bounds = array<i64: 1, 1>}, {transform_indices = @transform_7, window_bounds = array<i64: 8, 64>}]} {
    %c0 = arith.constant 0 : index
    %c0_0 = arith.constant 0 : index
    %c0_1 = arith.constant 0 : index
    %0 = vector.load %arg1[%c0, %c0_0, %c0_1] : memref<8x32x32xf32, #tpu.memory_space<vmem>>, vector<8x32x32xf32>
    %1 = vector.shape_cast %0 : vector<8x32x32xf32> to vector<256x32xf32>
    %c0_2 = arith.constant 0 : index
    %c0_3 = arith.constant 0 : index
    %2 = vector.load %arg2[%c0_2, %c0_3] : memref<32x192xf32, #tpu.memory_space<vmem>>, vector<32x192xf32>
    %cst = arith.constant dense<0.000000e+00> : vector<256x192xf32>
    %3 = tpu.matmul %1, %2, %cst {dimension_numbers = #tpu.dot_dimension_numbers<[1], [0], [0], [1], [0, 0, 1, 1], [], []>} : vector<256x32xf32>, vector<32x192xf32>, vector<256x192xf32> -> vector<256x192xf32>
    %c0_4 = arith.constant 0 : index
    %c0_5 = arith.constant 0 : index
    %4 = vector.load %arg3[%c0_4, %c0_5] : memref<1x192xf32, #tpu.memory_space<vmem>>, vector<1x192xf32>
    %5 = vector.broadcast %4 : vector<1x192xf32> to vector<256x192xf32>
    %6 = arith.addf %3, %5 : vector<256x192xf32>
    %7 = tpu.iota {dimensions = array<i32: 2>} : vector<1x1x32xi32>
    %c30_i32 = arith.constant 30 : i32
    %8 = vector.broadcast %c30_i32 : i32 to vector<1x1x32xi32>
    %9 = arith.cmpi slt, %7, %8 : vector<1x1x32xi32>
    %10 = arith.extui %9 : vector<1x1x32xi1> to vector<1x1x32xi32>
    %11 = arith.sitofp %10 : vector<1x1x32xi32> to vector<1x1x32xf32>
    %12 = vector.extract_strided_slice %6 {offsets = [0, 0], sizes = [256, 16], strides = [1, 1]} : vector<256x192xf32> to vector<256x16xf32>
    %13 = vector.shape_cast %12 : vector<256x16xf32> to vector<8x32x16xf32>
    %14 = vector.extract_strided_slice %6 {offsets = [0, 64], sizes = [256, 16], strides = [1, 1]} : vector<256x192xf32> to vector<256x16xf32>
    %15 = vector.shape_cast %14 : vector<256x16xf32> to vector<8x32x16xf32>
    %16 = vector.extract_strided_slice %6 {offsets = [0, 128], sizes = [256, 16], strides = [1, 1]} : vector<256x192xf32> to vector<256x16xf32>
    %17 = vector.shape_cast %16 : vector<256x16xf32> to vector<8x32x16xf32>
    "tpu.trace_start"() <{level = 10 : i32, message = "bqd,bkd->bqk"}> : () -> ()
    %cst_6 = arith.constant dense<0.000000e+00> : vector<8x32x32xf32>
    %18 = tpu.matmul %13, %15, %cst_6 {dimension_numbers = #tpu.dot_dimension_numbers<[2], [2], [1], [1], [0, 0, 0, 1, 1, 1], [0], [0]>} : vector<8x32x16xf32>, vector<8x32x16xf32>, vector<8x32x32xf32> -> vector<8x32x32xf32>
    "tpu.trace_stop"() : () -> ()
    %cst_7 = arith.constant 2.500000e-01 : f32
    %19 = vector.broadcast %cst_7 : f32 to vector<8x32x32xf32>
    %20 = arith.mulf %18, %19 : vector<8x32x32xf32>
    %21 = math.exp %20 : vector<8x32x32xf32>
    %22 = vector.broadcast %11 : vector<1x1x32xf32> to vector<8x32x32xf32>
    %23 = arith.mulf %21, %22 : vector<8x32x32xf32>
    %cst_8 = arith.constant dense<0.000000e+00> : vector<8x32xf32>
    %24 = vector.multi_reduction <add>, %23, %cst_8 [2] : vector<8x32x32xf32> to vector<8x32xf32>
    %25 = vector.shape_cast %24 : vector<8x32xf32> to vector<8x32x1xf32>
    %cst_9 = arith.constant 9.99999993E-9 : f32
    %26 = vector.broadcast %cst_9 : f32 to vector<8x32x1xf32>
    %27 = arith.addf %25, %26 : vector<8x32x1xf32>
    %28 = vector.broadcast %27 : vector<8x32x1xf32> to vector<8x32x32xf32>
    %29 = arith.divf %23, %28 : vector<8x32x32xf32>
    "tpu.trace_start"() <{level = 10 : i32, message = "bqk,bkd->bqd"}> : () -> ()
    %cst_10 = arith.constant dense<0.000000e+00> : vector<8x32x16xf32>
    %30 = tpu.matmul %29, %17, %cst_10 {dimension_numbers = #tpu.dot_dimension_numbers<[2], [1], [1], [2], [0, 0, 0, 1, 1, 2], [0], [0]>} : vector<8x32x32xf32>, vector<8x32x16xf32>, vector<8x32x16xf32> -> vector<8x32x16xf32>
    "tpu.trace_stop"() : () -> ()
    %31 = vector.shape_cast %30 : vector<8x32x16xf32> to vector<256x16xf32>
    %c0_11 = arith.constant 0 : index
    %c0_12 = arith.constant 0 : index
    %32 = vector.load %arg4[%c0_11, %c0_12] : memref<64x32xf32, #tpu.memory_space<vmem>>, vector<16x32xf32>
    %cst_13 = arith.constant dense<0.000000e+00> : vector<256x32xf32>
    %33 = tpu.matmul %31, %32, %cst_13 {dimension_numbers = #tpu.dot_dimension_numbers<[1], [0], [0], [1], [0, 0, 1, 1], [], []>} : vector<256x16xf32>, vector<16x32xf32>, vector<256x32xf32> -> vector<256x32xf32>
    %34 = vector.extract_strided_slice %6 {offsets = [0, 16], sizes = [256, 16], strides = [1, 1]} : vector<256x192xf32> to vector<256x16xf32>
    %35 = vector.shape_cast %34 : vector<256x16xf32> to vector<8x32x16xf32>
    %36 = vector.extract_strided_slice %6 {offsets = [0, 80], sizes = [256, 16], strides = [1, 1]} : vector<256x192xf32> to vector<256x16xf32>
    %37 = vector.shape_cast %36 : vector<256x16xf32> to vector<8x32x16xf32>
    %38 = vector.extract_strided_slice %6 {offsets = [0, 144], sizes = [256, 16], strides = [1, 1]} : vector<256x192xf32> to vector<256x16xf32>
    %39 = vector.shape_cast %38 : vector<256x16xf32> to vector<8x32x16xf32>
    "tpu.trace_start"() <{level = 10 : i32, message = "bqd,bkd->bqk"}> : () -> ()
    %cst_14 = arith.constant dense<0.000000e+00> : vector<8x32x32xf32>
    %40 = tpu.matmul %35, %37, %cst_14 {dimension_numbers = #tpu.dot_dimension_numbers<[2], [2], [1], [1], [0, 0, 0, 1, 1, 1], [0], [0]>} : vector<8x32x16xf32>, vector<8x32x16xf32>, vector<8x32x32xf32> -> vector<8x32x32xf32>
    "tpu.trace_stop"() : () -> ()
    %cst_15 = arith.constant 2.500000e-01 : f32
    %41 = vector.broadcast %cst_15 : f32 to vector<8x32x32xf32>
    %42 = arith.mulf %40, %41 : vector<8x32x32xf32>
    %43 = math.exp %42 : vector<8x32x32xf32>
    %44 = vector.broadcast %11 : vector<1x1x32xf32> to vector<8x32x32xf32>
    %45 = arith.mulf %43, %44 : vector<8x32x32xf32>
    %cst_16 = arith.constant dense<0.000000e+00> : vector<8x32xf32>
    %46 = vector.multi_reduction <add>, %45, %cst_16 [2] : vector<8x32x32xf32> to vector<8x32xf32>
    %47 = vector.shape_cast %46 : vector<8x32xf32> to vector<8x32x1xf32>
    %cst_17 = arith.constant 9.99999993E-9 : f32
    %48 = vector.broadcast %cst_17 : f32 to vector<8x32x1xf32>
    %49 = arith.addf %47, %48 : vector<8x32x1xf32>
    %50 = vector.broadcast %49 : vector<8x32x1xf32> to vector<8x32x32xf32>
    %51 = arith.divf %45, %50 : vector<8x32x32xf32>
    "tpu.trace_start"() <{level = 10 : i32, message = "bqk,bkd->bqd"}> : () -> ()
    %cst_18 = arith.constant dense<0.000000e+00> : vector<8x32x16xf32>
    %52 = tpu.matmul %51, %39, %cst_18 {dimension_numbers = #tpu.dot_dimension_numbers<[2], [1], [1], [2], [0, 0, 0, 1, 1, 2], [0], [0]>} : vector<8x32x32xf32>, vector<8x32x16xf32>, vector<8x32x16xf32> -> vector<8x32x16xf32>
    "tpu.trace_stop"() : () -> ()
    %53 = vector.shape_cast %52 : vector<8x32x16xf32> to vector<256x16xf32>
    %c16 = arith.constant 16 : index
    %c0_19 = arith.constant 0 : index
    %54 = vector.load %arg4[%c16, %c0_19] : memref<64x32xf32, #tpu.memory_space<vmem>>, vector<16x32xf32>
    %cst_20 = arith.constant dense<0.000000e+00> : vector<256x32xf32>
    %55 = tpu.matmul %53, %54, %cst_20 {dimension_numbers = #tpu.dot_dimension_numbers<[1], [0], [0], [1], [0, 0, 1, 1], [], []>} : vector<256x16xf32>, vector<16x32xf32>, vector<256x32xf32> -> vector<256x32xf32>
    %56 = arith.addf %33, %55 : vector<256x32xf32>
    %57 = vector.extract_strided_slice %6 {offsets = [0, 32], sizes = [256, 16], strides = [1, 1]} : vector<256x192xf32> to vector<256x16xf32>
    %58 = vector.shape_cast %57 : vector<256x16xf32> to vector<8x32x16xf32>
    %59 = vector.extract_strided_slice %6 {offsets = [0, 96], sizes = [256, 16], strides = [1, 1]} : vector<256x192xf32> to vector<256x16xf32>
    %60 = vector.shape_cast %59 : vector<256x16xf32> to vector<8x32x16xf32>
    %61 = vector.extract_strided_slice %6 {offsets = [0, 160], sizes = [256, 16], strides = [1, 1]} : vector<256x192xf32> to vector<256x16xf32>
    %62 = vector.shape_cast %61 : vector<256x16xf32> to vector<8x32x16xf32>
    "tpu.trace_start"() <{level = 10 : i32, message = "bqd,bkd->bqk"}> : () -> ()
    %cst_21 = arith.constant dense<0.000000e+00> : vector<8x32x32xf32>
    %63 = tpu.matmul %58, %60, %cst_21 {dimension_numbers = #tpu.dot_dimension_numbers<[2], [2], [1], [1], [0, 0, 0, 1, 1, 1], [0], [0]>} : vector<8x32x16xf32>, vector<8x32x16xf32>, vector<8x32x32xf32> -> vector<8x32x32xf32>
    "tpu.trace_stop"() : () -> ()
    %cst_22 = arith.constant 2.500000e-01 : f32
    %64 = vector.broadcast %cst_22 : f32 to vector<8x32x32xf32>
    %65 = arith.mulf %63, %64 : vector<8x32x32xf32>
    %66 = math.exp %65 : vector<8x32x32xf32>
    %67 = vector.broadcast %11 : vector<1x1x32xf32> to vector<8x32x32xf32>
    %68 = arith.mulf %66, %67 : vector<8x32x32xf32>
    %cst_23 = arith.constant dense<0.000000e+00> : vector<8x32xf32>
    %69 = vector.multi_reduction <add>, %68, %cst_23 [2] : vector<8x32x32xf32> to vector<8x32xf32>
    %70 = vector.shape_cast %69 : vector<8x32xf32> to vector<8x32x1xf32>
    %cst_24 = arith.constant 9.99999993E-9 : f32
    %71 = vector.broadcast %cst_24 : f32 to vector<8x32x1xf32>
    %72 = arith.addf %70, %71 : vector<8x32x1xf32>
    %73 = vector.broadcast %72 : vector<8x32x1xf32> to vector<8x32x32xf32>
    %74 = arith.divf %68, %73 : vector<8x32x32xf32>
    "tpu.trace_start"() <{level = 10 : i32, message = "bqk,bkd->bqd"}> : () -> ()
    %cst_25 = arith.constant dense<0.000000e+00> : vector<8x32x16xf32>
    %75 = tpu.matmul %74, %62, %cst_25 {dimension_numbers = #tpu.dot_dimension_numbers<[2], [1], [1], [2], [0, 0, 0, 1, 1, 2], [0], [0]>} : vector<8x32x32xf32>, vector<8x32x16xf32>, vector<8x32x16xf32> -> vector<8x32x16xf32>
    "tpu.trace_stop"() : () -> ()
    %76 = vector.shape_cast %75 : vector<8x32x16xf32> to vector<256x16xf32>
    %c32 = arith.constant 32 : index
    %c0_26 = arith.constant 0 : index
    %77 = vector.load %arg4[%c32, %c0_26] : memref<64x32xf32, #tpu.memory_space<vmem>>, vector<16x32xf32>
    %cst_27 = arith.constant dense<0.000000e+00> : vector<256x32xf32>
    %78 = tpu.matmul %76, %77, %cst_27 {dimension_numbers = #tpu.dot_dimension_numbers<[1], [0], [0], [1], [0, 0, 1, 1], [], []>} : vector<256x16xf32>, vector<16x32xf32>, vector<256x32xf32> -> vector<256x32xf32>
    %79 = arith.addf %56, %78 : vector<256x32xf32>
    %80 = vector.extract_strided_slice %6 {offsets = [0, 48], sizes = [256, 16], strides = [1, 1]} : vector<256x192xf32> to vector<256x16xf32>
    %81 = vector.shape_cast %80 : vector<256x16xf32> to vector<8x32x16xf32>
    %82 = vector.extract_strided_slice %6 {offsets = [0, 112], sizes = [256, 16], strides = [1, 1]} : vector<256x192xf32> to vector<256x16xf32>
    %83 = vector.shape_cast %82 : vector<256x16xf32> to vector<8x32x16xf32>
    %84 = vector.extract_strided_slice %6 {offsets = [0, 176], sizes = [256, 16], strides = [1, 1]} : vector<256x192xf32> to vector<256x16xf32>
    %85 = vector.shape_cast %84 : vector<256x16xf32> to vector<8x32x16xf32>
    "tpu.trace_start"() <{level = 10 : i32, message = "bqd,bkd->bqk"}> : () -> ()
    %cst_28 = arith.constant dense<0.000000e+00> : vector<8x32x32xf32>
    %86 = tpu.matmul %81, %83, %cst_28 {dimension_numbers = #tpu.dot_dimension_numbers<[2], [2], [1], [1], [0, 0, 0, 1, 1, 1], [0], [0]>} : vector<8x32x16xf32>, vector<8x32x16xf32>, vector<8x32x32xf32> -> vector<8x32x32xf32>
    "tpu.trace_stop"() : () -> ()
    %cst_29 = arith.constant 2.500000e-01 : f32
    %87 = vector.broadcast %cst_29 : f32 to vector<8x32x32xf32>
    %88 = arith.mulf %86, %87 : vector<8x32x32xf32>
    %89 = math.exp %88 : vector<8x32x32xf32>
    %90 = vector.broadcast %11 : vector<1x1x32xf32> to vector<8x32x32xf32>
    %91 = arith.mulf %89, %90 : vector<8x32x32xf32>
    %cst_30 = arith.constant dense<0.000000e+00> : vector<8x32xf32>
    %92 = vector.multi_reduction <add>, %91, %cst_30 [2] : vector<8x32x32xf32> to vector<8x32xf32>
    %93 = vector.shape_cast %92 : vector<8x32xf32> to vector<8x32x1xf32>
    %cst_31 = arith.constant 9.99999993E-9 : f32
    %94 = vector.broadcast %cst_31 : f32 to vector<8x32x1xf32>
    %95 = arith.addf %93, %94 : vector<8x32x1xf32>
    %96 = vector.broadcast %95 : vector<8x32x1xf32> to vector<8x32x32xf32>
    %97 = arith.divf %91, %96 : vector<8x32x32xf32>
    "tpu.trace_start"() <{level = 10 : i32, message = "bqk,bkd->bqd"}> : () -> ()
    %cst_32 = arith.constant dense<0.000000e+00> : vector<8x32x16xf32>
    %98 = tpu.matmul %97, %85, %cst_32 {dimension_numbers = #tpu.dot_dimension_numbers<[2], [1], [1], [2], [0, 0, 0, 1, 1, 2], [0], [0]>} : vector<8x32x32xf32>, vector<8x32x16xf32>, vector<8x32x16xf32> -> vector<8x32x16xf32>
    "tpu.trace_stop"() : () -> ()
    %99 = vector.shape_cast %98 : vector<8x32x16xf32> to vector<256x16xf32>
    %c48 = arith.constant 48 : index
    %c0_33 = arith.constant 0 : index
    %100 = vector.load %arg4[%c48, %c0_33] : memref<64x32xf32, #tpu.memory_space<vmem>>, vector<16x32xf32>
    %cst_34 = arith.constant dense<0.000000e+00> : vector<256x32xf32>
    %101 = tpu.matmul %99, %100, %cst_34 {dimension_numbers = #tpu.dot_dimension_numbers<[1], [0], [0], [1], [0, 0, 1, 1], [], []>} : vector<256x16xf32>, vector<16x32xf32>, vector<256x32xf32> -> vector<256x32xf32>
    %102 = arith.addf %79, %101 : vector<256x32xf32>
    %c0_35 = arith.constant 0 : index
    %c0_36 = arith.constant 0 : index
    %103 = vector.load %arg5[%c0_35, %c0_36] : memref<1x32xf32, #tpu.memory_space<vmem>>, vector<1x32xf32>
    %104 = vector.broadcast %103 : vector<1x32xf32> to vector<256x32xf32>
    %105 = arith.addf %102, %104 : vector<256x32xf32>
    %106 = math.tanh %105 : vector<256x32xf32>
    %107 = vector.shape_cast %106 : vector<256x32xf32> to vector<8x32x32xf32>
    %c0_37 = arith.constant 0 : index
    %c0_38 = arith.constant 0 : index
    %108 = vector.load %arg6[%c0_37, %c0_38] : memref<1x32xf32, #tpu.memory_space<vmem>>, vector<1x32xf32>
    %109 = vector.shape_cast %108 : vector<1x32xf32> to vector<1x1x32xf32>
    %110 = vector.broadcast %109 : vector<1x1x32xf32> to vector<8x32x32xf32>
    %111 = arith.mulf %107, %110 : vector<8x32x32xf32>
    %cst_39 = arith.constant dense<0.000000e+00> : vector<8x32xf32>
    %112 = vector.multi_reduction <add>, %111, %cst_39 [2] : vector<8x32x32xf32> to vector<8x32xf32>
    %113 = vector.shape_cast %112 : vector<8x32xf32> to vector<8x32x1xf32>
    %c0_40 = arith.constant 0 : index
    %c0_41 = arith.constant 0 : index
    %114 = vector.load %arg7[%c0_40, %c0_41] : memref<1x1xf32, #tpu.memory_space<vmem>>, vector<1x1xf32>
    %115 = vector.shape_cast %114 : vector<1x1xf32> to vector<1x1x1xf32>
    %116 = vector.broadcast %115 : vector<1x1x1xf32> to vector<8x32x1xf32>
    %117 = arith.addf %113, %116 : vector<8x32x1xf32>
    %118 = tpu.iota {dimensions = array<i32: 1>} : vector<1x32x1xi32>
    %c30_i32_42 = arith.constant 30 : i32
    %119 = vector.broadcast %c30_i32_42 : i32 to vector<1x32x1xi32>
    %120 = arith.cmpi slt, %118, %119 : vector<1x32x1xi32>
    %cst_43 = arith.constant -1.000000e+09 : f32
    %121 = vector.shape_cast %120 : vector<1x32x1xi1> to vector<1x32x1xi1>
    %122 = vector.broadcast %121 : vector<1x32x1xi1> to vector<8x32x1xi1>
    %123 = vector.broadcast %cst_43 : f32 to vector<8x32x1xf32>
    %124 = arith.select %122, %117, %123 : vector<8x32x1xi1>, vector<8x32x1xf32>
    %cst_44 = arith.constant dense<0xFF800000> : vector<8x1xf32>
    %125 = vector.multi_reduction <maximumf>, %124, %cst_44 [1] : vector<8x32x1xf32> to vector<8x1xf32>
    %126 = vector.shape_cast %125 : vector<8x1xf32> to vector<8x1x1xf32>
    %127 = vector.broadcast %126 : vector<8x1x1xf32> to vector<8x32x1xf32>
    %128 = arith.subf %124, %127 : vector<8x32x1xf32>
    %129 = math.exp %128 : vector<8x32x1xf32>
    %cst_45 = arith.constant dense<0.000000e+00> : vector<8x1xf32>
    %130 = vector.multi_reduction <add>, %129, %cst_45 [1] : vector<8x32x1xf32> to vector<8x1xf32>
    %131 = vector.shape_cast %130 : vector<8x1xf32> to vector<8x1x1xf32>
    %132 = vector.broadcast %131 : vector<8x1x1xf32> to vector<8x32x1xf32>
    %133 = arith.divf %129, %132 : vector<8x32x1xf32>
    %134 = vector.broadcast %133 : vector<8x32x1xf32> to vector<8x32x16xf32>
    %135 = arith.mulf %134, %30 : vector<8x32x16xf32>
    %cst_46 = arith.constant dense<0.000000e+00> : vector<8x16xf32>
    %136 = vector.multi_reduction <add>, %135, %cst_46 [1] : vector<8x32x16xf32> to vector<8x16xf32>
    %137 = vector.broadcast %133 : vector<8x32x1xf32> to vector<8x32x16xf32>
    %138 = arith.mulf %137, %52 : vector<8x32x16xf32>
    %cst_47 = arith.constant dense<0.000000e+00> : vector<8x16xf32>
    %139 = vector.multi_reduction <add>, %138, %cst_47 [1] : vector<8x32x16xf32> to vector<8x16xf32>
    %140 = vector.broadcast %133 : vector<8x32x1xf32> to vector<8x32x16xf32>
    %141 = arith.mulf %140, %75 : vector<8x32x16xf32>
    %cst_48 = arith.constant dense<0.000000e+00> : vector<8x16xf32>
    %142 = vector.multi_reduction <add>, %141, %cst_48 [1] : vector<8x32x16xf32> to vector<8x16xf32>
    %143 = vector.broadcast %133 : vector<8x32x1xf32> to vector<8x32x16xf32>
    %144 = arith.mulf %143, %98 : vector<8x32x16xf32>
    %cst_49 = arith.constant dense<0.000000e+00> : vector<8x16xf32>
    %145 = vector.multi_reduction <add>, %144, %cst_49 [1] : vector<8x32x16xf32> to vector<8x16xf32>
    %146 = tpu.concatenate %136, %139, %142, %145 in 1 : vector<8x16xf32>, vector<8x16xf32>, vector<8x16xf32>, vector<8x16xf32> -> vector<8x64xf32>
    %c0_50 = arith.constant 0 : index
    %c0_51 = arith.constant 0 : index
    %147 = vector.load %arg8[%c0_50, %c0_51] : memref<8x64xf32, #tpu.memory_space<vmem>>, vector<8x64xf32>
    tpu.vector_store %arg8[%c0_50, %c0_51], %146 {strides = array<i32>} : memref<8x64xf32, #tpu.memory_space<vmem>>, vector<8x64xf32>,
    return
  }
  func.func @transform_0(%arg0: i32) -> (i32, i32, i32) {
    %c0_i32 = arith.constant 0 : i32
    %c0_i32_0 = arith.constant 0 : i32
    %c0_i32_1 = arith.constant 0 : i32
    return %arg0, %c0_i32, %c0_i32_0 : i32, i32, i32
  }
  func.func @transform_1(%arg0: i32) -> (i32, i32) {
    %c0_i32 = arith.constant 0 : i32
    %c0_i32_0 = arith.constant 0 : i32
    %c0_i32_1 = arith.constant 0 : i32
    return %c0_i32, %c0_i32_0 : i32, i32
  }
  func.func @transform_2(%arg0: i32) -> (i32, i32) {
    %c0_i32 = arith.constant 0 : i32
    %c0_i32_0 = arith.constant 0 : i32
    %c0_i32_1 = arith.constant 0 : i32
    return %c0_i32, %c0_i32_0 : i32, i32
  }
  func.func @transform_3(%arg0: i32) -> (i32, i32) {
    %c0_i32 = arith.constant 0 : i32
    %c0_i32_0 = arith.constant 0 : i32
    %c0_i32_1 = arith.constant 0 : i32
    return %c0_i32, %c0_i32_0 : i32, i32
  }
  func.func @transform_4(%arg0: i32) -> (i32, i32) {
    %c0_i32 = arith.constant 0 : i32
    %c0_i32_0 = arith.constant 0 : i32
    %c0_i32_1 = arith.constant 0 : i32
    return %c0_i32, %c0_i32_0 : i32, i32
  }
  func.func @transform_5(%arg0: i32) -> (i32, i32) {
    %c0_i32 = arith.constant 0 : i32
    %c0_i32_0 = arith.constant 0 : i32
    %c0_i32_1 = arith.constant 0 : i32
    return %c0_i32, %c0_i32_0 : i32, i32
  }
  func.func @transform_6(%arg0: i32) -> (i32, i32) {
    %c0_i32 = arith.constant 0 : i32
    %c0_i32_0 = arith.constant 0 : i32
    %c0_i32_1 = arith.constant 0 : i32
    return %c0_i32, %c0_i32_0 : i32, i32
  }
  func.func @transform_7(%arg0: i32) -> (i32, i32) {
    %c0_i32 = arith.constant 0 : i32
    %c0_i32_0 = arith.constant 0 : i32
    return %arg0, %c0_i32 : i32, i32
  }
}

</mosaic_0001>

<llo_original>
// kernel: attn_news_encoder.1
$region0: #{attn_news_encoder.1}
  #allocation0 [shape = 'u32[]', space=smem, size = 0x4, offset = 0x4, fixed_abs, tag = 'smem constant byte address 0x4 - core index']
  #allocation1 [shape = 'u32[72,128]{1,0:T(1,128)}', space=vmem, size = 0x9000, scoped, tag = 'internal scratch']
  #allocation2 [shape = 'f32[1,1]{1,0:T(1,128)S(1)}', space=vmem, size = 0x200, scoped, tag = 'scoped memory for attn_news_encoder.1']
  %s0 = inlined_call_operand.vmem [shape: f32[16,32,32], index: 0, kind: input, shape index: {}]
  %s1 = inlined_call_operand.vmem [shape: f32[32,192], index: 1, kind: input, shape index: {}]
  %s2 = inlined_call_operand.vmem [shape: f32[1,192], index: 2, kind: input, shape index: {}]
  %s3 = inlined_call_operand.vmem [shape: f32[64,32], index: 3, kind: input, shape index: {}]
  %s4 = inlined_call_operand.vmem [shape: f32[1,32], index: 4, kind: input, shape index: {}]
  %s5 = inlined_call_operand.vmem [shape: f32[1,32], index: 5, kind: input, shape index: {}]
  %s6 = inlined_call_operand.<no memory space> [shape: f32[1,1], index: 6, kind: input, shape index: {}]
  %s7 = inlined_call_operand.hbm [shape: f32[16,64], index: 7, kind: output, shape index: {}]
  %s8 = sld [smem:[#allocation0]]
  $region61: #{attn_news_encoder.1} parent=0
    _
  %s10 = ssub.s32 1, %s8
  %s11 = scalar_select 0, %s10, %s8
  %v12 = vstv %s6
  %13 = vst [vmem:[#allocation2] sm:$0x1] %v12
  $region1: #{attn_news_encoder.1} parent=0
    #allocation3 [shape = 'u8[8192]{0}', space=vmem, size = 0x2000, scoped, tag = 'output window, operand 0']
    #allocation4 [shape = 's32[2]{0}', space=sflag, size = 0x8, scoped, tag = 'scoped memory for attn_news_encoder.1']
    %14 = vsyncpa [#allocation4], 0
    %s15 = scalar_lea.sflag [#allocation4], 1
    %16 = vsyncpa %s15, 0
    loop: start=0, step=1, limit=4
    $region2: #{attn_news_encoder.1} parent=1 // loop_pre_header
      _
    $region3: #{attn_news_encoder.1} parent=1 // loop_header
      %s18 = sphi 0, %s22
      %p19 = scmp.ge.s32.totalorder %s18, 4
      %s28 = sphi 0, %s30
      %s31 = sphi 0, %s28
      %s32 = sphi 0, %s31
      %s48 = sphi 0, %s32
      %s52 = sphi 0, %s52
      %s54 = sphi 0, %s52
      %s55 = sphi 0, %s54
      %s69 = sphi 0, %s55
      %s73 = sphi 0, %s73
      %s75 = sphi 0, %s73
      %s76 = sphi 0, %s75
      %s90 = sphi 0, %s76
      %s94 = sphi 0, %s94
      %s96 = sphi 0, %s94
      %s97 = sphi 0, %s96
      %s111 = sphi 0, %s97
      %s115 = sphi 0, %s115
      %s117 = sphi 0, %s115
      %s118 = sphi 0, %s117
      %s132 = sphi 0, %s118
      %s136 = sphi 0, %s136
      %s138 = sphi 0, %s136
      %s139 = sphi 0, %s138
      %s153 = sphi 0, %s139
      %s157 = sphi 0, %s157
      %s159 = sphi 0, %s157
      %s160 = sphi 0, %s159
      %s174 = sphi 0, %s160
      %s180 = sphi 0, %s182
      %s183 = sphi 0, %s180
      %s184 = sphi 0, %s183
      %s200 = sphi 0, %s184
    $region4: #{attn_news_encoder.1} parent=1 // loop_header_branch
      %21 = sbr.rel (%p19) target = $region8
    $region5: #{attn_news_encoder.1} parent=1 // loop_body
      %s23 = ssub.s32 %s18, 1
      %s24 = ssub.s32 %s18, 2
      %s25 = sadd.s32 %s18, 1
      %s26 = ssub.s32 %s18, %s25
      %p27 = scmp.eq.s32.totalorder %s26, 0
      %s29 = sadd.s32 %s28, 1
      %s30 = scalar_select %p27, %s28, %s29
      %p33 = pneg %p27
      %p34 = scmp.eq.s32.totalorder %s18, 1
      %p35 = por %p33, %p34
      %p36 = scmp.ne.s32.totalorder %s28, %s31
      %p37 = scmp.eq.s32.totalorder %s18, 0
      %p38 = por %p36, %p37
      %p39 = scmp.ne.s32.totalorder %s28, %s31
      %p40 = scmp.eq.s32.totalorder %s23, 1
      %p41 = por %p39, %p40
      %p42 = scmp.ne.s32.totalorder %s31, %s32
      %p43 = scmp.eq.s32.totalorder %s23, 0
      %p44 = por %p42, %p43
      %p45 = scmp.ne.s32.totalorder %s31, %s32
      %p46 = scmp.eq.s32.totalorder %s24, 1
      %p47 = por %p45, %p46
      %p49 = scmp.ne.s32.totalorder %s32, %s48
      %p50 = scmp.eq.s32.totalorder %s24, 0
      %p51 = por %p49, %p50
      %s53 = sadd.s32 %s52, 1
      %p56 = scmp.eq.s32.totalorder %s18, 1
      %p57 = scmp.ne.s32.totalorder %s52, %s54
      %p58 = scmp.eq.s32.totalorder %s18, 0
      %p59 = por %p57, %p58
      %p60 = scmp.ne.s32.totalorder %s52, %s54
      %p61 = scmp.eq.s32.totalorder %s23, 1
      %p62 = por %p60, %p61
      %p63 = scmp.ne.s32.totalorder %s54, %s55
      %p64 = scmp.eq.s32.totalorder %s23, 0
      %p65 = por %p63, %p64
      %p66 = scmp.ne.s32.totalorder %s54, %s55
      %p67 = scmp.eq.s32.totalorder %s24, 1
      %p68 = por %p66, %p67
      %p70 = scmp.ne.s32.totalorder %s55, %s69
      %p71 = scmp.eq.s32.totalorder %s24, 0
      %p72 = por %p70, %p71
      %s74 = sadd.s32 %s73, 1
      %p77 = scmp.eq.s32.totalorder %s18, 1
      %p78 = scmp.ne.s32.totalorder %s73, %s75
      %p79 = scmp.eq.s32.totalorder %s18, 0
      %p80 = por %p78, %p79
      %p81 = scmp.ne.s32.totalorder %s73, %s75
      %p82 = scmp.eq.s32.totalorder %s23, 1
      %p83 = por %p81, %p82
      %p84 = scmp.ne.s32.totalorder %s75, %s76
      %p85 = scmp.eq.s32.totalorder %s23, 0
      %p86 = por %p84, %p85
      %p87 = scmp.ne.s32.totalorder %s75, %s76
      %p88 = scmp.eq.s32.totalorder %s24, 1
      %p89 = por %p87, %p88
      %p91 = scmp.ne.s32.totalorder %s76, %s90
      %p92 = scmp.eq.s32.totalorder %s24, 0
      %p93 = por %p91, %p92
      %s95 = sadd.s32 %s94, 1
      %p98 = scmp.eq.s32.totalorder %s18, 1
      %p99 = scmp.ne.s32.totalorder %s94, %s96
      %p100 = scmp.eq.s32.totalorder %s18, 0
      %p101 = por %p99, %p100
      %p102 = scmp.ne.s32.totalorder %s94, %s96
      %p103 = scmp.eq.s32.totalorder %s23, 1
      %p104 = por %p102, %p103
      %p105 = scmp.ne.s32.totalorder %s96, %s97
      %p106 = scmp.eq.s32.totalorder %s23, 0
      %p107 = por %p105, %p106
      %p108 = scmp.ne.s32.totalorder %s96, %s97
      %p109 = scmp.eq.s32.totalorder %s24, 1
      %p110 = por %p108, %p109
      %p112 = scmp.ne.s32.totalorder %s97, %s111
      %p113 = scmp.eq.s32.totalorder %s24, 0
      %p114 = por %p112, %p113
      %s116 = sadd.s32 %s115, 1
      %p119 = scmp.eq.s32.totalorder %s18, 1
      %p120 = scmp.ne.s32.totalorder %s115, %s117
      %p121 = scmp.eq.s32.totalorder %s18, 0
      %p122 = por %p120, %p121
      %p123 = scmp.ne.s32.totalorder %s115, %s117
      %p124 = scmp.eq.s32.totalorder %s23, 1
      %p125 = por %p123, %p124
      %p126 = scmp.ne.s32.totalorder %s117, %s118
      %p127 = scmp.eq.s32.totalorder %s23, 0
      %p128 = por %p126, %p127
      %p129 = scmp.ne.s32.totalorder %s117, %s118
      %p130 = scmp.eq.s32.totalorder %s24, 1
      %p131 = por %p129, %p130
      %p133 = scmp.ne.s32.totalorder %s118, %s132
      %p134 = scmp.eq.s32.totalorder %s24, 0
      %p135 = por %p133, %p134
      %s137 = sadd.s32 %s136, 1
      %p140 = scmp.eq.s32.totalorder %s18, 1
      %p141 = scmp.ne.s32.totalorder %s136, %s138
      %p142 = scmp.eq.s32.totalorder %s18, 0
      %p143 = por %p141, %p142
      %p144 = scmp.ne.s32.totalorder %s136, %s138
      %p145 = scmp.eq.s32.totalorder %s23, 1
      %p146 = por %p144, %p145
      %p147 = scmp.ne.s32.totalorder %s138, %s139
      %p148 = scmp.eq.s32.totalorder %s23, 0
      %p149 = por %p147, %p148
      %p150 = scmp.ne.s32.totalorder %s138, %s139
      %p151 = scmp.eq.s32.totalorder %s24, 1
      %p152 = por %p150, %p151
      %p154 = scmp.ne.s32.totalorder %s139, %s153
      %p155 = scmp.eq.s32.totalorder %s24, 0
      %p156 = por %p154, %p155
      %s158 = sadd.s32 %s157, 1
      %p161 = scmp.eq.s32.totalorder %s18, 1
      %p162 = scmp.ne.s32.totalorder %s157, %s159
      %p163 = scmp.eq.s32.totalorder %s18, 0
      %p164 = por %p162, %p163
      %p165 = scmp.ne.s32.totalorder %s157, %s159
      %p166 = scmp.eq.s32.totalorder %s23, 1
      %p167 = por %p165, %p166
      %p168 = scmp.ne.s32.totalorder %s159, %s160
      %p169 = scmp.eq.s32.totalorder %s23, 0
      %p170 = por %p168, %p169
      %p171 = scmp.ne.s32.totalorder %s159, %s160
      %p172 = scmp.eq.s32.totalorder %s24, 1
      %p173 = por %p171, %p172
      %p175 = scmp.ne.s32.totalorder %s160, %s174
      %p176 = scmp.eq.s32.totalorder %s24, 0
      %p177 = por %p175, %p176
      %s178 = ssub.s32 %s18, %s25
      %p179 = scmp.eq.s32.totalorder %s178, 0
      %s181 = sadd.s32 %s180, 1
      %s182 = scalar_select %p179, %s180, %s181
      %p185 = pneg %p179
      %p186 = scmp.eq.s32.totalorder %s18, 1
      %p187 = por %p185, %p186
      %p188 = scmp.ne.s32.totalorder %s180, %s183
      %p189 = scmp.eq.s32.totalorder %s18, 0
      %p190 = por %p188, %p189
      %p191 = scmp.ne.s32.totalorder %s180, %s183
      %p192 = scmp.eq.s32.totalorder %s23, 1
      %p193 = por %p191, %p192
      %p194 = scmp.ne.s32.totalorder %s183, %s184
      %p195 = scmp.eq.s32.totalorder %s23, 0
      %p196 = por %p194, %p195
      %p197 = scmp.ne.s32.totalorder %s183, %s184
      %p198 = scmp.eq.s32.totalorder %s24, 1
      %p199 = por %p197, %p198
      %p201 = scmp.ne.s32.totalorder %s184, %s200
      %p202 = scmp.eq.s32.totalorder %s24, 0
      %p203 = por %p201, %p202
      %p204 = scmp.le.s32.totalorder 1, %s18
      %p205 = scmp.lt.s32.totalorder %s18, 3
      %p206 = pnand %p204, %p205
      %p207 = pneg %p206
      // Predicated region
      $region9: #{attn_news_encoder.1} parent=5 // pred_check
        _
      $region10: #{attn_news_encoder.1} parent=5 // pred_check_branch
        %209 = sbr.rel (%p206) target = $region12
      $region11: #{attn_news_encoder.1} parent=5 // pred_region
        %s210 = ssub.s32 %s18, 1
        // Predicated region
        $region13: #{attn_news_encoder.1} parent=11 // pred_check
          %p211 = pneg %p65
        $region14: #{attn_news_encoder.1} parent=11 // pred_check_branch
          %213 = sbr.rel (%p211) target = $region16
        $region15: #{attn_news_encoder.1} parent=11 // pred_region
          _
        $region16: #{attn_news_encoder.1} parent=11 // pred_fallthru
          _
        // Predicated region
        $region17: #{attn_news_encoder.1} parent=11 // pred_check
          %p214 = pneg %p86
        $region18: #{attn_news_encoder.1} parent=11 // pred_check_branch
          %216 = sbr.rel (%p214) target = $region20
        $region19: #{attn_news_encoder.1} parent=11 // pred_region
          _
        $region20: #{attn_news_encoder.1} parent=11 // pred_fallthru
          _
        // Predicated region
        $region21: #{attn_news_encoder.1} parent=11 // pred_check
          %p217 = pneg %p107
        $region22: #{attn_news_encoder.1} parent=11 // pred_check_branch
          %219 = sbr.rel (%p217) target = $region24
        $region23: #{attn_news_encoder.1} parent=11 // pred_region
          _
        $region24: #{attn_news_encoder.1} parent=11 // pred_fallthru
          _
        // Predicated region
        $region25: #{attn_news_encoder.1} parent=11 // pred_check
          %p220 = pneg %p128
        $region26: #{attn_news_encoder.1} parent=11 // pred_check_branch
          %222 = sbr.rel (%p220) target = $region28
        $region27: #{attn_news_encoder.1} parent=11 // pred_region
          _
        $region28: #{attn_news_encoder.1} parent=11 // pred_fallthru
          _
        // Predicated region
        $region29: #{attn_news_encoder.1} parent=11 // pred_check
          %p223 = pneg %p149
        $region30: #{attn_news_encoder.1} parent=11 // pred_check_branch
          %225 = sbr.rel (%p223) target = $region32
        $region31: #{attn_news_encoder.1} parent=11 // pred_region
          _
        $region32: #{attn_news_encoder.1} parent=11 // pred_fallthru
          _
        // Predicated region
        $region33: #{attn_news_encoder.1} parent=11 // pred_check
          %p226 = pneg %p170
        $region34: #{attn_news_encoder.1} parent=11 // pred_check_branch
          %228 = sbr.rel (%p226) target = $region36
        $region35: #{attn_news_encoder.1} parent=11 // pred_region
          _
        $region36: #{attn_news_encoder.1} parent=11 // pred_fallthru
          _
      $region12: #{attn_news_encoder.1} parent=5 // pred_fallthru
        _
      %p229 = scmp.lt.s32.totalorder %s18, 2
      // Predicated region
      $region37: #{attn_news_encoder.1} parent=5 // pred_check
        %p230 = pneg %p229
      $region38: #{attn_news_encoder.1} parent=5 // pred_check_branch
        %232 = sbr.rel (%p230) target = $region40
      $region39: #{attn_news_encoder.1} parent=5 // pred_region
        // Predicated region
        $region41: #{attn_news_encoder.1} parent=39 // pred_check
          %p233 = pneg %p38
        $region42: #{attn_news_encoder.1} parent=39 // pred_check_branch
          %235 = sbr.rel (%p233) target = $region44
        $region43: #{attn_news_encoder.1} parent=39 // pred_region
          %s236 = smul.u32 8, %s18
          %p237 = scmp.lt.s32.totalorder %s236, 15
          %s238 = scalar_select %p237, %s236, 15
          %s239 = smul.addr %s238, 4
          %s240 = smul.addr %s239, 8
          %s241 = scalar_lea.vmem %s0, %s240
          %s242 = smul.u32 8, %s18
        $region44: #{attn_news_encoder.1} parent=39 // pred_fallthru
          _
      $region40: #{attn_news_encoder.1} parent=5 // pred_fallthru
        _
      %p243 = scmp.le.s32.totalorder 1, %s18
      %p244 = scmp.lt.s32.totalorder %s18, 3
      %p245 = pnand %p243, %p244
      %p246 = pneg %p245
      // Predicated region
      $region45: #{attn_news_encoder.1} parent=5 // pred_check
        _
      $region46: #{attn_news_encoder.1} parent=5 // pred_check_branch
        %248 = sbr.rel (%p245) target = $region48
      $region47: #{attn_news_encoder.1} parent=5 // pred_region
        %s249 = ssub.s32 %s18, 1
        %s250 = smul.u32 8, %s23
        %p251 = scmp.lt.s32.totalorder %s250, 15
        %s252 = scalar_select %p251, %s250, 15
        %s253 = smul.addr %s252, 4
        %s254 = smul.addr %s253, 8
        %s255 = scalar_lea.vmem %s0, %s254
        %p256 = pneg %p44
        %p257 = pneg %p41
        %p258 = pneg %p65
        %p259 = pneg %p62
        %p260 = pneg %p86
        %p261 = pneg %p83
        %p262 = pneg %p107
        %p263 = pneg %p104
        %p264 = pneg %p128
        %p265 = pneg %p125
        %p266 = pneg %p149
        %p267 = pneg %p146
        %p268 = pneg %p170
        %p269 = pneg %p167
        %p270 = pneg %p196
        %p271 = pneg %p193
        %s272 = sand.u32 %s183, 1
        %s273 = scalar_lea.sflag [#allocation4], %s272
        %s274 = sand.u32 %s183, 1
        %s275 = smul.addr %s274, 8
        %s276 = scalar_lea.vmem [#allocation3], %s275
        %s277 = smul.u32 8, %s23
        %p278 = scmp.lt.s32.totalorder %s277, 15
        %s279 = scalar_select %p278, %s277, 15
        %s280 = smul.addr %s279, 4
        %s281 = smul.addr %s280, 8
        %s282 = scalar_lea.vmem %s0, %s281
        %s283 = smul.u32 8, %s23
        %v284 = vld [vmem:[%s282] sm:$0xff]
        %v285 = vld [vmem:[%s282 + $0x8] sm:$0xff]
        %v286 = vld [vmem:[%s282 + $0x10] sm:$0xff]
        %v287 = vld [vmem:[%s282 + $0x18] sm:$0xff]
        %v288 = vld [vmem:[%s282 + $0x20] sm:$0xff]
        %v289 = vld [vmem:[%s282 + $0x28] sm:$0xff]
        %v290 = vld [vmem:[%s282 + $0x30] sm:$0xff]
        %v291 = vld [vmem:[%s282 + $0x38] sm:$0xff]
        %v292 = vld [vmem:[%s282 + $0x40] sm:$0xff]
        %v293 = vld [vmem:[%s282 + $0x48] sm:$0xff]
        %v294 = vld [vmem:[%s282 + $0x50] sm:$0xff]
        %v295 = vld [vmem:[%s282 + $0x58] sm:$0xff]
        %v296 = vld [vmem:[%s282 + $0x60] sm:$0xff]
        %v297 = vld [vmem:[%s282 + $0x68] sm:$0xff]
        %v298 = vld [vmem:[%s282 + $0x70] sm:$0xff]
        %v299 = vld [vmem:[%s282 + $0x78] sm:$0xff]
        %v300 = vld [vmem:[%s282 + $0x80] sm:$0xff]
        %v301 = vld [vmem:[%s282 + $0x88] sm:$0xff]
        %v302 = vld [vmem:[%s282 + $0x90] sm:$0xff]
        %v303 = vld [vmem:[%s282 + $0x98] sm:$0xff]
        %v304 = vld [vmem:[%s282 + $0xa0] sm:$0xff]
        %v305 = vld [vmem:[%s282 + $0xa8] sm:$0xff]
        %v306 = vld [vmem:[%s282 + $0xb0] sm:$0xff]
        %v307 = vld [vmem:[%s282 + $0xb8] sm:$0xff]
        %v308 = vld [vmem:[%s282 + $0xc0] sm:$0xff]
        %v309 = vld [vmem:[%s282 + $0xc8] sm:$0xff]
        %v310 = vld [vmem:[%s282 + $0xd0] sm:$0xff]
        %v311 = vld [vmem:[%s282 + $0xd8] sm:$0xff]
        %v312 = vld [vmem:[%s282 + $0xe0] sm:$0xff]
        %v313 = vld [vmem:[%s282 + $0xe8] sm:$0xff]
        %v314 = vld [vmem:[%s282 + $0xf0] sm:$0xff]
        %v315 = vld [vmem:[%s282 + $0xf8] sm:$0xff]
        %v316 = vld [vmem:[%s1] sm:$0xff]
        %v317 = vld [vmem:[%s1 + $0x8] sm:$0xff]
        %v318 = vld [vmem:[%s1 + $0x10] sm:$0xff]
        %v319 = vld [vmem:[%s1 + $0x18] sm:$0xff]
        %v320 = vld [vmem:[%s1 + $0x20] sm:$0xff]
        %v321 = vld [vmem:[%s1 + $0x28] sm:$0xff]
        %v322 = vld [vmem:[%s1 + $0x30] sm:$0xff]
        %v323 = vld [vmem:[%s1 + $0x38] sm:$0xff]
        %v324 = vld [vmem:[%s2] sm:$0x3]
        %v326 = vperm.slane %v324, 0
        %v327 = vperm.slane %v324, 1
        %vm330 = vcmask 261120
        %v332 = vsel %vm330, %v284, 0
        %v335 = vsel %vm330, %v285, 0
        %v338 = vsel %vm330, %v286, 0
        %v341 = vsel %vm330, %v287, 0
        %v344 = vsel %vm330, %v288, 0
        %v347 = vsel %vm330, %v289, 0
        %v350 = vsel %vm330, %v290, 0
        %v353 = vsel %vm330, %v291, 0
        %v356 = vsel %vm330, %v292, 0
        %v359 = vsel %vm330, %v293, 0
        %v362 = vsel %vm330, %v294, 0
        %v365 = vsel %vm330, %v295, 0
        %v368 = vsel %vm330, %v296, 0
        %v371 = vsel %vm330, %v297, 0
        %v374 = vsel %vm330, %v298, 0
        %v377 = vsel %vm330, %v299, 0
        %v380 = vsel %vm330, %v300, 0
        %v383 = vsel %vm330, %v301, 0
        %v386 = vsel %vm330, %v302, 0
        %v389 = vsel %vm330, %v303, 0
        %v392 = vsel %vm330, %v304, 0
        %v395 = vsel %vm330, %v305, 0
        %v398 = vsel %vm330, %v306, 0
        %v401 = vsel %vm330, %v307, 0
        %v404 = vsel %vm330, %v308, 0
        %v407 = vsel %vm330, %v309, 0
        %v410 = vsel %vm330, %v310, 0
        %v413 = vsel %vm330, %v311, 0
        %v416 = vsel %vm330, %v312, 0
        %v419 = vsel %vm330, %v313, 0
        %v422 = vsel %vm330, %v314, 0
        %v425 = vsel %vm330, %v315, 0
        %427 = vmatpush.msra.mxu0 0.0
        %428 = vmatpush.msra.mxu0 0.0
        %429 = vmatpush.msra.mxu0 0.0
        %430 = vmatpush.msra.mxu0 0.0
        %431 = vmatpush.msra.mxu0 0.0
        %432 = vmatpush.msra.mxu0 0.0
        %433 = vmatpush.msra.mxu0 0.0
        %434 = vmatpush.msra.mxu0 0.0
        %435 = vmatpush.msra.mxu0 0.0
        %436 = vmatpush.msra.mxu0 0.0
        %437 = vmatpush.msra.mxu0 0.0
        %438 = vmatpush.msra.mxu0 0.0
        %439 = vmatpush.msra.mxu0 %v322
        %440 = vmatpush.msra.mxu0 %v320
        %441 = vmatpush.msra.mxu0 %v318
        %442 = vmatpush.msra.mxu0 %v316
        %443 = vmatmul.f32.gmra.mxu0 %v332
        %v444 = vpop.f32.mrf.mxu0
        %v445 = vadd.f32 %v326, %v444
        %446 = vmatmul.f32.gmra.mxu0 %v335
        %v447 = vpop.f32.mrf.mxu0
        %v448 = vadd.f32 %v326, %v447
        %449 = vmatmul.f32.gmra.mxu0 %v338
        %v450 = vpop.f32.mrf.mxu0
        %v451 = vadd.f32 %v326, %v450
        %452 = vmatmul.f32.gmra.mxu0 %v341
        %v453 = vpop.f32.mrf.mxu0
        %v454 = vadd.f32 %v326, %v453
        %455 = vmatmul.f32.gmra.mxu0 %v344
        %v456 = vpop.f32.mrf.mxu0
        %v457 = vadd.f32 %v326, %v456
        %458 = vmatmul.f32.gmra.mxu0 %v347
        %v459 = vpop.f32.mrf.mxu0
        %v460 = vadd.f32 %v326, %v459
        %461 = vmatmul.f32.gmra.mxu0 %v350
        %v462 = vpop.f32.mrf.mxu0
        %v463 = vadd.f32 %v326, %v462
        %464 = vmatmul.f32.gmra.mxu0 %v353
        %v465 = vpop.f32.mrf.mxu0
        %v466 = vadd.f32 %v326, %v465
        %467 = vmatmul.f32.gmra.mxu0 %v356
        %v468 = vpop.f32.mrf.mxu0
        %v469 = vadd.f32 %v326, %v468
        %470 = vmatmul.f32.gmra.mxu0 %v359
        %v471 = vpop.f32.mrf.mxu0
        %v472 = vadd.f32 %v326, %v471
        %473 = vmatmul.f32.gmra.mxu0 %v362
        %v474 = vpop.f32.mrf.mxu0
        %v475 = vadd.f32 %v326, %v474
        %476 = vmatmul.f32.gmra.mxu0 %v365
        %v477 = vpop.f32.mrf.mxu0
        %v478 = vadd.f32 %v326, %v477
        %479 = vmatmul.f32.gmra.mxu0 %v368
        %v480 = vpop.f32.mrf.mxu0
        %v481 = vadd.f32 %v326, %v480
        %482 = vmatmul.f32.gmra.mxu0 %v371
        %v483 = vpop.f32.mrf.mxu0
        %v484 = vadd.f32 %v326, %v483
        %485 = vmatmul.f32.gmra.mxu0 %v374
        %v486 = vpop.f32.mrf.mxu0
        %v487 = vadd.f32 %v326, %v486
        %488 = vmatmul.f32.gmra.mxu0 %v377
        %v489 = vpop.f32.mrf.mxu0
        %v490 = vadd.f32 %v326, %v489
        %491 = vmatmul.f32.gmra.mxu0 %v380
        %v492 = vpop.f32.mrf.mxu0
        %v493 = vadd.f32 %v326, %v492
        %494 = vmatmul.f32.gmra.mxu0 %v383
        %v495 = vpop.f32.mrf.mxu0
        %v496 = vadd.f32 %v326, %v495
        %497 = vmatmul.f32.gmra.mxu0 %v386
        %v498 = vpop.f32.mrf.mxu0
        %v499 = vadd.f32 %v326, %v498
        %500 = vmatmul.f32.gmra.mxu0 %v389
        %v501 = vpop.f32.mrf.mxu0
        %v502 = vadd.f32 %v326, %v501
        %503 = vmatmul.f32.gmra.mxu0 %v392
        %v504 = vpop.f32.mrf.mxu0
        %v505 = vadd.f32 %v326, %v504
        %506 = vmatmul.f32.gmra.mxu0 %v395
        %v507 = vpop.f32.mrf.mxu0
        %v508 = vadd.f32 %v326, %v507
        %509 = vmatmul.f32.gmra.mxu0 %v398
        %v510 = vpop.f32.mrf.mxu0
        %v511 = vadd.f32 %v326, %v510
        %512 = vmatmul.f32.gmra.mxu0 %v401
        %v513 = vpop.f32.mrf.mxu0
        %v514 = vadd.f32 %v326, %v513
        %515 = vmatmul.f32.gmra.mxu0 %v404
        %v516 = vpop.f32.mrf.mxu0
        %v517 = vadd.f32 %v326, %v516
        %518 = vmatmul.f32.gmra.mxu0 %v407
        %v519 = vpop.f32.mrf.mxu0
        %v520 = vadd.f32 %v326, %v519
        %521 = vmatmul.f32.gmra.mxu0 %v410
        %v522 = vpop.f32.mrf.mxu0
        %v523 = vadd.f32 %v326, %v522
        %524 = vmatmul.f32.gmra.mxu0 %v413
        %v525 = vpop.f32.mrf.mxu0
        %v526 = vadd.f32 %v326, %v525
        %527 = vmatmul.f32.gmra.mxu0 %v416
        %v528 = vpop.f32.mrf.mxu0
        %v529 = vadd.f32 %v326, %v528
        %530 = vmatmul.f32.gmra.mxu0 %v419
        %v531 = vpop.f32.mrf.mxu0
        %v532 = vadd.f32 %v326, %v531
        %533 = vmatmul.f32.gmra.mxu0 %v422
        %v534 = vpop.f32.mrf.mxu0
        %v535 = vadd.f32 %v326, %v534
        %536 = vmatmul.f32.gmra.mxu0 %v425
        %v537 = vpop.f32.mrf.mxu0
        %v538 = vadd.f32 %v326, %v537
        %539 = vdwg.mxu0
        %540 = vmatpush.msra.mxu0 0.0
        %541 = vmatpush.msra.mxu0 0.0
        %542 = vmatpush.msra.mxu0 0.0
        %543 = vmatpush.msra.mxu0 0.0
        %544 = vmatpush.msra.mxu0 0.0
        %545 = vmatpush.msra.mxu0 0.0
        %546 = vmatpush.msra.mxu0 0.0
        %547 = vmatpush.msra.mxu0 0.0
        %548 = vmatpush.msra.mxu0 0.0
        %549 = vmatpush.msra.mxu0 0.0
        %550 = vmatpush.msra.mxu0 0.0
        %551 = vmatpush.msra.mxu0 0.0
        %552 = vmatpush.msra.mxu0 %v323
        %553 = vmatpush.msra.mxu0 %v321
        %554 = vmatpush.msra.mxu0 %v319
        %555 = vmatpush.msra.mxu0 %v317
        %556 = vmatmul.f32.gmra.mxu0 %v332
        %v557 = vpop.f32.mrf.mxu0
        %v558 = vadd.f32 %v327, %v557
        %559 = vmatmul.f32.gmra.mxu0 %v335
        %v560 = vpop.f32.mrf.mxu0
        %v561 = vadd.f32 %v327, %v560
        %562 = vmatmul.f32.gmra.mxu0 %v338
        %v563 = vpop.f32.mrf.mxu0
        %v564 = vadd.f32 %v327, %v563
        %565 = vmatmul.f32.gmra.mxu0 %v341
        %v566 = vpop.f32.mrf.mxu0
        %v567 = vadd.f32 %v327, %v566
        %568 = vmatmul.f32.gmra.mxu0 %v344
        %v569 = vpop.f32.mrf.mxu0
        %v570 = vadd.f32 %v327, %v569
        %571 = vmatmul.f32.gmra.mxu0 %v347
        %v572 = vpop.f32.mrf.mxu0
        %v573 = vadd.f32 %v327, %v572
        %574 = vmatmul.f32.gmra.mxu0 %v350
        %v575 = vpop.f32.mrf.mxu0
        %v576 = vadd.f32 %v327, %v575
        %577 = vmatmul.f32.gmra.mxu0 %v353
        %v578 = vpop.f32.mrf.mxu0
        %v579 = vadd.f32 %v327, %v578
        %580 = vmatmul.f32.gmra.mxu0 %v356
        %v581 = vpop.f32.mrf.mxu0
        %v582 = vadd.f32 %v327, %v581
        %583 = vmatmul.f32.gmra.mxu0 %v359
        %v584 = vpop.f32.mrf.mxu0
        %v585 = vadd.f32 %v327, %v584
        %586 = vmatmul.f32.gmra.mxu0 %v362
        %v587 = vpop.f32.mrf.mxu0
        %v588 = vadd.f32 %v327, %v587
        %589 = vmatmul.f32.gmra.mxu0 %v365
        %v590 = vpop.f32.mrf.mxu0
        %v591 = vadd.f32 %v327, %v590
        %592 = vmatmul.f32.gmra.mxu0 %v368
        %v593 = vpop.f32.mrf.mxu0
        %v594 = vadd.f32 %v327, %v593
        %595 = vmatmul.f32.gmra.mxu0 %v371
        %v596 = vpop.f32.mrf.mxu0
        %v597 = vadd.f32 %v327, %v596
        %598 = vmatmul.f32.gmra.mxu0 %v374
        %v599 = vpop.f32.mrf.mxu0
        %v600 = vadd.f32 %v327, %v599
        %601 = vmatmul.f32.gmra.mxu0 %v377
        %v602 = vpop.f32.mrf.mxu0
        %v603 = vadd.f32 %v327, %v602
        %604 = vmatmul.f32.gmra.mxu0 %v380
        %v605 = vpop.f32.mrf.mxu0
        %v606 = vadd.f32 %v327, %v605
        %607 = vmatmul.f32.gmra.mxu0 %v383
        %v608 = vpop.f32.mrf.mxu0
        %v609 = vadd.f32 %v327, %v608
        %610 = vmatmul.f32.gmra.mxu0 %v386
        %v611 = vpop.f32.mrf.mxu0
        %v612 = vadd.f32 %v327, %v611
        %613 = vmatmul.f32.gmra.mxu0 %v389
        %v614 = vpop.f32.mrf.mxu0
        %v615 = vadd.f32 %v327, %v614
        %616 = vmatmul.f32.gmra.mxu0 %v392
        %v617 = vpop.f32.mrf.mxu0
        %v618 = vadd.f32 %v327, %v617
        %619 = vmatmul.f32.gmra.mxu0 %v395
        %v620 = vpop.f32.mrf.mxu0
        %v621 = vadd.f32 %v327, %v620
        %622 = vmatmul.f32.gmra.mxu0 %v398
        %v623 = vpop.f32.mrf.mxu0
        %v624 = vadd.f32 %v327, %v623
        %625 = vmatmul.f32.gmra.mxu0 %v401
        %v626 = vpop.f32.mrf.mxu0
        %v627 = vadd.f32 %v327, %v626
        %628 = vmatmul.f32.gmra.mxu0 %v404
        %v629 = vpop.f32.mrf.mxu0
        %v630 = vadd.f32 %v327, %v629
        %631 = vmatmul.f32.gmra.mxu0 %v407
        %v632 = vpop.f32.mrf.mxu0
        %v633 = vadd.f32 %v327, %v632
        %634 = vmatmul.f32.gmra.mxu0 %v410
        %v635 = vpop.f32.mrf.mxu0
        %v636 = vadd.f32 %v327, %v635
        %637 = vmatmul.f32.gmra.mxu0 %v413
        %v638 = vpop.f32.mrf.mxu0
        %v639 = vadd.f32 %v327, %v638
        %640 = vmatmul.f32.gmra.mxu0 %v416
        %v641 = vpop.f32.mrf.mxu0
        %v642 = vadd.f32 %v327, %v641
        %643 = vmatmul.f32.gmra.mxu0 %v419
        %v644 = vpop.f32.mrf.mxu0
        %v645 = vadd.f32 %v327, %v644
        %646 = vmatmul.f32.gmra.mxu0 %v422
        %v647 = vpop.f32.mrf.mxu0
        %v648 = vadd.f32 %v327, %v647
        %649 = vmatmul.f32.gmra.mxu0 %v425
        %v650 = vpop.f32.mrf.mxu0
        %v651 = vadd.f32 %v327, %v650
        %652 = vdwg.mxu0
        %v653 = vlaneseq
        %v654 = vand.u32 %v653, 127
        %vm655 = vcmp.lt.s32.totalorder %v654, 30
        %v656 = vsel %vm655, 1, 0
        %v657 = vcvt.s32.f32 %v656
        %662 = vrot.lane.b32.xlu0 %v445, 64
        %v663 = vpop.permute.xlu0 %662
        %664 = vrot.lane.b32.xlu0 %v448, 64
        %v665 = vpop.permute.xlu0 %664
        %666 = vrot.lane.b32.xlu0 %v451, 64
        %v667 = vpop.permute.xlu0 %666
        %668 = vrot.lane.b32.xlu0 %v454, 64
        %v669 = vpop.permute.xlu0 %668
        %vm670 = vcmask 130048
        %v671 = vsel %vm670, %v445, 0
        %v673 = vsel %vm670, %v448, 0
        %v675 = vsel %vm670, %v451, 0
        %v677 = vsel %vm670, %v454, 0
        %v679 = vsel %vm670, %v663, 0
        %v681 = vsel %vm670, %v665, 0
        %v683 = vsel %vm670, %v667, 0
        %v685 = vsel %vm670, %v669, 0
        %687 = vmatpush.xpose.msra.mxu0 0.0
        %688 = vmatpush.xpose.msra.mxu0 0.0
        %689 = vmatpush.xpose.msra.mxu0 0.0
        %690 = vmatpush.xpose.msra.mxu0 0.0
        %691 = vmatpush.xpose.msra.mxu0 0.0
        %692 = vmatpush.xpose.msra.mxu0 0.0
        %693 = vmatpush.xpose.msra.mxu0 0.0
        %694 = vmatpush.xpose.msra.mxu0 0.0
        %695 = vmatpush.xpose.msra.mxu0 0.0
        %696 = vmatpush.xpose.msra.mxu0 0.0
        %697 = vmatpush.xpose.msra.mxu0 0.0
        %698 = vmatpush.xpose.msra.mxu0 0.0
        %699 = vmatpush.xpose.msra.mxu0 %v685
        %700 = vmatpush.xpose.msra.mxu0 %v683
        %701 = vmatpush.xpose.msra.mxu0 %v681
        %702 = vmatpush.xpose.msra.mxu0 %v679
        %703 = vmatmul.f32.gmra.mxu0 %v671
        %v704 = vpop.f32.mrf.mxu0
        %v705 = vadd.f32 0.0, %v704
        %706 = vmatmul.f32.gmra.mxu0 %v673
        %v707 = vpop.f32.mrf.mxu0
        %v708 = vadd.f32 0.0, %v707
        %709 = vmatmul.f32.gmra.mxu0 %v675
        %v710 = vpop.f32.mrf.mxu0
        %v711 = vadd.f32 0.0, %v710
        %712 = vmatmul.f32.gmra.mxu0 %v677
        %v713 = vpop.f32.mrf.mxu0
        %v714 = vadd.f32 0.0, %v713
        %715 = vdwg.mxu0
        %720 = vrot.lane.b32.xlu0 %v457, 64
        %v721 = vpop.permute.xlu0 %720
        %722 = vrot.lane.b32.xlu0 %v460, 64
        %v723 = vpop.permute.xlu0 %722
        %724 = vrot.lane.b32.xlu0 %v463, 64
        %v725 = vpop.permute.xlu0 %724
        %726 = vrot.lane.b32.xlu0 %v466, 64
        %v727 = vpop.permute.xlu0 %726
        %v728 = vsel %vm670, %v457, 0
        %v730 = vsel %vm670, %v460, 0
        %v732 = vsel %vm670, %v463, 0
        %v734 = vsel %vm670, %v466, 0
        %v736 = vsel %vm670, %v721, 0
        %v738 = vsel %vm670, %v723, 0
        %v740 = vsel %vm670, %v725, 0
        %v742 = vsel %vm670, %v727, 0
        %744 = vmatpush.xpose.msra.mxu0 0.0
        %745 = vmatpush.xpose.msra.mxu0 0.0
        %746 = vmatpush.xpose.msra.mxu0 0.0
        %747 = vmatpush.xpose.msra.mxu0 0.0
        %748 = vmatpush.xpose.msra.mxu0 0.0
        %749 = vmatpush.xpose.msra.mxu0 0.0
        %750 = vmatpush.xpose.msra.mxu0 0.0
        %751 = vmatpush.xpose.msra.mxu0 0.0
        %752 = vmatpush.xpose.msra.mxu0 0.0
        %753 = vmatpush.xpose.msra.mxu0 0.0
        %754 = vmatpush.xpose.msra.mxu0 0.0
        %755 = vmatpush.xpose.msra.mxu0 0.0
        %756 = vmatpush.xpose.msra.mxu0 %v742
        %757 = vmatpush.xpose.msra.mxu0 %v740
        %758 = vmatpush.xpose.msra.mxu0 %v738
        %759 = vmatpush.xpose.msra.mxu0 %v736
        %760 = vmatmul.f32.gmra.mxu0 %v728
        %v761 = vpop.f32.mrf.mxu0
        %v762 = vadd.f32 0.0, %v761
        %763 = vmatmul.f32.gmra.mxu0 %v730
        %v764 = vpop.f32.mrf.mxu0
        %v765 = vadd.f32 0.0, %v764
        %766 = vmatmul.f32.gmra.mxu0 %v732
        %v767 = vpop.f32.mrf.mxu0
        %v768 = vadd.f32 0.0, %v767
        %769 = vmatmul.f32.gmra.mxu0 %v734
        %v770 = vpop.f32.mrf.mxu0
        %v771 = vadd.f32 0.0, %v770
        %772 = vdwg.mxu0
        %777 = vrot.lane.b32.xlu0 %v469, 64
        %v778 = vpop.permute.xlu0 %777
        %779 = vrot.lane.b32.xlu0 %v472, 64
        %v780 = vpop.permute.xlu0 %779
        %781 = vrot.lane.b32.xlu0 %v475, 64
        %v782 = vpop.permute.xlu0 %781
        %783 = vrot.lane.b32.xlu0 %v478, 64
        %v784 = vpop.permute.xlu0 %783
        %v785 = vsel %vm670, %v469, 0
        %v787 = vsel %vm670, %v472, 0
        %v789 = vsel %vm670, %v475, 0
        %v791 = vsel %vm670, %v478, 0
        %v793 = vsel %vm670, %v778, 0
        %v795 = vsel %vm670, %v780, 0
        %v797 = vsel %vm670, %v782, 0
        %v799 = vsel %vm670, %v784, 0
        %801 = vmatpush.xpose.msra.mxu0 0.0
        %802 = vmatpush.xpose.msra.mxu0 0.0
        %803 = vmatpush.xpose.msra.mxu0 0.0
        %804 = vmatpush.xpose.msra.mxu0 0.0
        %805 = vmatpush.xpose.msra.mxu0 0.0
        %806 = vmatpush.xpose.msra.mxu0 0.0
        %807 = vmatpush.xpose.msra.mxu0 0.0
        %808 = vmatpush.xpose.msra.mxu0 0.0
        %809 = vmatpush.xpose.msra.mxu0 0.0
        %810 = vmatpush.xpose.msra.mxu0 0.0
        %811 = vmatpush.xpose.msra.mxu0 0.0
        %812 = vmatpush.xpose.msra.mxu0 0.0
        %813 = vmatpush.xpose.msra.mxu0 %v799
        %814 = vmatpush.xpose.msra.mxu0 %v797
        %815 = vmatpush.xpose.msra.mxu0 %v795
        %816 = vmatpush.xpose.msra.mxu0 %v793
        %817 = vmatmul.f32.gmra.mxu0 %v785
        %v818 = vpop.f32.mrf.mxu0
        %v819 = vadd.f32 0.0, %v818
        %820 = vmatmul.f32.gmra.mxu0 %v787
        %v821 = vpop.f32.mrf.mxu0
        %v822 = vadd.f32 0.0, %v821
        %823 = vmatmul.f32.gmra.mxu0 %v789
        %v824 = vpop.f32.mrf.mxu0
        %v825 = vadd.f32 0.0, %v824
        %826 = vmatmul.f32.gmra.mxu0 %v791
        %v827 = vpop.f32.mrf.mxu0
        %v828 = vadd.f32 0.0, %v827
        %829 = vdwg.mxu0
        %834 = vrot.lane.b32.xlu0 %v481, 64
        %v835 = vpop.permute.xlu0 %834
        %836 = vrot.lane.b32.xlu0 %v484, 64
        %v837 = vpop.permute.xlu0 %836
        %838 = vrot.lane.b32.xlu0 %v487, 64
        %v839 = vpop.permute.xlu0 %838
        %840 = vrot.lane.b32.xlu0 %v490, 64
        %v841 = vpop.permute.xlu0 %840
        %v842 = vsel %vm670, %v481, 0
        %v844 = vsel %vm670, %v484, 0
        %v846 = vsel %vm670, %v487, 0
        %v848 = vsel %vm670, %v490, 0
        %v850 = vsel %vm670, %v835, 0
        %v852 = vsel %vm670, %v837, 0
        %v854 = vsel %vm670, %v839, 0
        %v856 = vsel %vm670, %v841, 0
        %858 = vmatpush.xpose.msra.mxu0 0.0
        %859 = vmatpush.xpose.msra.mxu0 0.0
        %860 = vmatpush.xpose.msra.mxu0 0.0
        %861 = vmatpush.xpose.msra.mxu0 0.0
        %862 = vmatpush.xpose.msra.mxu0 0.0
        %863 = vmatpush.xpose.msra.mxu0 0.0
        %864 = vmatpush.xpose.msra.mxu0 0.0
        %865 = vmatpush.xpose.msra.mxu0 0.0
        %866 = vmatpush.xpose.msra.mxu0 0.0
        %867 = vmatpush.xpose.msra.mxu0 0.0
        %868 = vmatpush.xpose.msra.mxu0 0.0
        %869 = vmatpush.xpose.msra.mxu0 0.0
        %870 = vmatpush.xpose.msra.mxu0 %v856
        %871 = vmatpush.xpose.msra.mxu0 %v854
        %872 = vmatpush.xpose.msra.mxu0 %v852
        %873 = vmatpush.xpose.msra.mxu0 %v850
        %874 = vmatmul.f32.gmra.mxu0 %v842
        %v875 = vpop.f32.mrf.mxu0
        %v876 = vadd.f32 0.0, %v875
        %877 = vmatmul.f32.gmra.mxu0 %v844
        %v878 = vpop.f32.mrf.mxu0
        %v879 = vadd.f32 0.0, %v878
        %880 = vmatmul.f32.gmra.mxu0 %v846
        %v881 = vpop.f32.mrf.mxu0
        %v882 = vadd.f32 0.0, %v881
        %883 = vmatmul.f32.gmra.mxu0 %v848
        %v884 = vpop.f32.mrf.mxu0
        %v885 = vadd.f32 0.0, %v884
        %886 = vdwg.mxu0
        %891 = vrot.lane.b32.xlu0 %v493, 64
        %v892 = vpop.permute.xlu0 %891
        %893 = vrot.lane.b32.xlu0 %v496, 64
        %v894 = vpop.permute.xlu0 %893
        %895 = vrot.lane.b32.xlu0 %v499, 64
        %v896 = vpop.permute.xlu0 %895
        %897 = vrot.lane.b32.xlu0 %v502, 64
        %v898 = vpop.permute.xlu0 %897
        %v899 = vsel %vm670, %v493, 0
        %v901 = vsel %vm670, %v496, 0
        %v903 = vsel %vm670, %v499, 0
        %v905 = vsel %vm670, %v502, 0
        %v907 = vsel %vm670, %v892, 0
        %v909 = vsel %vm670, %v894, 0
        %v911 = vsel %vm670, %v896, 0
        %v913 = vsel %vm670, %v898, 0
        %915 = vmatpush.xpose.msra.mxu0 0.0
        %916 = vmatpush.xpose.msra.mxu0 0.0
        %917 = vmatpush.xpose.msra.mxu0 0.0
        %918 = vmatpush.xpose.msra.mxu0 0.0
        %919 = vmatpush.xpose.msra.mxu0 0.0
        %920 = vmatpush.xpose.msra.mxu0 0.0
        %921 = vmatpush.xpose.msra.mxu0 0.0
        %922 = vmatpush.xpose.msra.mxu0 0.0
        %923 = vmatpush.xpose.msra.mxu0 0.0
        %924 = vmatpush.xpose.msra.mxu0 0.0
        %925 = vmatpush.xpose.msra.mxu0 0.0
        %926 = vmatpush.xpose.msra.mxu0 0.0
        %927 = vmatpush.xpose.msra.mxu0 %v913
        %928 = vmatpush.xpose.msra.mxu0 %v911
        %929 = vmatpush.xpose.msra.mxu0 %v909
        %930 = vmatpush.xpose.msra.mxu0 %v907
        %931 = vmatmul.f32.gmra.mxu0 %v899
        %v932 = vpop.f32.mrf.mxu0
        %v933 = vadd.f32 0.0, %v932
        %934 = vmatmul.f32.gmra.mxu0 %v901
        %v935 = vpop.f32.mrf.mxu0
        %v936 = vadd.f32 0.0, %v935
        %937 = vmatmul.f32.gmra.mxu0 %v903
        %v938 = vpop.f32.mrf.mxu0
        %v939 = vadd.f32 0.0, %v938
        %940 = vmatmul.f32.gmra.mxu0 %v905
        %v941 = vpop.f32.mrf.mxu0
        %v942 = vadd.f32 0.0, %v941
        %943 = vdwg.mxu0
        %948 = vrot.lane.b32.xlu0 %v505, 64
        %v949 = vpop.permute.xlu0 %948
        %950 = vrot.lane.b32.xlu0 %v508, 64
        %v951 = vpop.permute.xlu0 %950
        %952 = vrot.lane.b32.xlu0 %v511, 64
        %v953 = vpop.permute.xlu0 %952
        %954 = vrot.lane.b32.xlu0 %v514, 64
        %v955 = vpop.permute.xlu0 %954
        %v956 = vsel %vm670, %v505, 0
        %v958 = vsel %vm670, %v508, 0
        %v960 = vsel %vm670, %v511, 0
        %v962 = vsel %vm670, %v514, 0
        %v964 = vsel %vm670, %v949, 0
        %v966 = vsel %vm670, %v951, 0
        %v968 = vsel %vm670, %v953, 0
        %v970 = vsel %vm670, %v955, 0
        %972 = vmatpush.xpose.msra.mxu0 0.0
        %973 = vmatpush.xpose.msra.mxu0 0.0
        %974 = vmatpush.xpose.msra.mxu0 0.0
        %975 = vmatpush.xpose.msra.mxu0 0.0
        %976 = vmatpush.xpose.msra.mxu0 0.0
        %977 = vmatpush.xpose.msra.mxu0 0.0
        %978 = vmatpush.xpose.msra.mxu0 0.0
        %979 = vmatpush.xpose.msra.mxu0 0.0
        %980 = vmatpush.xpose.msra.mxu0 0.0
        %981 = vmatpush.xpose.msra.mxu0 0.0
        %982 = vmatpush.xpose.msra.mxu0 0.0
        %983 = vmatpush.xpose.msra.mxu0 0.0
        %984 = vmatpush.xpose.msra.mxu0 %v970
        %985 = vmatpush.xpose.msra.mxu0 %v968
        %986 = vmatpush.xpose.msra.mxu0 %v966
        %987 = vmatpush.xpose.msra.mxu0 %v964
        %988 = vmatmul.f32.gmra.mxu0 %v956
        %v989 = vpop.f32.mrf.mxu0
        %v990 = vadd.f32 0.0, %v989
        %991 = vmatmul.f32.gmra.mxu0 %v958
        %v992 = vpop.f32.mrf.mxu0
        %v993 = vadd.f32 0.0, %v992
        %994 = vmatmul.f32.gmra.mxu0 %v960
        %v995 = vpop.f32.mrf.mxu0
        %v996 = vadd.f32 0.0, %v995
        %997 = vmatmul.f32.gmra.mxu0 %v962
        %v998 = vpop.f32.mrf.mxu0
        %v999 = vadd.f32 0.0, %v998
        %1000 = vdwg.mxu0
        %1005 = vrot.lane.b32.xlu0 %v517, 64
        %v1006 = vpop.permute.xlu0 %1005
        %1007 = vrot.lane.b32.xlu0 %v520, 64
        %v1008 = vpop.permute.xlu0 %1007
        %1009 = vrot.lane.b32.xlu0 %v523, 64
        %v1010 = vpop.permute.xlu0 %1009
        %1011 = vrot.lane.b32.xlu0 %v526, 64
        %v1012 = vpop.permute.xlu0 %1011
        %v1013 = vsel %vm670, %v517, 0
        %v1015 = vsel %vm670, %v520, 0
        %v1017 = vsel %vm670, %v523, 0
        %v1019 = vsel %vm670, %v526, 0
        %v1021 = vsel %vm670, %v1006, 0
        %v1023 = vsel %vm670, %v1008, 0
        %v1025 = vsel %vm670, %v1010, 0
        %v1027 = vsel %vm670, %v1012, 0
        %1029 = vmatpush.xpose.msra.mxu0 0.0
        %1030 = vmatpush.xpose.msra.mxu0 0.0
        %1031 = vmatpush.xpose.msra.mxu0 0.0
        %1032 = vmatpush.xpose.msra.mxu0 0.0
        %1033 = vmatpush.xpose.msra.mxu0 0.0
        %1034 = vmatpush.xpose.msra.mxu0 0.0
        %1035 = vmatpush.xpose.msra.mxu0 0.0
        %1036 = vmatpush.xpose.msra.mxu0 0.0
        %1037 = vmatpush.xpose.msra.mxu0 0.0
        %1038 = vmatpush.xpose.msra.mxu0 0.0
        %1039 = vmatpush.xpose.msra.mxu0 0.0
        %1040 = vmatpush.xpose.msra.mxu0 0.0
        %1041 = vmatpush.xpose.msra.mxu0 %v1027
        %1042 = vmatpush.xpose.msra.mxu0 %v1025
        %1043 = vmatpush.xpose.msra.mxu0 %v1023
        %1044 = vmatpush.xpose.msra.mxu0 %v1021
        %1045 = vmatmul.f32.gmra.mxu0 %v1013
        %v1046 = vpop.f32.mrf.mxu0
        %v1047 = vadd.f32 0.0, %v1046
        %1048 = vmatmul.f32.gmra.mxu0 %v1015
        %v1049 = vpop.f32.mrf.mxu0
        %v1050 = vadd.f32 0.0, %v1049
        %1051 = vmatmul.f32.gmra.mxu0 %v1017
        %v1052 = vpop.f32.mrf.mxu0
        %v1053 = vadd.f32 0.0, %v1052
        %1054 = vmatmul.f32.gmra.mxu0 %v1019
        %v1055 = vpop.f32.mrf.mxu0
        %v1056 = vadd.f32 0.0, %v1055
        %1057 = vdwg.mxu0
        %1062 = vrot.lane.b32.xlu0 %v529, 64
        %v1063 = vpop.permute.xlu0 %1062
        %1064 = vrot.lane.b32.xlu0 %v532, 64
        %v1065 = vpop.permute.xlu0 %1064
        %1066 = vrot.lane.b32.xlu0 %v535, 64
        %v1067 = vpop.permute.xlu0 %1066
        %1068 = vrot.lane.b32.xlu0 %v538, 64
        %v1069 = vpop.permute.xlu0 %1068
        %v1070 = vsel %vm670, %v529, 0
        %v1072 = vsel %vm670, %v532, 0
        %v1074 = vsel %vm670, %v535, 0
        %v1076 = vsel %vm670, %v538, 0
        %v1078 = vsel %vm670, %v1063, 0
        %v1080 = vsel %vm670, %v1065, 0
        %v1082 = vsel %vm670, %v1067, 0
        %v1084 = vsel %vm670, %v1069, 0
        %1086 = vmatpush.xpose.msra.mxu0 0.0
        %1087 = vmatpush.xpose.msra.mxu0 0.0
        %1088 = vmatpush.xpose.msra.mxu0 0.0
        %1089 = vmatpush.xpose.msra.mxu0 0.0
        %1090 = vmatpush.xpose.msra.mxu0 0.0
        %1091 = vmatpush.xpose.msra.mxu0 0.0
        %1092 = vmatpush.xpose.msra.mxu0 0.0
        %1093 = vmatpush.xpose.msra.mxu0 0.0
        %1094 = vmatpush.xpose.msra.mxu0 0.0
        %1095 = vmatpush.xpose.msra.mxu0 0.0
        %1096 = vmatpush.xpose.msra.mxu0 0.0
        %1097 = vmatpush.xpose.msra.mxu0 0.0
        %1098 = vmatpush.xpose.msra.mxu0 %v1084
        %1099 = vmatpush.xpose.msra.mxu0 %v1082
        %1100 = vmatpush.xpose.msra.mxu0 %v1080
        %1101 = vmatpush.xpose.msra.mxu0 %v1078
        %1102 = vmatmul.f32.gmra.mxu0 %v1070
        %v1103 = vpop.f32.mrf.mxu0
        %v1104 = vadd.f32 0.0, %v1103
        %1105 = vmatmul.f32.gmra.mxu0 %v1072
        %v1106 = vpop.f32.mrf.mxu0
        %v1107 = vadd.f32 0.0, %v1106
        %1108 = vmatmul.f32.gmra.mxu0 %v1074
        %v1109 = vpop.f32.mrf.mxu0
        %v1110 = vadd.f32 0.0, %v1109
        %1111 = vmatmul.f32.gmra.mxu0 %v1076
        %v1112 = vpop.f32.mrf.mxu0
        %v1113 = vadd.f32 0.0, %v1112
        %1114 = vdwg.mxu0
        %v1115 = vmul.f32 %v705, 0.25
        %v1116 = vmul.f32 %v708, 0.25
        %v1117 = vmul.f32 %v711, 0.25
        %v1118 = vmul.f32 %v714, 0.25
        %v1119 = vmul.f32 %v762, 0.25
        %v1120 = vmul.f32 %v765, 0.25
        %v1121 = vmul.f32 %v768, 0.25
        %v1122 = vmul.f32 %v771, 0.25
        %v1123 = vmul.f32 %v819, 0.25
        %v1124 = vmul.f32 %v822, 0.25
        %v1125 = vmul.f32 %v825, 0.25
        %v1126 = vmul.f32 %v828, 0.25
        %v1127 = vmul.f32 %v876, 0.25
        %v1128 = vmul.f32 %v879, 0.25
        %v1129 = vmul.f32 %v882, 0.25
        %v1130 = vmul.f32 %v885, 0.25
        %v1131 = vmul.f32 %v933, 0.25
        %v1132 = vmul.f32 %v936, 0.25
        %v1133 = vmul.f32 %v939, 0.25
        %v1134 = vmul.f32 %v942, 0.25
        %v1135 = vmul.f32 %v990, 0.25
        %v1136 = vmul.f32 %v993, 0.25
        %v1137 = vmul.f32 %v996, 0.25
        %v1138 = vmul.f32 %v999, 0.25
        %v1139 = vmul.f32 %v1047, 0.25
        %v1140 = vmul.f32 %v1050, 0.25
        %v1141 = vmul.f32 %v1053, 0.25
        %v1142 = vmul.f32 %v1056, 0.25
        %v1143 = vmul.f32 %v1104, 0.25
        %v1144 = vmul.f32 %v1107, 0.25
        %v1145 = vmul.f32 %v1110, 0.25
        %v1146 = vmul.f32 %v1113, 0.25
        %v1147 = vmul.f32 %v1115, 1.442695
        %v1148 = vpow.pop %v1147
        %v1149 = vmul.f32 %v1116, 1.442695
        %v1150 = vpow.pop %v1149
        %v1151 = vmul.f32 %v1117, 1.442695
        %v1152 = vpow.pop %v1151
        %v1153 = vmul.f32 %v1118, 1.442695
        %v1154 = vpow.pop %v1153
        %v1155 = vmul.f32 %v1119, 1.442695
        %v1156 = vpow.pop %v1155
        %v1157 = vmul.f32 %v1120, 1.442695
        %v1158 = vpow.pop %v1157
        %v1159 = vmul.f32 %v1121, 1.442695
        %v1160 = vpow.pop %v1159
        %v1161 = vmul.f32 %v1122, 1.442695
        %v1162 = vpow.pop %v1161
        %v1163 = vmul.f32 %v1123, 1.442695
        %v1164 = vpow.pop %v1163
        %v1165 = vmul.f32 %v1124, 1.442695
        %v1166 = vpow.pop %v1165
        %v1167 = vmul.f32 %v1125, 1.442695
        %v1168 = vpow.pop %v1167
        %v1169 = vmul.f32 %v1126, 1.442695
        %v1170 = vpow.pop %v1169
        %v1171 = vmul.f32 %v1127, 1.442695
        %v1172 = vpow.pop %v1171
        %v1173 = vmul.f32 %v1128, 1.442695
        %v1174 = vpow.pop %v1173
        %v1175 = vmul.f32 %v1129, 1.442695
        %v1176 = vpow.pop %v1175
        %v1177 = vmul.f32 %v1130, 1.442695
        %v1178 = vpow.pop %v1177
        %v1179 = vmul.f32 %v1131, 1.442695
        %v1180 = vpow.pop %v1179
        %v1181 = vmul.f32 %v1132, 1.442695
        %v1182 = vpow.pop %v1181
        %v1183 = vmul.f32 %v1133, 1.442695
        %v1184 = vpow.pop %v1183
        %v1185 = vmul.f32 %v1134, 1.442695
        %v1186 = vpow.pop %v1185
        %v1187 = vmul.f32 %v1135, 1.442695
        %v1188 = vpow.pop %v1187
        %v1189 = vmul.f32 %v1136, 1.442695
        %v1190 = vpow.pop %v1189
        %v1191 = vmul.f32 %v1137, 1.442695
        %v1192 = vpow.pop %v1191
        %v1193 = vmul.f32 %v1138, 1.442695
        %v1194 = vpow.pop %v1193
        %v1195 = vmul.f32 %v1139, 1.442695
        %v1196 = vpow.pop %v1195
        %v1197 = vmul.f32 %v1140, 1.442695
        %v1198 = vpow.pop %v1197
        %v1199 = vmul.f32 %v1141, 1.442695
        %v1200 = vpow.pop %v1199
        %v1201 = vmul.f32 %v1142, 1.442695
        %v1202 = vpow.pop %v1201
        %v1203 = vmul.f32 %v1143, 1.442695
        %v1204 = vpow.pop %v1203
        %v1205 = vmul.f32 %v1144, 1.442695
        %v1206 = vpow.pop %v1205
        %v1207 = vmul.f32 %v1145, 1.442695
        %v1208 = vpow.pop %v1207
        %v1209 = vmul.f32 %v1146, 1.442695
        %v1210 = vpow.pop %v1209
        %v1211 = vmul.f32 %v1148, %v657
        %v1212 = vmul.f32 %v1150, %v657
        %v1213 = vmul.f32 %v1152, %v657
        %v1214 = vmul.f32 %v1154, %v657
        %v1215 = vmul.f32 %v1156, %v657
        %v1216 = vmul.f32 %v1158, %v657
        %v1217 = vmul.f32 %v1160, %v657
        %v1218 = vmul.f32 %v1162, %v657
        %v1219 = vmul.f32 %v1164, %v657
        %v1220 = vmul.f32 %v1166, %v657
        %v1221 = vmul.f32 %v1168, %v657
        %v1222 = vmul.f32 %v1170, %v657
        %v1223 = vmul.f32 %v1172, %v657
        %v1224 = vmul.f32 %v1174, %v657
        %v1225 = vmul.f32 %v1176, %v657
        %v1226 = vmul.f32 %v1178, %v657
        %v1227 = vmul.f32 %v1180, %v657
        %v1228 = vmul.f32 %v1182, %v657
        %v1229 = vmul.f32 %v1184, %v657
        %v1230 = vmul.f32 %v1186, %v657
        %v1231 = vmul.f32 %v1188, %v657
        %v1232 = vmul.f32 %v1190, %v657
        %v1233 = vmul.f32 %v1192, %v657
        %v1234 = vmul.f32 %v1194, %v657
        %v1235 = vmul.f32 %v1196, %v657
        %v1236 = vmul.f32 %v1198, %v657
        %v1237 = vmul.f32 %v1200, %v657
        %v1238 = vmul.f32 %v1202, %v657
        %v1239 = vmul.f32 %v1204, %v657
        %v1240 = vmul.f32 %v1206, %v657
        %v1241 = vmul.f32 %v1208, %v657
        %v1242 = vmul.f32 %v1210, %v657
        %v1243 = vsel %vm330, %v1211, 0.0
        %1244 = vadd.xlane.f32.xlu0 %v1243
        %v1245 = vpop.xlane.xlu0 %1244
        %v1246 = vsel %vm330, %v1212, 0.0
        %1247 = vadd.xlane.f32.xlu0 %v1246
        %v1248 = vpop.xlane.xlu0 %1247
        %v1249 = vsel %vm330, %v1213, 0.0
        %1250 = vadd.xlane.f32.xlu0 %v1249
        %v1251 = vpop.xlane.xlu0 %1250
        %v1252 = vsel %vm330, %v1214, 0.0
        %1253 = vadd.xlane.f32.xlu0 %v1252
        %v1254 = vpop.xlane.xlu0 %1253
        %v1255 = vsel %vm330, %v1215, 0.0
        %1256 = vadd.xlane.f32.xlu0 %v1255
        %v1257 = vpop.xlane.xlu0 %1256
        %v1258 = vsel %vm330, %v1216, 0.0
        %1259 = vadd.xlane.f32.xlu0 %v1258
        %v1260 = vpop.xlane.xlu0 %1259
        %v1261 = vsel %vm330, %v1217, 0.0
        %1262 = vadd.xlane.f32.xlu0 %v1261
        %v1263 = vpop.xlane.xlu0 %1262
        %v1264 = vsel %vm330, %v1218, 0.0
        %1265 = vadd.xlane.f32.xlu0 %v1264
        %v1266 = vpop.xlane.xlu0 %1265
        %v1267 = vsel %vm330, %v1219, 0.0
        %1268 = vadd.xlane.f32.xlu0 %v1267
        %v1269 = vpop.xlane.xlu0 %1268
        %v1270 = vsel %vm330, %v1220, 0.0
        %1271 = vadd.xlane.f32.xlu0 %v1270
        %v1272 = vpop.xlane.xlu0 %1271
        %v1273 = vsel %vm330, %v1221, 0.0
        %1274 = vadd.xlane.f32.xlu0 %v1273
        %v1275 = vpop.xlane.xlu0 %1274
        %v1276 = vsel %vm330, %v1222, 0.0
        %1277 = vadd.xlane.f32.xlu0 %v1276
        %v1278 = vpop.xlane.xlu0 %1277
        %v1279 = vsel %vm330, %v1223, 0.0
        %1280 = vadd.xlane.f32.xlu0 %v1279
        %v1281 = vpop.xlane.xlu0 %1280
        %v1282 = vsel %vm330, %v1224, 0.0
        %1283 = vadd.xlane.f32.xlu0 %v1282
        %v1284 = vpop.xlane.xlu0 %1283
        %v1285 = vsel %vm330, %v1225, 0.0
        %1286 = vadd.xlane.f32.xlu0 %v1285
        %v1287 = vpop.xlane.xlu0 %1286
        %v1288 = vsel %vm330, %v1226, 0.0
        %1289 = vadd.xlane.f32.xlu0 %v1288
        %v1290 = vpop.xlane.xlu0 %1289
        %v1291 = vsel %vm330, %v1227, 0.0
        %1292 = vadd.xlane.f32.xlu0 %v1291
        %v1293 = vpop.xlane.xlu0 %1292
        %v1294 = vsel %vm330, %v1228, 0.0
        %1295 = vadd.xlane.f32.xlu0 %v1294
        %v1296 = vpop.xlane.xlu0 %1295
        %v1297 = vsel %vm330, %v1229, 0.0
        %1298 = vadd.xlane.f32.xlu0 %v1297
        %v1299 = vpop.xlane.xlu0 %1298
        %v1300 = vsel %vm330, %v1230, 0.0
        %1301 = vadd.xlane.f32.xlu0 %v1300
        %v1302 = vpop.xlane.xlu0 %1301
        %v1303 = vsel %vm330, %v1231, 0.0
        %1304 = vadd.xlane.f32.xlu0 %v1303
        %v1305 = vpop.xlane.xlu0 %1304
        %v1306 = vsel %vm330, %v1232, 0.0
        %1307 = vadd.xlane.f32.xlu0 %v1306
        %v1308 = vpop.xlane.xlu0 %1307
        %v1309 = vsel %vm330, %v1233, 0.0
        %1310 = vadd.xlane.f32.xlu0 %v1309
        %v1311 = vpop.xlane.xlu0 %1310
        %v1312 = vsel %vm330, %v1234, 0.0
        %1313 = vadd.xlane.f32.xlu0 %v1312
        %v1314 = vpop.xlane.xlu0 %1313
        %v1315 = vsel %vm330, %v1235, 0.0
        %1316 = vadd.xlane.f32.xlu0 %v1315
        %v1317 = vpop.xlane.xlu0 %1316
        %v1318 = vsel %vm330, %v1236, 0.0
        %1319 = vadd.xlane.f32.xlu0 %v1318
        %v1320 = vpop.xlane.xlu0 %1319
        %v1321 = vsel %vm330, %v1237, 0.0
        %1322 = vadd.xlane.f32.xlu0 %v1321
        %v1323 = vpop.xlane.xlu0 %1322
        %v1324 = vsel %vm330, %v1238, 0.0
        %1325 = vadd.xlane.f32.xlu0 %v1324
        %v1326 = vpop.xlane.xlu0 %1325
        %v1327 = vsel %vm330, %v1239, 0.0
        %1328 = vadd.xlane.f32.xlu0 %v1327
        %v1329 = vpop.xlane.xlu0 %1328
        %v1330 = vsel %vm330, %v1240, 0.0
        %1331 = vadd.xlane.f32.xlu0 %v1330
        %v1332 = vpop.xlane.xlu0 %1331
        %v1333 = vsel %vm330, %v1241, 0.0
        %1334 = vadd.xlane.f32.xlu0 %v1333
        %v1335 = vpop.xlane.xlu0 %1334
        %v1336 = vsel %vm330, %v1242, 0.0
        %1337 = vadd.xlane.f32.xlu0 %v1336
        %v1338 = vpop.xlane.xlu0 %1337
        %v1339 = vadd.f32 %v1245, 1e-08
        %v1340 = vadd.f32 %v1248, 1e-08
        %v1341 = vadd.f32 %v1251, 1e-08
        %v1342 = vadd.f32 %v1254, 1e-08
        %v1343 = vadd.f32 %v1257, 1e-08
        %v1344 = vadd.f32 %v1260, 1e-08
        %v1345 = vadd.f32 %v1263, 1e-08
        %v1346 = vadd.f32 %v1266, 1e-08
        %v1347 = vadd.f32 %v1269, 1e-08
        %v1348 = vadd.f32 %v1272, 1e-08
        %v1349 = vadd.f32 %v1275, 1e-08
        %v1350 = vadd.f32 %v1278, 1e-08
        %v1351 = vadd.f32 %v1281, 1e-08
        %v1352 = vadd.f32 %v1284, 1e-08
        %v1353 = vadd.f32 %v1287, 1e-08
        %v1354 = vadd.f32 %v1290, 1e-08
        %v1355 = vadd.f32 %v1293, 1e-08
        %v1356 = vadd.f32 %v1296, 1e-08
        %v1357 = vadd.f32 %v1299, 1e-08
        %v1358 = vadd.f32 %v1302, 1e-08
        %v1359 = vadd.f32 %v1305, 1e-08
        %v1360 = vadd.f32 %v1308, 1e-08
        %v1361 = vadd.f32 %v1311, 1e-08
        %v1362 = vadd.f32 %v1314, 1e-08
        %v1363 = vadd.f32 %v1317, 1e-08
        %v1364 = vadd.f32 %v1320, 1e-08
        %v1365 = vadd.f32 %v1323, 1e-08
        %v1366 = vadd.f32 %v1326, 1e-08
        %v1367 = vadd.f32 %v1329, 1e-08
        %v1368 = vadd.f32 %v1332, 1e-08
        %v1369 = vadd.f32 %v1335, 1e-08
        %v1370 = vadd.f32 %v1338, 1e-08
        %v1371 = vrcp.pop %v1339
        %v1372 = vmul.f32 %v1339, %v1371
        %v1373 = vsub.f32 1.0, %v1372
        %v1374 = vmul.f32 %v1371, %v1373
        %v1375 = vadd.f32 %v1371, %v1374
        %vm1376 = vweird.f32 %v1339
        %vm1377 = vweird.f32 %v1371
        %vm1378 = vmor %vm1376, %vm1377
        %v1379 = vsel %vm1378, %v1371, %v1375
        %v1380 = vand.u32 2147483647, %v1339
        %vm1381 = vcmp.eq.f32.partialorder %v1380, 8.507059e+37
        %v1382 = vand.u32 %v1339, 2147483648
        %v1383 = vor.u32 1.1754944e-38, %v1382
        %v1384 = vsel %vm1381, %v1383, %v1379
        %v1385 = vmul.f32 %v1211, %v1384
        %v1386 = vrcp.pop %v1340
        %v1387 = vmul.f32 %v1340, %v1386
        %v1388 = vsub.f32 1.0, %v1387
        %v1389 = vmul.f32 %v1386, %v1388
        %v1390 = vadd.f32 %v1386, %v1389
        %vm1391 = vweird.f32 %v1340
        %vm1392 = vweird.f32 %v1386
        %vm1393 = vmor %vm1391, %vm1392
        %v1394 = vsel %vm1393, %v1386, %v1390
        %v1395 = vand.u32 2147483647, %v1340
        %vm1396 = vcmp.eq.f32.partialorder %v1395, 8.507059e+37
        %v1397 = vand.u32 %v1340, 2147483648
        %v1398 = vor.u32 1.1754944e-38, %v1397
        %v1399 = vsel %vm1396, %v1398, %v1394
        %v1400 = vmul.f32 %v1212, %v1399
        %v1401 = vrcp.pop %v1341
        %v1402 = vmul.f32 %v1341, %v1401
        %v1403 = vsub.f32 1.0, %v1402
        %v1404 = vmul.f32 %v1401, %v1403
        %v1405 = vadd.f32 %v1401, %v1404
        %vm1406 = vweird.f32 %v1341
        %vm1407 = vweird.f32 %v1401
        %vm1408 = vmor %vm1406, %vm1407
        %v1409 = vsel %vm1408, %v1401, %v1405
        %v1410 = vand.u32 2147483647, %v1341
        %vm1411 = vcmp.eq.f32.partialorder %v1410, 8.507059e+37
        %v1412 = vand.u32 %v1341, 2147483648
        %v1413 = vor.u32 1.1754944e-38, %v1412
        %v1414 = vsel %vm1411, %v1413, %v1409
        %v1415 = vmul.f32 %v1213, %v1414
        %v1416 = vrcp.pop %v1342
        %v1417 = vmul.f32 %v1342, %v1416
        %v1418 = vsub.f32 1.0, %v1417
        %v1419 = vmul.f32 %v1416, %v1418
        %v1420 = vadd.f32 %v1416, %v1419
        %vm1421 = vweird.f32 %v1342
        %vm1422 = vweird.f32 %v1416
        %vm1423 = vmor %vm1421, %vm1422
        %v1424 = vsel %vm1423, %v1416, %v1420
        %v1425 = vand.u32 2147483647, %v1342
        %vm1426 = vcmp.eq.f32.partialorder %v1425, 8.507059e+37
        %v1427 = vand.u32 %v1342, 2147483648
        %v1428 = vor.u32 1.1754944e-38, %v1427
        %v1429 = vsel %vm1426, %v1428, %v1424
        %v1430 = vmul.f32 %v1214, %v1429
        %v1431 = vrcp.pop %v1343
        %v1432 = vmul.f32 %v1343, %v1431
        %v1433 = vsub.f32 1.0, %v1432
        %v1434 = vmul.f32 %v1431, %v1433
        %v1435 = vadd.f32 %v1431, %v1434
        %vm1436 = vweird.f32 %v1343
        %vm1437 = vweird.f32 %v1431
        %vm1438 = vmor %vm1436, %vm1437
        %v1439 = vsel %vm1438, %v1431, %v1435
        %v1440 = vand.u32 2147483647, %v1343
        %vm1441 = vcmp.eq.f32.partialorder %v1440, 8.507059e+37
        %v1442 = vand.u32 %v1343, 2147483648
        %v1443 = vor.u32 1.1754944e-38, %v1442
        %v1444 = vsel %vm1441, %v1443, %v1439
        %v1445 = vmul.f32 %v1215, %v1444
        %v1446 = vrcp.pop %v1344
        %v1447 = vmul.f32 %v1344, %v1446
        %v1448 = vsub.f32 1.0, %v1447
        %v1449 = vmul.f32 %v1446, %v1448
        %v1450 = vadd.f32 %v1446, %v1449
        %vm1451 = vweird.f32 %v1344
        %vm1452 = vweird.f32 %v1446
        %vm1453 = vmor %vm1451, %vm1452
        %v1454 = vsel %vm1453, %v1446, %v1450
        %v1455 = vand.u32 2147483647, %v1344
        %vm1456 = vcmp.eq.f32.partialorder %v1455, 8.507059e+37
        %v1457 = vand.u32 %v1344, 2147483648
        %v1458 = vor.u32 1.1754944e-38, %v1457
        %v1459 = vsel %vm1456, %v1458, %v1454
        %v1460 = vmul.f32 %v1216, %v1459
        %v1461 = vrcp.pop %v1345
        %v1462 = vmul.f32 %v1345, %v1461
        %v1463 = vsub.f32 1.0, %v1462
        %v1464 = vmul.f32 %v1461, %v1463
        %v1465 = vadd.f32 %v1461, %v1464
        %vm1466 = vweird.f32 %v1345
        %vm1467 = vweird.f32 %v1461
        %vm1468 = vmor %vm1466, %vm1467
        %v1469 = vsel %vm1468, %v1461, %v1465
        %v1470 = vand.u32 2147483647, %v1345
        %vm1471 = vcmp.eq.f32.partialorder %v1470, 8.507059e+37
        %v1472 = vand.u32 %v1345, 2147483648
        %v1473 = vor.u32 1.1754944e-38, %v1472
        %v1474 = vsel %vm1471, %v1473, %v1469
        %v1475 = vmul.f32 %v1217, %v1474
        %v1476 = vrcp.pop %v1346
        %v1477 = vmul.f32 %v1346, %v1476
        %v1478 = vsub.f32 1.0, %v1477
        %v1479 = vmul.f32 %v1476, %v1478
        %v1480 = vadd.f32 %v1476, %v1479
        %vm1481 = vweird.f32 %v1346
        %vm1482 = vweird.f32 %v1476
        %vm1483 = vmor %vm1481, %vm1482
        %v1484 = vsel %vm1483, %v1476, %v1480
        %v1485 = vand.u32 2147483647, %v1346
        %vm1486 = vcmp.eq.f32.partialorder %v1485, 8.507059e+37
        %v1487 = vand.u32 %v1346, 2147483648
        %v1488 = vor.u32 1.1754944e-38, %v1487
        %v1489 = vsel %vm1486, %v1488, %v1484
        %v1490 = vmul.f32 %v1218, %v1489
        %v1491 = vrcp.pop %v1347
        %v1492 = vmul.f32 %v1347, %v1491
        %v1493 = vsub.f32 1.0, %v1492
        %v1494 = vmul.f32 %v1491, %v1493
        %v1495 = vadd.f32 %v1491, %v1494
        %vm1496 = vweird.f32 %v1347
        %vm1497 = vweird.f32 %v1491
        %vm1498 = vmor %vm1496, %vm1497
        %v1499 = vsel %vm1498, %v1491, %v1495
        %v1500 = vand.u32 2147483647, %v1347
        %vm1501 = vcmp.eq.f32.partialorder %v1500, 8.507059e+37
        %v1502 = vand.u32 %v1347, 2147483648
        %v1503 = vor.u32 1.1754944e-38, %v1502
        %v1504 = vsel %vm1501, %v1503, %v1499
        %v1505 = vmul.f32 %v1219, %v1504
        %v1506 = vrcp.pop %v1348
        %v1507 = vmul.f32 %v1348, %v1506
        %v1508 = vsub.f32 1.0, %v1507
        %v1509 = vmul.f32 %v1506, %v1508
        %v1510 = vadd.f32 %v1506, %v1509
        %vm1511 = vweird.f32 %v1348
        %vm1512 = vweird.f32 %v1506
        %vm1513 = vmor %vm1511, %vm1512
        %v1514 = vsel %vm1513, %v1506, %v1510
        %v1515 = vand.u32 2147483647, %v1348
        %vm1516 = vcmp.eq.f32.partialorder %v1515, 8.507059e+37
        %v1517 = vand.u32 %v1348, 2147483648
        %v1518 = vor.u32 1.1754944e-38, %v1517
        %v1519 = vsel %vm1516, %v1518, %v1514
        %v1520 = vmul.f32 %v1220, %v1519
        %v1521 = vrcp.pop %v1349
        %v1522 = vmul.f32 %v1349, %v1521
        %v1523 = vsub.f32 1.0, %v1522
        %v1524 = vmul.f32 %v1521, %v1523
        %v1525 = vadd.f32 %v1521, %v1524
        %vm1526 = vweird.f32 %v1349
        %vm1527 = vweird.f32 %v1521
        %vm1528 = vmor %vm1526, %vm1527
        %v1529 = vsel %vm1528, %v1521, %v1525
        %v1530 = vand.u32 2147483647, %v1349
        %vm1531 = vcmp.eq.f32.partialorder %v1530, 8.507059e+37
        %v1532 = vand.u32 %v1349, 2147483648
        %v1533 = vor.u32 1.1754944e-38, %v1532
        %v1534 = vsel %vm1531, %v1533, %v1529
        %v1535 = vmul.f32 %v1221, %v1534
        %v1536 = vrcp.pop %v1350
        %v1537 = vmul.f32 %v1350, %v1536
        %v1538 = vsub.f32 1.0, %v1537
        %v1539 = vmul.f32 %v1536, %v1538
        %v1540 = vadd.f32 %v1536, %v1539
        %vm1541 = vweird.f32 %v1350
        %vm1542 = vweird.f32 %v1536
        %vm1543 = vmor %vm1541, %vm1542
        %v1544 = vsel %vm1543, %v1536, %v1540
        %v1545 = vand.u32 2147483647, %v1350
        %vm1546 = vcmp.eq.f32.partialorder %v1545, 8.507059e+37
        %v1547 = vand.u32 %v1350, 2147483648
        %v1548 = vor.u32 1.1754944e-38, %v1547
        %v1549 = vsel %vm1546, %v1548, %v1544
        %v1550 = vmul.f32 %v1222, %v1549
        %v1551 = vrcp.pop %v1351
        %v1552 = vmul.f32 %v1351, %v1551
        %v1553 = vsub.f32 1.0, %v1552
        %v1554 = vmul.f32 %v1551, %v1553
        %v1555 = vadd.f32 %v1551, %v1554
        %vm1556 = vweird.f32 %v1351
        %vm1557 = vweird.f32 %v1551
        %vm1558 = vmor %vm1556, %vm1557
        %v1559 = vsel %vm1558, %v1551, %v1555
        %v1560 = vand.u32 2147483647, %v1351
        %vm1561 = vcmp.eq.f32.partialorder %v1560, 8.507059e+37
        %v1562 = vand.u32 %v1351, 2147483648
        %v1563 = vor.u32 1.1754944e-38, %v1562
        %v1564 = vsel %vm1561, %v1563, %v1559
        %v1565 = vmul.f32 %v1223, %v1564
        %v1566 = vrcp.pop %v1352
        %v1567 = vmul.f32 %v1352, %v1566
        %v1568 = vsub.f32 1.0, %v1567
        %v1569 = vmul.f32 %v1566, %v1568
        %v1570 = vadd.f32 %v1566, %v1569
        %vm1571 = vweird.f32 %v1352
        %vm1572 = vweird.f32 %v1566
        %vm1573 = vmor %vm1571, %vm1572
        %v1574 = vsel %vm1573, %v1566, %v1570
        %v1575 = vand.u32 2147483647, %v1352
        %vm1576 = vcmp.eq.f32.partialorder %v1575, 8.507059e+37
        %v1577 = vand.u32 %v1352, 2147483648
        %v1578 = vor.u32 1.1754944e-38, %v1577
        %v1579 = vsel %vm1576, %v1578, %v1574
        %v1580 = vmul.f32 %v1224, %v1579
        %v1581 = vrcp.pop %v1353
        %v1582 = vmul.f32 %v1353, %v1581
        %v1583 = vsub.f32 1.0, %v1582
        %v1584 = vmul.f32 %v1581, %v1583
        %v1585 = vadd.f32 %v1581, %v1584
        %vm1586 = vweird.f32 %v1353
        %vm1587 = vweird.f32 %v1581
        %vm1588 = vmor %vm1586, %vm1587
        %v1589 = vsel %vm1588, %v1581, %v1585
        %v1590 = vand.u32 2147483647, %v1353
        %vm1591 = vcmp.eq.f32.partialorder %v1590, 8.507059e+37
        %v1592 = vand.u32 %v1353, 2147483648
        %v1593 = vor.u32 1.1754944e-38, %v1592
        %v1594 = vsel %vm1591, %v1593, %v1589
        %v1595 = vmul.f32 %v1225, %v1594
        %v1596 = vrcp.pop %v1354
        %v1597 = vmul.f32 %v1354, %v1596
        %v1598 = vsub.f32 1.0, %v1597
        %v1599 = vmul.f32 %v1596, %v1598
        %v1600 = vadd.f32 %v1596, %v1599
        %vm1601 = vweird.f32 %v1354
        %vm1602 = vweird.f32 %v1596
        %vm1603 = vmor %vm1601, %vm1602
        %v1604 = vsel %vm1603, %v1596, %v1600
        %v1605 = vand.u32 2147483647, %v1354
        %vm1606 = vcmp.eq.f32.partialorder %v1605, 8.507059e+37
        %v1607 = vand.u32 %v1354, 2147483648
        %v1608 = vor.u32 1.1754944e-38, %v1607
        %v1609 = vsel %vm1606, %v1608, %v1604
        %v1610 = vmul.f32 %v1226, %v1609
        %v1611 = vrcp.pop %v1355
        %v1612 = vmul.f32 %v1355, %v1611
        %v1613 = vsub.f32 1.0, %v1612
        %v1614 = vmul.f32 %v1611, %v1613
        %v1615 = vadd.f32 %v1611, %v1614
        %vm1616 = vweird.f32 %v1355
        %vm1617 = vweird.f32 %v1611
        %vm1618 = vmor %vm1616, %vm1617
        %v1619 = vsel %vm1618, %v1611, %v1615
        %v1620 = vand.u32 2147483647, %v1355
        %vm1621 = vcmp.eq.f32.partialorder %v1620, 8.507059e+37
        %v1622 = vand.u32 %v1355, 2147483648
        %v1623 = vor.u32 1.1754944e-38, %v1622
        %v1624 = vsel %vm1621, %v1623, %v1619
        %v1625 = vmul.f32 %v1227, %v1624
        %v1626 = vrcp.pop %v1356
        %v1627 = vmul.f32 %v1356, %v1626
        %v1628 = vsub.f32 1.0, %v1627
        %v1629 = vmul.f32 %v1626, %v1628
        %v1630 = vadd.f32 %v1626, %v1629
        %vm1631 = vweird.f32 %v1356
        %vm1632 = vweird.f32 %v1626
        %vm1633 = vmor %vm1631, %vm1632
        %v1634 = vsel %vm1633, %v1626, %v1630
        %v1635 = vand.u32 2147483647, %v1356
        %vm1636 = vcmp.eq.f32.partialorder %v1635, 8.507059e+37
        %v1637 = vand.u32 %v1356, 2147483648
        %v1638 = vor.u32 1.1754944e-38, %v1637
        %v1639 = vsel %vm1636, %v1638, %v1634
        %v1640 = vmul.f32 %v1228, %v1639
        %v1641 = vrcp.pop %v1357
        %v1642 = vmul.f32 %v1357, %v1641
        %v1643 = vsub.f32 1.0, %v1642
        %v1644 = vmul.f32 %v1641, %v1643
        %v1645 = vadd.f32 %v1641, %v1644
        %vm1646 = vweird.f32 %v1357
        %vm1647 = vweird.f32 %v1641
        %vm1648 = vmor %vm1646, %vm1647
        %v1649 = vsel %vm1648, %v1641, %v1645
        %v1650 = vand.u32 2147483647, %v1357
        %vm1651 = vcmp.eq.f32.partialorder %v1650, 8.507059e+37
        %v1652 = vand.u32 %v1357, 2147483648
        %v1653 = vor.u32 1.1754944e-38, %v1652
        %v1654 = vsel %vm1651, %v1653, %v1649
        %v1655 = vmul.f32 %v1229, %v1654
        %v1656 = vrcp.pop %v1358
        %v1657 = vmul.f32 %v1358, %v1656
        %v1658 = vsub.f32 1.0, %v1657
        %v1659 = vmul.f32 %v1656, %v1658
        %v1660 = vadd.f32 %v1656, %v1659
        %vm1661 = vweird.f32 %v1358
        %vm1662 = vweird.f32 %v1656
        %vm1663 = vmor %vm1661, %vm1662
        %v1664 = vsel %vm1663, %v1656, %v1660
        %v1665 = vand.u32 2147483647, %v1358
        %vm1666 = vcmp.eq.f32.partialorder %v1665, 8.507059e+37
        %v1667 = vand.u32 %v1358, 2147483648
        %v1668 = vor.u32 1.1754944e-38, %v1667
        %v1669 = vsel %vm1666, %v1668, %v1664
        %v1670 = vmul.f32 %v1230, %v1669
        %v1671 = vrcp.pop %v1359
        %v1672 = vmul.f32 %v1359, %v1671
        %v1673 = vsub.f32 1.0, %v1672
        %v1674 = vmul.f32 %v1671, %v1673
        %v1675 = vadd.f32 %v1671, %v1674
        %vm1676 = vweird.f32 %v1359
        %vm1677 = vweird.f32 %v1671
        %vm1678 = vmor %vm1676, %vm1677
        %v1679 = vsel %vm1678, %v1671, %v1675
        %v1680 = vand.u32 2147483647, %v1359
        %vm1681 = vcmp.eq.f32.partialorder %v1680, 8.507059e+37
        %v1682 = vand.u32 %v1359, 2147483648
        %v1683 = vor.u32 1.1754944e-38, %v1682
        %v1684 = vsel %vm1681, %v1683, %v1679
        %v1685 = vmul.f32 %v1231, %v1684
        %v1686 = vrcp.pop %v1360
        %v1687 = vmul.f32 %v1360, %v1686
        %v1688 = vsub.f32 1.0, %v1687
        %v1689 = vmul.f32 %v1686, %v1688
        %v1690 = vadd.f32 %v1686, %v1689
        %vm1691 = vweird.f32 %v1360
        %vm1692 = vweird.f32 %v1686
        %vm1693 = vmor %vm1691, %vm1692
        %v1694 = vsel %vm1693, %v1686, %v1690
        %v1695 = vand.u32 2147483647, %v1360
        %vm1696 = vcmp.eq.f32.partialorder %v1695, 8.507059e+37
        %v1697 = vand.u32 %v1360, 2147483648
        %v1698 = vor.u32 1.1754944e-38, %v1697
        %v1699 = vsel %vm1696, %v1698, %v1694
        %v1700 = vmul.f32 %v1232, %v1699
        %v1701 = vrcp.pop %v1361
        %v1702 = vmul.f32 %v1361, %v1701
        %v1703 = vsub.f32 1.0, %v1702
        %v1704 = vmul.f32 %v1701, %v1703
        %v1705 = vadd.f32 %v1701, %v1704
        %vm1706 = vweird.f32 %v1361
        %vm1707 = vweird.f32 %v1701
        %vm1708 = vmor %vm1706, %vm1707
        %v1709 = vsel %vm1708, %v1701, %v1705
        %v1710 = vand.u32 2147483647, %v1361
        %vm1711 = vcmp.eq.f32.partialorder %v1710, 8.507059e+37
        %v1712 = vand.u32 %v1361, 2147483648
        %v1713 = vor.u32 1.1754944e-38, %v1712
        %v1714 = vsel %vm1711, %v1713, %v1709
        %v1715 = vmul.f32 %v1233, %v1714
        %v1716 = vrcp.pop %v1362
        %v1717 = vmul.f32 %v1362, %v1716
        %v1718 = vsub.f32 1.0, %v1717
        %v1719 = vmul.f32 %v1716, %v1718
        %v1720 = vadd.f32 %v1716, %v1719
        %vm1721 = vweird.f32 %v1362
        %vm1722 = vweird.f32 %v1716
        %vm1723 = vmor %vm1721, %vm1722
        %v1724 = vsel %vm1723, %v1716, %v1720
        %v1725 = vand.u32 2147483647, %v1362
        %vm1726 = vcmp.eq.f32.partialorder %v1725, 8.507059e+37
        %v1727 = vand.u32 %v1362, 2147483648
        %v1728 = vor.u32 1.1754944e-38, %v1727
        %v1729 = vsel %vm1726, %v1728, %v1724
        %v1730 = vmul.f32 %v1234, %v1729
        %v1731 = vrcp.pop %v1363
        %v1732 = vmul.f32 %v1363, %v1731
        %v1733 = vsub.f32 1.0, %v1732
        %v1734 = vmul.f32 %v1731, %v1733
        %v1735 = vadd.f32 %v1731, %v1734
        %vm1736 = vweird.f32 %v1363
        %vm1737 = vweird.f32 %v1731
        %vm1738 = vmor %vm1736, %vm1737
        %v1739 = vsel %vm1738, %v1731, %v1735
        %v1740 = vand.u32 2147483647, %v1363
        %vm1741 = vcmp.eq.f32.partialorder %v1740, 8.507059e+37
        %v1742 = vand.u32 %v1363, 2147483648
        %v1743 = vor.u32 1.1754944e-38, %v1742
        %v1744 = vsel %vm1741, %v1743, %v1739
        %v1745 = vmul.f32 %v1235, %v1744
        %v1746 = vrcp.pop %v1364
        %v1747 = vmul.f32 %v1364, %v1746
        %v1748 = vsub.f32 1.0, %v1747
        %v1749 = vmul.f32 %v1746, %v1748
        %v1750 = vadd.f32 %v1746, %v1749
        %vm1751 = vweird.f32 %v1364
        %vm1752 = vweird.f32 %v1746
        %vm1753 = vmor %vm1751, %vm1752
        %v1754 = vsel %vm1753, %v1746, %v1750
        %v1755 = vand.u32 2147483647, %v1364
        %vm1756 = vcmp.eq.f32.partialorder %v1755, 8.507059e+37
        %v1757 = vand.u32 %v1364, 2147483648
        %v1758 = vor.u32 1.1754944e-38, %v1757
        %v1759 = vsel %vm1756, %v1758, %v1754
        %v1760 = vmul.f32 %v1236, %v1759
        %v1761 = vrcp.pop %v1365
        %v1762 = vmul.f32 %v1365, %v1761
        %v1763 = vsub.f32 1.0, %v1762
        %v1764 = vmul.f32 %v1761, %v1763
        %v1765 = vadd.f32 %v1761, %v1764
        %vm1766 = vweird.f32 %v1365
        %vm1767 = vweird.f32 %v1761
        %vm1768 = vmor %vm1766, %vm1767
        %v1769 = vsel %vm1768, %v1761, %v1765
        %v1770 = vand.u32 2147483647, %v1365
        %vm1771 = vcmp.eq.f32.partialorder %v1770, 8.507059e+37
        %v1772 = vand.u32 %v1365, 2147483648
        %v1773 = vor.u32 1.1754944e-38, %v1772
        %v1774 = vsel %vm1771, %v1773, %v1769
        %v1775 = vmul.f32 %v1237, %v1774
        %v1776 = vrcp.pop %v1366
        %v1777 = vmul.f32 %v1366, %v1776
        %v1778 = vsub.f32 1.0, %v1777
        %v1779 = vmul.f32 %v1776, %v1778
        %v1780 = vadd.f32 %v1776, %v1779
        %vm1781 = vweird.f32 %v1366
        %vm1782 = vweird.f32 %v1776
        %vm1783 = vmor %vm1781, %vm1782
        %v1784 = vsel %vm1783, %v1776, %v1780
        %v1785 = vand.u32 2147483647, %v1366
        %vm1786 = vcmp.eq.f32.partialorder %v1785, 8.507059e+37
        %v1787 = vand.u32 %v1366, 2147483648
        %v1788 = vor.u32 1.1754944e-38, %v1787
        %v1789 = vsel %vm1786, %v1788, %v1784
        %v1790 = vmul.f32 %v1238, %v1789
        %v1791 = vrcp.pop %v1367
        %v1792 = vmul.f32 %v1367, %v1791
        %v1793 = vsub.f32 1.0, %v1792
        %v1794 = vmul.f32 %v1791, %v1793
        %v1795 = vadd.f32 %v1791, %v1794
        %vm1796 = vweird.f32 %v1367
        %vm1797 = vweird.f32 %v1791
        %vm1798 = vmor %vm1796, %vm1797
        %v1799 = vsel %vm1798, %v1791, %v1795
        %v1800 = vand.u32 2147483647, %v1367
        %vm1801 = vcmp.eq.f32.partialorder %v1800, 8.507059e+37
        %v1802 = vand.u32 %v1367, 2147483648
        %v1803 = vor.u32 1.1754944e-38, %v1802
        %v1804 = vsel %vm1801, %v1803, %v1799
        %v1805 = vmul.f32 %v1239, %v1804
        %v1806 = vrcp.pop %v1368
        %v1807 = vmul.f32 %v1368, %v1806
        %v1808 = vsub.f32 1.0, %v1807
        %v1809 = vmul.f32 %v1806, %v1808
        %v1810 = vadd.f32 %v1806, %v1809
        %vm1811 = vweird.f32 %v1368
        %vm1812 = vweird.f32 %v1806
        %vm1813 = vmor %vm1811, %vm1812
        %v1814 = vsel %vm1813, %v1806, %v1810
        %v1815 = vand.u32 2147483647, %v1368
        %vm1816 = vcmp.eq.f32.partialorder %v1815, 8.507059e+37
        %v1817 = vand.u32 %v1368, 2147483648
        %v1818 = vor.u32 1.1754944e-38, %v1817
        %v1819 = vsel %vm1816, %v1818, %v1814
        %v1820 = vmul.f32 %v1240, %v1819
        %v1821 = vrcp.pop %v1369
        %v1822 = vmul.f32 %v1369, %v1821
        %v1823 = vsub.f32 1.0, %v1822
        %v1824 = vmul.f32 %v1821, %v1823
        %v1825 = vadd.f32 %v1821, %v1824
        %vm1826 = vweird.f32 %v1369
        %vm1827 = vweird.f32 %v1821
        %vm1828 = vmor %vm1826, %vm1827
        %v1829 = vsel %vm1828, %v1821, %v1825
        %v1830 = vand.u32 2147483647, %v1369
        %vm1831 = vcmp.eq.f32.partialorder %v1830, 8.507059e+37
        %v1832 = vand.u32 %v1369, 2147483648
        %v1833 = vor.u32 1.1754944e-38, %v1832
        %v1834 = vsel %vm1831, %v1833, %v1829
        %v1835 = vmul.f32 %v1241, %v1834
        %v1836 = vrcp.pop %v1370
        %v1837 = vmul.f32 %v1370, %v1836
        %v1838 = vsub.f32 1.0, %v1837
        %v1839 = vmul.f32 %v1836, %v1838
        %v1840 = vadd.f32 %v1836, %v1839
        %vm1841 = vweird.f32 %v1370
        %vm1842 = vweird.f32 %v1836
        %vm1843 = vmor %vm1841, %vm1842
        %v1844 = vsel %vm1843, %v1836, %v1840
        %v1845 = vand.u32 2147483647, %v1370
        %vm1846 = vcmp.eq.f32.partialorder %v1845, 8.507059e+37
        %v1847 = vand.u32 %v1370, 2147483648
        %v1848 = vor.u32 1.1754944e-38, %v1847
        %v1849 = vsel %vm1846, %v1848, %v1844
        %v1850 = vmul.f32 %v1242, %v1849
        %v1852 = vsel %vm330, %v1385, 0
        %v1855 = vsel %vm330, %v1400, 0
        %v1858 = vsel %vm330, %v1415, 0
        %v1861 = vsel %vm330, %v1430, 0
        %1863 = vmatpush.msra.mxu0 0.0
        %1864 = vmatpush.msra.mxu0 0.0
        %1865 = vmatpush.msra.mxu0 0.0
        %1866 = vmatpush.msra.mxu0 0.0
        %1867 = vmatpush.msra.mxu0 0.0
        %1868 = vmatpush.msra.mxu0 0.0
        %1869 = vmatpush.msra.mxu0 0.0
        %1870 = vmatpush.msra.mxu0 0.0
        %1871 = vmatpush.msra.mxu0 0.0
        %1872 = vmatpush.msra.mxu0 0.0
        %1873 = vmatpush.msra.mxu0 0.0
        %1874 = vmatpush.msra.mxu0 0.0
        %1875 = vmatpush.msra.mxu0 %v567
        %1876 = vmatpush.msra.mxu0 %v564
        %1877 = vmatpush.msra.mxu0 %v561
        %1878 = vmatpush.msra.mxu0 %v558
        %1879 = vmatmul.f32.gmra.mxu0 %v1852
        %v1880 = vpop.f32.mrf.mxu0
        %v1881 = vadd.f32 0.0, %v1880
        %1882 = vmatmul.f32.gmra.mxu0 %v1855
        %v1883 = vpop.f32.mrf.mxu0
        %v1884 = vadd.f32 0.0, %v1883
        %1885 = vmatmul.f32.gmra.mxu0 %v1858
        %v1886 = vpop.f32.mrf.mxu0
        %v1887 = vadd.f32 0.0, %v1886
        %1888 = vmatmul.f32.gmra.mxu0 %v1861
        %v1889 = vpop.f32.mrf.mxu0
        %v1890 = vadd.f32 0.0, %v1889
        %1891 = vdwg.mxu0
        %v1893 = vsel %vm330, %v1445, 0
        %v1896 = vsel %vm330, %v1460, 0
        %v1899 = vsel %vm330, %v1475, 0
        %v1902 = vsel %vm330, %v1490, 0
        %1904 = vmatpush.msra.mxu0 0.0
        %1905 = vmatpush.msra.mxu0 0.0
        %1906 = vmatpush.msra.mxu0 0.0
        %1907 = vmatpush.msra.mxu0 0.0
        %1908 = vmatpush.msra.mxu0 0.0
        %1909 = vmatpush.msra.mxu0 0.0
        %1910 = vmatpush.msra.mxu0 0.0
        %1911 = vmatpush.msra.mxu0 0.0
        %1912 = vmatpush.msra.mxu0 0.0
        %1913 = vmatpush.msra.mxu0 0.0
        %1914 = vmatpush.msra.mxu0 0.0
        %1915 = vmatpush.msra.mxu0 0.0
        %1916 = vmatpush.msra.mxu0 %v579
        %1917 = vmatpush.msra.mxu0 %v576
        %1918 = vmatpush.msra.mxu0 %v573
        %1919 = vmatpush.msra.mxu0 %v570
        %1920 = vmatmul.f32.gmra.mxu0 %v1893
        %v1921 = vpop.f32.mrf.mxu0
        %v1922 = vadd.f32 0.0, %v1921
        %1923 = vmatmul.f32.gmra.mxu0 %v1896
        %v1924 = vpop.f32.mrf.mxu0
        %v1925 = vadd.f32 0.0, %v1924
        %1926 = vmatmul.f32.gmra.mxu0 %v1899
        %v1927 = vpop.f32.mrf.mxu0
        %v1928 = vadd.f32 0.0, %v1927
        %1929 = vmatmul.f32.gmra.mxu0 %v1902
        %v1930 = vpop.f32.mrf.mxu0
        %v1931 = vadd.f32 0.0, %v1930
        %1932 = vdwg.mxu0
        %v1934 = vsel %vm330, %v1505, 0
        %v1937 = vsel %vm330, %v1520, 0
        %v1940 = vsel %vm330, %v1535, 0
        %v1943 = vsel %vm330, %v1550, 0
        %1945 = vmatpush.msra.mxu0 0.0
        %1946 = vmatpush.msra.mxu0 0.0
        %1947 = vmatpush.msra.mxu0 0.0
        %1948 = vmatpush.msra.mxu0 0.0
        %1949 = vmatpush.msra.mxu0 0.0
        %1950 = vmatpush.msra.mxu0 0.0
        %1951 = vmatpush.msra.mxu0 0.0
        %1952 = vmatpush.msra.mxu0 0.0
        %1953 = vmatpush.msra.mxu0 0.0
        %1954 = vmatpush.msra.mxu0 0.0
        %1955 = vmatpush.msra.mxu0 0.0
        %1956 = vmatpush.msra.mxu0 0.0
        %1957 = vmatpush.msra.mxu0 %v591
        %1958 = vmatpush.msra.mxu0 %v588
        %1959 = vmatpush.msra.mxu0 %v585
        %1960 = vmatpush.msra.mxu0 %v582
        %1961 = vmatmul.f32.gmra.mxu0 %v1934
        %v1962 = vpop.f32.mrf.mxu0
        %v1963 = vadd.f32 0.0, %v1962
        %1964 = vmatmul.f32.gmra.mxu0 %v1937
        %v1965 = vpop.f32.mrf.mxu0
        %v1966 = vadd.f32 0.0, %v1965
        %1967 = vmatmul.f32.gmra.mxu0 %v1940
        %v1968 = vpop.f32.mrf.mxu0
        %v1969 = vadd.f32 0.0, %v1968
        %1970 = vmatmul.f32.gmra.mxu0 %v1943
        %v1971 = vpop.f32.mrf.mxu0
        %v1972 = vadd.f32 0.0, %v1971
        %1973 = vdwg.mxu0
        %v1975 = vsel %vm330, %v1565, 0
        %v1978 = vsel %vm330, %v1580, 0
        %v1981 = vsel %vm330, %v1595, 0
        %v1984 = vsel %vm330, %v1610, 0
        %1986 = vmatpush.msra.mxu0 0.0
        %1987 = vmatpush.msra.mxu0 0.0
        %1988 = vmatpush.msra.mxu0 0.0
        %1989 = vmatpush.msra.mxu0 0.0
        %1990 = vmatpush.msra.mxu0 0.0
        %1991 = vmatpush.msra.mxu0 0.0
        %1992 = vmatpush.msra.mxu0 0.0
        %1993 = vmatpush.msra.mxu0 0.0
        %1994 = vmatpush.msra.mxu0 0.0
        %1995 = vmatpush.msra.mxu0 0.0
        %1996 = vmatpush.msra.mxu0 0.0
        %1997 = vmatpush.msra.mxu0 0.0
        %1998 = vmatpush.msra.mxu0 %v603
        %1999 = vmatpush.msra.mxu0 %v600
        %2000 = vmatpush.msra.mxu0 %v597
        %2001 = vmatpush.msra.mxu0 %v594
        %2002 = vmatmul.f32.gmra.mxu0 %v1975
        %v2003 = vpop.f32.mrf.mxu0
        %v2004 = vadd.f32 0.0, %v2003
        %2005 = vmatmul.f32.gmra.mxu0 %v1978
        %v2006 = vpop.f32.mrf.mxu0
        %v2007 = vadd.f32 0.0, %v2006
        %2008 = vmatmul.f32.gmra.mxu0 %v1981
        %v2009 = vpop.f32.mrf.mxu0
        %v2010 = vadd.f32 0.0, %v2009
        %2011 = vmatmul.f32.gmra.mxu0 %v1984
        %v2012 = vpop.f32.mrf.mxu0
        %v2013 = vadd.f32 0.0, %v2012
        %2014 = vdwg.mxu0
        %v2016 = vsel %vm330, %v1625, 0
        %v2019 = vsel %vm330, %v1640, 0
        %v2022 = vsel %vm330, %v1655, 0
        %v2025 = vsel %vm330, %v1670, 0
        %2027 = vmatpush.msra.mxu0 0.0
        %2028 = vmatpush.msra.mxu0 0.0
        %2029 = vmatpush.msra.mxu0 0.0
        %2030 = vmatpush.msra.mxu0 0.0
        %2031 = vmatpush.msra.mxu0 0.0
        %2032 = vmatpush.msra.mxu0 0.0
        %2033 = vmatpush.msra.mxu0 0.0
        %2034 = vmatpush.msra.mxu0 0.0
        %2035 = vmatpush.msra.mxu0 0.0
        %2036 = vmatpush.msra.mxu0 0.0
        %2037 = vmatpush.msra.mxu0 0.0
        %2038 = vmatpush.msra.mxu0 0.0
        %2039 = vmatpush.msra.mxu0 %v615
        %2040 = vmatpush.msra.mxu0 %v612
        %2041 = vmatpush.msra.mxu0 %v609
        %2042 = vmatpush.msra.mxu0 %v606
        %2043 = vmatmul.f32.gmra.mxu0 %v2016
        %v2044 = vpop.f32.mrf.mxu0
        %v2045 = vadd.f32 0.0, %v2044
        %2046 = vmatmul.f32.gmra.mxu0 %v2019
        %v2047 = vpop.f32.mrf.mxu0
        %v2048 = vadd.f32 0.0, %v2047
        %2049 = vmatmul.f32.gmra.mxu0 %v2022
        %v2050 = vpop.f32.mrf.mxu0
        %v2051 = vadd.f32 0.0, %v2050
        %2052 = vmatmul.f32.gmra.mxu0 %v2025
        %v2053 = vpop.f32.mrf.mxu0
        %v2054 = vadd.f32 0.0, %v2053
        %2055 = vdwg.mxu0
        %v2057 = vsel %vm330, %v1685, 0
        %v2060 = vsel %vm330, %v1700, 0
        %v2063 = vsel %vm330, %v1715, 0
        %v2066 = vsel %vm330, %v1730, 0
        %2068 = vmatpush.msra.mxu0 0.0
        %2069 = vmatpush.msra.mxu0 0.0
        %2070 = vmatpush.msra.mxu0 0.0
        %2071 = vmatpush.msra.mxu0 0.0
        %2072 = vmatpush.msra.mxu0 0.0
        %2073 = vmatpush.msra.mxu0 0.0
        %2074 = vmatpush.msra.mxu0 0.0
        %2075 = vmatpush.msra.mxu0 0.0
        %2076 = vmatpush.msra.mxu0 0.0
        %2077 = vmatpush.msra.mxu0 0.0
        %2078 = vmatpush.msra.mxu0 0.0
        %2079 = vmatpush.msra.mxu0 0.0
        %2080 = vmatpush.msra.mxu0 %v627
        %2081 = vmatpush.msra.mxu0 %v624
        %2082 = vmatpush.msra.mxu0 %v621
        %2083 = vmatpush.msra.mxu0 %v618
        %2084 = vmatmul.f32.gmra.mxu0 %v2057
        %v2085 = vpop.f32.mrf.mxu0
        %v2086 = vadd.f32 0.0, %v2085
        %2087 = vmatmul.f32.gmra.mxu0 %v2060
        %v2088 = vpop.f32.mrf.mxu0
        %v2089 = vadd.f32 0.0, %v2088
        %2090 = vmatmul.f32.gmra.mxu0 %v2063
        %v2091 = vpop.f32.mrf.mxu0
        %v2092 = vadd.f32 0.0, %v2091
        %2093 = vmatmul.f32.gmra.mxu0 %v2066
        %v2094 = vpop.f32.mrf.mxu0
        %v2095 = vadd.f32 0.0, %v2094
        %2096 = vdwg.mxu0
        %v2098 = vsel %vm330, %v1745, 0
        %v2101 = vsel %vm330, %v1760, 0
        %v2104 = vsel %vm330, %v1775, 0
        %v2107 = vsel %vm330, %v1790, 0
        %2109 = vmatpush.msra.mxu0 0.0
        %2110 = vmatpush.msra.mxu0 0.0
        %2111 = vmatpush.msra.mxu0 0.0
        %2112 = vmatpush.msra.mxu0 0.0
        %2113 = vmatpush.msra.mxu0 0.0
        %2114 = vmatpush.msra.mxu0 0.0
        %2115 = vmatpush.msra.mxu0 0.0
        %2116 = vmatpush.msra.mxu0 0.0
        %2117 = vmatpush.msra.mxu0 0.0
        %2118 = vmatpush.msra.mxu0 0.0
        %2119 = vmatpush.msra.mxu0 0.0
        %2120 = vmatpush.msra.mxu0 0.0
        %2121 = vmatpush.msra.mxu0 %v639
        %2122 = vmatpush.msra.mxu0 %v636
        %2123 = vmatpush.msra.mxu0 %v633
        %2124 = vmatpush.msra.mxu0 %v630
        %2125 = vmatmul.f32.gmra.mxu0 %v2098
        %v2126 = vpop.f32.mrf.mxu0
        %v2127 = vadd.f32 0.0, %v2126
        %2128 = vmatmul.f32.gmra.mxu0 %v2101
        %v2129 = vpop.f32.mrf.mxu0
        %v2130 = vadd.f32 0.0, %v2129
        %2131 = vmatmul.f32.gmra.mxu0 %v2104
        %v2132 = vpop.f32.mrf.mxu0
        %v2133 = vadd.f32 0.0, %v2132
        %2134 = vmatmul.f32.gmra.mxu0 %v2107
        %v2135 = vpop.f32.mrf.mxu0
        %v2136 = vadd.f32 0.0, %v2135
        %2137 = vdwg.mxu0
        %v2139 = vsel %vm330, %v1805, 0
        %v2142 = vsel %vm330, %v1820, 0
        %v2145 = vsel %vm330, %v1835, 0
        %v2148 = vsel %vm330, %v1850, 0
        %2150 = vmatpush.msra.mxu0 0.0
        %2151 = vmatpush.msra.mxu0 0.0
        %2152 = vmatpush.msra.mxu0 0.0
        %2153 = vmatpush.msra.mxu0 0.0
        %2154 = vmatpush.msra.mxu0 0.0
        %2155 = vmatpush.msra.mxu0 0.0
        %2156 = vmatpush.msra.mxu0 0.0
        %2157 = vmatpush.msra.mxu0 0.0
        %2158 = vmatpush.msra.mxu0 0.0
        %2159 = vmatpush.msra.mxu0 0.0
        %2160 = vmatpush.msra.mxu0 0.0
        %2161 = vmatpush.msra.mxu0 0.0
        %2162 = vmatpush.msra.mxu0 %v651
        %2163 = vmatpush.msra.mxu0 %v648
        %2164 = vmatpush.msra.mxu0 %v645
        %2165 = vmatpush.msra.mxu0 %v642
        %2166 = vmatmul.f32.gmra.mxu0 %v2139
        %v2167 = vpop.f32.mrf.mxu0
        %v2168 = vadd.f32 0.0, %v2167
        %2169 = vmatmul.f32.gmra.mxu0 %v2142
        %v2170 = vpop.f32.mrf.mxu0
        %v2171 = vadd.f32 0.0, %v2170
        %2172 = vmatmul.f32.gmra.mxu0 %v2145
        %v2173 = vpop.f32.mrf.mxu0
        %v2174 = vadd.f32 0.0, %v2173
        %2175 = vmatmul.f32.gmra.mxu0 %v2148
        %v2176 = vpop.f32.mrf.mxu0
        %v2177 = vadd.f32 0.0, %v2176
        %2178 = vdwg.mxu0
        %v2179 = vld [vmem:[%s3] sm:$0xff]
        %v2180 = vld [vmem:[%s3 + $0x8] sm:$0xff]
        %2181 = vrot.lane.b32.xlu0 %v445, 112
        %v2182 = vpop.permute.xlu0 %2181
        %2183 = vrot.lane.b32.xlu0 %v448, 112
        %v2184 = vpop.permute.xlu0 %2183
        %2185 = vrot.lane.b32.xlu0 %v451, 112
        %v2186 = vpop.permute.xlu0 %2185
        %2187 = vrot.lane.b32.xlu0 %v454, 112
        %v2188 = vpop.permute.xlu0 %2187
        %2189 = vrot.lane.b32.xlu0 %v445, 48
        %v2190 = vpop.permute.xlu0 %2189
        %2191 = vrot.lane.b32.xlu0 %v448, 48
        %v2192 = vpop.permute.xlu0 %2191
        %2193 = vrot.lane.b32.xlu0 %v451, 48
        %v2194 = vpop.permute.xlu0 %2193
        %2195 = vrot.lane.b32.xlu0 %v454, 48
        %v2196 = vpop.permute.xlu0 %2195
        %v2197 = vsel %vm670, %v2182, 0
        %v2199 = vsel %vm670, %v2184, 0
        %v2201 = vsel %vm670, %v2186, 0
        %v2203 = vsel %vm670, %v2188, 0
        %v2205 = vsel %vm670, %v2190, 0
        %v2207 = vsel %vm670, %v2192, 0
        %v2209 = vsel %vm670, %v2194, 0
        %v2211 = vsel %vm670, %v2196, 0
        %2213 = vmatpush.xpose.msra.mxu0 0.0
        %2214 = vmatpush.xpose.msra.mxu0 0.0
        %2215 = vmatpush.xpose.msra.mxu0 0.0
        %2216 = vmatpush.xpose.msra.mxu0 0.0
        %2217 = vmatpush.xpose.msra.mxu0 0.0
        %2218 = vmatpush.xpose.msra.mxu0 0.0
        %2219 = vmatpush.xpose.msra.mxu0 0.0
        %2220 = vmatpush.xpose.msra.mxu0 0.0
        %2221 = vmatpush.xpose.msra.mxu0 0.0
        %2222 = vmatpush.xpose.msra.mxu0 0.0
        %2223 = vmatpush.xpose.msra.mxu0 0.0
        %2224 = vmatpush.xpose.msra.mxu0 0.0
        %2225 = vmatpush.xpose.msra.mxu0 %v2211
        %2226 = vmatpush.xpose.msra.mxu0 %v2209
        %2227 = vmatpush.xpose.msra.mxu0 %v2207
        %2228 = vmatpush.xpose.msra.mxu0 %v2205
        %2229 = vmatmul.f32.gmra.mxu0 %v2197
        %v2230 = vpop.f32.mrf.mxu0
        %v2231 = vadd.f32 0.0, %v2230
        %2232 = vmatmul.f32.gmra.mxu0 %v2199
        %v2233 = vpop.f32.mrf.mxu0
        %v2234 = vadd.f32 0.0, %v2233
        %2235 = vmatmul.f32.gmra.mxu0 %v2201
        %v2236 = vpop.f32.mrf.mxu0
        %v2237 = vadd.f32 0.0, %v2236
        %2238 = vmatmul.f32.gmra.mxu0 %v2203
        %v2239 = vpop.f32.mrf.mxu0
        %v2240 = vadd.f32 0.0, %v2239
        %2241 = vdwg.mxu0
        %2242 = vrot.lane.b32.xlu0 %v457, 112
        %v2243 = vpop.permute.xlu0 %2242
        %2244 = vrot.lane.b32.xlu0 %v460, 112
        %v2245 = vpop.permute.xlu0 %2244
        %2246 = vrot.lane.b32.xlu0 %v463, 112
        %v2247 = vpop.permute.xlu0 %2246
        %2248 = vrot.lane.b32.xlu0 %v466, 112
        %v2249 = vpop.permute.xlu0 %2248
        %2250 = vrot.lane.b32.xlu0 %v457, 48
        %v2251 = vpop.permute.xlu0 %2250
        %2252 = vrot.lane.b32.xlu0 %v460, 48
        %v2253 = vpop.permute.xlu0 %2252
        %2254 = vrot.lane.b32.xlu0 %v463, 48
        %v2255 = vpop.permute.xlu0 %2254
        %2256 = vrot.lane.b32.xlu0 %v466, 48
        %v2257 = vpop.permute.xlu0 %2256
        %v2258 = vsel %vm670, %v2243, 0
        %v2260 = vsel %vm670, %v2245, 0
        %v2262 = vsel %vm670, %v2247, 0
        %v2264 = vsel %vm670, %v2249, 0
        %v2266 = vsel %vm670, %v2251, 0
        %v2268 = vsel %vm670, %v2253, 0
        %v2270 = vsel %vm670, %v2255, 0
        %v2272 = vsel %vm670, %v2257, 0
        %2274 = vmatpush.xpose.msra.mxu0 0.0
        %2275 = vmatpush.xpose.msra.mxu0 0.0
        %2276 = vmatpush.xpose.msra.mxu0 0.0
        %2277 = vmatpush.xpose.msra.mxu0 0.0
        %2278 = vmatpush.xpose.msra.mxu0 0.0
        %2279 = vmatpush.xpose.msra.mxu0 0.0
        %2280 = vmatpush.xpose.msra.mxu0 0.0
        %2281 = vmatpush.xpose.msra.mxu0 0.0
        %2282 = vmatpush.xpose.msra.mxu0 0.0
        %2283 = vmatpush.xpose.msra.mxu0 0.0
        %2284 = vmatpush.xpose.msra.mxu0 0.0
        %2285 = vmatpush.xpose.msra.mxu0 0.0
        %2286 = vmatpush.xpose.msra.mxu0 %v2272
        %2287 = vmatpush.xpose.msra.mxu0 %v2270
        %2288 = vmatpush.xpose.msra.mxu0 %v2268
        %2289 = vmatpush.xpose.msra.mxu0 %v2266
        %2290 = vmatmul.f32.gmra.mxu0 %v2258
        %v2291 = vpop.f32.mrf.mxu0
        %v2292 = vadd.f32 0.0, %v2291
        %2293 = vmatmul.f32.gmra.mxu0 %v2260
        %v2294 = vpop.f32.mrf.mxu0
        %v2295 = vadd.f32 0.0, %v2294
        %2296 = vmatmul.f32.gmra.mxu0 %v2262
        %v2297 = vpop.f32.mrf.mxu0
        %v2298 = vadd.f32 0.0, %v2297
        %2299 = vmatmul.f32.gmra.mxu0 %v2264
        %v2300 = vpop.f32.mrf.mxu0
        %v2301 = vadd.f32 0.0, %v2300
        %2302 = vdwg.mxu0
        %2303 = vrot.lane.b32.xlu0 %v469, 112
        %v2304 = vpop.permute.xlu0 %2303
        %2305 = vrot.lane.b32.xlu0 %v472, 112
        %v2306 = vpop.permute.xlu0 %2305
        %2307 = vrot.lane.b32.xlu0 %v475, 112
        %v2308 = vpop.permute.xlu0 %2307
        %2309 = vrot.lane.b32.xlu0 %v478, 112
        %v2310 = vpop.permute.xlu0 %2309
        %2311 = vrot.lane.b32.xlu0 %v469, 48
        %v2312 = vpop.permute.xlu0 %2311
        %2313 = vrot.lane.b32.xlu0 %v472, 48
        %v2314 = vpop.permute.xlu0 %2313
        %2315 = vrot.lane.b32.xlu0 %v475, 48
        %v2316 = vpop.permute.xlu0 %2315
        %2317 = vrot.lane.b32.xlu0 %v478, 48
        %v2318 = vpop.permute.xlu0 %2317
        %v2319 = vsel %vm670, %v2304, 0
        %v2321 = vsel %vm670, %v2306, 0
        %v2323 = vsel %vm670, %v2308, 0
        %v2325 = vsel %vm670, %v2310, 0
        %v2327 = vsel %vm670, %v2312, 0
        %v2329 = vsel %vm670, %v2314, 0
        %v2331 = vsel %vm670, %v2316, 0
        %v2333 = vsel %vm670, %v2318, 0
        %2335 = vmatpush.xpose.msra.mxu0 0.0
        %2336 = vmatpush.xpose.msra.mxu0 0.0
        %2337 = vmatpush.xpose.msra.mxu0 0.0
        %2338 = vmatpush.xpose.msra.mxu0 0.0
        %2339 = vmatpush.xpose.msra.mxu0 0.0
        %2340 = vmatpush.xpose.msra.mxu0 0.0
        %2341 = vmatpush.xpose.msra.mxu0 0.0
        %2342 = vmatpush.xpose.msra.mxu0 0.0
        %2343 = vmatpush.xpose.msra.mxu0 0.0
        %2344 = vmatpush.xpose.msra.mxu0 0.0
        %2345 = vmatpush.xpose.msra.mxu0 0.0
        %2346 = vmatpush.xpose.msra.mxu0 0.0
        %2347 = vmatpush.xpose.msra.mxu0 %v2333
        %2348 = vmatpush.xpose.msra.mxu0 %v2331
        %2349 = vmatpush.xpose.msra.mxu0 %v2329
        %2350 = vmatpush.xpose.msra.mxu0 %v2327
        %2351 = vmatmul.f32.gmra.mxu0 %v2319
        %v2352 = vpop.f32.mrf.mxu0
        %v2353 = vadd.f32 0.0, %v2352
        %2354 = vmatmul.f32.gmra.mxu0 %v2321
        %v2355 = vpop.f32.mrf.mxu0
        %v2356 = vadd.f32 0.0, %v2355
        %2357 = vmatmul.f32.gmra.mxu0 %v2323
        %v2358 = vpop.f32.mrf.mxu0
        %v2359 = vadd.f32 0.0, %v2358
        %2360 = vmatmul.f32.gmra.mxu0 %v2325
        %v2361 = vpop.f32.mrf.mxu0
        %v2362 = vadd.f32 0.0, %v2361
        %2363 = vdwg.mxu0
        %2364 = vrot.lane.b32.xlu0 %v481, 112
        %v2365 = vpop.permute.xlu0 %2364
        %2366 = vrot.lane.b32.xlu0 %v484, 112
        %v2367 = vpop.permute.xlu0 %2366
        %2368 = vrot.lane.b32.xlu0 %v487, 112
        %v2369 = vpop.permute.xlu0 %2368
        %2370 = vrot.lane.b32.xlu0 %v490, 112
        %v2371 = vpop.permute.xlu0 %2370
        %2372 = vrot.lane.b32.xlu0 %v481, 48
        %v2373 = vpop.permute.xlu0 %2372
        %2374 = vrot.lane.b32.xlu0 %v484, 48
        %v2375 = vpop.permute.xlu0 %2374
        %2376 = vrot.lane.b32.xlu0 %v487, 48
        %v2377 = vpop.permute.xlu0 %2376
        %2378 = vrot.lane.b32.xlu0 %v490, 48
        %v2379 = vpop.permute.xlu0 %2378
        %v2380 = vsel %vm670, %v2365, 0
        %v2382 = vsel %vm670, %v2367, 0
        %v2384 = vsel %vm670, %v2369, 0
        %v2386 = vsel %vm670, %v2371, 0
        %v2388 = vsel %vm670, %v2373, 0
        %v2390 = vsel %vm670, %v2375, 0
        %v2392 = vsel %vm670, %v2377, 0
        %v2394 = vsel %vm670, %v2379, 0
        %2396 = vmatpush.xpose.msra.mxu0 0.0
        %2397 = vmatpush.xpose.msra.mxu0 0.0
        %2398 = vmatpush.xpose.msra.mxu0 0.0
        %2399 = vmatpush.xpose.msra.mxu0 0.0
        %2400 = vmatpush.xpose.msra.mxu0 0.0
        %2401 = vmatpush.xpose.msra.mxu0 0.0
        %2402 = vmatpush.xpose.msra.mxu0 0.0
        %2403 = vmatpush.xpose.msra.mxu0 0.0
        %2404 = vmatpush.xpose.msra.mxu0 0.0
        %2405 = vmatpush.xpose.msra.mxu0 0.0
        %2406 = vmatpush.xpose.msra.mxu0 0.0
        %2407 = vmatpush.xpose.msra.mxu0 0.0
        %2408 = vmatpush.xpose.msra.mxu0 %v2394
        %2409 = vmatpush.xpose.msra.mxu0 %v2392
        %2410 = vmatpush.xpose.msra.mxu0 %v2390
        %2411 = vmatpush.xpose.msra.mxu0 %v2388
        %2412 = vmatmul.f32.gmra.mxu0 %v2380
        %v2413 = vpop.f32.mrf.mxu0
        %v2414 = vadd.f32 0.0, %v2413
        %2415 = vmatmul.f32.gmra.mxu0 %v2382
        %v2416 = vpop.f32.mrf.mxu0
        %v2417 = vadd.f32 0.0, %v2416
        %2418 = vmatmul.f32.gmra.mxu0 %v2384
        %v2419 = vpop.f32.mrf.mxu0
        %v2420 = vadd.f32 0.0, %v2419
        %2421 = vmatmul.f32.gmra.mxu0 %v2386
        %v2422 = vpop.f32.mrf.mxu0
        %v2423 = vadd.f32 0.0, %v2422
        %2424 = vdwg.mxu0
        %2425 = vrot.lane.b32.xlu0 %v493, 112
        %v2426 = vpop.permute.xlu0 %2425
        %2427 = vrot.lane.b32.xlu0 %v496, 112
        %v2428 = vpop.permute.xlu0 %2427
        %2429 = vrot.lane.b32.xlu0 %v499, 112
        %v2430 = vpop.permute.xlu0 %2429
        %2431 = vrot.lane.b32.xlu0 %v502, 112
        %v2432 = vpop.permute.xlu0 %2431
        %2433 = vrot.lane.b32.xlu0 %v493, 48
        %v2434 = vpop.permute.xlu0 %2433
        %2435 = vrot.lane.b32.xlu0 %v496, 48
        %v2436 = vpop.permute.xlu0 %2435
        %2437 = vrot.lane.b32.xlu0 %v499, 48
        %v2438 = vpop.permute.xlu0 %2437
        %2439 = vrot.lane.b32.xlu0 %v502, 48
        %v2440 = vpop.permute.xlu0 %2439
        %v2441 = vsel %vm670, %v2426, 0
        %v2443 = vsel %vm670, %v2428, 0
        %v2445 = vsel %vm670, %v2430, 0
        %v2447 = vsel %vm670, %v2432, 0
        %v2449 = vsel %vm670, %v2434, 0
        %v2451 = vsel %vm670, %v2436, 0
        %v2453 = vsel %vm670, %v2438, 0
        %v2455 = vsel %vm670, %v2440, 0
        %2457 = vmatpush.xpose.msra.mxu0 0.0
        %2458 = vmatpush.xpose.msra.mxu0 0.0
        %2459 = vmatpush.xpose.msra.mxu0 0.0
        %2460 = vmatpush.xpose.msra.mxu0 0.0
        %2461 = vmatpush.xpose.msra.mxu0 0.0
        %2462 = vmatpush.xpose.msra.mxu0 0.0
        %2463 = vmatpush.xpose.msra.mxu0 0.0
        %2464 = vmatpush.xpose.msra.mxu0 0.0
        %2465 = vmatpush.xpose.msra.mxu0 0.0
        %2466 = vmatpush.xpose.msra.mxu0 0.0
        %2467 = vmatpush.xpose.msra.mxu0 0.0
        %2468 = vmatpush.xpose.msra.mxu0 0.0
        %2469 = vmatpush.xpose.msra.mxu0 %v2455
        %2470 = vmatpush.xpose.msra.mxu0 %v2453
        %2471 = vmatpush.xpose.msra.mxu0 %v2451
        %2472 = vmatpush.xpose.msra.mxu0 %v2449
        %2473 = vmatmul.f32.gmra.mxu0 %v2441
        %v2474 = vpop.f32.mrf.mxu0
        %v2475 = vadd.f32 0.0, %v2474
        %2476 = vmatmul.f32.gmra.mxu0 %v2443
        %v2477 = vpop.f32.mrf.mxu0
        %v2478 = vadd.f32 0.0, %v2477
        %2479 = vmatmul.f32.gmra.mxu0 %v2445
        %v2480 = vpop.f32.mrf.mxu0
        %v2481 = vadd.f32 0.0, %v2480
        %2482 = vmatmul.f32.gmra.mxu0 %v2447
        %v2483 = vpop.f32.mrf.mxu0
        %v2484 = vadd.f32 0.0, %v2483
        %2485 = vdwg.mxu0
        %2486 = vrot.lane.b32.xlu0 %v505, 112
        %v2487 = vpop.permute.xlu0 %2486
        %2488 = vrot.lane.b32.xlu0 %v508, 112
        %v2489 = vpop.permute.xlu0 %2488
        %2490 = vrot.lane.b32.xlu0 %v511, 112
        %v2491 = vpop.permute.xlu0 %2490
        %2492 = vrot.lane.b32.xlu0 %v514, 112
        %v2493 = vpop.permute.xlu0 %2492
        %2494 = vrot.lane.b32.xlu0 %v505, 48
        %v2495 = vpop.permute.xlu0 %2494
        %2496 = vrot.lane.b32.xlu0 %v508, 48
        %v2497 = vpop.permute.xlu0 %2496
        %2498 = vrot.lane.b32.xlu0 %v511, 48
        %v2499 = vpop.permute.xlu0 %2498
        %2500 = vrot.lane.b32.xlu0 %v514, 48
        %v2501 = vpop.permute.xlu0 %2500
        %v2502 = vsel %vm670, %v2487, 0
        %v2504 = vsel %vm670, %v2489, 0
        %v2506 = vsel %vm670, %v2491, 0
        %v2508 = vsel %vm670, %v2493, 0
        %v2510 = vsel %vm670, %v2495, 0
        %v2512 = vsel %vm670, %v2497, 0
        %v2514 = vsel %vm670, %v2499, 0
        %v2516 = vsel %vm670, %v2501, 0
        %2518 = vmatpush.xpose.msra.mxu0 0.0
        %2519 = vmatpush.xpose.msra.mxu0 0.0
        %2520 = vmatpush.xpose.msra.mxu0 0.0
        %2521 = vmatpush.xpose.msra.mxu0 0.0
        %2522 = vmatpush.xpose.msra.mxu0 0.0
        %2523 = vmatpush.xpose.msra.mxu0 0.0
        %2524 = vmatpush.xpose.msra.mxu0 0.0
        %2525 = vmatpush.xpose.msra.mxu0 0.0
        %2526 = vmatpush.xpose.msra.mxu0 0.0
        %2527 = vmatpush.xpose.msra.mxu0 0.0
        %2528 = vmatpush.xpose.msra.mxu0 0.0
        %2529 = vmatpush.xpose.msra.mxu0 0.0
        %2530 = vmatpush.xpose.msra.mxu0 %v2516
        %2531 = vmatpush.xpose.msra.mxu0 %v2514
        %2532 = vmatpush.xpose.msra.mxu0 %v2512
        %2533 = vmatpush.xpose.msra.mxu0 %v2510
        %2534 = vmatmul.f32.gmra.mxu0 %v2502
        %v2535 = vpop.f32.mrf.mxu0
        %v2536 = vadd.f32 0.0, %v2535
        %2537 = vmatmul.f32.gmra.mxu0 %v2504
        %v2538 = vpop.f32.mrf.mxu0
        %v2539 = vadd.f32 0.0, %v2538
        %2540 = vmatmul.f32.gmra.mxu0 %v2506
        %v2541 = vpop.f32.mrf.mxu0
        %v2542 = vadd.f32 0.0, %v2541
        %2543 = vmatmul.f32.gmra.mxu0 %v2508
        %v2544 = vpop.f32.mrf.mxu0
        %v2545 = vadd.f32 0.0, %v2544
        %2546 = vdwg.mxu0
        %2547 = vrot.lane.b32.xlu0 %v517, 112
        %v2548 = vpop.permute.xlu0 %2547
        %2549 = vrot.lane.b32.xlu0 %v520, 112
        %v2550 = vpop.permute.xlu0 %2549
        %2551 = vrot.lane.b32.xlu0 %v523, 112
        %v2552 = vpop.permute.xlu0 %2551
        %2553 = vrot.lane.b32.xlu0 %v526, 112
        %v2554 = vpop.permute.xlu0 %2553
        %2555 = vrot.lane.b32.xlu0 %v517, 48
        %v2556 = vpop.permute.xlu0 %2555
        %2557 = vrot.lane.b32.xlu0 %v520, 48
        %v2558 = vpop.permute.xlu0 %2557
        %2559 = vrot.lane.b32.xlu0 %v523, 48
        %v2560 = vpop.permute.xlu0 %2559
        %2561 = vrot.lane.b32.xlu0 %v526, 48
        %v2562 = vpop.permute.xlu0 %2561
        %v2563 = vsel %vm670, %v2548, 0
        %v2565 = vsel %vm670, %v2550, 0
        %v2567 = vsel %vm670, %v2552, 0
        %v2569 = vsel %vm670, %v2554, 0
        %v2571 = vsel %vm670, %v2556, 0
        %v2573 = vsel %vm670, %v2558, 0
        %v2575 = vsel %vm670, %v2560, 0
        %v2577 = vsel %vm670, %v2562, 0
        %2579 = vmatpush.xpose.msra.mxu0 0.0
        %2580 = vmatpush.xpose.msra.mxu0 0.0
        %2581 = vmatpush.xpose.msra.mxu0 0.0
        %2582 = vmatpush.xpose.msra.mxu0 0.0
        %2583 = vmatpush.xpose.msra.mxu0 0.0
        %2584 = vmatpush.xpose.msra.mxu0 0.0
        %2585 = vmatpush.xpose.msra.mxu0 0.0
        %2586 = vmatpush.xpose.msra.mxu0 0.0
        %2587 = vmatpush.xpose.msra.mxu0 0.0
        %2588 = vmatpush.xpose.msra.mxu0 0.0
        %2589 = vmatpush.xpose.msra.mxu0 0.0
        %2590 = vmatpush.xpose.msra.mxu0 0.0
        %2591 = vmatpush.xpose.msra.mxu0 %v2577
        %2592 = vmatpush.xpose.msra.mxu0 %v2575
        %2593 = vmatpush.xpose.msra.mxu0 %v2573
        %2594 = vmatpush.xpose.msra.mxu0 %v2571
        %2595 = vmatmul.f32.gmra.mxu0 %v2563
        %v2596 = vpop.f32.mrf.mxu0
        %v2597 = vadd.f32 0.0, %v2596
        %2598 = vmatmul.f32.gmra.mxu0 %v2565
        %v2599 = vpop.f32.mrf.mxu0
        %v2600 = vadd.f32 0.0, %v2599
        %2601 = vmatmul.f32.gmra.mxu0 %v2567
        %v2602 = vpop.f32.mrf.mxu0
        %v2603 = vadd.f32 0.0, %v2602
        %2604 = vmatmul.f32.gmra.mxu0 %v2569
        %v2605 = vpop.f32.mrf.mxu0
        %v2606 = vadd.f32 0.0, %v2605
        %2607 = vdwg.mxu0
        %2608 = vrot.lane.b32.xlu0 %v529, 112
        %v2609 = vpop.permute.xlu0 %2608
        %2610 = vrot.lane.b32.xlu0 %v532, 112
        %v2611 = vpop.permute.xlu0 %2610
        %2612 = vrot.lane.b32.xlu0 %v535, 112
        %v2613 = vpop.permute.xlu0 %2612
        %2614 = vrot.lane.b32.xlu0 %v538, 112
        %v2615 = vpop.permute.xlu0 %2614
        %2616 = vrot.lane.b32.xlu0 %v529, 48
        %v2617 = vpop.permute.xlu0 %2616
        %2618 = vrot.lane.b32.xlu0 %v532, 48
        %v2619 = vpop.permute.xlu0 %2618
        %2620 = vrot.lane.b32.xlu0 %v535, 48
        %v2621 = vpop.permute.xlu0 %2620
        %2622 = vrot.lane.b32.xlu0 %v538, 48
        %v2623 = vpop.permute.xlu0 %2622
        %v2624 = vsel %vm670, %v2609, 0
        %v2626 = vsel %vm670, %v2611, 0
        %v2628 = vsel %vm670, %v2613, 0
        %v2630 = vsel %vm670, %v2615, 0
        %v2632 = vsel %vm670, %v2617, 0
        %v2634 = vsel %vm670, %v2619, 0
        %v2636 = vsel %vm670, %v2621, 0
        %v2638 = vsel %vm670, %v2623, 0
        %2640 = vmatpush.xpose.msra.mxu0 0.0
        %2641 = vmatpush.xpose.msra.mxu0 0.0
        %2642 = vmatpush.xpose.msra.mxu0 0.0
        %2643 = vmatpush.xpose.msra.mxu0 0.0
        %2644 = vmatpush.xpose.msra.mxu0 0.0
        %2645 = vmatpush.xpose.msra.mxu0 0.0
        %2646 = vmatpush.xpose.msra.mxu0 0.0
        %2647 = vmatpush.xpose.msra.mxu0 0.0
        %2648 = vmatpush.xpose.msra.mxu0 0.0
        %2649 = vmatpush.xpose.msra.mxu0 0.0
        %2650 = vmatpush.xpose.msra.mxu0 0.0
        %2651 = vmatpush.xpose.msra.mxu0 0.0
        %2652 = vmatpush.xpose.msra.mxu0 %v2638
        %2653 = vmatpush.xpose.msra.mxu0 %v2636
        %2654 = vmatpush.xpose.msra.mxu0 %v2634
        %2655 = vmatpush.xpose.msra.mxu0 %v2632
        %2656 = vmatmul.f32.gmra.mxu0 %v2624
        %v2657 = vpop.f32.mrf.mxu0
        %v2658 = vadd.f32 0.0, %v2657
        %2659 = vmatmul.f32.gmra.mxu0 %v2626
        %v2660 = vpop.f32.mrf.mxu0
        %v2661 = vadd.f32 0.0, %v2660
        %2662 = vmatmul.f32.gmra.mxu0 %v2628
        %v2663 = vpop.f32.mrf.mxu0
        %v2664 = vadd.f32 0.0, %v2663
        %2665 = vmatmul.f32.gmra.mxu0 %v2630
        %v2666 = vpop.f32.mrf.mxu0
        %v2667 = vadd.f32 0.0, %v2666
        %2668 = vdwg.mxu0
        %v2669 = vmul.f32 %v2231, 0.25
        %v2670 = vmul.f32 %v2234, 0.25
        %v2671 = vmul.f32 %v2237, 0.25
        %v2672 = vmul.f32 %v2240, 0.25
        %v2673 = vmul.f32 %v2292, 0.25
        %v2674 = vmul.f32 %v2295, 0.25
        %v2675 = vmul.f32 %v2298, 0.25
        %v2676 = vmul.f32 %v2301, 0.25
        %v2677 = vmul.f32 %v2353, 0.25
        %v2678 = vmul.f32 %v2356, 0.25
        %v2679 = vmul.f32 %v2359, 0.25
        %v2680 = vmul.f32 %v2362, 0.25
        %v2681 = vmul.f32 %v2414, 0.25
        %v2682 = vmul.f32 %v2417, 0.25
        %v2683 = vmul.f32 %v2420, 0.25
        %v2684 = vmul.f32 %v2423, 0.25
        %v2685 = vmul.f32 %v2475, 0.25
        %v2686 = vmul.f32 %v2478, 0.25
        %v2687 = vmul.f32 %v2481, 0.25
        %v2688 = vmul.f32 %v2484, 0.25
        %v2689 = vmul.f32 %v2536, 0.25
        %v2690 = vmul.f32 %v2539, 0.25
        %v2691 = vmul.f32 %v2542, 0.25
        %v2692 = vmul.f32 %v2545, 0.25
        %v2693 = vmul.f32 %v2597, 0.25
        %v2694 = vmul.f32 %v2600, 0.25
        %v2695 = vmul.f32 %v2603, 0.25
        %v2696 = vmul.f32 %v2606, 0.25
        %v2697 = vmul.f32 %v2658, 0.25
        %v2698 = vmul.f32 %v2661, 0.25
        %v2699 = vmul.f32 %v2664, 0.25
        %v2700 = vmul.f32 %v2667, 0.25
        %v2701 = vmul.f32 %v2669, 1.442695
        %v2702 = vpow.pop %v2701
        %v2703 = vmul.f32 %v2670, 1.442695
        %v2704 = vpow.pop %v2703
        %v2705 = vmul.f32 %v2671, 1.442695
        %v2706 = vpow.pop %v2705
        %v2707 = vmul.f32 %v2672, 1.442695
        %v2708 = vpow.pop %v2707
        %v2709 = vmul.f32 %v2673, 1.442695
        %v2710 = vpow.pop %v2709
        %v2711 = vmul.f32 %v2674, 1.442695
        %v2712 = vpow.pop %v2711
        %v2713 = vmul.f32 %v2675, 1.442695
        %v2714 = vpow.pop %v2713
        %v2715 = vmul.f32 %v2676, 1.442695
        %v2716 = vpow.pop %v2715
        %v2717 = vmul.f32 %v2677, 1.442695
        %v2718 = vpow.pop %v2717
        %v2719 = vmul.f32 %v2678, 1.442695
        %v2720 = vpow.pop %v2719
        %v2721 = vmul.f32 %v2679, 1.442695
        %v2722 = vpow.pop %v2721
        %v2723 = vmul.f32 %v2680, 1.442695
        %v2724 = vpow.pop %v2723
        %v2725 = vmul.f32 %v2681, 1.442695
        %v2726 = vpow.pop %v2725
        %v2727 = vmul.f32 %v2682, 1.442695
        %v2728 = vpow.pop %v2727
        %v2729 = vmul.f32 %v2683, 1.442695
        %v2730 = vpow.pop %v2729
        %v2731 = vmul.f32 %v2684, 1.442695
        %v2732 = vpow.pop %v2731
        %v2733 = vmul.f32 %v2685, 1.442695
        %v2734 = vpow.pop %v2733
        %v2735 = vmul.f32 %v2686, 1.442695
        %v2736 = vpow.pop %v2735
        %v2737 = vmul.f32 %v2687, 1.442695
        %v2738 = vpow.pop %v2737
        %v2739 = vmul.f32 %v2688, 1.442695
        %v2740 = vpow.pop %v2739
        %v2741 = vmul.f32 %v2689, 1.442695
        %v2742 = vpow.pop %v2741
        %v2743 = vmul.f32 %v2690, 1.442695
        %v2744 = vpow.pop %v2743
        %v2745 = vmul.f32 %v2691, 1.442695
        %v2746 = vpow.pop %v2745
        %v2747 = vmul.f32 %v2692, 1.442695
        %v2748 = vpow.pop %v2747
        %v2749 = vmul.f32 %v2693, 1.442695
        %v2750 = vpow.pop %v2749
        %v2751 = vmul.f32 %v2694, 1.442695
        %v2752 = vpow.pop %v2751
        %v2753 = vmul.f32 %v2695, 1.442695
        %v2754 = vpow.pop %v2753
        %v2755 = vmul.f32 %v2696, 1.442695
        %v2756 = vpow.pop %v2755
        %v2757 = vmul.f32 %v2697, 1.442695
        %v2758 = vpow.pop %v2757
        %v2759 = vmul.f32 %v2698, 1.442695
        %v2760 = vpow.pop %v2759
        %v2761 = vmul.f32 %v2699, 1.442695
        %v2762 = vpow.pop %v2761
        %v2763 = vmul.f32 %v2700, 1.442695
        %v2764 = vpow.pop %v2763
        %v2765 = vmul.f32 %v2702, %v657
        %v2766 = vmul.f32 %v2704, %v657
        %v2767 = vmul.f32 %v2706, %v657
        %v2768 = vmul.f32 %v2708, %v657
        %v2769 = vmul.f32 %v2710, %v657
        %v2770 = vmul.f32 %v2712, %v657
        %v2771 = vmul.f32 %v2714, %v657
        %v2772 = vmul.f32 %v2716, %v657
        %v2773 = vmul.f32 %v2718, %v657
        %v2774 = vmul.f32 %v2720, %v657
        %v2775 = vmul.f32 %v2722, %v657
        %v2776 = vmul.f32 %v2724, %v657
        %v2777 = vmul.f32 %v2726, %v657
        %v2778 = vmul.f32 %v2728, %v657
        %v2779 = vmul.f32 %v2730, %v657
        %v2780 = vmul.f32 %v2732, %v657
        %v2781 = vmul.f32 %v2734, %v657
        %v2782 = vmul.f32 %v2736, %v657
        %v2783 = vmul.f32 %v2738, %v657
        %v2784 = vmul.f32 %v2740, %v657
        %v2785 = vmul.f32 %v2742, %v657
        %v2786 = vmul.f32 %v2744, %v657
        %v2787 = vmul.f32 %v2746, %v657
        %v2788 = vmul.f32 %v2748, %v657
        %v2789 = vmul.f32 %v2750, %v657
        %v2790 = vmul.f32 %v2752, %v657
        %v2791 = vmul.f32 %v2754, %v657
        %v2792 = vmul.f32 %v2756, %v657
        %v2793 = vmul.f32 %v2758, %v657
        %v2794 = vmul.f32 %v2760, %v657
        %v2795 = vmul.f32 %v2762, %v657
        %v2796 = vmul.f32 %v2764, %v657
        %v2797 = vsel %vm330, %v2765, 0.0
        %2798 = vadd.xlane.f32.xlu0 %v2797
        %v2799 = vpop.xlane.xlu0 %2798
        %v2800 = vsel %vm330, %v2766, 0.0
        %2801 = vadd.xlane.f32.xlu0 %v2800
        %v2802 = vpop.xlane.xlu0 %2801
        %v2803 = vsel %vm330, %v2767, 0.0
        %2804 = vadd.xlane.f32.xlu0 %v2803
        %v2805 = vpop.xlane.xlu0 %2804
        %v2806 = vsel %vm330, %v2768, 0.0
        %2807 = vadd.xlane.f32.xlu0 %v2806
        %v2808 = vpop.xlane.xlu0 %2807
        %v2809 = vsel %vm330, %v2769, 0.0
        %2810 = vadd.xlane.f32.xlu0 %v2809
        %v2811 = vpop.xlane.xlu0 %2810
        %v2812 = vsel %vm330, %v2770, 0.0
        %2813 = vadd.xlane.f32.xlu0 %v2812
        %v2814 = vpop.xlane.xlu0 %2813
        %v2815 = vsel %vm330, %v2771, 0.0
        %2816 = vadd.xlane.f32.xlu0 %v2815
        %v2817 = vpop.xlane.xlu0 %2816
        %v2818 = vsel %vm330, %v2772, 0.0
        %2819 = vadd.xlane.f32.xlu0 %v2818
        %v2820 = vpop.xlane.xlu0 %2819
        %v2821 = vsel %vm330, %v2773, 0.0
        %2822 = vadd.xlane.f32.xlu0 %v2821
        %v2823 = vpop.xlane.xlu0 %2822
        %v2824 = vsel %vm330, %v2774, 0.0
        %2825 = vadd.xlane.f32.xlu0 %v2824
        %v2826 = vpop.xlane.xlu0 %2825
        %v2827 = vsel %vm330, %v2775, 0.0
        %2828 = vadd.xlane.f32.xlu0 %v2827
        %v2829 = vpop.xlane.xlu0 %2828
        %v2830 = vsel %vm330, %v2776, 0.0
        %2831 = vadd.xlane.f32.xlu0 %v2830
        %v2832 = vpop.xlane.xlu0 %2831
        %v2833 = vsel %vm330, %v2777, 0.0
        %2834 = vadd.xlane.f32.xlu0 %v2833
        %v2835 = vpop.xlane.xlu0 %2834
        %v2836 = vsel %vm330, %v2778, 0.0
        %2837 = vadd.xlane.f32.xlu0 %v2836
        %v2838 = vpop.xlane.xlu0 %2837
        %v2839 = vsel %vm330, %v2779, 0.0
        %2840 = vadd.xlane.f32.xlu0 %v2839
        %v2841 = vpop.xlane.xlu0 %2840
        %v2842 = vsel %vm330, %v2780, 0.0
        %2843 = vadd.xlane.f32.xlu0 %v2842
        %v2844 = vpop.xlane.xlu0 %2843
        %v2845 = vsel %vm330, %v2781, 0.0
        %2846 = vadd.xlane.f32.xlu0 %v2845
        %v2847 = vpop.xlane.xlu0 %2846
        %v2848 = vsel %vm330, %v2782, 0.0
        %2849 = vadd.xlane.f32.xlu0 %v2848
        %v2850 = vpop.xlane.xlu0 %2849
        %v2851 = vsel %vm330, %v2783, 0.0
        %2852 = vadd.xlane.f32.xlu0 %v2851
        %v2853 = vpop.xlane.xlu0 %2852
        %v2854 = vsel %vm330, %v2784, 0.0
        %2855 = vadd.xlane.f32.xlu0 %v2854
        %v2856 = vpop.xlane.xlu0 %2855
        %v2857 = vsel %vm330, %v2785, 0.0
        %2858 = vadd.xlane.f32.xlu0 %v2857
        %v2859 = vpop.xlane.xlu0 %2858
        %v2860 = vsel %vm330, %v2786, 0.0
        %2861 = vadd.xlane.f32.xlu0 %v2860
        %v2862 = vpop.xlane.xlu0 %2861
        %v2863 = vsel %vm330, %v2787, 0.0
        %2864 = vadd.xlane.f32.xlu0 %v2863
        %v2865 = vpop.xlane.xlu0 %2864
        %v2866 = vsel %vm330, %v2788, 0.0
        %2867 = vadd.xlane.f32.xlu0 %v2866
        %v2868 = vpop.xlane.xlu0 %2867
        %v2869 = vsel %vm330, %v2789, 0.0
        %2870 = vadd.xlane.f32.xlu0 %v2869
        %v2871 = vpop.xlane.xlu0 %2870
        %v2872 = vsel %vm330, %v2790, 0.0
        %2873 = vadd.xlane.f32.xlu0 %v2872
        %v2874 = vpop.xlane.xlu0 %2873
        %v2875 = vsel %vm330, %v2791, 0.0
        %2876 = vadd.xlane.f32.xlu0 %v2875
        %v2877 = vpop.xlane.xlu0 %2876
        %v2878 = vsel %vm330, %v2792, 0.0
        %2879 = vadd.xlane.f32.xlu0 %v2878
        %v2880 = vpop.xlane.xlu0 %2879
        %v2881 = vsel %vm330, %v2793, 0.0
        %2882 = vadd.xlane.f32.xlu0 %v2881
        %v2883 = vpop.xlane.xlu0 %2882
        %v2884 = vsel %vm330, %v2794, 0.0
        %2885 = vadd.xlane.f32.xlu0 %v2884
        %v2886 = vpop.xlane.xlu0 %2885
        %v2887 = vsel %vm330, %v2795, 0.0
        %2888 = vadd.xlane.f32.xlu0 %v2887
        %v2889 = vpop.xlane.xlu0 %2888
        %v2890 = vsel %vm330, %v2796, 0.0
        %2891 = vadd.xlane.f32.xlu0 %v2890
        %v2892 = vpop.xlane.xlu0 %2891
        %v2893 = vadd.f32 %v2799, 1e-08
        %v2894 = vadd.f32 %v2802, 1e-08
        %v2895 = vadd.f32 %v2805, 1e-08
        %v2896 = vadd.f32 %v2808, 1e-08
        %v2897 = vadd.f32 %v2811, 1e-08
        %v2898 = vadd.f32 %v2814, 1e-08
        %v2899 = vadd.f32 %v2817, 1e-08
        %v2900 = vadd.f32 %v2820, 1e-08
        %v2901 = vadd.f32 %v2823, 1e-08
        %v2902 = vadd.f32 %v2826, 1e-08
        %v2903 = vadd.f32 %v2829, 1e-08
        %v2904 = vadd.f32 %v2832, 1e-08
        %v2905 = vadd.f32 %v2835, 1e-08
        %v2906 = vadd.f32 %v2838, 1e-08
        %v2907 = vadd.f32 %v2841, 1e-08
        %v2908 = vadd.f32 %v2844, 1e-08
        %v2909 = vadd.f32 %v2847, 1e-08
        %v2910 = vadd.f32 %v2850, 1e-08
        %v2911 = vadd.f32 %v2853, 1e-08
        %v2912 = vadd.f32 %v2856, 1e-08
        %v2913 = vadd.f32 %v2859, 1e-08
        %v2914 = vadd.f32 %v2862, 1e-08
        %v2915 = vadd.f32 %v2865, 1e-08
        %v2916 = vadd.f32 %v2868, 1e-08
        %v2917 = vadd.f32 %v2871, 1e-08
        %v2918 = vadd.f32 %v2874, 1e-08
        %v2919 = vadd.f32 %v2877, 1e-08
        %v2920 = vadd.f32 %v2880, 1e-08
        %v2921 = vadd.f32 %v2883, 1e-08
        %v2922 = vadd.f32 %v2886, 1e-08
        %v2923 = vadd.f32 %v2889, 1e-08
        %v2924 = vadd.f32 %v2892, 1e-08
        %v2925 = vrcp.pop %v2893
        %v2926 = vmul.f32 %v2893, %v2925
        %v2927 = vsub.f32 1.0, %v2926
        %v2928 = vmul.f32 %v2925, %v2927
        %v2929 = vadd.f32 %v2925, %v2928
        %vm2930 = vweird.f32 %v2893
        %vm2931 = vweird.f32 %v2925
        %vm2932 = vmor %vm2930, %vm2931
        %v2933 = vsel %vm2932, %v2925, %v2929
        %v2934 = vand.u32 2147483647, %v2893
        %vm2935 = vcmp.eq.f32.partialorder %v2934, 8.507059e+37
        %v2936 = vand.u32 %v2893, 2147483648
        %v2937 = vor.u32 1.1754944e-38, %v2936
        %v2938 = vsel %vm2935, %v2937, %v2933
        %v2939 = vmul.f32 %v2765, %v2938
        %v2940 = vrcp.pop %v2894
        %v2941 = vmul.f32 %v2894, %v2940
        %v2942 = vsub.f32 1.0, %v2941
        %v2943 = vmul.f32 %v2940, %v2942
        %v2944 = vadd.f32 %v2940, %v2943
        %vm2945 = vweird.f32 %v2894
        %vm2946 = vweird.f32 %v2940
        %vm2947 = vmor %vm2945, %vm2946
        %v2948 = vsel %vm2947, %v2940, %v2944
        %v2949 = vand.u32 2147483647, %v2894
        %vm2950 = vcmp.eq.f32.partialorder %v2949, 8.507059e+37
        %v2951 = vand.u32 %v2894, 2147483648
        %v2952 = vor.u32 1.1754944e-38, %v2951
        %v2953 = vsel %vm2950, %v2952, %v2948
        %v2954 = vmul.f32 %v2766, %v2953
        %v2955 = vrcp.pop %v2895
        %v2956 = vmul.f32 %v2895, %v2955
        %v2957 = vsub.f32 1.0, %v2956
        %v2958 = vmul.f32 %v2955, %v2957
        %v2959 = vadd.f32 %v2955, %v2958
        %vm2960 = vweird.f32 %v2895
        %vm2961 = vweird.f32 %v2955
        %vm2962 = vmor %vm2960, %vm2961
        %v2963 = vsel %vm2962, %v2955, %v2959
        %v2964 = vand.u32 2147483647, %v2895
        %vm2965 = vcmp.eq.f32.partialorder %v2964, 8.507059e+37
        %v2966 = vand.u32 %v2895, 2147483648
        %v2967 = vor.u32 1.1754944e-38, %v2966
        %v2968 = vsel %vm2965, %v2967, %v2963
        %v2969 = vmul.f32 %v2767, %v2968
        %v2970 = vrcp.pop %v2896
        %v2971 = vmul.f32 %v2896, %v2970
        %v2972 = vsub.f32 1.0, %v2971
        %v2973 = vmul.f32 %v2970, %v2972
        %v2974 = vadd.f32 %v2970, %v2973
        %vm2975 = vweird.f32 %v2896
        %vm2976 = vweird.f32 %v2970
        %vm2977 = vmor %vm2975, %vm2976
        %v2978 = vsel %vm2977, %v2970, %v2974
        %v2979 = vand.u32 2147483647, %v2896
        %vm2980 = vcmp.eq.f32.partialorder %v2979, 8.507059e+37
        %v2981 = vand.u32 %v2896, 2147483648
        %v2982 = vor.u32 1.1754944e-38, %v2981
        %v2983 = vsel %vm2980, %v2982, %v2978
        %v2984 = vmul.f32 %v2768, %v2983
        %v2985 = vrcp.pop %v2897
        %v2986 = vmul.f32 %v2897, %v2985
        %v2987 = vsub.f32 1.0, %v2986
        %v2988 = vmul.f32 %v2985, %v2987
        %v2989 = vadd.f32 %v2985, %v2988
        %vm2990 = vweird.f32 %v2897
        %vm2991 = vweird.f32 %v2985
        %vm2992 = vmor %vm2990, %vm2991
        %v2993 = vsel %vm2992, %v2985, %v2989
        %v2994 = vand.u32 2147483647, %v2897
        %vm2995 = vcmp.eq.f32.partialorder %v2994, 8.507059e+37
        %v2996 = vand.u32 %v2897, 2147483648
        %v2997 = vor.u32 1.1754944e-38, %v2996
        %v2998 = vsel %vm2995, %v2997, %v2993
        %v2999 = vmul.f32 %v2769, %v2998
        %v3000 = vrcp.pop %v2898
        %v3001 = vmul.f32 %v2898, %v3000
        %v3002 = vsub.f32 1.0, %v3001
        %v3003 = vmul.f32 %v3000, %v3002
        %v3004 = vadd.f32 %v3000, %v3003
        %vm3005 = vweird.f32 %v2898
        %vm3006 = vweird.f32 %v3000
        %vm3007 = vmor %vm3005, %vm3006
        %v3008 = vsel %vm3007, %v3000, %v3004
        %v3009 = vand.u32 2147483647, %v2898
        %vm3010 = vcmp.eq.f32.partialorder %v3009, 8.507059e+37
        %v3011 = vand.u32 %v2898, 2147483648
        %v3012 = vor.u32 1.1754944e-38, %v3011
        %v3013 = vsel %vm3010, %v3012, %v3008
        %v3014 = vmul.f32 %v2770, %v3013
        %v3015 = vrcp.pop %v2899
        %v3016 = vmul.f32 %v2899, %v3015
        %v3017 = vsub.f32 1.0, %v3016
        %v3018 = vmul.f32 %v3015, %v3017
        %v3019 = vadd.f32 %v3015, %v3018
        %vm3020 = vweird.f32 %v2899
        %vm3021 = vweird.f32 %v3015
        %vm3022 = vmor %vm3020, %vm3021
        %v3023 = vsel %vm3022, %v3015, %v3019
        %v3024 = vand.u32 2147483647, %v2899
        %vm3025 = vcmp.eq.f32.partialorder %v3024, 8.507059e+37
        %v3026 = vand.u32 %v2899, 2147483648
        %v3027 = vor.u32 1.1754944e-38, %v3026
        %v3028 = vsel %vm3025, %v3027, %v3023
        %v3029 = vmul.f32 %v2771, %v3028
        %v3030 = vrcp.pop %v2900
        %v3031 = vmul.f32 %v2900, %v3030
        %v3032 = vsub.f32 1.0, %v3031
        %v3033 = vmul.f32 %v3030, %v3032
        %v3034 = vadd.f32 %v3030, %v3033
        %vm3035 = vweird.f32 %v2900
        %vm3036 = vweird.f32 %v3030
        %vm3037 = vmor %vm3035, %vm3036
        %v3038 = vsel %vm3037, %v3030, %v3034
        %v3039 = vand.u32 2147483647, %v2900
        %vm3040 = vcmp.eq.f32.partialorder %v3039, 8.507059e+37
        %v3041 = vand.u32 %v2900, 2147483648
        %v3042 = vor.u32 1.1754944e-38, %v3041
        %v3043 = vsel %vm3040, %v3042, %v3038
        %v3044 = vmul.f32 %v2772, %v3043
        %v3045 = vrcp.pop %v2901
        %v3046 = vmul.f32 %v2901, %v3045
        %v3047 = vsub.f32 1.0, %v3046
        %v3048 = vmul.f32 %v3045, %v3047
        %v3049 = vadd.f32 %v3045, %v3048
        %vm3050 = vweird.f32 %v2901
        %vm3051 = vweird.f32 %v3045
        %vm3052 = vmor %vm3050, %vm3051
        %v3053 = vsel %vm3052, %v3045, %v3049
        %v3054 = vand.u32 2147483647, %v2901
        %vm3055 = vcmp.eq.f32.partialorder %v3054, 8.507059e+37
        %v3056 = vand.u32 %v2901, 2147483648
        %v3057 = vor.u32 1.1754944e-38, %v3056
        %v3058 = vsel %vm3055, %v3057, %v3053
        %v3059 = vmul.f32 %v2773, %v3058
        %v3060 = vrcp.pop %v2902
        %v3061 = vmul.f32 %v2902, %v3060
        %v3062 = vsub.f32 1.0, %v3061
        %v3063 = vmul.f32 %v3060, %v3062
        %v3064 = vadd.f32 %v3060, %v3063
        %vm3065 = vweird.f32 %v2902
        %vm3066 = vweird.f32 %v3060
        %vm3067 = vmor %vm3065, %vm3066
        %v3068 = vsel %vm3067, %v3060, %v3064
        %v3069 = vand.u32 2147483647, %v2902
        %vm3070 = vcmp.eq.f32.partialorder %v3069, 8.507059e+37
        %v3071 = vand.u32 %v2902, 2147483648
        %v3072 = vor.u32 1.1754944e-38, %v3071
        %v3073 = vsel %vm3070, %v3072, %v3068
        %v3074 = vmul.f32 %v2774, %v3073
        %v3075 = vrcp.pop %v2903
        %v3076 = vmul.f32 %v2903, %v3075
        %v3077 = vsub.f32 1.0, %v3076
        %v3078 = vmul.f32 %v3075, %v3077
        %v3079 = vadd.f32 %v3075, %v3078
        %vm3080 = vweird.f32 %v2903
        %vm3081 = vweird.f32 %v3075
        %vm3082 = vmor %vm3080, %vm3081
        %v3083 = vsel %vm3082, %v3075, %v3079
        %v3084 = vand.u32 2147483647, %v2903
        %vm3085 = vcmp.eq.f32.partialorder %v3084, 8.507059e+37
        %v3086 = vand.u32 %v2903, 2147483648
        %v3087 = vor.u32 1.1754944e-38, %v3086
        %v3088 = vsel %vm3085, %v3087, %v3083
        %v3089 = vmul.f32 %v2775, %v3088
        %v3090 = vrcp.pop %v2904
        %v3091 = vmul.f32 %v2904, %v3090
        %v3092 = vsub.f32 1.0, %v3091
        %v3093 = vmul.f32 %v3090, %v3092
        %v3094 = vadd.f32 %v3090, %v3093
        %vm3095 = vweird.f32 %v2904
        %vm3096 = vweird.f32 %v3090
        %vm3097 = vmor %vm3095, %vm3096
        %v3098 = vsel %vm3097, %v3090, %v3094
        %v3099 = vand.u32 2147483647, %v2904
        %vm3100 = vcmp.eq.f32.partialorder %v3099, 8.507059e+37
        %v3101 = vand.u32 %v2904, 2147483648
        %v3102 = vor.u32 1.1754944e-38, %v3101
        %v3103 = vsel %vm3100, %v3102, %v3098
        %v3104 = vmul.f32 %v2776, %v3103
        %v3105 = vrcp.pop %v2905
        %v3106 = vmul.f32 %v2905, %v3105
        %v3107 = vsub.f32 1.0, %v3106
        %v3108 = vmul.f32 %v3105, %v3107
        %v3109 = vadd.f32 %v3105, %v3108
        %vm3110 = vweird.f32 %v2905
        %vm3111 = vweird.f32 %v3105
        %vm3112 = vmor %vm3110, %vm3111
        %v3113 = vsel %vm3112, %v3105, %v3109
        %v3114 = vand.u32 2147483647, %v2905
        %vm3115 = vcmp.eq.f32.partialorder %v3114, 8.507059e+37
        %v3116 = vand.u32 %v2905, 2147483648
        %v3117 = vor.u32 1.1754944e-38, %v3116
        %v3118 = vsel %vm3115, %v3117, %v3113
        %v3119 = vmul.f32 %v2777, %v3118
        %v3120 = vrcp.pop %v2906
        %v3121 = vmul.f32 %v2906, %v3120
        %v3122 = vsub.f32 1.0, %v3121
        %v3123 = vmul.f32 %v3120, %v3122
        %v3124 = vadd.f32 %v3120, %v3123
        %vm3125 = vweird.f32 %v2906
        %vm3126 = vweird.f32 %v3120
        %vm3127 = vmor %vm3125, %vm3126
        %v3128 = vsel %vm3127, %v3120, %v3124
        %v3129 = vand.u32 2147483647, %v2906
        %vm3130 = vcmp.eq.f32.partialorder %v3129, 8.507059e+37
        %v3131 = vand.u32 %v2906, 2147483648
        %v3132 = vor.u32 1.1754944e-38, %v3131
        %v3133 = vsel %vm3130, %v3132, %v3128
        %v3134 = vmul.f32 %v2778, %v3133
        %v3135 = vrcp.pop %v2907
        %v3136 = vmul.f32 %v2907, %v3135
        %v3137 = vsub.f32 1.0, %v3136
        %v3138 = vmul.f32 %v3135, %v3137
        %v3139 = vadd.f32 %v3135, %v3138
        %vm3140 = vweird.f32 %v2907
        %vm3141 = vweird.f32 %v3135
        %vm3142 = vmor %vm3140, %vm3141
        %v3143 = vsel %vm3142, %v3135, %v3139
        %v3144 = vand.u32 2147483647, %v2907
        %vm3145 = vcmp.eq.f32.partialorder %v3144, 8.507059e+37
        %v3146 = vand.u32 %v2907, 2147483648
        %v3147 = vor.u32 1.1754944e-38, %v3146
        %v3148 = vsel %vm3145, %v3147, %v3143
        %v3149 = vmul.f32 %v2779, %v3148
        %v3150 = vrcp.pop %v2908
        %v3151 = vmul.f32 %v2908, %v3150
        %v3152 = vsub.f32 1.0, %v3151
        %v3153 = vmul.f32 %v3150, %v3152
        %v3154 = vadd.f32 %v3150, %v3153
        %vm3155 = vweird.f32 %v2908
        %vm3156 = vweird.f32 %v3150
        %vm3157 = vmor %vm3155, %vm3156
        %v3158 = vsel %vm3157, %v3150, %v3154
        %v3159 = vand.u32 2147483647, %v2908
        %vm3160 = vcmp.eq.f32.partialorder %v3159, 8.507059e+37
        %v3161 = vand.u32 %v2908, 2147483648
        %v3162 = vor.u32 1.1754944e-38, %v3161
        %v3163 = vsel %vm3160, %v3162, %v3158
        %v3164 = vmul.f32 %v2780, %v3163
        %v3165 = vrcp.pop %v2909
        %v3166 = vmul.f32 %v2909, %v3165
        %v3167 = vsub.f32 1.0, %v3166
        %v3168 = vmul.f32 %v3165, %v3167
        %v3169 = vadd.f32 %v3165, %v3168
        %vm3170 = vweird.f32 %v2909
        %vm3171 = vweird.f32 %v3165
        %vm3172 = vmor %vm3170, %vm3171
        %v3173 = vsel %vm3172, %v3165, %v3169
        %v3174 = vand.u32 2147483647, %v2909
        %vm3175 = vcmp.eq.f32.partialorder %v3174, 8.507059e+37
        %v3176 = vand.u32 %v2909, 2147483648
        %v3177 = vor.u32 1.1754944e-38, %v3176
        %v3178 = vsel %vm3175, %v3177, %v3173
        %v3179 = vmul.f32 %v2781, %v3178
        %v3180 = vrcp.pop %v2910
        %v3181 = vmul.f32 %v2910, %v3180
        %v3182 = vsub.f32 1.0, %v3181
        %v3183 = vmul.f32 %v3180, %v3182
        %v3184 = vadd.f32 %v3180, %v3183
        %vm3185 = vweird.f32 %v2910
        %vm3186 = vweird.f32 %v3180
        %vm3187 = vmor %vm3185, %vm3186
        %v3188 = vsel %vm3187, %v3180, %v3184
        %v3189 = vand.u32 2147483647, %v2910
        %vm3190 = vcmp.eq.f32.partialorder %v3189, 8.507059e+37
        %v3191 = vand.u32 %v2910, 2147483648
        %v3192 = vor.u32 1.1754944e-38, %v3191
        %v3193 = vsel %vm3190, %v3192, %v3188
        %v3194 = vmul.f32 %v2782, %v3193
        %v3195 = vrcp.pop %v2911
        %v3196 = vmul.f32 %v2911, %v3195
        %v3197 = vsub.f32 1.0, %v3196
        %v3198 = vmul.f32 %v3195, %v3197
        %v3199 = vadd.f32 %v3195, %v3198
        %vm3200 = vweird.f32 %v2911
        %vm3201 = vweird.f32 %v3195
        %vm3202 = vmor %vm3200, %vm3201
        %v3203 = vsel %vm3202, %v3195, %v3199
        %v3204 = vand.u32 2147483647, %v2911
        %vm3205 = vcmp.eq.f32.partialorder %v3204, 8.507059e+37
        %v3206 = vand.u32 %v2911, 2147483648
        %v3207 = vor.u32 1.1754944e-38, %v3206
        %v3208 = vsel %vm3205, %v3207, %v3203
        %v3209 = vmul.f32 %v2783, %v3208
        %v3210 = vrcp.pop %v2912
        %v3211 = vmul.f32 %v2912, %v3210
        %v3212 = vsub.f32 1.0, %v3211
        %v3213 = vmul.f32 %v3210, %v3212
        %v3214 = vadd.f32 %v3210, %v3213
        %vm3215 = vweird.f32 %v2912
        %vm3216 = vweird.f32 %v3210
        %vm3217 = vmor %vm3215, %vm3216
        %v3218 = vsel %vm3217, %v3210, %v3214
        %v3219 = vand.u32 2147483647, %v2912
        %vm3220 = vcmp.eq.f32.partialorder %v3219, 8.507059e+37
        %v3221 = vand.u32 %v2912, 2147483648
        %v3222 = vor.u32 1.1754944e-38, %v3221
        %v3223 = vsel %vm3220, %v3222, %v3218
        %v3224 = vmul.f32 %v2784, %v3223
        %v3225 = vrcp.pop %v2913
        %v3226 = vmul.f32 %v2913, %v3225
        %v3227 = vsub.f32 1.0, %v3226
        %v3228 = vmul.f32 %v3225, %v3227
        %v3229 = vadd.f32 %v3225, %v3228
        %vm3230 = vweird.f32 %v2913
        %vm3231 = vweird.f32 %v3225
        %vm3232 = vmor %vm3230, %vm3231
        %v3233 = vsel %vm3232, %v3225, %v3229
        %v3234 = vand.u32 2147483647, %v2913
        %vm3235 = vcmp.eq.f32.partialorder %v3234, 8.507059e+37
        %v3236 = vand.u32 %v2913, 2147483648
        %v3237 = vor.u32 1.1754944e-38, %v3236
        %v3238 = vsel %vm3235, %v3237, %v3233
        %v3239 = vmul.f32 %v2785, %v3238
        %v3240 = vrcp.pop %v2914
        %v3241 = vmul.f32 %v2914, %v3240
        %v3242 = vsub.f32 1.0, %v3241
        %v3243 = vmul.f32 %v3240, %v3242
        %v3244 = vadd.f32 %v3240, %v3243
        %vm3245 = vweird.f32 %v2914
        %vm3246 = vweird.f32 %v3240
        %vm3247 = vmor %vm3245, %vm3246
        %v3248 = vsel %vm3247, %v3240, %v3244
        %v3249 = vand.u32 2147483647, %v2914
        %vm3250 = vcmp.eq.f32.partialorder %v3249, 8.507059e+37
        %v3251 = vand.u32 %v2914, 2147483648
        %v3252 = vor.u32 1.1754944e-38, %v3251
        %v3253 = vsel %vm3250, %v3252, %v3248
        %v3254 = vmul.f32 %v2786, %v3253
        %v3255 = vrcp.pop %v2915
        %v3256 = vmul.f32 %v2915, %v3255
        %v3257 = vsub.f32 1.0, %v3256
        %v3258 = vmul.f32 %v3255, %v3257
        %v3259 = vadd.f32 %v3255, %v3258
        %vm3260 = vweird.f32 %v2915
        %vm3261 = vweird.f32 %v3255
        %vm3262 = vmor %vm3260, %vm3261
        %v3263 = vsel %vm3262, %v3255, %v3259
        %v3264 = vand.u32 2147483647, %v2915
        %vm3265 = vcmp.eq.f32.partialorder %v3264, 8.507059e+37
        %v3266 = vand.u32 %v2915, 2147483648
        %v3267 = vor.u32 1.1754944e-38, %v3266
        %v3268 = vsel %vm3265, %v3267, %v3263
        %v3269 = vmul.f32 %v2787, %v3268
        %v3270 = vrcp.pop %v2916
        %v3271 = vmul.f32 %v2916, %v3270
        %v3272 = vsub.f32 1.0, %v3271
        %v3273 = vmul.f32 %v3270, %v3272
        %v3274 = vadd.f32 %v3270, %v3273
        %vm3275 = vweird.f32 %v2916
        %vm3276 = vweird.f32 %v3270
        %vm3277 = vmor %vm3275, %vm3276
        %v3278 = vsel %vm3277, %v3270, %v3274
        %v3279 = vand.u32 2147483647, %v2916
        %vm3280 = vcmp.eq.f32.partialorder %v3279, 8.507059e+37
        %v3281 = vand.u32 %v2916, 2147483648
        %v3282 = vor.u32 1.1754944e-38, %v3281
        %v3283 = vsel %vm3280, %v3282, %v3278
        %v3284 = vmul.f32 %v2788, %v3283
        %v3285 = vrcp.pop %v2917
        %v3286 = vmul.f32 %v2917, %v3285
        %v3287 = vsub.f32 1.0, %v3286
        %v3288 = vmul.f32 %v3285, %v3287
        %v3289 = vadd.f32 %v3285, %v3288
        %vm3290 = vweird.f32 %v2917
        %vm3291 = vweird.f32 %v3285
        %vm3292 = vmor %vm3290, %vm3291
        %v3293 = vsel %vm3292, %v3285, %v3289
        %v3294 = vand.u32 2147483647, %v2917
        %vm3295 = vcmp.eq.f32.partialorder %v3294, 8.507059e+37
        %v3296 = vand.u32 %v2917, 2147483648
        %v3297 = vor.u32 1.1754944e-38, %v3296
        %v3298 = vsel %vm3295, %v3297, %v3293
        %v3299 = vmul.f32 %v2789, %v3298
        %v3300 = vrcp.pop %v2918
        %v3301 = vmul.f32 %v2918, %v3300
        %v3302 = vsub.f32 1.0, %v3301
        %v3303 = vmul.f32 %v3300, %v3302
        %v3304 = vadd.f32 %v3300, %v3303
        %vm3305 = vweird.f32 %v2918
        %vm3306 = vweird.f32 %v3300
        %vm3307 = vmor %vm3305, %vm3306
        %v3308 = vsel %vm3307, %v3300, %v3304
        %v3309 = vand.u32 2147483647, %v2918
        %vm3310 = vcmp.eq.f32.partialorder %v3309, 8.507059e+37
        %v3311 = vand.u32 %v2918, 2147483648
        %v3312 = vor.u32 1.1754944e-38, %v3311
        %v3313 = vsel %vm3310, %v3312, %v3308
        %v3314 = vmul.f32 %v2790, %v3313
        %v3315 = vrcp.pop %v2919
        %v3316 = vmul.f32 %v2919, %v3315
        %v3317 = vsub.f32 1.0, %v3316
        %v3318 = vmul.f32 %v3315, %v3317
        %v3319 = vadd.f32 %v3315, %v3318
        %vm3320 = vweird.f32 %v2919
        %vm3321 = vweird.f32 %v3315
        %vm3322 = vmor %vm3320, %vm3321
        %v3323 = vsel %vm3322, %v3315, %v3319
        %v3324 = vand.u32 2147483647, %v2919
        %vm3325 = vcmp.eq.f32.partialorder %v3324, 8.507059e+37
        %v3326 = vand.u32 %v2919, 2147483648
        %v3327 = vor.u32 1.1754944e-38, %v3326
        %v3328 = vsel %vm3325, %v3327, %v3323
        %v3329 = vmul.f32 %v2791, %v3328
        %v3330 = vrcp.pop %v2920
        %v3331 = vmul.f32 %v2920, %v3330
        %v3332 = vsub.f32 1.0, %v3331
        %v3333 = vmul.f32 %v3330, %v3332
        %v3334 = vadd.f32 %v3330, %v3333
        %vm3335 = vweird.f32 %v2920
        %vm3336 = vweird.f32 %v3330
        %vm3337 = vmor %vm3335, %vm3336
        %v3338 = vsel %vm3337, %v3330, %v3334
        %v3339 = vand.u32 2147483647, %v2920
        %vm3340 = vcmp.eq.f32.partialorder %v3339, 8.507059e+37
        %v3341 = vand.u32 %v2920, 2147483648
        %v3342 = vor.u32 1.1754944e-38, %v3341
        %v3343 = vsel %vm3340, %v3342, %v3338
        %v3344 = vmul.f32 %v2792, %v3343
        %v3345 = vrcp.pop %v2921
        %v3346 = vmul.f32 %v2921, %v3345
        %v3347 = vsub.f32 1.0, %v3346
        %v3348 = vmul.f32 %v3345, %v3347
        %v3349 = vadd.f32 %v3345, %v3348
        %vm3350 = vweird.f32 %v2921
        %vm3351 = vweird.f32 %v3345
        %vm3352 = vmor %vm3350, %vm3351
        %v3353 = vsel %vm3352, %v3345, %v3349
        %v3354 = vand.u32 2147483647, %v2921
        %vm3355 = vcmp.eq.f32.partialorder %v3354, 8.507059e+37
        %v3356 = vand.u32 %v2921, 2147483648
        %v3357 = vor.u32 1.1754944e-38, %v3356
        %v3358 = vsel %vm3355, %v3357, %v3353
        %v3359 = vmul.f32 %v2793, %v3358
        %v3360 = vrcp.pop %v2922
        %v3361 = vmul.f32 %v2922, %v3360
        %v3362 = vsub.f32 1.0, %v3361
        %v3363 = vmul.f32 %v3360, %v3362
        %v3364 = vadd.f32 %v3360, %v3363
        %vm3365 = vweird.f32 %v2922
        %vm3366 = vweird.f32 %v3360
        %vm3367 = vmor %vm3365, %vm3366
        %v3368 = vsel %vm3367, %v3360, %v3364
        %v3369 = vand.u32 2147483647, %v2922
        %vm3370 = vcmp.eq.f32.partialorder %v3369, 8.507059e+37
        %v3371 = vand.u32 %v2922, 2147483648
        %v3372 = vor.u32 1.1754944e-38, %v3371
        %v3373 = vsel %vm3370, %v3372, %v3368
        %v3374 = vmul.f32 %v2794, %v3373
        %v3375 = vrcp.pop %v2923
        %v3376 = vmul.f32 %v2923, %v3375
        %v3377 = vsub.f32 1.0, %v3376
        %v3378 = vmul.f32 %v3375, %v3377
        %v3379 = vadd.f32 %v3375, %v3378
        %vm3380 = vweird.f32 %v2923
        %vm3381 = vweird.f32 %v3375
        %vm3382 = vmor %vm3380, %vm3381
        %v3383 = vsel %vm3382, %v3375, %v3379
        %v3384 = vand.u32 2147483647, %v2923
        %vm3385 = vcmp.eq.f32.partialorder %v3384, 8.507059e+37
        %v3386 = vand.u32 %v2923, 2147483648
        %v3387 = vor.u32 1.1754944e-38, %v3386
        %v3388 = vsel %vm3385, %v3387, %v3383
        %v3389 = vmul.f32 %v2795, %v3388
        %v3390 = vrcp.pop %v2924
        %v3391 = vmul.f32 %v2924, %v3390
        %v3392 = vsub.f32 1.0, %v3391
        %v3393 = vmul.f32 %v3390, %v3392
        %v3394 = vadd.f32 %v3390, %v3393
        %vm3395 = vweird.f32 %v2924
        %vm3396 = vweird.f32 %v3390
        %vm3397 = vmor %vm3395, %vm3396
        %v3398 = vsel %vm3397, %v3390, %v3394
        %v3399 = vand.u32 2147483647, %v2924
        %vm3400 = vcmp.eq.f32.partialorder %v3399, 8.507059e+37
        %v3401 = vand.u32 %v2924, 2147483648
        %v3402 = vor.u32 1.1754944e-38, %v3401
        %v3403 = vsel %vm3400, %v3402, %v3398
        %v3404 = vmul.f32 %v2796, %v3403
        %3409 = vrot.lane.b32.xlu0 %v558, 112
        %v3410 = vpop.permute.xlu0 %3409
        %3411 = vrot.lane.b32.xlu0 %v561, 112
        %v3412 = vpop.permute.xlu0 %3411
        %3413 = vrot.lane.b32.xlu0 %v564, 112
        %v3414 = vpop.permute.xlu0 %3413
        %3415 = vrot.lane.b32.xlu0 %v567, 112
        %v3416 = vpop.permute.xlu0 %3415
        %v3422 = vsel %vm330, %v2939, 0
        %v3425 = vsel %vm330, %v2954, 0
        %v3428 = vsel %vm330, %v2969, 0
        %v3431 = vsel %vm330, %v2984, 0
        %3433 = vmatpush.msra.mxu0 0.0
        %3434 = vmatpush.msra.mxu0 0.0
        %3435 = vmatpush.msra.mxu0 0.0
        %3436 = vmatpush.msra.mxu0 0.0
        %3437 = vmatpush.msra.mxu0 0.0
        %3438 = vmatpush.msra.mxu0 0.0
        %3439 = vmatpush.msra.mxu0 0.0
        %3440 = vmatpush.msra.mxu0 0.0
        %3441 = vmatpush.msra.mxu0 0.0
        %3442 = vmatpush.msra.mxu0 0.0
        %3443 = vmatpush.msra.mxu0 0.0
        %3444 = vmatpush.msra.mxu0 0.0
        %3445 = vmatpush.msra.mxu0 %v3416
        %3446 = vmatpush.msra.mxu0 %v3414
        %3447 = vmatpush.msra.mxu0 %v3412
        %3448 = vmatpush.msra.mxu0 %v3410
        %3449 = vmatmul.f32.gmra.mxu0 %v3422
        %v3450 = vpop.f32.mrf.mxu0
        %v3451 = vadd.f32 0.0, %v3450
        %3452 = vmatmul.f32.gmra.mxu0 %v3425
        %v3453 = vpop.f32.mrf.mxu0
        %v3454 = vadd.f32 0.0, %v3453
        %3455 = vmatmul.f32.gmra.mxu0 %v3428
        %v3456 = vpop.f32.mrf.mxu0
        %v3457 = vadd.f32 0.0, %v3456
        %3458 = vmatmul.f32.gmra.mxu0 %v3431
        %v3459 = vpop.f32.mrf.mxu0
        %v3460 = vadd.f32 0.0, %v3459
        %3461 = vdwg.mxu0
        %3466 = vrot.lane.b32.xlu0 %v570, 112
        %v3467 = vpop.permute.xlu0 %3466
        %3468 = vrot.lane.b32.xlu0 %v573, 112
        %v3469 = vpop.permute.xlu0 %3468
        %3470 = vrot.lane.b32.xlu0 %v576, 112
        %v3471 = vpop.permute.xlu0 %3470
        %3472 = vrot.lane.b32.xlu0 %v579, 112
        %v3473 = vpop.permute.xlu0 %3472
        %v3479 = vsel %vm330, %v2999, 0
        %v3482 = vsel %vm330, %v3014, 0
        %v3485 = vsel %vm330, %v3029, 0
        %v3488 = vsel %vm330, %v3044, 0
        %3490 = vmatpush.msra.mxu0 0.0
        %3491 = vmatpush.msra.mxu0 0.0
        %3492 = vmatpush.msra.mxu0 0.0
        %3493 = vmatpush.msra.mxu0 0.0
        %3494 = vmatpush.msra.mxu0 0.0
        %3495 = vmatpush.msra.mxu0 0.0
        %3496 = vmatpush.msra.mxu0 0.0
        %3497 = vmatpush.msra.mxu0 0.0
        %3498 = vmatpush.msra.mxu0 0.0
        %3499 = vmatpush.msra.mxu0 0.0
        %3500 = vmatpush.msra.mxu0 0.0
        %3501 = vmatpush.msra.mxu0 0.0
        %3502 = vmatpush.msra.mxu0 %v3473
        %3503 = vmatpush.msra.mxu0 %v3471
        %3504 = vmatpush.msra.mxu0 %v3469
        %3505 = vmatpush.msra.mxu0 %v3467
        %3506 = vmatmul.f32.gmra.mxu0 %v3479
        %v3507 = vpop.f32.mrf.mxu0
        %v3508 = vadd.f32 0.0, %v3507
        %3509 = vmatmul.f32.gmra.mxu0 %v3482
        %v3510 = vpop.f32.mrf.mxu0
        %v3511 = vadd.f32 0.0, %v3510
        %3512 = vmatmul.f32.gmra.mxu0 %v3485
        %v3513 = vpop.f32.mrf.mxu0
        %v3514 = vadd.f32 0.0, %v3513
        %3515 = vmatmul.f32.gmra.mxu0 %v3488
        %v3516 = vpop.f32.mrf.mxu0
        %v3517 = vadd.f32 0.0, %v3516
        %3518 = vdwg.mxu0
        %3523 = vrot.lane.b32.xlu0 %v582, 112
        %v3524 = vpop.permute.xlu0 %3523
        %3525 = vrot.lane.b32.xlu0 %v585, 112
        %v3526 = vpop.permute.xlu0 %3525
        %3527 = vrot.lane.b32.xlu0 %v588, 112
        %v3528 = vpop.permute.xlu0 %3527
        %3529 = vrot.lane.b32.xlu0 %v591, 112
        %v3530 = vpop.permute.xlu0 %3529
        %v3536 = vsel %vm330, %v3059, 0
        %v3539 = vsel %vm330, %v3074, 0
        %v3542 = vsel %vm330, %v3089, 0
        %v3545 = vsel %vm330, %v3104, 0
        %3547 = vmatpush.msra.mxu0 0.0
        %3548 = vmatpush.msra.mxu0 0.0
        %3549 = vmatpush.msra.mxu0 0.0
        %3550 = vmatpush.msra.mxu0 0.0
        %3551 = vmatpush.msra.mxu0 0.0
        %3552 = vmatpush.msra.mxu0 0.0
        %3553 = vmatpush.msra.mxu0 0.0
        %3554 = vmatpush.msra.mxu0 0.0
        %3555 = vmatpush.msra.mxu0 0.0
        %3556 = vmatpush.msra.mxu0 0.0
        %3557 = vmatpush.msra.mxu0 0.0
        %3558 = vmatpush.msra.mxu0 0.0
        %3559 = vmatpush.msra.mxu0 %v3530
        %3560 = vmatpush.msra.mxu0 %v3528
        %3561 = vmatpush.msra.mxu0 %v3526
        %3562 = vmatpush.msra.mxu0 %v3524
        %3563 = vmatmul.f32.gmra.mxu0 %v3536
        %v3564 = vpop.f32.mrf.mxu0
        %v3565 = vadd.f32 0.0, %v3564
        %3566 = vmatmul.f32.gmra.mxu0 %v3539
        %v3567 = vpop.f32.mrf.mxu0
        %v3568 = vadd.f32 0.0, %v3567
        %3569 = vmatmul.f32.gmra.mxu0 %v3542
        %v3570 = vpop.f32.mrf.mxu0
        %v3571 = vadd.f32 0.0, %v3570
        %3572 = vmatmul.f32.gmra.mxu0 %v3545
        %v3573 = vpop.f32.mrf.mxu0
        %v3574 = vadd.f32 0.0, %v3573
        %3575 = vdwg.mxu0
        %3580 = vrot.lane.b32.xlu0 %v594, 112
        %v3581 = vpop.permute.xlu0 %3580
        %3582 = vrot.lane.b32.xlu0 %v597, 112
        %v3583 = vpop.permute.xlu0 %3582
        %3584 = vrot.lane.b32.xlu0 %v600, 112
        %v3585 = vpop.permute.xlu0 %3584
        %3586 = vrot.lane.b32.xlu0 %v603, 112
        %v3587 = vpop.permute.xlu0 %3586
        %v3593 = vsel %vm330, %v3119, 0
        %v3596 = vsel %vm330, %v3134, 0
        %v3599 = vsel %vm330, %v3149, 0
        %v3602 = vsel %vm330, %v3164, 0
        %3604 = vmatpush.msra.mxu0 0.0
        %3605 = vmatpush.msra.mxu0 0.0
        %3606 = vmatpush.msra.mxu0 0.0
        %3607 = vmatpush.msra.mxu0 0.0
        %3608 = vmatpush.msra.mxu0 0.0
        %3609 = vmatpush.msra.mxu0 0.0
        %3610 = vmatpush.msra.mxu0 0.0
        %3611 = vmatpush.msra.mxu0 0.0
        %3612 = vmatpush.msra.mxu0 0.0
        %3613 = vmatpush.msra.mxu0 0.0
        %3614 = vmatpush.msra.mxu0 0.0
        %3615 = vmatpush.msra.mxu0 0.0
        %3616 = vmatpush.msra.mxu0 %v3587
        %3617 = vmatpush.msra.mxu0 %v3585
        %3618 = vmatpush.msra.mxu0 %v3583
        %3619 = vmatpush.msra.mxu0 %v3581
        %3620 = vmatmul.f32.gmra.mxu0 %v3593
        %v3621 = vpop.f32.mrf.mxu0
        %v3622 = vadd.f32 0.0, %v3621
        %3623 = vmatmul.f32.gmra.mxu0 %v3596
        %v3624 = vpop.f32.mrf.mxu0
        %v3625 = vadd.f32 0.0, %v3624
        %3626 = vmatmul.f32.gmra.mxu0 %v3599
        %v3627 = vpop.f32.mrf.mxu0
        %v3628 = vadd.f32 0.0, %v3627
        %3629 = vmatmul.f32.gmra.mxu0 %v3602
        %v3630 = vpop.f32.mrf.mxu0
        %v3631 = vadd.f32 0.0, %v3630
        %3632 = vdwg.mxu0
        %3637 = vrot.lane.b32.xlu0 %v606, 112
        %v3638 = vpop.permute.xlu0 %3637
        %3639 = vrot.lane.b32.xlu0 %v609, 112
        %v3640 = vpop.permute.xlu0 %3639
        %3641 = vrot.lane.b32.xlu0 %v612, 112
        %v3642 = vpop.permute.xlu0 %3641
        %3643 = vrot.lane.b32.xlu0 %v615, 112
        %v3644 = vpop.permute.xlu0 %3643
        %v3650 = vsel %vm330, %v3179, 0
        %v3653 = vsel %vm330, %v3194, 0
        %v3656 = vsel %vm330, %v3209, 0
        %v3659 = vsel %vm330, %v3224, 0
        %3661 = vmatpush.msra.mxu0 0.0
        %3662 = vmatpush.msra.mxu0 0.0
        %3663 = vmatpush.msra.mxu0 0.0
        %3664 = vmatpush.msra.mxu0 0.0
        %3665 = vmatpush.msra.mxu0 0.0
        %3666 = vmatpush.msra.mxu0 0.0
        %3667 = vmatpush.msra.mxu0 0.0
        %3668 = vmatpush.msra.mxu0 0.0
        %3669 = vmatpush.msra.mxu0 0.0
        %3670 = vmatpush.msra.mxu0 0.0
        %3671 = vmatpush.msra.mxu0 0.0
        %3672 = vmatpush.msra.mxu0 0.0
        %3673 = vmatpush.msra.mxu0 %v3644
        %3674 = vmatpush.msra.mxu0 %v3642
        %3675 = vmatpush.msra.mxu0 %v3640
        %3676 = vmatpush.msra.mxu0 %v3638
        %3677 = vmatmul.f32.gmra.mxu0 %v3650
        %v3678 = vpop.f32.mrf.mxu0
        %v3679 = vadd.f32 0.0, %v3678
        %3680 = vmatmul.f32.gmra.mxu0 %v3653
        %v3681 = vpop.f32.mrf.mxu0
        %v3682 = vadd.f32 0.0, %v3681
        %3683 = vmatmul.f32.gmra.mxu0 %v3656
        %v3684 = vpop.f32.mrf.mxu0
        %v3685 = vadd.f32 0.0, %v3684
        %3686 = vmatmul.f32.gmra.mxu0 %v3659
        %v3687 = vpop.f32.mrf.mxu0
        %v3688 = vadd.f32 0.0, %v3687
        %3689 = vdwg.mxu0
        %3694 = vrot.lane.b32.xlu0 %v618, 112
        %v3695 = vpop.permute.xlu0 %3694
        %3696 = vrot.lane.b32.xlu0 %v621, 112
        %v3697 = vpop.permute.xlu0 %3696
        %3698 = vrot.lane.b32.xlu0 %v624, 112
        %v3699 = vpop.permute.xlu0 %3698
        %3700 = vrot.lane.b32.xlu0 %v627, 112
        %v3701 = vpop.permute.xlu0 %3700
        %v3707 = vsel %vm330, %v3239, 0
        %v3710 = vsel %vm330, %v3254, 0
        %v3713 = vsel %vm330, %v3269, 0
        %v3716 = vsel %vm330, %v3284, 0
        %3718 = vmatpush.msra.mxu0 0.0
        %3719 = vmatpush.msra.mxu0 0.0
        %3720 = vmatpush.msra.mxu0 0.0
        %3721 = vmatpush.msra.mxu0 0.0
        %3722 = vmatpush.msra.mxu0 0.0
        %3723 = vmatpush.msra.mxu0 0.0
        %3724 = vmatpush.msra.mxu0 0.0
        %3725 = vmatpush.msra.mxu0 0.0
        %3726 = vmatpush.msra.mxu0 0.0
        %3727 = vmatpush.msra.mxu0 0.0
        %3728 = vmatpush.msra.mxu0 0.0
        %3729 = vmatpush.msra.mxu0 0.0
        %3730 = vmatpush.msra.mxu0 %v3701
        %3731 = vmatpush.msra.mxu0 %v3699
        %3732 = vmatpush.msra.mxu0 %v3697
        %3733 = vmatpush.msra.mxu0 %v3695
        %3734 = vmatmul.f32.gmra.mxu0 %v3707
        %v3735 = vpop.f32.mrf.mxu0
        %v3736 = vadd.f32 0.0, %v3735
        %3737 = vmatmul.f32.gmra.mxu0 %v3710
        %v3738 = vpop.f32.mrf.mxu0
        %v3739 = vadd.f32 0.0, %v3738
        %3740 = vmatmul.f32.gmra.mxu0 %v3713
        %v3741 = vpop.f32.mrf.mxu0
        %v3742 = vadd.f32 0.0, %v3741
        %3743 = vmatmul.f32.gmra.mxu0 %v3716
        %v3744 = vpop.f32.mrf.mxu0
        %v3745 = vadd.f32 0.0, %v3744
        %3746 = vdwg.mxu0
        %3751 = vrot.lane.b32.xlu0 %v630, 112
        %v3752 = vpop.permute.xlu0 %3751
        %3753 = vrot.lane.b32.xlu0 %v633, 112
        %v3754 = vpop.permute.xlu0 %3753
        %3755 = vrot.lane.b32.xlu0 %v636, 112
        %v3756 = vpop.permute.xlu0 %3755
        %3757 = vrot.lane.b32.xlu0 %v639, 112
        %v3758 = vpop.permute.xlu0 %3757
        %v3764 = vsel %vm330, %v3299, 0
        %v3767 = vsel %vm330, %v3314, 0
        %v3770 = vsel %vm330, %v3329, 0
        %v3773 = vsel %vm330, %v3344, 0
        %3775 = vmatpush.msra.mxu0 0.0
        %3776 = vmatpush.msra.mxu0 0.0
        %3777 = vmatpush.msra.mxu0 0.0
        %3778 = vmatpush.msra.mxu0 0.0
        %3779 = vmatpush.msra.mxu0 0.0
        %3780 = vmatpush.msra.mxu0 0.0
        %3781 = vmatpush.msra.mxu0 0.0
        %3782 = vmatpush.msra.mxu0 0.0
        %3783 = vmatpush.msra.mxu0 0.0
        %3784 = vmatpush.msra.mxu0 0.0
        %3785 = vmatpush.msra.mxu0 0.0
        %3786 = vmatpush.msra.mxu0 0.0
        %3787 = vmatpush.msra.mxu0 %v3758
        %3788 = vmatpush.msra.mxu0 %v3756
        %3789 = vmatpush.msra.mxu0 %v3754
        %3790 = vmatpush.msra.mxu0 %v3752
        %3791 = vmatmul.f32.gmra.mxu0 %v3764
        %v3792 = vpop.f32.mrf.mxu0
        %v3793 = vadd.f32 0.0, %v3792
        %3794 = vmatmul.f32.gmra.mxu0 %v3767
        %v3795 = vpop.f32.mrf.mxu0
        %v3796 = vadd.f32 0.0, %v3795
        %3797 = vmatmul.f32.gmra.mxu0 %v3770
        %v3798 = vpop.f32.mrf.mxu0
        %v3799 = vadd.f32 0.0, %v3798
        %3800 = vmatmul.f32.gmra.mxu0 %v3773
        %v3801 = vpop.f32.mrf.mxu0
        %v3802 = vadd.f32 0.0, %v3801
        %3803 = vdwg.mxu0
        %3808 = vrot.lane.b32.xlu0 %v642, 112
        %v3809 = vpop.permute.xlu0 %3808
        %3810 = vrot.lane.b32.xlu0 %v645, 112
        %v3811 = vpop.permute.xlu0 %3810
        %3812 = vrot.lane.b32.xlu0 %v648, 112
        %v3813 = vpop.permute.xlu0 %3812
        %3814 = vrot.lane.b32.xlu0 %v651, 112
        %v3815 = vpop.permute.xlu0 %3814
        %v3821 = vsel %vm330, %v3359, 0
        %v3824 = vsel %vm330, %v3374, 0
        %v3827 = vsel %vm330, %v3389, 0
        %v3830 = vsel %vm330, %v3404, 0
        %3832 = vmatpush.msra.mxu0 0.0
        %3833 = vmatpush.msra.mxu0 0.0
        %3834 = vmatpush.msra.mxu0 0.0
        %3835 = vmatpush.msra.mxu0 0.0
        %3836 = vmatpush.msra.mxu0 0.0
        %3837 = vmatpush.msra.mxu0 0.0
        %3838 = vmatpush.msra.mxu0 0.0
        %3839 = vmatpush.msra.mxu0 0.0
        %3840 = vmatpush.msra.mxu0 0.0
        %3841 = vmatpush.msra.mxu0 0.0
        %3842 = vmatpush.msra.mxu0 0.0
        %3843 = vmatpush.msra.mxu0 0.0
        %3844 = vmatpush.msra.mxu0 %v3815
        %3845 = vmatpush.msra.mxu0 %v3813
        %3846 = vmatpush.msra.mxu0 %v3811
        %3847 = vmatpush.msra.mxu0 %v3809
        %3848 = vmatmul.f32.gmra.mxu0 %v3821
        %v3849 = vpop.f32.mrf.mxu0
        %v3850 = vadd.f32 0.0, %v3849
        %3851 = vmatmul.f32.gmra.mxu0 %v3824
        %v3852 = vpop.f32.mrf.mxu0
        %v3853 = vadd.f32 0.0, %v3852
        %3854 = vmatmul.f32.gmra.mxu0 %v3827
        %v3855 = vpop.f32.mrf.mxu0
        %v3856 = vadd.f32 0.0, %v3855
        %3857 = vmatmul.f32.gmra.mxu0 %v3830
        %v3858 = vpop.f32.mrf.mxu0
        %v3859 = vadd.f32 0.0, %v3858
        %3860 = vdwg.mxu0
        %v3861 = vld [vmem:[%s3 + $0x10] sm:$0xff]
        %v3862 = vld [vmem:[%s3 + $0x18] sm:$0xff]
        %v3864 = vsel %vm670, %v3451, 0
        %v3867 = vsel %vm670, %v3454, 0
        %v3870 = vsel %vm670, %v3457, 0
        %v3873 = vsel %vm670, %v3460, 0
        %v3876 = vsel %vm670, %v3508, 0
        %v3879 = vsel %vm670, %v3511, 0
        %v3882 = vsel %vm670, %v3514, 0
        %v3885 = vsel %vm670, %v3517, 0
        %v3888 = vsel %vm670, %v3565, 0
        %v3891 = vsel %vm670, %v3568, 0
        %v3894 = vsel %vm670, %v3571, 0
        %v3897 = vsel %vm670, %v3574, 0
        %v3900 = vsel %vm670, %v3622, 0
        %v3903 = vsel %vm670, %v3625, 0
        %v3906 = vsel %vm670, %v3628, 0
        %v3909 = vsel %vm670, %v3631, 0
        %v3912 = vsel %vm670, %v3679, 0
        %v3915 = vsel %vm670, %v3682, 0
        %v3918 = vsel %vm670, %v3685, 0
        %v3921 = vsel %vm670, %v3688, 0
        %v3924 = vsel %vm670, %v3736, 0
        %v3927 = vsel %vm670, %v3739, 0
        %v3930 = vsel %vm670, %v3742, 0
        %v3933 = vsel %vm670, %v3745, 0
        %v3936 = vsel %vm670, %v3793, 0
        %v3939 = vsel %vm670, %v3796, 0
        %v3942 = vsel %vm670, %v3799, 0
        %v3945 = vsel %vm670, %v3802, 0
        %v3948 = vsel %vm670, %v3850, 0
        %v3951 = vsel %vm670, %v3853, 0
        %v3954 = vsel %vm670, %v3856, 0
        %v3957 = vsel %vm670, %v3859, 0
        %3959 = vmatpush.msra.mxu0 0.0
        %3960 = vmatpush.msra.mxu0 0.0
        %3961 = vmatpush.msra.mxu0 0.0
        %3962 = vmatpush.msra.mxu0 0.0
        %3963 = vmatpush.msra.mxu0 0.0
        %3964 = vmatpush.msra.mxu0 0.0
        %3965 = vmatpush.msra.mxu0 0.0
        %3966 = vmatpush.msra.mxu0 0.0
        %3967 = vmatpush.msra.mxu0 0.0
        %3968 = vmatpush.msra.mxu0 0.0
        %3969 = vmatpush.msra.mxu0 0.0
        %3970 = vmatpush.msra.mxu0 0.0
        %3971 = vmatpush.msra.mxu0 0.0
        %3972 = vmatpush.msra.mxu0 0.0
        %3973 = vmatpush.msra.mxu0 %v3862
        %3974 = vmatpush.msra.mxu0 %v3861
        %3975 = vmatmul.f32.gmra.mxu0 %v3864
        %v3976 = vpop.f32.mrf.mxu0
        %v3977 = vadd.f32 0.0, %v3976
        %3978 = vmatmul.f32.gmra.mxu0 %v3867
        %v3979 = vpop.f32.mrf.mxu0
        %v3980 = vadd.f32 0.0, %v3979
        %3981 = vmatmul.f32.gmra.mxu0 %v3870
        %v3982 = vpop.f32.mrf.mxu0
        %v3983 = vadd.f32 0.0, %v3982
        %3984 = vmatmul.f32.gmra.mxu0 %v3873
        %v3985 = vpop.f32.mrf.mxu0
        %v3986 = vadd.f32 0.0, %v3985
        %3987 = vmatmul.f32.gmra.mxu0 %v3876
        %v3988 = vpop.f32.mrf.mxu0
        %v3989 = vadd.f32 0.0, %v3988
        %3990 = vmatmul.f32.gmra.mxu0 %v3879
        %v3991 = vpop.f32.mrf.mxu0
        %v3992 = vadd.f32 0.0, %v3991
        %3993 = vmatmul.f32.gmra.mxu0 %v3882
        %v3994 = vpop.f32.mrf.mxu0
        %v3995 = vadd.f32 0.0, %v3994
        %3996 = vmatmul.f32.gmra.mxu0 %v3885
        %v3997 = vpop.f32.mrf.mxu0
        %v3998 = vadd.f32 0.0, %v3997
        %3999 = vmatmul.f32.gmra.mxu0 %v3888
        %v4000 = vpop.f32.mrf.mxu0
        %v4001 = vadd.f32 0.0, %v4000
        %4002 = vmatmul.f32.gmra.mxu0 %v3891
        %v4003 = vpop.f32.mrf.mxu0
        %v4004 = vadd.f32 0.0, %v4003
        %4005 = vmatmul.f32.gmra.mxu0 %v3894
        %v4006 = vpop.f32.mrf.mxu0
        %v4007 = vadd.f32 0.0, %v4006
        %4008 = vmatmul.f32.gmra.mxu0 %v3897
        %v4009 = vpop.f32.mrf.mxu0
        %v4010 = vadd.f32 0.0, %v4009
        %4011 = vmatmul.f32.gmra.mxu0 %v3900
        %v4012 = vpop.f32.mrf.mxu0
        %v4013 = vadd.f32 0.0, %v4012
        %4014 = vmatmul.f32.gmra.mxu0 %v3903
        %v4015 = vpop.f32.mrf.mxu0
        %v4016 = vadd.f32 0.0, %v4015
        %4017 = vmatmul.f32.gmra.mxu0 %v3906
        %v4018 = vpop.f32.mrf.mxu0
        %v4019 = vadd.f32 0.0, %v4018
        %4020 = vmatmul.f32.gmra.mxu0 %v3909
        %v4021 = vpop.f32.mrf.mxu0
        %v4022 = vadd.f32 0.0, %v4021
        %4023 = vmatmul.f32.gmra.mxu0 %v3912
        %v4024 = vpop.f32.mrf.mxu0
        %v4025 = vadd.f32 0.0, %v4024
        %4026 = vmatmul.f32.gmra.mxu0 %v3915
        %v4027 = vpop.f32.mrf.mxu0
        %v4028 = vadd.f32 0.0, %v4027
        %4029 = vmatmul.f32.gmra.mxu0 %v3918
        %v4030 = vpop.f32.mrf.mxu0
        %v4031 = vadd.f32 0.0, %v4030
        %4032 = vmatmul.f32.gmra.mxu0 %v3921
        %v4033 = vpop.f32.mrf.mxu0
        %v4034 = vadd.f32 0.0, %v4033
        %4035 = vmatmul.f32.gmra.mxu0 %v3924
        %v4036 = vpop.f32.mrf.mxu0
        %v4037 = vadd.f32 0.0, %v4036
        %4038 = vmatmul.f32.gmra.mxu0 %v3927
        %v4039 = vpop.f32.mrf.mxu0
        %v4040 = vadd.f32 0.0, %v4039
        %4041 = vmatmul.f32.gmra.mxu0 %v3930
        %v4042 = vpop.f32.mrf.mxu0
        %v4043 = vadd.f32 0.0, %v4042
        %4044 = vmatmul.f32.gmra.mxu0 %v3933
        %v4045 = vpop.f32.mrf.mxu0
        %v4046 = vadd.f32 0.0, %v4045
        %4047 = vmatmul.f32.gmra.mxu0 %v3936
        %v4048 = vpop.f32.mrf.mxu0
        %v4049 = vadd.f32 0.0, %v4048
        %4050 = vmatmul.f32.gmra.mxu0 %v3939
        %v4051 = vpop.f32.mrf.mxu0
        %v4052 = vadd.f32 0.0, %v4051
        %4053 = vmatmul.f32.gmra.mxu0 %v3942
        %v4054 = vpop.f32.mrf.mxu0
        %v4055 = vadd.f32 0.0, %v4054
        %4056 = vmatmul.f32.gmra.mxu0 %v3945
        %v4057 = vpop.f32.mrf.mxu0
        %v4058 = vadd.f32 0.0, %v4057
        %4059 = vmatmul.f32.gmra.mxu0 %v3948
        %v4060 = vpop.f32.mrf.mxu0
        %v4061 = vadd.f32 0.0, %v4060
        %4062 = vmatmul.f32.gmra.mxu0 %v3951
        %v4063 = vpop.f32.mrf.mxu0
        %v4064 = vadd.f32 0.0, %v4063
        %4065 = vmatmul.f32.gmra.mxu0 %v3954
        %v4066 = vpop.f32.mrf.mxu0
        %v4067 = vadd.f32 0.0, %v4066
        %4068 = vmatmul.f32.gmra.mxu0 %v3957
        %v4069 = vpop.f32.mrf.mxu0
        %v4070 = vadd.f32 0.0, %v4069
        %4071 = vdwg.mxu0
        %v4073 = vsel %vm670, %v1881, 0
        %v4076 = vsel %vm670, %v1884, 0
        %v4079 = vsel %vm670, %v1887, 0
        %v4082 = vsel %vm670, %v1890, 0
        %v4085 = vsel %vm670, %v1922, 0
        %v4088 = vsel %vm670, %v1925, 0
        %v4091 = vsel %vm670, %v1928, 0
        %v4094 = vsel %vm670, %v1931, 0
        %v4097 = vsel %vm670, %v1963, 0
        %v4100 = vsel %vm670, %v1966, 0
        %v4103 = vsel %vm670, %v1969, 0
        %v4106 = vsel %vm670, %v1972, 0
        %v4109 = vsel %vm670, %v2004, 0
        %v4112 = vsel %vm670, %v2007, 0
        %v4115 = vsel %vm670, %v2010, 0
        %v4118 = vsel %vm670, %v2013, 0
        %v4121 = vsel %vm670, %v2045, 0
        %v4124 = vsel %vm670, %v2048, 0
        %v4127 = vsel %vm670, %v2051, 0
        %v4130 = vsel %vm670, %v2054, 0
        %v4133 = vsel %vm670, %v2086, 0
        %v4136 = vsel %vm670, %v2089, 0
        %v4139 = vsel %vm670, %v2092, 0
        %v4142 = vsel %vm670, %v2095, 0
        %v4145 = vsel %vm670, %v2127, 0
        %v4148 = vsel %vm670, %v2130, 0
        %v4151 = vsel %vm670, %v2133, 0
        %v4154 = vsel %vm670, %v2136, 0
        %v4157 = vsel %vm670, %v2168, 0
        %v4160 = vsel %vm670, %v2171, 0
        %v4163 = vsel %vm670, %v2174, 0
        %v4166 = vsel %vm670, %v2177, 0
        %4168 = vmatpush.msra.mxu0 0.0
        %4169 = vmatpush.msra.mxu0 0.0
        %4170 = vmatpush.msra.mxu0 0.0
        %4171 = vmatpush.msra.mxu0 0.0
        %4172 = vmatpush.msra.mxu0 0.0
        %4173 = vmatpush.msra.mxu0 0.0
        %4174 = vmatpush.msra.mxu0 0.0
        %4175 = vmatpush.msra.mxu0 0.0
        %4176 = vmatpush.msra.mxu0 0.0
        %4177 = vmatpush.msra.mxu0 0.0
        %4178 = vmatpush.msra.mxu0 0.0
        %4179 = vmatpush.msra.mxu0 0.0
        %4180 = vmatpush.msra.mxu0 0.0
        %4181 = vmatpush.msra.mxu0 0.0
        %4182 = vmatpush.msra.mxu0 %v2180
        %4183 = vmatpush.msra.mxu0 %v2179
        %4184 = vmatmul.f32.gmra.mxu0 %v4073
        %v4185 = vpop.f32.mrf.mxu0
        %v4186 = vadd.f32 %v3977, %v4185
        %4187 = vmatmul.f32.gmra.mxu0 %v4076
        %v4188 = vpop.f32.mrf.mxu0
        %v4189 = vadd.f32 %v3980, %v4188
        %4190 = vmatmul.f32.gmra.mxu0 %v4079
        %v4191 = vpop.f32.mrf.mxu0
        %v4192 = vadd.f32 %v3983, %v4191
        %4193 = vmatmul.f32.gmra.mxu0 %v4082
        %v4194 = vpop.f32.mrf.mxu0
        %v4195 = vadd.f32 %v3986, %v4194
        %4196 = vmatmul.f32.gmra.mxu0 %v4085
        %v4197 = vpop.f32.mrf.mxu0
        %v4198 = vadd.f32 %v3989, %v4197
        %4199 = vmatmul.f32.gmra.mxu0 %v4088
        %v4200 = vpop.f32.mrf.mxu0
        %v4201 = vadd.f32 %v3992, %v4200
        %4202 = vmatmul.f32.gmra.mxu0 %v4091
        %v4203 = vpop.f32.mrf.mxu0
        %v4204 = vadd.f32 %v3995, %v4203
        %4205 = vmatmul.f32.gmra.mxu0 %v4094
        %v4206 = vpop.f32.mrf.mxu0
        %v4207 = vadd.f32 %v3998, %v4206
        %4208 = vmatmul.f32.gmra.mxu0 %v4097
        %v4209 = vpop.f32.mrf.mxu0
        %v4210 = vadd.f32 %v4001, %v4209
        %4211 = vmatmul.f32.gmra.mxu0 %v4100
        %v4212 = vpop.f32.mrf.mxu0
        %v4213 = vadd.f32 %v4004, %v4212
        %4214 = vmatmul.f32.gmra.mxu0 %v4103
        %v4215 = vpop.f32.mrf.mxu0
        %v4216 = vadd.f32 %v4007, %v4215
        %4217 = vmatmul.f32.gmra.mxu0 %v4106
        %v4218 = vpop.f32.mrf.mxu0
        %v4219 = vadd.f32 %v4010, %v4218
        %4220 = vmatmul.f32.gmra.mxu0 %v4109
        %v4221 = vpop.f32.mrf.mxu0
        %v4222 = vadd.f32 %v4013, %v4221
        %4223 = vmatmul.f32.gmra.mxu0 %v4112
        %v4224 = vpop.f32.mrf.mxu0
        %v4225 = vadd.f32 %v4016, %v4224
        %4226 = vmatmul.f32.gmra.mxu0 %v4115
        %v4227 = vpop.f32.mrf.mxu0
        %v4228 = vadd.f32 %v4019, %v4227
        %4229 = vmatmul.f32.gmra.mxu0 %v4118
        %v4230 = vpop.f32.mrf.mxu0
        %v4231 = vadd.f32 %v4022, %v4230
        %4232 = vmatmul.f32.gmra.mxu0 %v4121
        %v4233 = vpop.f32.mrf.mxu0
        %v4234 = vadd.f32 %v4025, %v4233
        %4235 = vmatmul.f32.gmra.mxu0 %v4124
        %v4236 = vpop.f32.mrf.mxu0
        %v4237 = vadd.f32 %v4028, %v4236
        %4238 = vmatmul.f32.gmra.mxu0 %v4127
        %v4239 = vpop.f32.mrf.mxu0
        %v4240 = vadd.f32 %v4031, %v4239
        %4241 = vmatmul.f32.gmra.mxu0 %v4130
        %v4242 = vpop.f32.mrf.mxu0
        %v4243 = vadd.f32 %v4034, %v4242
        %4244 = vmatmul.f32.gmra.mxu0 %v4133
        %v4245 = vpop.f32.mrf.mxu0
        %v4246 = vadd.f32 %v4037, %v4245
        %4247 = vmatmul.f32.gmra.mxu0 %v4136
        %v4248 = vpop.f32.mrf.mxu0
        %v4249 = vadd.f32 %v4040, %v4248
        %4250 = vmatmul.f32.gmra.mxu0 %v4139
        %v4251 = vpop.f32.mrf.mxu0
        %v4252 = vadd.f32 %v4043, %v4251
        %4253 = vmatmul.f32.gmra.mxu0 %v4142
        %v4254 = vpop.f32.mrf.mxu0
        %v4255 = vadd.f32 %v4046, %v4254
        %4256 = vmatmul.f32.gmra.mxu0 %v4145
        %v4257 = vpop.f32.mrf.mxu0
        %v4258 = vadd.f32 %v4049, %v4257
        %4259 = vmatmul.f32.gmra.mxu0 %v4148
        %v4260 = vpop.f32.mrf.mxu0
        %v4261 = vadd.f32 %v4052, %v4260
        %4262 = vmatmul.f32.gmra.mxu0 %v4151
        %v4263 = vpop.f32.mrf.mxu0
        %v4264 = vadd.f32 %v4055, %v4263
        %4265 = vmatmul.f32.gmra.mxu0 %v4154
        %v4266 = vpop.f32.mrf.mxu0
        %v4267 = vadd.f32 %v4058, %v4266
        %4268 = vmatmul.f32.gmra.mxu0 %v4157
        %v4269 = vpop.f32.mrf.mxu0
        %v4270 = vadd.f32 %v4061, %v4269
        %4271 = vmatmul.f32.gmra.mxu0 %v4160
        %v4272 = vpop.f32.mrf.mxu0
        %v4273 = vadd.f32 %v4064, %v4272
        %4274 = vmatmul.f32.gmra.mxu0 %v4163
        %v4275 = vpop.f32.mrf.mxu0
        %v4276 = vadd.f32 %v4067, %v4275
        %4277 = vmatmul.f32.gmra.mxu0 %v4166
        %v4278 = vpop.f32.mrf.mxu0
        %v4279 = vadd.f32 %v4070, %v4278
        %4280 = vdwg.mxu0
        %4281 = vrot.lane.b32.xlu0 %v445, 96
        %v4282 = vpop.permute.xlu0 %4281
        %4283 = vrot.lane.b32.xlu0 %v448, 96
        %v4284 = vpop.permute.xlu0 %4283
        %4285 = vrot.lane.b32.xlu0 %v451, 96
        %v4286 = vpop.permute.xlu0 %4285
        %4287 = vrot.lane.b32.xlu0 %v454, 96
        %v4288 = vpop.permute.xlu0 %4287
        %4289 = vrot.lane.b32.xlu0 %v445, 32
        %v4290 = vpop.permute.xlu0 %4289
        %4291 = vrot.lane.b32.xlu0 %v448, 32
        %v4292 = vpop.permute.xlu0 %4291
        %4293 = vrot.lane.b32.xlu0 %v451, 32
        %v4294 = vpop.permute.xlu0 %4293
        %4295 = vrot.lane.b32.xlu0 %v454, 32
        %v4296 = vpop.permute.xlu0 %4295
        %v4297 = vsel %vm670, %v4282, 0
        %v4299 = vsel %vm670, %v4284, 0
        %v4301 = vsel %vm670, %v4286, 0
        %v4303 = vsel %vm670, %v4288, 0
        %v4305 = vsel %vm670, %v4290, 0
        %v4307 = vsel %vm670, %v4292, 0
        %v4309 = vsel %vm670, %v4294, 0
        %v4311 = vsel %vm670, %v4296, 0
        %4313 = vmatpush.xpose.msra.mxu0 0.0
        %4314 = vmatpush.xpose.msra.mxu0 0.0
        %4315 = vmatpush.xpose.msra.mxu0 0.0
        %4316 = vmatpush.xpose.msra.mxu0 0.0
        %4317 = vmatpush.xpose.msra.mxu0 0.0
        %4318 = vmatpush.xpose.msra.mxu0 0.0
        %4319 = vmatpush.xpose.msra.mxu0 0.0
        %4320 = vmatpush.xpose.msra.mxu0 0.0
        %4321 = vmatpush.xpose.msra.mxu0 0.0
        %4322 = vmatpush.xpose.msra.mxu0 0.0
        %4323 = vmatpush.xpose.msra.mxu0 0.0
        %4324 = vmatpush.xpose.msra.mxu0 0.0
        %4325 = vmatpush.xpose.msra.mxu0 %v4311
        %4326 = vmatpush.xpose.msra.mxu0 %v4309
        %4327 = vmatpush.xpose.msra.mxu0 %v4307
        %4328 = vmatpush.xpose.msra.mxu0 %v4305
        %4329 = vmatmul.f32.gmra.mxu0 %v4297
        %v4330 = vpop.f32.mrf.mxu0
        %v4331 = vadd.f32 0.0, %v4330
        %4332 = vmatmul.f32.gmra.mxu0 %v4299
        %v4333 = vpop.f32.mrf.mxu0
        %v4334 = vadd.f32 0.0, %v4333
        %4335 = vmatmul.f32.gmra.mxu0 %v4301
        %v4336 = vpop.f32.mrf.mxu0
        %v4337 = vadd.f32 0.0, %v4336
        %4338 = vmatmul.f32.gmra.mxu0 %v4303
        %v4339 = vpop.f32.mrf.mxu0
        %v4340 = vadd.f32 0.0, %v4339
        %4341 = vdwg.mxu0
        %4342 = vrot.lane.b32.xlu0 %v457, 96
        %v4343 = vpop.permute.xlu0 %4342
        %4344 = vrot.lane.b32.xlu0 %v460, 96
        %v4345 = vpop.permute.xlu0 %4344
        %4346 = vrot.lane.b32.xlu0 %v463, 96
        %v4347 = vpop.permute.xlu0 %4346
        %4348 = vrot.lane.b32.xlu0 %v466, 96
        %v4349 = vpop.permute.xlu0 %4348
        %4350 = vrot.lane.b32.xlu0 %v457, 32
        %v4351 = vpop.permute.xlu0 %4350
        %4352 = vrot.lane.b32.xlu0 %v460, 32
        %v4353 = vpop.permute.xlu0 %4352
        %4354 = vrot.lane.b32.xlu0 %v463, 32
        %v4355 = vpop.permute.xlu0 %4354
        %4356 = vrot.lane.b32.xlu0 %v466, 32
        %v4357 = vpop.permute.xlu0 %4356
        %v4358 = vsel %vm670, %v4343, 0
        %v4360 = vsel %vm670, %v4345, 0
        %v4362 = vsel %vm670, %v4347, 0
        %v4364 = vsel %vm670, %v4349, 0
        %v4366 = vsel %vm670, %v4351, 0
        %v4368 = vsel %vm670, %v4353, 0
        %v4370 = vsel %vm670, %v4355, 0
        %v4372 = vsel %vm670, %v4357, 0
        %4374 = vmatpush.xpose.msra.mxu0 0.0
        %4375 = vmatpush.xpose.msra.mxu0 0.0
        %4376 = vmatpush.xpose.msra.mxu0 0.0
        %4377 = vmatpush.xpose.msra.mxu0 0.0
        %4378 = vmatpush.xpose.msra.mxu0 0.0
        %4379 = vmatpush.xpose.msra.mxu0 0.0
        %4380 = vmatpush.xpose.msra.mxu0 0.0
        %4381 = vmatpush.xpose.msra.mxu0 0.0
        %4382 = vmatpush.xpose.msra.mxu0 0.0
        %4383 = vmatpush.xpose.msra.mxu0 0.0
        %4384 = vmatpush.xpose.msra.mxu0 0.0
        %4385 = vmatpush.xpose.msra.mxu0 0.0
        %4386 = vmatpush.xpose.msra.mxu0 %v4372
        %4387 = vmatpush.xpose.msra.mxu0 %v4370
        %4388 = vmatpush.xpose.msra.mxu0 %v4368
        %4389 = vmatpush.xpose.msra.mxu0 %v4366
        %4390 = vmatmul.f32.gmra.mxu0 %v4358
        %v4391 = vpop.f32.mrf.mxu0
        %v4392 = vadd.f32 0.0, %v4391
        %4393 = vmatmul.f32.gmra.mxu0 %v4360
        %v4394 = vpop.f32.mrf.mxu0
        %v4395 = vadd.f32 0.0, %v4394
        %4396 = vmatmul.f32.gmra.mxu0 %v4362
        %v4397 = vpop.f32.mrf.mxu0
        %v4398 = vadd.f32 0.0, %v4397
        %4399 = vmatmul.f32.gmra.mxu0 %v4364
        %v4400 = vpop.f32.mrf.mxu0
        %v4401 = vadd.f32 0.0, %v4400
        %4402 = vdwg.mxu0
        %4403 = vrot.lane.b32.xlu0 %v469, 96
        %v4404 = vpop.permute.xlu0 %4403
        %4405 = vrot.lane.b32.xlu0 %v472, 96
        %v4406 = vpop.permute.xlu0 %4405
        %4407 = vrot.lane.b32.xlu0 %v475, 96
        %v4408 = vpop.permute.xlu0 %4407
        %4409 = vrot.lane.b32.xlu0 %v478, 96
        %v4410 = vpop.permute.xlu0 %4409
        %4411 = vrot.lane.b32.xlu0 %v469, 32
        %v4412 = vpop.permute.xlu0 %4411
        %4413 = vrot.lane.b32.xlu0 %v472, 32
        %v4414 = vpop.permute.xlu0 %4413
        %4415 = vrot.lane.b32.xlu0 %v475, 32
        %v4416 = vpop.permute.xlu0 %4415
        %4417 = vrot.lane.b32.xlu0 %v478, 32
        %v4418 = vpop.permute.xlu0 %4417
        %v4419 = vsel %vm670, %v4404, 0
        %v4421 = vsel %vm670, %v4406, 0
        %v4423 = vsel %vm670, %v4408, 0
        %v4425 = vsel %vm670, %v4410, 0
        %v4427 = vsel %vm670, %v4412, 0
        %v4429 = vsel %vm670, %v4414, 0
        %v4431 = vsel %vm670, %v4416, 0
        %v4433 = vsel %vm670, %v4418, 0
        %4435 = vmatpush.xpose.msra.mxu0 0.0
        %4436 = vmatpush.xpose.msra.mxu0 0.0
        %4437 = vmatpush.xpose.msra.mxu0 0.0
        %4438 = vmatpush.xpose.msra.mxu0 0.0
        %4439 = vmatpush.xpose.msra.mxu0 0.0
        %4440 = vmatpush.xpose.msra.mxu0 0.0
        %4441 = vmatpush.xpose.msra.mxu0 0.0
        %4442 = vmatpush.xpose.msra.mxu0 0.0
        %4443 = vmatpush.xpose.msra.mxu0 0.0
        %4444 = vmatpush.xpose.msra.mxu0 0.0
        %4445 = vmatpush.xpose.msra.mxu0 0.0
        %4446 = vmatpush.xpose.msra.mxu0 0.0
        %4447 = vmatpush.xpose.msra.mxu0 %v4433
        %4448 = vmatpush.xpose.msra.mxu0 %v4431
        %4449 = vmatpush.xpose.msra.mxu0 %v4429
        %4450 = vmatpush.xpose.msra.mxu0 %v4427
        %4451 = vmatmul.f32.gmra.mxu0 %v4419
        %v4452 = vpop.f32.mrf.mxu0
        %v4453 = vadd.f32 0.0, %v4452
        %4454 = vmatmul.f32.gmra.mxu0 %v4421
        %v4455 = vpop.f32.mrf.mxu0
        %v4456 = vadd.f32 0.0, %v4455
        %4457 = vmatmul.f32.gmra.mxu0 %v4423
        %v4458 = vpop.f32.mrf.mxu0
        %v4459 = vadd.f32 0.0, %v4458
        %4460 = vmatmul.f32.gmra.mxu0 %v4425
        %v4461 = vpop.f32.mrf.mxu0
        %v4462 = vadd.f32 0.0, %v4461
        %4463 = vdwg.mxu0
        %4464 = vrot.lane.b32.xlu0 %v481, 96
        %v4465 = vpop.permute.xlu0 %4464
        %4466 = vrot.lane.b32.xlu0 %v484, 96
        %v4467 = vpop.permute.xlu0 %4466
        %4468 = vrot.lane.b32.xlu0 %v487, 96
        %v4469 = vpop.permute.xlu0 %4468
        %4470 = vrot.lane.b32.xlu0 %v490, 96
        %v4471 = vpop.permute.xlu0 %4470
        %4472 = vrot.lane.b32.xlu0 %v481, 32
        %v4473 = vpop.permute.xlu0 %4472
        %4474 = vrot.lane.b32.xlu0 %v484, 32
        %v4475 = vpop.permute.xlu0 %4474
        %4476 = vrot.lane.b32.xlu0 %v487, 32
        %v4477 = vpop.permute.xlu0 %4476
        %4478 = vrot.lane.b32.xlu0 %v490, 32
        %v4479 = vpop.permute.xlu0 %4478
        %v4480 = vsel %vm670, %v4465, 0
        %v4482 = vsel %vm670, %v4467, 0
        %v4484 = vsel %vm670, %v4469, 0
        %v4486 = vsel %vm670, %v4471, 0
        %v4488 = vsel %vm670, %v4473, 0
        %v4490 = vsel %vm670, %v4475, 0
        %v4492 = vsel %vm670, %v4477, 0
        %v4494 = vsel %vm670, %v4479, 0
        %4496 = vmatpush.xpose.msra.mxu0 0.0
        %4497 = vmatpush.xpose.msra.mxu0 0.0
        %4498 = vmatpush.xpose.msra.mxu0 0.0
        %4499 = vmatpush.xpose.msra.mxu0 0.0
        %4500 = vmatpush.xpose.msra.mxu0 0.0
        %4501 = vmatpush.xpose.msra.mxu0 0.0
        %4502 = vmatpush.xpose.msra.mxu0 0.0
        %4503 = vmatpush.xpose.msra.mxu0 0.0
        %4504 = vmatpush.xpose.msra.mxu0 0.0
        %4505 = vmatpush.xpose.msra.mxu0 0.0
        %4506 = vmatpush.xpose.msra.mxu0 0.0
        %4507 = vmatpush.xpose.msra.mxu0 0.0
        %4508 = vmatpush.xpose.msra.mxu0 %v4494
        %4509 = vmatpush.xpose.msra.mxu0 %v4492
        %4510 = vmatpush.xpose.msra.mxu0 %v4490
        %4511 = vmatpush.xpose.msra.mxu0 %v4488
        %4512 = vmatmul.f32.gmra.mxu0 %v4480
        %v4513 = vpop.f32.mrf.mxu0
        %v4514 = vadd.f32 0.0, %v4513
        %4515 = vmatmul.f32.gmra.mxu0 %v4482
        %v4516 = vpop.f32.mrf.mxu0
        %v4517 = vadd.f32 0.0, %v4516
        %4518 = vmatmul.f32.gmra.mxu0 %v4484
        %v4519 = vpop.f32.mrf.mxu0
        %v4520 = vadd.f32 0.0, %v4519
        %4521 = vmatmul.f32.gmra.mxu0 %v4486
        %v4522 = vpop.f32.mrf.mxu0
        %v4523 = vadd.f32 0.0, %v4522
        %4524 = vdwg.mxu0
        %4525 = vrot.lane.b32.xlu0 %v493, 96
        %v4526 = vpop.permute.xlu0 %4525
        %4527 = vrot.lane.b32.xlu0 %v496, 96
        %v4528 = vpop.permute.xlu0 %4527
        %4529 = vrot.lane.b32.xlu0 %v499, 96
        %v4530 = vpop.permute.xlu0 %4529
        %4531 = vrot.lane.b32.xlu0 %v502, 96
        %v4532 = vpop.permute.xlu0 %4531
        %4533 = vrot.lane.b32.xlu0 %v493, 32
        %v4534 = vpop.permute.xlu0 %4533
        %4535 = vrot.lane.b32.xlu0 %v496, 32
        %v4536 = vpop.permute.xlu0 %4535
        %4537 = vrot.lane.b32.xlu0 %v499, 32
        %v4538 = vpop.permute.xlu0 %4537
        %4539 = vrot.lane.b32.xlu0 %v502, 32
        %v4540 = vpop.permute.xlu0 %4539
        %v4541 = vsel %vm670, %v4526, 0
        %v4543 = vsel %vm670, %v4528, 0
        %v4545 = vsel %vm670, %v4530, 0
        %v4547 = vsel %vm670, %v4532, 0
        %v4549 = vsel %vm670, %v4534, 0
        %v4551 = vsel %vm670, %v4536, 0
        %v4553 = vsel %vm670, %v4538, 0
        %v4555 = vsel %vm670, %v4540, 0
        %4557 = vmatpush.xpose.msra.mxu0 0.0
        %4558 = vmatpush.xpose.msra.mxu0 0.0
        %4559 = vmatpush.xpose.msra.mxu0 0.0
        %4560 = vmatpush.xpose.msra.mxu0 0.0
        %4561 = vmatpush.xpose.msra.mxu0 0.0
        %4562 = vmatpush.xpose.msra.mxu0 0.0
        %4563 = vmatpush.xpose.msra.mxu0 0.0
        %4564 = vmatpush.xpose.msra.mxu0 0.0
        %4565 = vmatpush.xpose.msra.mxu0 0.0
        %4566 = vmatpush.xpose.msra.mxu0 0.0
        %4567 = vmatpush.xpose.msra.mxu0 0.0
        %4568 = vmatpush.xpose.msra.mxu0 0.0
        %4569 = vmatpush.xpose.msra.mxu0 %v4555
        %4570 = vmatpush.xpose.msra.mxu0 %v4553
        %4571 = vmatpush.xpose.msra.mxu0 %v4551
        %4572 = vmatpush.xpose.msra.mxu0 %v4549
        %4573 = vmatmul.f32.gmra.mxu0 %v4541
        %v4574 = vpop.f32.mrf.mxu0
        %v4575 = vadd.f32 0.0, %v4574
        %4576 = vmatmul.f32.gmra.mxu0 %v4543
        %v4577 = vpop.f32.mrf.mxu0
        %v4578 = vadd.f32 0.0, %v4577
        %4579 = vmatmul.f32.gmra.mxu0 %v4545
        %v4580 = vpop.f32.mrf.mxu0
        %v4581 = vadd.f32 0.0, %v4580
        %4582 = vmatmul.f32.gmra.mxu0 %v4547
        %v4583 = vpop.f32.mrf.mxu0
        %v4584 = vadd.f32 0.0, %v4583
        %4585 = vdwg.mxu0
        %4586 = vrot.lane.b32.xlu0 %v505, 96
        %v4587 = vpop.permute.xlu0 %4586
        %4588 = vrot.lane.b32.xlu0 %v508, 96
        %v4589 = vpop.permute.xlu0 %4588
        %4590 = vrot.lane.b32.xlu0 %v511, 96
        %v4591 = vpop.permute.xlu0 %4590
        %4592 = vrot.lane.b32.xlu0 %v514, 96
        %v4593 = vpop.permute.xlu0 %4592
        %4594 = vrot.lane.b32.xlu0 %v505, 32
        %v4595 = vpop.permute.xlu0 %4594
        %4596 = vrot.lane.b32.xlu0 %v508, 32
        %v4597 = vpop.permute.xlu0 %4596
        %4598 = vrot.lane.b32.xlu0 %v511, 32
        %v4599 = vpop.permute.xlu0 %4598
        %4600 = vrot.lane.b32.xlu0 %v514, 32
        %v4601 = vpop.permute.xlu0 %4600
        %v4602 = vsel %vm670, %v4587, 0
        %v4604 = vsel %vm670, %v4589, 0
        %v4606 = vsel %vm670, %v4591, 0
        %v4608 = vsel %vm670, %v4593, 0
        %v4610 = vsel %vm670, %v4595, 0
        %v4612 = vsel %vm670, %v4597, 0
        %v4614 = vsel %vm670, %v4599, 0
        %v4616 = vsel %vm670, %v4601, 0
        %4618 = vmatpush.xpose.msra.mxu0 0.0
        %4619 = vmatpush.xpose.msra.mxu0 0.0
        %4620 = vmatpush.xpose.msra.mxu0 0.0
        %4621 = vmatpush.xpose.msra.mxu0 0.0
        %4622 = vmatpush.xpose.msra.mxu0 0.0
        %4623 = vmatpush.xpose.msra.mxu0 0.0
        %4624 = vmatpush.xpose.msra.mxu0 0.0
        %4625 = vmatpush.xpose.msra.mxu0 0.0
        %4626 = vmatpush.xpose.msra.mxu0 0.0
        %4627 = vmatpush.xpose.msra.mxu0 0.0
        %4628 = vmatpush.xpose.msra.mxu0 0.0
        %4629 = vmatpush.xpose.msra.mxu0 0.0
        %4630 = vmatpush.xpose.msra.mxu0 %v4616
        %4631 = vmatpush.xpose.msra.mxu0 %v4614
        %4632 = vmatpush.xpose.msra.mxu0 %v4612
        %4633 = vmatpush.xpose.msra.mxu0 %v4610
        %4634 = vmatmul.f32.gmra.mxu0 %v4602
        %v4635 = vpop.f32.mrf.mxu0
        %v4636 = vadd.f32 0.0, %v4635
        %4637 = vmatmul.f32.gmra.mxu0 %v4604
        %v4638 = vpop.f32.mrf.mxu0
        %v4639 = vadd.f32 0.0, %v4638
        %4640 = vmatmul.f32.gmra.mxu0 %v4606
        %v4641 = vpop.f32.mrf.mxu0
        %v4642 = vadd.f32 0.0, %v4641
        %4643 = vmatmul.f32.gmra.mxu0 %v4608
        %v4644 = vpop.f32.mrf.mxu0
        %v4645 = vadd.f32 0.0, %v4644
        %4646 = vdwg.mxu0
        %4647 = vrot.lane.b32.xlu0 %v517, 96
        %v4648 = vpop.permute.xlu0 %4647
        %4649 = vrot.lane.b32.xlu0 %v520, 96
        %v4650 = vpop.permute.xlu0 %4649
        %4651 = vrot.lane.b32.xlu0 %v523, 96
        %v4652 = vpop.permute.xlu0 %4651
        %4653 = vrot.lane.b32.xlu0 %v526, 96
        %v4654 = vpop.permute.xlu0 %4653
        %4655 = vrot.lane.b32.xlu0 %v517, 32
        %v4656 = vpop.permute.xlu0 %4655
        %4657 = vrot.lane.b32.xlu0 %v520, 32
        %v4658 = vpop.permute.xlu0 %4657
        %4659 = vrot.lane.b32.xlu0 %v523, 32
        %v4660 = vpop.permute.xlu0 %4659
        %4661 = vrot.lane.b32.xlu0 %v526, 32
        %v4662 = vpop.permute.xlu0 %4661
        %v4663 = vsel %vm670, %v4648, 0
        %v4665 = vsel %vm670, %v4650, 0
        %v4667 = vsel %vm670, %v4652, 0
        %v4669 = vsel %vm670, %v4654, 0
        %v4671 = vsel %vm670, %v4656, 0
        %v4673 = vsel %vm670, %v4658, 0
        %v4675 = vsel %vm670, %v4660, 0
        %v4677 = vsel %vm670, %v4662, 0
        %4679 = vmatpush.xpose.msra.mxu0 0.0
        %4680 = vmatpush.xpose.msra.mxu0 0.0
        %4681 = vmatpush.xpose.msra.mxu0 0.0
        %4682 = vmatpush.xpose.msra.mxu0 0.0
        %4683 = vmatpush.xpose.msra.mxu0 0.0
        %4684 = vmatpush.xpose.msra.mxu0 0.0
        %4685 = vmatpush.xpose.msra.mxu0 0.0
        %4686 = vmatpush.xpose.msra.mxu0 0.0
        %4687 = vmatpush.xpose.msra.mxu0 0.0
        %4688 = vmatpush.xpose.msra.mxu0 0.0
        %4689 = vmatpush.xpose.msra.mxu0 0.0
        %4690 = vmatpush.xpose.msra.mxu0 0.0
        %4691 = vmatpush.xpose.msra.mxu0 %v4677
        %4692 = vmatpush.xpose.msra.mxu0 %v4675
        %4693 = vmatpush.xpose.msra.mxu0 %v4673
        %4694 = vmatpush.xpose.msra.mxu0 %v4671
        %4695 = vmatmul.f32.gmra.mxu0 %v4663
        %v4696 = vpop.f32.mrf.mxu0
        %v4697 = vadd.f32 0.0, %v4696
        %4698 = vmatmul.f32.gmra.mxu0 %v4665
        %v4699 = vpop.f32.mrf.mxu0
        %v4700 = vadd.f32 0.0, %v4699
        %4701 = vmatmul.f32.gmra.mxu0 %v4667
        %v4702 = vpop.f32.mrf.mxu0
        %v4703 = vadd.f32 0.0, %v4702
        %4704 = vmatmul.f32.gmra.mxu0 %v4669
        %v4705 = vpop.f32.mrf.mxu0
        %v4706 = vadd.f32 0.0, %v4705
        %4707 = vdwg.mxu0
        %4708 = vrot.lane.b32.xlu0 %v529, 96
        %v4709 = vpop.permute.xlu0 %4708
        %4710 = vrot.lane.b32.xlu0 %v532, 96
        %v4711 = vpop.permute.xlu0 %4710
        %4712 = vrot.lane.b32.xlu0 %v535, 96
        %v4713 = vpop.permute.xlu0 %4712
        %4714 = vrot.lane.b32.xlu0 %v538, 96
        %v4715 = vpop.permute.xlu0 %4714
        %4716 = vrot.lane.b32.xlu0 %v529, 32
        %v4717 = vpop.permute.xlu0 %4716
        %4718 = vrot.lane.b32.xlu0 %v532, 32
        %v4719 = vpop.permute.xlu0 %4718
        %4720 = vrot.lane.b32.xlu0 %v535, 32
        %v4721 = vpop.permute.xlu0 %4720
        %4722 = vrot.lane.b32.xlu0 %v538, 32
        %v4723 = vpop.permute.xlu0 %4722
        %v4724 = vsel %vm670, %v4709, 0
        %v4726 = vsel %vm670, %v4711, 0
        %v4728 = vsel %vm670, %v4713, 0
        %v4730 = vsel %vm670, %v4715, 0
        %v4732 = vsel %vm670, %v4717, 0
        %v4734 = vsel %vm670, %v4719, 0
        %v4736 = vsel %vm670, %v4721, 0
        %v4738 = vsel %vm670, %v4723, 0
        %4740 = vmatpush.xpose.msra.mxu0 0.0
        %4741 = vmatpush.xpose.msra.mxu0 0.0
        %4742 = vmatpush.xpose.msra.mxu0 0.0
        %4743 = vmatpush.xpose.msra.mxu0 0.0
        %4744 = vmatpush.xpose.msra.mxu0 0.0
        %4745 = vmatpush.xpose.msra.mxu0 0.0
        %4746 = vmatpush.xpose.msra.mxu0 0.0
        %4747 = vmatpush.xpose.msra.mxu0 0.0
        %4748 = vmatpush.xpose.msra.mxu0 0.0
        %4749 = vmatpush.xpose.msra.mxu0 0.0
        %4750 = vmatpush.xpose.msra.mxu0 0.0
        %4751 = vmatpush.xpose.msra.mxu0 0.0
        %4752 = vmatpush.xpose.msra.mxu0 %v4738
        %4753 = vmatpush.xpose.msra.mxu0 %v4736
        %4754 = vmatpush.xpose.msra.mxu0 %v4734
        %4755 = vmatpush.xpose.msra.mxu0 %v4732
        %4756 = vmatmul.f32.gmra.mxu0 %v4724
        %v4757 = vpop.f32.mrf.mxu0
        %v4758 = vadd.f32 0.0, %v4757
        %4759 = vmatmul.f32.gmra.mxu0 %v4726
        %v4760 = vpop.f32.mrf.mxu0
        %v4761 = vadd.f32 0.0, %v4760
        %4762 = vmatmul.f32.gmra.mxu0 %v4728
        %v4763 = vpop.f32.mrf.mxu0
        %v4764 = vadd.f32 0.0, %v4763
        %4765 = vmatmul.f32.gmra.mxu0 %v4730
        %v4766 = vpop.f32.mrf.mxu0
        %v4767 = vadd.f32 0.0, %v4766
        %4768 = vdwg.mxu0
        %v4769 = vmul.f32 %v4331, 0.25
        %v4770 = vmul.f32 %v4334, 0.25
        %v4771 = vmul.f32 %v4337, 0.25
        %v4772 = vmul.f32 %v4340, 0.25
        %v4773 = vmul.f32 %v4392, 0.25
        %v4774 = vmul.f32 %v4395, 0.25
        %v4775 = vmul.f32 %v4398, 0.25
        %v4776 = vmul.f32 %v4401, 0.25
        %v4777 = vmul.f32 %v4453, 0.25
        %v4778 = vmul.f32 %v4456, 0.25
        %v4779 = vmul.f32 %v4459, 0.25
        %v4780 = vmul.f32 %v4462, 0.25
        %v4781 = vmul.f32 %v4514, 0.25
        %v4782 = vmul.f32 %v4517, 0.25
        %v4783 = vmul.f32 %v4520, 0.25
        %v4784 = vmul.f32 %v4523, 0.25
        %v4785 = vmul.f32 %v4575, 0.25
        %v4786 = vmul.f32 %v4578, 0.25
        %v4787 = vmul.f32 %v4581, 0.25
        %v4788 = vmul.f32 %v4584, 0.25
        %v4789 = vmul.f32 %v4636, 0.25
        %v4790 = vmul.f32 %v4639, 0.25
        %v4791 = vmul.f32 %v4642, 0.25
        %v4792 = vmul.f32 %v4645, 0.25
        %v4793 = vmul.f32 %v4697, 0.25
        %v4794 = vmul.f32 %v4700, 0.25
        %v4795 = vmul.f32 %v4703, 0.25
        %v4796 = vmul.f32 %v4706, 0.25
        %v4797 = vmul.f32 %v4758, 0.25
        %v4798 = vmul.f32 %v4761, 0.25
        %v4799 = vmul.f32 %v4764, 0.25
        %v4800 = vmul.f32 %v4767, 0.25
        %v4801 = vmul.f32 %v4769, 1.442695
        %v4802 = vpow.pop %v4801
        %v4803 = vmul.f32 %v4770, 1.442695
        %v4804 = vpow.pop %v4803
        %v4805 = vmul.f32 %v4771, 1.442695
        %v4806 = vpow.pop %v4805
        %v4807 = vmul.f32 %v4772, 1.442695
        %v4808 = vpow.pop %v4807
        %v4809 = vmul.f32 %v4773, 1.442695
        %v4810 = vpow.pop %v4809
        %v4811 = vmul.f32 %v4774, 1.442695
        %v4812 = vpow.pop %v4811
        %v4813 = vmul.f32 %v4775, 1.442695
        %v4814 = vpow.pop %v4813
        %v4815 = vmul.f32 %v4776, 1.442695
        %v4816 = vpow.pop %v4815
        %v4817 = vmul.f32 %v4777, 1.442695
        %v4818 = vpow.pop %v4817
        %v4819 = vmul.f32 %v4778, 1.442695
        %v4820 = vpow.pop %v4819
        %v4821 = vmul.f32 %v4779, 1.442695
        %v4822 = vpow.pop %v4821
        %v4823 = vmul.f32 %v4780, 1.442695
        %v4824 = vpow.pop %v4823
        %v4825 = vmul.f32 %v4781, 1.442695
        %v4826 = vpow.pop %v4825
        %v4827 = vmul.f32 %v4782, 1.442695
        %v4828 = vpow.pop %v4827
        %v4829 = vmul.f32 %v4783, 1.442695
        %v4830 = vpow.pop %v4829
        %v4831 = vmul.f32 %v4784, 1.442695
        %v4832 = vpow.pop %v4831
        %v4833 = vmul.f32 %v4785, 1.442695
        %v4834 = vpow.pop %v4833
        %v4835 = vmul.f32 %v4786, 1.442695
        %v4836 = vpow.pop %v4835
        %v4837 = vmul.f32 %v4787, 1.442695
        %v4838 = vpow.pop %v4837
        %v4839 = vmul.f32 %v4788, 1.442695
        %v4840 = vpow.pop %v4839
        %v4841 = vmul.f32 %v4789, 1.442695
        %v4842 = vpow.pop %v4841
        %v4843 = vmul.f32 %v4790, 1.442695
        %v4844 = vpow.pop %v4843
        %v4845 = vmul.f32 %v4791, 1.442695
        %v4846 = vpow.pop %v4845
        %v4847 = vmul.f32 %v4792, 1.442695
        %v4848 = vpow.pop %v4847
        %v4849 = vmul.f32 %v4793, 1.442695
        %v4850 = vpow.pop %v4849
        %v4851 = vmul.f32 %v4794, 1.442695
        %v4852 = vpow.pop %v4851
        %v4853 = vmul.f32 %v4795, 1.442695
        %v4854 = vpow.pop %v4853
        %v4855 = vmul.f32 %v4796, 1.442695
        %v4856 = vpow.pop %v4855
        %v4857 = vmul.f32 %v4797, 1.442695
        %v4858 = vpow.pop %v4857
        %v4859 = vmul.f32 %v4798, 1.442695
        %v4860 = vpow.pop %v4859
        %v4861 = vmul.f32 %v4799, 1.442695
        %v4862 = vpow.pop %v4861
        %v4863 = vmul.f32 %v4800, 1.442695
        %v4864 = vpow.pop %v4863
        %v4865 = vmul.f32 %v4802, %v657
        %v4866 = vmul.f32 %v4804, %v657
        %v4867 = vmul.f32 %v4806, %v657
        %v4868 = vmul.f32 %v4808, %v657
        %v4869 = vmul.f32 %v4810, %v657
        %v4870 = vmul.f32 %v4812, %v657
        %v4871 = vmul.f32 %v4814, %v657
        %v4872 = vmul.f32 %v4816, %v657
        %v4873 = vmul.f32 %v4818, %v657
        %v4874 = vmul.f32 %v4820, %v657
        %v4875 = vmul.f32 %v4822, %v657
        %v4876 = vmul.f32 %v4824, %v657
        %v4877 = vmul.f32 %v4826, %v657
        %v4878 = vmul.f32 %v4828, %v657
        %v4879 = vmul.f32 %v4830, %v657
        %v4880 = vmul.f32 %v4832, %v657
        %v4881 = vmul.f32 %v4834, %v657
        %v4882 = vmul.f32 %v4836, %v657
        %v4883 = vmul.f32 %v4838, %v657
        %v4884 = vmul.f32 %v4840, %v657
        %v4885 = vmul.f32 %v4842, %v657
        %v4886 = vmul.f32 %v4844, %v657
        %v4887 = vmul.f32 %v4846, %v657
        %v4888 = vmul.f32 %v4848, %v657
        %v4889 = vmul.f32 %v4850, %v657
        %v4890 = vmul.f32 %v4852, %v657
        %v4891 = vmul.f32 %v4854, %v657
        %v4892 = vmul.f32 %v4856, %v657
        %v4893 = vmul.f32 %v4858, %v657
        %v4894 = vmul.f32 %v4860, %v657
        %v4895 = vmul.f32 %v4862, %v657
        %v4896 = vmul.f32 %v4864, %v657
        %v4897 = vsel %vm330, %v4865, 0.0
        %4898 = vadd.xlane.f32.xlu0 %v4897
        %v4899 = vpop.xlane.xlu0 %4898
        %v4900 = vsel %vm330, %v4866, 0.0
        %4901 = vadd.xlane.f32.xlu0 %v4900
        %v4902 = vpop.xlane.xlu0 %4901
        %v4903 = vsel %vm330, %v4867, 0.0
        %4904 = vadd.xlane.f32.xlu0 %v4903
        %v4905 = vpop.xlane.xlu0 %4904
        %v4906 = vsel %vm330, %v4868, 0.0
        %4907 = vadd.xlane.f32.xlu0 %v4906
        %v4908 = vpop.xlane.xlu0 %4907
        %v4909 = vsel %vm330, %v4869, 0.0
        %4910 = vadd.xlane.f32.xlu0 %v4909
        %v4911 = vpop.xlane.xlu0 %4910
        %v4912 = vsel %vm330, %v4870, 0.0
        %4913 = vadd.xlane.f32.xlu0 %v4912
        %v4914 = vpop.xlane.xlu0 %4913
        %v4915 = vsel %vm330, %v4871, 0.0
        %4916 = vadd.xlane.f32.xlu0 %v4915
        %v4917 = vpop.xlane.xlu0 %4916
        %v4918 = vsel %vm330, %v4872, 0.0
        %4919 = vadd.xlane.f32.xlu0 %v4918
        %v4920 = vpop.xlane.xlu0 %4919
        %v4921 = vsel %vm330, %v4873, 0.0
        %4922 = vadd.xlane.f32.xlu0 %v4921
        %v4923 = vpop.xlane.xlu0 %4922
        %v4924 = vsel %vm330, %v4874, 0.0
        %4925 = vadd.xlane.f32.xlu0 %v4924
        %v4926 = vpop.xlane.xlu0 %4925
        %v4927 = vsel %vm330, %v4875, 0.0
        %4928 = vadd.xlane.f32.xlu0 %v4927
        %v4929 = vpop.xlane.xlu0 %4928
        %v4930 = vsel %vm330, %v4876, 0.0
        %4931 = vadd.xlane.f32.xlu0 %v4930
        %v4932 = vpop.xlane.xlu0 %4931
        %v4933 = vsel %vm330, %v4877, 0.0
        %4934 = vadd.xlane.f32.xlu0 %v4933
        %v4935 = vpop.xlane.xlu0 %4934
        %v4936 = vsel %vm330, %v4878, 0.0
        %4937 = vadd.xlane.f32.xlu0 %v4936
        %v4938 = vpop.xlane.xlu0 %4937
        %v4939 = vsel %vm330, %v4879, 0.0
        %4940 = vadd.xlane.f32.xlu0 %v4939
        %v4941 = vpop.xlane.xlu0 %4940
        %v4942 = vsel %vm330, %v4880, 0.0
        %4943 = vadd.xlane.f32.xlu0 %v4942
        %v4944 = vpop.xlane.xlu0 %4943
        %v4945 = vsel %vm330, %v4881, 0.0
        %4946 = vadd.xlane.f32.xlu0 %v4945
        %v4947 = vpop.xlane.xlu0 %4946
        %v4948 = vsel %vm330, %v4882, 0.0
        %4949 = vadd.xlane.f32.xlu0 %v4948
        %v4950 = vpop.xlane.xlu0 %4949
        %v4951 = vsel %vm330, %v4883, 0.0
        %4952 = vadd.xlane.f32.xlu0 %v4951
        %v4953 = vpop.xlane.xlu0 %4952
        %v4954 = vsel %vm330, %v4884, 0.0
        %4955 = vadd.xlane.f32.xlu0 %v4954
        %v4956 = vpop.xlane.xlu0 %4955
        %v4957 = vsel %vm330, %v4885, 0.0
        %4958 = vadd.xlane.f32.xlu0 %v4957
        %v4959 = vpop.xlane.xlu0 %4958
        %v4960 = vsel %vm330, %v4886, 0.0
        %4961 = vadd.xlane.f32.xlu0 %v4960
        %v4962 = vpop.xlane.xlu0 %4961
        %v4963 = vsel %vm330, %v4887, 0.0
        %4964 = vadd.xlane.f32.xlu0 %v4963
        %v4965 = vpop.xlane.xlu0 %4964
        %v4966 = vsel %vm330, %v4888, 0.0
        %4967 = vadd.xlane.f32.xlu0 %v4966
        %v4968 = vpop.xlane.xlu0 %4967
        %v4969 = vsel %vm330, %v4889, 0.0
        %4970 = vadd.xlane.f32.xlu0 %v4969
        %v4971 = vpop.xlane.xlu0 %4970
        %v4972 = vsel %vm330, %v4890, 0.0
        %4973 = vadd.xlane.f32.xlu0 %v4972
        %v4974 = vpop.xlane.xlu0 %4973
        %v4975 = vsel %vm330, %v4891, 0.0
        %4976 = vadd.xlane.f32.xlu0 %v4975
        %v4977 = vpop.xlane.xlu0 %4976
        %v4978 = vsel %vm330, %v4892, 0.0
        %4979 = vadd.xlane.f32.xlu0 %v4978
        %v4980 = vpop.xlane.xlu0 %4979
        %v4981 = vsel %vm330, %v4893, 0.0
        %4982 = vadd.xlane.f32.xlu0 %v4981
        %v4983 = vpop.xlane.xlu0 %4982
        %v4984 = vsel %vm330, %v4894, 0.0
        %4985 = vadd.xlane.f32.xlu0 %v4984
        %v4986 = vpop.xlane.xlu0 %4985
        %v4987 = vsel %vm330, %v4895, 0.0
        %4988 = vadd.xlane.f32.xlu0 %v4987
        %v4989 = vpop.xlane.xlu0 %4988
        %v4990 = vsel %vm330, %v4896, 0.0
        %4991 = vadd.xlane.f32.xlu0 %v4990
        %v4992 = vpop.xlane.xlu0 %4991
        %v4993 = vadd.f32 %v4899, 1e-08
        %v4994 = vadd.f32 %v4902, 1e-08
        %v4995 = vadd.f32 %v4905, 1e-08
        %v4996 = vadd.f32 %v4908, 1e-08
        %v4997 = vadd.f32 %v4911, 1e-08
        %v4998 = vadd.f32 %v4914, 1e-08
        %v4999 = vadd.f32 %v4917, 1e-08
        %v5000 = vadd.f32 %v4920, 1e-08
        %v5001 = vadd.f32 %v4923, 1e-08
        %v5002 = vadd.f32 %v4926, 1e-08
        %v5003 = vadd.f32 %v4929, 1e-08
        %v5004 = vadd.f32 %v4932, 1e-08
        %v5005 = vadd.f32 %v4935, 1e-08
        %v5006 = vadd.f32 %v4938, 1e-08
        %v5007 = vadd.f32 %v4941, 1e-08
        %v5008 = vadd.f32 %v4944, 1e-08
        %v5009 = vadd.f32 %v4947, 1e-08
        %v5010 = vadd.f32 %v4950, 1e-08
        %v5011 = vadd.f32 %v4953, 1e-08
        %v5012 = vadd.f32 %v4956, 1e-08
        %v5013 = vadd.f32 %v4959, 1e-08
        %v5014 = vadd.f32 %v4962, 1e-08
        %v5015 = vadd.f32 %v4965, 1e-08
        %v5016 = vadd.f32 %v4968, 1e-08
        %v5017 = vadd.f32 %v4971, 1e-08
        %v5018 = vadd.f32 %v4974, 1e-08
        %v5019 = vadd.f32 %v4977, 1e-08
        %v5020 = vadd.f32 %v4980, 1e-08
        %v5021 = vadd.f32 %v4983, 1e-08
        %v5022 = vadd.f32 %v4986, 1e-08
        %v5023 = vadd.f32 %v4989, 1e-08
        %v5024 = vadd.f32 %v4992, 1e-08
        %v5025 = vrcp.pop %v4993
        %v5026 = vmul.f32 %v4993, %v5025
        %v5027 = vsub.f32 1.0, %v5026
        %v5028 = vmul.f32 %v5025, %v5027
        %v5029 = vadd.f32 %v5025, %v5028
        %vm5030 = vweird.f32 %v4993
        %vm5031 = vweird.f32 %v5025
        %vm5032 = vmor %vm5030, %vm5031
        %v5033 = vsel %vm5032, %v5025, %v5029
        %v5034 = vand.u32 2147483647, %v4993
        %vm5035 = vcmp.eq.f32.partialorder %v5034, 8.507059e+37
        %v5036 = vand.u32 %v4993, 2147483648
        %v5037 = vor.u32 1.1754944e-38, %v5036
        %v5038 = vsel %vm5035, %v5037, %v5033
        %v5039 = vmul.f32 %v4865, %v5038
        %v5040 = vrcp.pop %v4994
        %v5041 = vmul.f32 %v4994, %v5040
        %v5042 = vsub.f32 1.0, %v5041
        %v5043 = vmul.f32 %v5040, %v5042
        %v5044 = vadd.f32 %v5040, %v5043
        %vm5045 = vweird.f32 %v4994
        %vm5046 = vweird.f32 %v5040
        %vm5047 = vmor %vm5045, %vm5046
        %v5048 = vsel %vm5047, %v5040, %v5044
        %v5049 = vand.u32 2147483647, %v4994
        %vm5050 = vcmp.eq.f32.partialorder %v5049, 8.507059e+37
        %v5051 = vand.u32 %v4994, 2147483648
        %v5052 = vor.u32 1.1754944e-38, %v5051
        %v5053 = vsel %vm5050, %v5052, %v5048
        %v5054 = vmul.f32 %v4866, %v5053
        %v5055 = vrcp.pop %v4995
        %v5056 = vmul.f32 %v4995, %v5055
        %v5057 = vsub.f32 1.0, %v5056
        %v5058 = vmul.f32 %v5055, %v5057
        %v5059 = vadd.f32 %v5055, %v5058
        %vm5060 = vweird.f32 %v4995
        %vm5061 = vweird.f32 %v5055
        %vm5062 = vmor %vm5060, %vm5061
        %v5063 = vsel %vm5062, %v5055, %v5059
        %v5064 = vand.u32 2147483647, %v4995
        %vm5065 = vcmp.eq.f32.partialorder %v5064, 8.507059e+37
        %v5066 = vand.u32 %v4995, 2147483648
        %v5067 = vor.u32 1.1754944e-38, %v5066
        %v5068 = vsel %vm5065, %v5067, %v5063
        %v5069 = vmul.f32 %v4867, %v5068
        %v5070 = vrcp.pop %v4996
        %v5071 = vmul.f32 %v4996, %v5070
        %v5072 = vsub.f32 1.0, %v5071
        %v5073 = vmul.f32 %v5070, %v5072
        %v5074 = vadd.f32 %v5070, %v5073
        %vm5075 = vweird.f32 %v4996
        %vm5076 = vweird.f32 %v5070
        %vm5077 = vmor %vm5075, %vm5076
        %v5078 = vsel %vm5077, %v5070, %v5074
        %v5079 = vand.u32 2147483647, %v4996
        %vm5080 = vcmp.eq.f32.partialorder %v5079, 8.507059e+37
        %v5081 = vand.u32 %v4996, 2147483648
        %v5082 = vor.u32 1.1754944e-38, %v5081
        %v5083 = vsel %vm5080, %v5082, %v5078
        %v5084 = vmul.f32 %v4868, %v5083
        %v5085 = vrcp.pop %v4997
        %v5086 = vmul.f32 %v4997, %v5085
        %v5087 = vsub.f32 1.0, %v5086
        %v5088 = vmul.f32 %v5085, %v5087
        %v5089 = vadd.f32 %v5085, %v5088
        %vm5090 = vweird.f32 %v4997
        %vm5091 = vweird.f32 %v5085
        %vm5092 = vmor %vm5090, %vm5091
        %v5093 = vsel %vm5092, %v5085, %v5089
        %v5094 = vand.u32 2147483647, %v4997
        %vm5095 = vcmp.eq.f32.partialorder %v5094, 8.507059e+37
        %v5096 = vand.u32 %v4997, 2147483648
        %v5097 = vor.u32 1.1754944e-38, %v5096
        %v5098 = vsel %vm5095, %v5097, %v5093
        %v5099 = vmul.f32 %v4869, %v5098
        %v5100 = vrcp.pop %v4998
        %v5101 = vmul.f32 %v4998, %v5100
        %v5102 = vsub.f32 1.0, %v5101
        %v5103 = vmul.f32 %v5100, %v5102
        %v5104 = vadd.f32 %v5100, %v5103
        %vm5105 = vweird.f32 %v4998
        %vm5106 = vweird.f32 %v5100
        %vm5107 = vmor %vm5105, %vm5106
        %v5108 = vsel %vm5107, %v5100, %v5104
        %v5109 = vand.u32 2147483647, %v4998
        %vm5110 = vcmp.eq.f32.partialorder %v5109, 8.507059e+37
        %v5111 = vand.u32 %v4998, 2147483648
        %v5112 = vor.u32 1.1754944e-38, %v5111
        %v5113 = vsel %vm5110, %v5112, %v5108
        %v5114 = vmul.f32 %v4870, %v5113
        %v5115 = vrcp.pop %v4999
        %v5116 = vmul.f32 %v4999, %v5115
        %v5117 = vsub.f32 1.0, %v5116
        %v5118 = vmul.f32 %v5115, %v5117
        %v5119 = vadd.f32 %v5115, %v5118
        %vm5120 = vweird.f32 %v4999
        %vm5121 = vweird.f32 %v5115
        %vm5122 = vmor %vm5120, %vm5121
        %v5123 = vsel %vm5122, %v5115, %v5119
        %v5124 = vand.u32 2147483647, %v4999
        %vm5125 = vcmp.eq.f32.partialorder %v5124, 8.507059e+37
        %v5126 = vand.u32 %v4999, 2147483648
        %v5127 = vor.u32 1.1754944e-38, %v5126
        %v5128 = vsel %vm5125, %v5127, %v5123
        %v5129 = vmul.f32 %v4871, %v5128
        %v5130 = vrcp.pop %v5000
        %v5131 = vmul.f32 %v5000, %v5130
        %v5132 = vsub.f32 1.0, %v5131
        %v5133 = vmul.f32 %v5130, %v5132
        %v5134 = vadd.f32 %v5130, %v5133
        %vm5135 = vweird.f32 %v5000
        %vm5136 = vweird.f32 %v5130
        %vm5137 = vmor %vm5135, %vm5136
        %v5138 = vsel %vm5137, %v5130, %v5134
        %v5139 = vand.u32 2147483647, %v5000
        %vm5140 = vcmp.eq.f32.partialorder %v5139, 8.507059e+37
        %v5141 = vand.u32 %v5000, 2147483648
        %v5142 = vor.u32 1.1754944e-38, %v5141
        %v5143 = vsel %vm5140, %v5142, %v5138
        %v5144 = vmul.f32 %v4872, %v5143
        %v5145 = vrcp.pop %v5001
        %v5146 = vmul.f32 %v5001, %v5145
        %v5147 = vsub.f32 1.0, %v5146
        %v5148 = vmul.f32 %v5145, %v5147
        %v5149 = vadd.f32 %v5145, %v5148
        %vm5150 = vweird.f32 %v5001
        %vm5151 = vweird.f32 %v5145
        %vm5152 = vmor %vm5150, %vm5151
        %v5153 = vsel %vm5152, %v5145, %v5149
        %v5154 = vand.u32 2147483647, %v5001
        %vm5155 = vcmp.eq.f32.partialorder %v5154, 8.507059e+37
        %v5156 = vand.u32 %v5001, 2147483648
        %v5157 = vor.u32 1.1754944e-38, %v5156
        %v5158 = vsel %vm5155, %v5157, %v5153
        %v5159 = vmul.f32 %v4873, %v5158
        %v5160 = vrcp.pop %v5002
        %v5161 = vmul.f32 %v5002, %v5160
        %v5162 = vsub.f32 1.0, %v5161
        %v5163 = vmul.f32 %v5160, %v5162
        %v5164 = vadd.f32 %v5160, %v5163
        %vm5165 = vweird.f32 %v5002
        %vm5166 = vweird.f32 %v5160
        %vm5167 = vmor %vm5165, %vm5166
        %v5168 = vsel %vm5167, %v5160, %v5164
        %v5169 = vand.u32 2147483647, %v5002
        %vm5170 = vcmp.eq.f32.partialorder %v5169, 8.507059e+37
        %v5171 = vand.u32 %v5002, 2147483648
        %v5172 = vor.u32 1.1754944e-38, %v5171
        %v5173 = vsel %vm5170, %v5172, %v5168
        %v5174 = vmul.f32 %v4874, %v5173
        %v5175 = vrcp.pop %v5003
        %v5176 = vmul.f32 %v5003, %v5175
        %v5177 = vsub.f32 1.0, %v5176
        %v5178 = vmul.f32 %v5175, %v5177
        %v5179 = vadd.f32 %v5175, %v5178
        %vm5180 = vweird.f32 %v5003
        %vm5181 = vweird.f32 %v5175
        %vm5182 = vmor %vm5180, %vm5181
        %v5183 = vsel %vm5182, %v5175, %v5179
        %v5184 = vand.u32 2147483647, %v5003
        %vm5185 = vcmp.eq.f32.partialorder %v5184, 8.507059e+37
        %v5186 = vand.u32 %v5003, 2147483648
        %v5187 = vor.u32 1.1754944e-38, %v5186
        %v5188 = vsel %vm5185, %v5187, %v5183
        %v5189 = vmul.f32 %v4875, %v5188
        %v5190 = vrcp.pop %v5004
        %v5191 = vmul.f32 %v5004, %v5190
        %v5192 = vsub.f32 1.0, %v5191
        %v5193 = vmul.f32 %v5190, %v5192
        %v5194 = vadd.f32 %v5190, %v5193
        %vm5195 = vweird.f32 %v5004
        %vm5196 = vweird.f32 %v5190
        %vm5197 = vmor %vm5195, %vm5196
        %v5198 = vsel %vm5197, %v5190, %v5194
        %v5199 = vand.u32 2147483647, %v5004
        %vm5200 = vcmp.eq.f32.partialorder %v5199, 8.507059e+37
        %v5201 = vand.u32 %v5004, 2147483648
        %v5202 = vor.u32 1.1754944e-38, %v5201
        %v5203 = vsel %vm5200, %v5202, %v5198
        %v5204 = vmul.f32 %v4876, %v5203
        %v5205 = vrcp.pop %v5005
        %v5206 = vmul.f32 %v5005, %v5205
        %v5207 = vsub.f32 1.0, %v5206
        %v5208 = vmul.f32 %v5205, %v5207
        %v5209 = vadd.f32 %v5205, %v5208
        %vm5210 = vweird.f32 %v5005
        %vm5211 = vweird.f32 %v5205
        %vm5212 = vmor %vm5210, %vm5211
        %v5213 = vsel %vm5212, %v5205, %v5209
        %v5214 = vand.u32 2147483647, %v5005
        %vm5215 = vcmp.eq.f32.partialorder %v5214, 8.507059e+37
        %v5216 = vand.u32 %v5005, 2147483648
        %v5217 = vor.u32 1.1754944e-38, %v5216
        %v5218 = vsel %vm5215, %v5217, %v5213
        %v5219 = vmul.f32 %v4877, %v5218
        %v5220 = vrcp.pop %v5006
        %v5221 = vmul.f32 %v5006, %v5220
        %v5222 = vsub.f32 1.0, %v5221
        %v5223 = vmul.f32 %v5220, %v5222
        %v5224 = vadd.f32 %v5220, %v5223
        %vm5225 = vweird.f32 %v5006
        %vm5226 = vweird.f32 %v5220
        %vm5227 = vmor %vm5225, %vm5226
        %v5228 = vsel %vm5227, %v5220, %v5224
        %v5229 = vand.u32 2147483647, %v5006
        %vm5230 = vcmp.eq.f32.partialorder %v5229, 8.507059e+37
        %v5231 = vand.u32 %v5006, 2147483648
        %v5232 = vor.u32 1.1754944e-38, %v5231
        %v5233 = vsel %vm5230, %v5232, %v5228
        %v5234 = vmul.f32 %v4878, %v5233
        %v5235 = vrcp.pop %v5007
        %v5236 = vmul.f32 %v5007, %v5235
        %v5237 = vsub.f32 1.0, %v5236
        %v5238 = vmul.f32 %v5235, %v5237
        %v5239 = vadd.f32 %v5235, %v5238
        %vm5240 = vweird.f32 %v5007
        %vm5241 = vweird.f32 %v5235
        %vm5242 = vmor %vm5240, %vm5241
        %v5243 = vsel %vm5242, %v5235, %v5239
        %v5244 = vand.u32 2147483647, %v5007
        %vm5245 = vcmp.eq.f32.partialorder %v5244, 8.507059e+37
        %v5246 = vand.u32 %v5007, 2147483648
        %v5247 = vor.u32 1.1754944e-38, %v5246
        %v5248 = vsel %vm5245, %v5247, %v5243
        %v5249 = vmul.f32 %v4879, %v5248
        %v5250 = vrcp.pop %v5008
        %v5251 = vmul.f32 %v5008, %v5250
        %v5252 = vsub.f32 1.0, %v5251
        %v5253 = vmul.f32 %v5250, %v5252
        %v5254 = vadd.f32 %v5250, %v5253
        %vm5255 = vweird.f32 %v5008
        %vm5256 = vweird.f32 %v5250
        %vm5257 = vmor %vm5255, %vm5256
        %v5258 = vsel %vm5257, %v5250, %v5254
        %v5259 = vand.u32 2147483647, %v5008
        %vm5260 = vcmp.eq.f32.partialorder %v5259, 8.507059e+37
        %v5261 = vand.u32 %v5008, 2147483648
        %v5262 = vor.u32 1.1754944e-38, %v5261
        %v5263 = vsel %vm5260, %v5262, %v5258
        %v5264 = vmul.f32 %v4880, %v5263
        %v5265 = vrcp.pop %v5009
        %v5266 = vmul.f32 %v5009, %v5265
        %v5267 = vsub.f32 1.0, %v5266
        %v5268 = vmul.f32 %v5265, %v5267
        %v5269 = vadd.f32 %v5265, %v5268
        %vm5270 = vweird.f32 %v5009
        %vm5271 = vweird.f32 %v5265
        %vm5272 = vmor %vm5270, %vm5271
        %v5273 = vsel %vm5272, %v5265, %v5269
        %v5274 = vand.u32 2147483647, %v5009
        %vm5275 = vcmp.eq.f32.partialorder %v5274, 8.507059e+37
        %v5276 = vand.u32 %v5009, 2147483648
        %v5277 = vor.u32 1.1754944e-38, %v5276
        %v5278 = vsel %vm5275, %v5277, %v5273
        %v5279 = vmul.f32 %v4881, %v5278
        %v5280 = vrcp.pop %v5010
        %v5281 = vmul.f32 %v5010, %v5280
        %v5282 = vsub.f32 1.0, %v5281
        %v5283 = vmul.f32 %v5280, %v5282
        %v5284 = vadd.f32 %v5280, %v5283
        %vm5285 = vweird.f32 %v5010
        %vm5286 = vweird.f32 %v5280
        %vm5287 = vmor %vm5285, %vm5286
        %v5288 = vsel %vm5287, %v5280, %v5284
        %v5289 = vand.u32 2147483647, %v5010
        %vm5290 = vcmp.eq.f32.partialorder %v5289, 8.507059e+37
        %v5291 = vand.u32 %v5010, 2147483648
        %v5292 = vor.u32 1.1754944e-38, %v5291
        %v5293 = vsel %vm5290, %v5292, %v5288
        %v5294 = vmul.f32 %v4882, %v5293
        %v5295 = vrcp.pop %v5011
        %v5296 = vmul.f32 %v5011, %v5295
        %v5297 = vsub.f32 1.0, %v5296
        %v5298 = vmul.f32 %v5295, %v5297
        %v5299 = vadd.f32 %v5295, %v5298
        %vm5300 = vweird.f32 %v5011
        %vm5301 = vweird.f32 %v5295
        %vm5302 = vmor %vm5300, %vm5301
        %v5303 = vsel %vm5302, %v5295, %v5299
        %v5304 = vand.u32 2147483647, %v5011
        %vm5305 = vcmp.eq.f32.partialorder %v5304, 8.507059e+37
        %v5306 = vand.u32 %v5011, 2147483648
        %v5307 = vor.u32 1.1754944e-38, %v5306
        %v5308 = vsel %vm5305, %v5307, %v5303
        %v5309 = vmul.f32 %v4883, %v5308
        %v5310 = vrcp.pop %v5012
        %v5311 = vmul.f32 %v5012, %v5310
        %v5312 = vsub.f32 1.0, %v5311
        %v5313 = vmul.f32 %v5310, %v5312
        %v5314 = vadd.f32 %v5310, %v5313
        %vm5315 = vweird.f32 %v5012
        %vm5316 = vweird.f32 %v5310
        %vm5317 = vmor %vm5315, %vm5316
        %v5318 = vsel %vm5317, %v5310, %v5314
        %v5319 = vand.u32 2147483647, %v5012
        %vm5320 = vcmp.eq.f32.partialorder %v5319, 8.507059e+37
        %v5321 = vand.u32 %v5012, 2147483648
        %v5322 = vor.u32 1.1754944e-38, %v5321
        %v5323 = vsel %vm5320, %v5322, %v5318
        %v5324 = vmul.f32 %v4884, %v5323
        %v5325 = vrcp.pop %v5013
        %v5326 = vmul.f32 %v5013, %v5325
        %v5327 = vsub.f32 1.0, %v5326
        %v5328 = vmul.f32 %v5325, %v5327
        %v5329 = vadd.f32 %v5325, %v5328
        %vm5330 = vweird.f32 %v5013
        %vm5331 = vweird.f32 %v5325
        %vm5332 = vmor %vm5330, %vm5331
        %v5333 = vsel %vm5332, %v5325, %v5329
        %v5334 = vand.u32 2147483647, %v5013
        %vm5335 = vcmp.eq.f32.partialorder %v5334, 8.507059e+37
        %v5336 = vand.u32 %v5013, 2147483648
        %v5337 = vor.u32 1.1754944e-38, %v5336
        %v5338 = vsel %vm5335, %v5337, %v5333
        %v5339 = vmul.f32 %v4885, %v5338
        %v5340 = vrcp.pop %v5014
        %v5341 = vmul.f32 %v5014, %v5340
        %v5342 = vsub.f32 1.0, %v5341
        %v5343 = vmul.f32 %v5340, %v5342
        %v5344 = vadd.f32 %v5340, %v5343
        %vm5345 = vweird.f32 %v5014
        %vm5346 = vweird.f32 %v5340
        %vm5347 = vmor %vm5345, %vm5346
        %v5348 = vsel %vm5347, %v5340, %v5344
        %v5349 = vand.u32 2147483647, %v5014
        %vm5350 = vcmp.eq.f32.partialorder %v5349, 8.507059e+37
        %v5351 = vand.u32 %v5014, 2147483648
        %v5352 = vor.u32 1.1754944e-38, %v5351
        %v5353 = vsel %vm5350, %v5352, %v5348
        %v5354 = vmul.f32 %v4886, %v5353
        %v5355 = vrcp.pop %v5015
        %v5356 = vmul.f32 %v5015, %v5355
        %v5357 = vsub.f32 1.0, %v5356
        %v5358 = vmul.f32 %v5355, %v5357
        %v5359 = vadd.f32 %v5355, %v5358
        %vm5360 = vweird.f32 %v5015
        %vm5361 = vweird.f32 %v5355
        %vm5362 = vmor %vm5360, %vm5361
        %v5363 = vsel %vm5362, %v5355, %v5359
        %v5364 = vand.u32 2147483647, %v5015
        %vm5365 = vcmp.eq.f32.partialorder %v5364, 8.507059e+37
        %v5366 = vand.u32 %v5015, 2147483648
        %v5367 = vor.u32 1.1754944e-38, %v5366
        %v5368 = vsel %vm5365, %v5367, %v5363
        %v5369 = vmul.f32 %v4887, %v5368
        %v5370 = vrcp.pop %v5016
        %v5371 = vmul.f32 %v5016, %v5370
        %v5372 = vsub.f32 1.0, %v5371
        %v5373 = vmul.f32 %v5370, %v5372
        %v5374 = vadd.f32 %v5370, %v5373
        %vm5375 = vweird.f32 %v5016
        %vm5376 = vweird.f32 %v5370
        %vm5377 = vmor %vm5375, %vm5376
        %v5378 = vsel %vm5377, %v5370, %v5374
        %v5379 = vand.u32 2147483647, %v5016
        %vm5380 = vcmp.eq.f32.partialorder %v5379, 8.507059e+37
        %v5381 = vand.u32 %v5016, 2147483648
        %v5382 = vor.u32 1.1754944e-38, %v5381
        %v5383 = vsel %vm5380, %v5382, %v5378
        %v5384 = vmul.f32 %v4888, %v5383
        %v5385 = vrcp.pop %v5017
        %v5386 = vmul.f32 %v5017, %v5385
        %v5387 = vsub.f32 1.0, %v5386
        %v5388 = vmul.f32 %v5385, %v5387
        %v5389 = vadd.f32 %v5385, %v5388
        %vm5390 = vweird.f32 %v5017
        %vm5391 = vweird.f32 %v5385
        %vm5392 = vmor %vm5390, %vm5391
        %v5393 = vsel %vm5392, %v5385, %v5389
        %v5394 = vand.u32 2147483647, %v5017
        %vm5395 = vcmp.eq.f32.partialorder %v5394, 8.507059e+37
        %v5396 = vand.u32 %v5017, 2147483648
        %v5397 = vor.u32 1.1754944e-38, %v5396
        %v5398 = vsel %vm5395, %v5397, %v5393
        %v5399 = vmul.f32 %v4889, %v5398
        %v5400 = vrcp.pop %v5018
        %v5401 = vmul.f32 %v5018, %v5400
        %v5402 = vsub.f32 1.0, %v5401
        %v5403 = vmul.f32 %v5400, %v5402
        %v5404 = vadd.f32 %v5400, %v5403
        %vm5405 = vweird.f32 %v5018
        %vm5406 = vweird.f32 %v5400
        %vm5407 = vmor %vm5405, %vm5406
        %v5408 = vsel %vm5407, %v5400, %v5404
        %v5409 = vand.u32 2147483647, %v5018
        %vm5410 = vcmp.eq.f32.partialorder %v5409, 8.507059e+37
        %v5411 = vand.u32 %v5018, 2147483648
        %v5412 = vor.u32 1.1754944e-38, %v5411
        %v5413 = vsel %vm5410, %v5412, %v5408
        %v5414 = vmul.f32 %v4890, %v5413
        %v5415 = vrcp.pop %v5019
        %v5416 = vmul.f32 %v5019, %v5415
        %v5417 = vsub.f32 1.0, %v5416
        %v5418 = vmul.f32 %v5415, %v5417
        %v5419 = vadd.f32 %v5415, %v5418
        %vm5420 = vweird.f32 %v5019
        %vm5421 = vweird.f32 %v5415
        %vm5422 = vmor %vm5420, %vm5421
        %v5423 = vsel %vm5422, %v5415, %v5419
        %v5424 = vand.u32 2147483647, %v5019
        %vm5425 = vcmp.eq.f32.partialorder %v5424, 8.507059e+37
        %v5426 = vand.u32 %v5019, 2147483648
        %v5427 = vor.u32 1.1754944e-38, %v5426
        %v5428 = vsel %vm5425, %v5427, %v5423
        %v5429 = vmul.f32 %v4891, %v5428
        %v5430 = vrcp.pop %v5020
        %v5431 = vmul.f32 %v5020, %v5430
        %v5432 = vsub.f32 1.0, %v5431
        %v5433 = vmul.f32 %v5430, %v5432
        %v5434 = vadd.f32 %v5430, %v5433
        %vm5435 = vweird.f32 %v5020
        %vm5436 = vweird.f32 %v5430
        %vm5437 = vmor %vm5435, %vm5436
        %v5438 = vsel %vm5437, %v5430, %v5434
        %v5439 = vand.u32 2147483647, %v5020
        %vm5440 = vcmp.eq.f32.partialorder %v5439, 8.507059e+37
        %v5441 = vand.u32 %v5020, 2147483648
        %v5442 = vor.u32 1.1754944e-38, %v5441
        %v5443 = vsel %vm5440, %v5442, %v5438
        %v5444 = vmul.f32 %v4892, %v5443
        %v5445 = vrcp.pop %v5021
        %v5446 = vmul.f32 %v5021, %v5445
        %v5447 = vsub.f32 1.0, %v5446
        %v5448 = vmul.f32 %v5445, %v5447
        %v5449 = vadd.f32 %v5445, %v5448
        %vm5450 = vweird.f32 %v5021
        %vm5451 = vweird.f32 %v5445
        %vm5452 = vmor %vm5450, %vm5451
        %v5453 = vsel %vm5452, %v5445, %v5449
        %v5454 = vand.u32 2147483647, %v5021
        %vm5455 = vcmp.eq.f32.partialorder %v5454, 8.507059e+37
        %v5456 = vand.u32 %v5021, 2147483648
        %v5457 = vor.u32 1.1754944e-38, %v5456
        %v5458 = vsel %vm5455, %v5457, %v5453
        %v5459 = vmul.f32 %v4893, %v5458
        %v5460 = vrcp.pop %v5022
        %v5461 = vmul.f32 %v5022, %v5460
        %v5462 = vsub.f32 1.0, %v5461
        %v5463 = vmul.f32 %v5460, %v5462
        %v5464 = vadd.f32 %v5460, %v5463
        %vm5465 = vweird.f32 %v5022
        %vm5466 = vweird.f32 %v5460
        %vm5467 = vmor %vm5465, %vm5466
        %v5468 = vsel %vm5467, %v5460, %v5464
        %v5469 = vand.u32 2147483647, %v5022
        %vm5470 = vcmp.eq.f32.partialorder %v5469, 8.507059e+37
        %v5471 = vand.u32 %v5022, 2147483648
        %v5472 = vor.u32 1.1754944e-38, %v5471
        %v5473 = vsel %vm5470, %v5472, %v5468
        %v5474 = vmul.f32 %v4894, %v5473
        %v5475 = vrcp.pop %v5023
        %v5476 = vmul.f32 %v5023, %v5475
        %v5477 = vsub.f32 1.0, %v5476
        %v5478 = vmul.f32 %v5475, %v5477
        %v5479 = vadd.f32 %v5475, %v5478
        %vm5480 = vweird.f32 %v5023
        %vm5481 = vweird.f32 %v5475
        %vm5482 = vmor %vm5480, %vm5481
        %v5483 = vsel %vm5482, %v5475, %v5479
        %v5484 = vand.u32 2147483647, %v5023
        %vm5485 = vcmp.eq.f32.partialorder %v5484, 8.507059e+37
        %v5486 = vand.u32 %v5023, 2147483648
        %v5487 = vor.u32 1.1754944e-38, %v5486
        %v5488 = vsel %vm5485, %v5487, %v5483
        %v5489 = vmul.f32 %v4895, %v5488
        %v5490 = vrcp.pop %v5024
        %v5491 = vmul.f32 %v5024, %v5490
        %v5492 = vsub.f32 1.0, %v5491
        %v5493 = vmul.f32 %v5490, %v5492
        %v5494 = vadd.f32 %v5490, %v5493
        %vm5495 = vweird.f32 %v5024
        %vm5496 = vweird.f32 %v5490
        %vm5497 = vmor %vm5495, %vm5496
        %v5498 = vsel %vm5497, %v5490, %v5494
        %v5499 = vand.u32 2147483647, %v5024
        %vm5500 = vcmp.eq.f32.partialorder %v5499, 8.507059e+37
        %v5501 = vand.u32 %v5024, 2147483648
        %v5502 = vor.u32 1.1754944e-38, %v5501
        %v5503 = vsel %vm5500, %v5502, %v5498
        %v5504 = vmul.f32 %v4896, %v5503
        %5505 = vrot.lane.b32.xlu0 %v558, 96
        %v5506 = vpop.permute.xlu0 %5505
        %5507 = vrot.lane.b32.xlu0 %v561, 96
        %v5508 = vpop.permute.xlu0 %5507
        %5509 = vrot.lane.b32.xlu0 %v564, 96
        %v5510 = vpop.permute.xlu0 %5509
        %5511 = vrot.lane.b32.xlu0 %v567, 96
        %v5512 = vpop.permute.xlu0 %5511
        %v5518 = vsel %vm330, %v5039, 0
        %v5521 = vsel %vm330, %v5054, 0
        %v5524 = vsel %vm330, %v5069, 0
        %v5527 = vsel %vm330, %v5084, 0
        %5529 = vmatpush.msra.mxu0 0.0
        %5530 = vmatpush.msra.mxu0 0.0
        %5531 = vmatpush.msra.mxu0 0.0
        %5532 = vmatpush.msra.mxu0 0.0
        %5533 = vmatpush.msra.mxu0 0.0
        %5534 = vmatpush.msra.mxu0 0.0
        %5535 = vmatpush.msra.mxu0 0.0
        %5536 = vmatpush.msra.mxu0 0.0
        %5537 = vmatpush.msra.mxu0 0.0
        %5538 = vmatpush.msra.mxu0 0.0
        %5539 = vmatpush.msra.mxu0 0.0
        %5540 = vmatpush.msra.mxu0 0.0
        %5541 = vmatpush.msra.mxu0 %v5512
        %5542 = vmatpush.msra.mxu0 %v5510
        %5543 = vmatpush.msra.mxu0 %v5508
        %5544 = vmatpush.msra.mxu0 %v5506
        %5545 = vmatmul.f32.gmra.mxu0 %v5518
        %v5546 = vpop.f32.mrf.mxu0
        %v5547 = vadd.f32 0.0, %v5546
        %5548 = vmatmul.f32.gmra.mxu0 %v5521
        %v5549 = vpop.f32.mrf.mxu0
        %v5550 = vadd.f32 0.0, %v5549
        %5551 = vmatmul.f32.gmra.mxu0 %v5524
        %v5552 = vpop.f32.mrf.mxu0
        %v5553 = vadd.f32 0.0, %v5552
        %5554 = vmatmul.f32.gmra.mxu0 %v5527
        %v5555 = vpop.f32.mrf.mxu0
        %v5556 = vadd.f32 0.0, %v5555
        %5557 = vdwg.mxu0
        %5558 = vrot.lane.b32.xlu0 %v570, 96
        %v5559 = vpop.permute.xlu0 %5558
        %5560 = vrot.lane.b32.xlu0 %v573, 96
        %v5561 = vpop.permute.xlu0 %5560
        %5562 = vrot.lane.b32.xlu0 %v576, 96
        %v5563 = vpop.permute.xlu0 %5562
        %5564 = vrot.lane.b32.xlu0 %v579, 96
        %v5565 = vpop.permute.xlu0 %5564
        %v5571 = vsel %vm330, %v5099, 0
        %v5574 = vsel %vm330, %v5114, 0
        %v5577 = vsel %vm330, %v5129, 0
        %v5580 = vsel %vm330, %v5144, 0
        %5582 = vmatpush.msra.mxu0 0.0
        %5583 = vmatpush.msra.mxu0 0.0
        %5584 = vmatpush.msra.mxu0 0.0
        %5585 = vmatpush.msra.mxu0 0.0
        %5586 = vmatpush.msra.mxu0 0.0
        %5587 = vmatpush.msra.mxu0 0.0
        %5588 = vmatpush.msra.mxu0 0.0
        %5589 = vmatpush.msra.mxu0 0.0
        %5590 = vmatpush.msra.mxu0 0.0
        %5591 = vmatpush.msra.mxu0 0.0
        %5592 = vmatpush.msra.mxu0 0.0
        %5593 = vmatpush.msra.mxu0 0.0
        %5594 = vmatpush.msra.mxu0 %v5565
        %5595 = vmatpush.msra.mxu0 %v5563
        %5596 = vmatpush.msra.mxu0 %v5561
        %5597 = vmatpush.msra.mxu0 %v5559
        %5598 = vmatmul.f32.gmra.mxu0 %v5571
        %v5599 = vpop.f32.mrf.mxu0
        %v5600 = vadd.f32 0.0, %v5599
        %5601 = vmatmul.f32.gmra.mxu0 %v5574
        %v5602 = vpop.f32.mrf.mxu0
        %v5603 = vadd.f32 0.0, %v5602
        %5604 = vmatmul.f32.gmra.mxu0 %v5577
        %v5605 = vpop.f32.mrf.mxu0
        %v5606 = vadd.f32 0.0, %v5605
        %5607 = vmatmul.f32.gmra.mxu0 %v5580
        %v5608 = vpop.f32.mrf.mxu0
        %v5609 = vadd.f32 0.0, %v5608
        %5610 = vdwg.mxu0
        %5611 = vrot.lane.b32.xlu0 %v582, 96
        %v5612 = vpop.permute.xlu0 %5611
        %5613 = vrot.lane.b32.xlu0 %v585, 96
        %v5614 = vpop.permute.xlu0 %5613
        %5615 = vrot.lane.b32.xlu0 %v588, 96
        %v5616 = vpop.permute.xlu0 %5615
        %5617 = vrot.lane.b32.xlu0 %v591, 96
        %v5618 = vpop.permute.xlu0 %5617
        %v5624 = vsel %vm330, %v5159, 0
        %v5627 = vsel %vm330, %v5174, 0
        %v5630 = vsel %vm330, %v5189, 0
        %v5633 = vsel %vm330, %v5204, 0
        %5635 = vmatpush.msra.mxu0 0.0
        %5636 = vmatpush.msra.mxu0 0.0
        %5637 = vmatpush.msra.mxu0 0.0
        %5638 = vmatpush.msra.mxu0 0.0
        %5639 = vmatpush.msra.mxu0 0.0
        %5640 = vmatpush.msra.mxu0 0.0
        %5641 = vmatpush.msra.mxu0 0.0
        %5642 = vmatpush.msra.mxu0 0.0
        %5643 = vmatpush.msra.mxu0 0.0
        %5644 = vmatpush.msra.mxu0 0.0
        %5645 = vmatpush.msra.mxu0 0.0
        %5646 = vmatpush.msra.mxu0 0.0
        %5647 = vmatpush.msra.mxu0 %v5618
        %5648 = vmatpush.msra.mxu0 %v5616
        %5649 = vmatpush.msra.mxu0 %v5614
        %5650 = vmatpush.msra.mxu0 %v5612
        %5651 = vmatmul.f32.gmra.mxu0 %v5624
        %v5652 = vpop.f32.mrf.mxu0
        %v5653 = vadd.f32 0.0, %v5652
        %5654 = vmatmul.f32.gmra.mxu0 %v5627
        %v5655 = vpop.f32.mrf.mxu0
        %v5656 = vadd.f32 0.0, %v5655
        %5657 = vmatmul.f32.gmra.mxu0 %v5630
        %v5658 = vpop.f32.mrf.mxu0
        %v5659 = vadd.f32 0.0, %v5658
        %5660 = vmatmul.f32.gmra.mxu0 %v5633
        %v5661 = vpop.f32.mrf.mxu0
        %v5662 = vadd.f32 0.0, %v5661
        %5663 = vdwg.mxu0
        %5664 = vrot.lane.b32.xlu0 %v594, 96
        %v5665 = vpop.permute.xlu0 %5664
        %5666 = vrot.lane.b32.xlu0 %v597, 96
        %v5667 = vpop.permute.xlu0 %5666
        %5668 = vrot.lane.b32.xlu0 %v600, 96
        %v5669 = vpop.permute.xlu0 %5668
        %5670 = vrot.lane.b32.xlu0 %v603, 96
        %v5671 = vpop.permute.xlu0 %5670
        %v5677 = vsel %vm330, %v5219, 0
        %v5680 = vsel %vm330, %v5234, 0
        %v5683 = vsel %vm330, %v5249, 0
        %v5686 = vsel %vm330, %v5264, 0
        %5688 = vmatpush.msra.mxu0 0.0
        %5689 = vmatpush.msra.mxu0 0.0
        %5690 = vmatpush.msra.mxu0 0.0
        %5691 = vmatpush.msra.mxu0 0.0
        %5692 = vmatpush.msra.mxu0 0.0
        %5693 = vmatpush.msra.mxu0 0.0
        %5694 = vmatpush.msra.mxu0 0.0
        %5695 = vmatpush.msra.mxu0 0.0
        %5696 = vmatpush.msra.mxu0 0.0
        %5697 = vmatpush.msra.mxu0 0.0
        %5698 = vmatpush.msra.mxu0 0.0
        %5699 = vmatpush.msra.mxu0 0.0
        %5700 = vmatpush.msra.mxu0 %v5671
        %5701 = vmatpush.msra.mxu0 %v5669
        %5702 = vmatpush.msra.mxu0 %v5667
        %5703 = vmatpush.msra.mxu0 %v5665
        %5704 = vmatmul.f32.gmra.mxu0 %v5677
        %v5705 = vpop.f32.mrf.mxu0
        %v5706 = vadd.f32 0.0, %v5705
        %5707 = vmatmul.f32.gmra.mxu0 %v5680
        %v5708 = vpop.f32.mrf.mxu0
        %v5709 = vadd.f32 0.0, %v5708
        %5710 = vmatmul.f32.gmra.mxu0 %v5683
        %v5711 = vpop.f32.mrf.mxu0
        %v5712 = vadd.f32 0.0, %v5711
        %5713 = vmatmul.f32.gmra.mxu0 %v5686
        %v5714 = vpop.f32.mrf.mxu0
        %v5715 = vadd.f32 0.0, %v5714
        %5716 = vdwg.mxu0
        %5717 = vrot.lane.b32.xlu0 %v606, 96
        %v5718 = vpop.permute.xlu0 %5717
        %5719 = vrot.lane.b32.xlu0 %v609, 96
        %v5720 = vpop.permute.xlu0 %5719
        %5721 = vrot.lane.b32.xlu0 %v612, 96
        %v5722 = vpop.permute.xlu0 %5721
        %5723 = vrot.lane.b32.xlu0 %v615, 96
        %v5724 = vpop.permute.xlu0 %5723
        %v5730 = vsel %vm330, %v5279, 0
        %v5733 = vsel %vm330, %v5294, 0
        %v5736 = vsel %vm330, %v5309, 0
        %v5739 = vsel %vm330, %v5324, 0
        %5741 = vmatpush.msra.mxu0 0.0
        %5742 = vmatpush.msra.mxu0 0.0
        %5743 = vmatpush.msra.mxu0 0.0
        %5744 = vmatpush.msra.mxu0 0.0
        %5745 = vmatpush.msra.mxu0 0.0
        %5746 = vmatpush.msra.mxu0 0.0
        %5747 = vmatpush.msra.mxu0 0.0
        %5748 = vmatpush.msra.mxu0 0.0
        %5749 = vmatpush.msra.mxu0 0.0
        %5750 = vmatpush.msra.mxu0 0.0
        %5751 = vmatpush.msra.mxu0 0.0
        %5752 = vmatpush.msra.mxu0 0.0
        %5753 = vmatpush.msra.mxu0 %v5724
        %5754 = vmatpush.msra.mxu0 %v5722
        %5755 = vmatpush.msra.mxu0 %v5720
        %5756 = vmatpush.msra.mxu0 %v5718
        %5757 = vmatmul.f32.gmra.mxu0 %v5730
        %v5758 = vpop.f32.mrf.mxu0
        %v5759 = vadd.f32 0.0, %v5758
        %5760 = vmatmul.f32.gmra.mxu0 %v5733
        %v5761 = vpop.f32.mrf.mxu0
        %v5762 = vadd.f32 0.0, %v5761
        %5763 = vmatmul.f32.gmra.mxu0 %v5736
        %v5764 = vpop.f32.mrf.mxu0
        %v5765 = vadd.f32 0.0, %v5764
        %5766 = vmatmul.f32.gmra.mxu0 %v5739
        %v5767 = vpop.f32.mrf.mxu0
        %v5768 = vadd.f32 0.0, %v5767
        %5769 = vdwg.mxu0
        %5770 = vrot.lane.b32.xlu0 %v618, 96
        %v5771 = vpop.permute.xlu0 %5770
        %5772 = vrot.lane.b32.xlu0 %v621, 96
        %v5773 = vpop.permute.xlu0 %5772
        %5774 = vrot.lane.b32.xlu0 %v624, 96
        %v5775 = vpop.permute.xlu0 %5774
        %5776 = vrot.lane.b32.xlu0 %v627, 96
        %v5777 = vpop.permute.xlu0 %5776
        %v5783 = vsel %vm330, %v5339, 0
        %v5786 = vsel %vm330, %v5354, 0
        %v5789 = vsel %vm330, %v5369, 0
        %v5792 = vsel %vm330, %v5384, 0
        %5794 = vmatpush.msra.mxu0 0.0
        %5795 = vmatpush.msra.mxu0 0.0
        %5796 = vmatpush.msra.mxu0 0.0
        %5797 = vmatpush.msra.mxu0 0.0
        %5798 = vmatpush.msra.mxu0 0.0
        %5799 = vmatpush.msra.mxu0 0.0
        %5800 = vmatpush.msra.mxu0 0.0
        %5801 = vmatpush.msra.mxu0 0.0
        %5802 = vmatpush.msra.mxu0 0.0
        %5803 = vmatpush.msra.mxu0 0.0
        %5804 = vmatpush.msra.mxu0 0.0
        %5805 = vmatpush.msra.mxu0 0.0
        %5806 = vmatpush.msra.mxu0 %v5777
        %5807 = vmatpush.msra.mxu0 %v5775
        %5808 = vmatpush.msra.mxu0 %v5773
        %5809 = vmatpush.msra.mxu0 %v5771
        %5810 = vmatmul.f32.gmra.mxu0 %v5783
        %v5811 = vpop.f32.mrf.mxu0
        %v5812 = vadd.f32 0.0, %v5811
        %5813 = vmatmul.f32.gmra.mxu0 %v5786
        %v5814 = vpop.f32.mrf.mxu0
        %v5815 = vadd.f32 0.0, %v5814
        %5816 = vmatmul.f32.gmra.mxu0 %v5789
        %v5817 = vpop.f32.mrf.mxu0
        %v5818 = vadd.f32 0.0, %v5817
        %5819 = vmatmul.f32.gmra.mxu0 %v5792
        %v5820 = vpop.f32.mrf.mxu0
        %v5821 = vadd.f32 0.0, %v5820
        %5822 = vdwg.mxu0
        %5823 = vrot.lane.b32.xlu0 %v630, 96
        %v5824 = vpop.permute.xlu0 %5823
        %5825 = vrot.lane.b32.xlu0 %v633, 96
        %v5826 = vpop.permute.xlu0 %5825
        %5827 = vrot.lane.b32.xlu0 %v636, 96
        %v5828 = vpop.permute.xlu0 %5827
        %5829 = vrot.lane.b32.xlu0 %v639, 96
        %v5830 = vpop.permute.xlu0 %5829
        %v5836 = vsel %vm330, %v5399, 0
        %v5839 = vsel %vm330, %v5414, 0
        %v5842 = vsel %vm330, %v5429, 0
        %v5845 = vsel %vm330, %v5444, 0
        %5847 = vmatpush.msra.mxu0 0.0
        %5848 = vmatpush.msra.mxu0 0.0
        %5849 = vmatpush.msra.mxu0 0.0
        %5850 = vmatpush.msra.mxu0 0.0
        %5851 = vmatpush.msra.mxu0 0.0
        %5852 = vmatpush.msra.mxu0 0.0
        %5853 = vmatpush.msra.mxu0 0.0
        %5854 = vmatpush.msra.mxu0 0.0
        %5855 = vmatpush.msra.mxu0 0.0
        %5856 = vmatpush.msra.mxu0 0.0
        %5857 = vmatpush.msra.mxu0 0.0
        %5858 = vmatpush.msra.mxu0 0.0
        %5859 = vmatpush.msra.mxu0 %v5830
        %5860 = vmatpush.msra.mxu0 %v5828
        %5861 = vmatpush.msra.mxu0 %v5826
        %5862 = vmatpush.msra.mxu0 %v5824
        %5863 = vmatmul.f32.gmra.mxu0 %v5836
        %v5864 = vpop.f32.mrf.mxu0
        %v5865 = vadd.f32 0.0, %v5864
        %5866 = vmatmul.f32.gmra.mxu0 %v5839
        %v5867 = vpop.f32.mrf.mxu0
        %v5868 = vadd.f32 0.0, %v5867
        %5869 = vmatmul.f32.gmra.mxu0 %v5842
        %v5870 = vpop.f32.mrf.mxu0
        %v5871 = vadd.f32 0.0, %v5870
        %5872 = vmatmul.f32.gmra.mxu0 %v5845
        %v5873 = vpop.f32.mrf.mxu0
        %v5874 = vadd.f32 0.0, %v5873
        %5875 = vdwg.mxu0
        %5876 = vrot.lane.b32.xlu0 %v642, 96
        %v5877 = vpop.permute.xlu0 %5876
        %5878 = vrot.lane.b32.xlu0 %v645, 96
        %v5879 = vpop.permute.xlu0 %5878
        %5880 = vrot.lane.b32.xlu0 %v648, 96
        %v5881 = vpop.permute.xlu0 %5880
        %5882 = vrot.lane.b32.xlu0 %v651, 96
        %v5883 = vpop.permute.xlu0 %5882
        %v5889 = vsel %vm330, %v5459, 0
        %v5892 = vsel %vm330, %v5474, 0
        %v5895 = vsel %vm330, %v5489, 0
        %v5898 = vsel %vm330, %v5504, 0
        %5900 = vmatpush.msra.mxu0 0.0
        %5901 = vmatpush.msra.mxu0 0.0
        %5902 = vmatpush.msra.mxu0 0.0
        %5903 = vmatpush.msra.mxu0 0.0
        %5904 = vmatpush.msra.mxu0 0.0
        %5905 = vmatpush.msra.mxu0 0.0
        %5906 = vmatpush.msra.mxu0 0.0
        %5907 = vmatpush.msra.mxu0 0.0
        %5908 = vmatpush.msra.mxu0 0.0
        %5909 = vmatpush.msra.mxu0 0.0
        %5910 = vmatpush.msra.mxu0 0.0
        %5911 = vmatpush.msra.mxu0 0.0
        %5912 = vmatpush.msra.mxu0 %v5883
        %5913 = vmatpush.msra.mxu0 %v5881
        %5914 = vmatpush.msra.mxu0 %v5879
        %5915 = vmatpush.msra.mxu0 %v5877
        %5916 = vmatmul.f32.gmra.mxu0 %v5889
        %v5917 = vpop.f32.mrf.mxu0
        %v5918 = vadd.f32 0.0, %v5917
        %5919 = vmatmul.f32.gmra.mxu0 %v5892
        %v5920 = vpop.f32.mrf.mxu0
        %v5921 = vadd.f32 0.0, %v5920
        %5922 = vmatmul.f32.gmra.mxu0 %v5895
        %v5923 = vpop.f32.mrf.mxu0
        %v5924 = vadd.f32 0.0, %v5923
        %5925 = vmatmul.f32.gmra.mxu0 %v5898
        %v5926 = vpop.f32.mrf.mxu0
        %v5927 = vadd.f32 0.0, %v5926
        %5928 = vdwg.mxu0
        %v5929 = vld [vmem:[%s3 + $0x20] sm:$0xff]
        %v5930 = vld [vmem:[%s3 + $0x28] sm:$0xff]
        %v5932 = vsel %vm670, %v5547, 0
        %v5935 = vsel %vm670, %v5550, 0
        %v5938 = vsel %vm670, %v5553, 0
        %v5941 = vsel %vm670, %v5556, 0
        %v5944 = vsel %vm670, %v5600, 0
        %v5947 = vsel %vm670, %v5603, 0
        %v5950 = vsel %vm670, %v5606, 0
        %v5953 = vsel %vm670, %v5609, 0
        %v5956 = vsel %vm670, %v5653, 0
        %v5959 = vsel %vm670, %v5656, 0
        %v5962 = vsel %vm670, %v5659, 0
        %v5965 = vsel %vm670, %v5662, 0
        %v5968 = vsel %vm670, %v5706, 0
        %v5971 = vsel %vm670, %v5709, 0
        %v5974 = vsel %vm670, %v5712, 0
        %v5977 = vsel %vm670, %v5715, 0
        %v5980 = vsel %vm670, %v5759, 0
        %v5983 = vsel %vm670, %v5762, 0
        %v5986 = vsel %vm670, %v5765, 0
        %v5989 = vsel %vm670, %v5768, 0
        %v5992 = vsel %vm670, %v5812, 0
        %v5995 = vsel %vm670, %v5815, 0
        %v5998 = vsel %vm670, %v5818, 0
        %v6001 = vsel %vm670, %v5821, 0
        %v6004 = vsel %vm670, %v5865, 0
        %v6007 = vsel %vm670, %v5868, 0
        %v6010 = vsel %vm670, %v5871, 0
        %v6013 = vsel %vm670, %v5874, 0
        %v6016 = vsel %vm670, %v5918, 0
        %v6019 = vsel %vm670, %v5921, 0
        %v6022 = vsel %vm670, %v5924, 0
        %v6025 = vsel %vm670, %v5927, 0
        %6027 = vmatpush.msra.mxu0 0.0
        %6028 = vmatpush.msra.mxu0 0.0
        %6029 = vmatpush.msra.mxu0 0.0
        %6030 = vmatpush.msra.mxu0 0.0
        %6031 = vmatpush.msra.mxu0 0.0
        %6032 = vmatpush.msra.mxu0 0.0
        %6033 = vmatpush.msra.mxu0 0.0
        %6034 = vmatpush.msra.mxu0 0.0
        %6035 = vmatpush.msra.mxu0 0.0
        %6036 = vmatpush.msra.mxu0 0.0
        %6037 = vmatpush.msra.mxu0 0.0
        %6038 = vmatpush.msra.mxu0 0.0
        %6039 = vmatpush.msra.mxu0 0.0
        %6040 = vmatpush.msra.mxu0 0.0
        %6041 = vmatpush.msra.mxu0 %v5930
        %6042 = vmatpush.msra.mxu0 %v5929
        %6043 = vmatmul.f32.gmra.mxu0 %v5932
        %v6044 = vpop.f32.mrf.mxu0
        %v6045 = vadd.f32 0.0, %v6044
        %6046 = vmatmul.f32.gmra.mxu0 %v5935
        %v6047 = vpop.f32.mrf.mxu0
        %v6048 = vadd.f32 0.0, %v6047
        %6049 = vmatmul.f32.gmra.mxu0 %v5938
        %v6050 = vpop.f32.mrf.mxu0
        %v6051 = vadd.f32 0.0, %v6050
        %6052 = vmatmul.f32.gmra.mxu0 %v5941
        %v6053 = vpop.f32.mrf.mxu0
        %v6054 = vadd.f32 0.0, %v6053
        %6055 = vmatmul.f32.gmra.mxu0 %v5944
        %v6056 = vpop.f32.mrf.mxu0
        %v6057 = vadd.f32 0.0, %v6056
        %6058 = vmatmul.f32.gmra.mxu0 %v5947
        %v6059 = vpop.f32.mrf.mxu0
        %v6060 = vadd.f32 0.0, %v6059
        %6061 = vmatmul.f32.gmra.mxu0 %v5950
        %v6062 = vpop.f32.mrf.mxu0
        %v6063 = vadd.f32 0.0, %v6062
        %6064 = vmatmul.f32.gmra.mxu0 %v5953
        %v6065 = vpop.f32.mrf.mxu0
        %v6066 = vadd.f32 0.0, %v6065
        %6067 = vmatmul.f32.gmra.mxu0 %v5956
        %v6068 = vpop.f32.mrf.mxu0
        %v6069 = vadd.f32 0.0, %v6068
        %6070 = vmatmul.f32.gmra.mxu0 %v5959
        %v6071 = vpop.f32.mrf.mxu0
        %v6072 = vadd.f32 0.0, %v6071
        %6073 = vmatmul.f32.gmra.mxu0 %v5962
        %v6074 = vpop.f32.mrf.mxu0
        %v6075 = vadd.f32 0.0, %v6074
        %6076 = vmatmul.f32.gmra.mxu0 %v5965
        %v6077 = vpop.f32.mrf.mxu0
        %v6078 = vadd.f32 0.0, %v6077
        %6079 = vmatmul.f32.gmra.mxu0 %v5968
        %v6080 = vpop.f32.mrf.mxu0
        %v6081 = vadd.f32 0.0, %v6080
        %6082 = vmatmul.f32.gmra.mxu0 %v5971
        %v6083 = vpop.f32.mrf.mxu0
        %v6084 = vadd.f32 0.0, %v6083
        %6085 = vmatmul.f32.gmra.mxu0 %v5974
        %v6086 = vpop.f32.mrf.mxu0
        %v6087 = vadd.f32 0.0, %v6086
        %6088 = vmatmul.f32.gmra.mxu0 %v5977
        %v6089 = vpop.f32.mrf.mxu0
        %v6090 = vadd.f32 0.0, %v6089
        %6091 = vmatmul.f32.gmra.mxu0 %v5980
        %v6092 = vpop.f32.mrf.mxu0
        %v6093 = vadd.f32 0.0, %v6092
        %6094 = vmatmul.f32.gmra.mxu0 %v5983
        %v6095 = vpop.f32.mrf.mxu0
        %v6096 = vadd.f32 0.0, %v6095
        %6097 = vmatmul.f32.gmra.mxu0 %v5986
        %v6098 = vpop.f32.mrf.mxu0
        %v6099 = vadd.f32 0.0, %v6098
        %6100 = vmatmul.f32.gmra.mxu0 %v5989
        %v6101 = vpop.f32.mrf.mxu0
        %v6102 = vadd.f32 0.0, %v6101
        %6103 = vmatmul.f32.gmra.mxu0 %v5992
        %v6104 = vpop.f32.mrf.mxu0
        %v6105 = vadd.f32 0.0, %v6104
        %6106 = vmatmul.f32.gmra.mxu0 %v5995
        %v6107 = vpop.f32.mrf.mxu0
        %v6108 = vadd.f32 0.0, %v6107
        %6109 = vmatmul.f32.gmra.mxu0 %v5998
        %v6110 = vpop.f32.mrf.mxu0
        %v6111 = vadd.f32 0.0, %v6110
        %6112 = vmatmul.f32.gmra.mxu0 %v6001
        %v6113 = vpop.f32.mrf.mxu0
        %v6114 = vadd.f32 0.0, %v6113
        %6115 = vmatmul.f32.gmra.mxu0 %v6004
        %v6116 = vpop.f32.mrf.mxu0
        %v6117 = vadd.f32 0.0, %v6116
        %6118 = vmatmul.f32.gmra.mxu0 %v6007
        %v6119 = vpop.f32.mrf.mxu0
        %v6120 = vadd.f32 0.0, %v6119
        %6121 = vmatmul.f32.gmra.mxu0 %v6010
        %v6122 = vpop.f32.mrf.mxu0
        %v6123 = vadd.f32 0.0, %v6122
        %6124 = vmatmul.f32.gmra.mxu0 %v6013
        %v6125 = vpop.f32.mrf.mxu0
        %v6126 = vadd.f32 0.0, %v6125
        %6127 = vmatmul.f32.gmra.mxu0 %v6016
        %v6128 = vpop.f32.mrf.mxu0
        %v6129 = vadd.f32 0.0, %v6128
        %6130 = vmatmul.f32.gmra.mxu0 %v6019
        %v6131 = vpop.f32.mrf.mxu0
        %v6132 = vadd.f32 0.0, %v6131
        %6133 = vmatmul.f32.gmra.mxu0 %v6022
        %v6134 = vpop.f32.mrf.mxu0
        %v6135 = vadd.f32 0.0, %v6134
        %6136 = vmatmul.f32.gmra.mxu0 %v6025
        %v6137 = vpop.f32.mrf.mxu0
        %v6138 = vadd.f32 0.0, %v6137
        %6139 = vdwg.mxu0
        %v6140 = vadd.f32 %v4186, %v6045
        %v6141 = vadd.f32 %v4189, %v6048
        %v6142 = vadd.f32 %v4192, %v6051
        %v6143 = vadd.f32 %v4195, %v6054
        %v6144 = vadd.f32 %v4198, %v6057
        %v6145 = vadd.f32 %v4201, %v6060
        %v6146 = vadd.f32 %v4204, %v6063
        %v6147 = vadd.f32 %v4207, %v6066
        %v6148 = vadd.f32 %v4210, %v6069
        %v6149 = vadd.f32 %v4213, %v6072
        %v6150 = vadd.f32 %v4216, %v6075
        %v6151 = vadd.f32 %v4219, %v6078
        %v6152 = vadd.f32 %v4222, %v6081
        %v6153 = vadd.f32 %v4225, %v6084
        %v6154 = vadd.f32 %v4228, %v6087
        %v6155 = vadd.f32 %v4231, %v6090
        %v6156 = vadd.f32 %v4234, %v6093
        %v6157 = vadd.f32 %v4237, %v6096
        %v6158 = vadd.f32 %v4240, %v6099
        %v6159 = vadd.f32 %v4243, %v6102
        %v6160 = vadd.f32 %v4246, %v6105
        %v6161 = vadd.f32 %v4249, %v6108
        %v6162 = vadd.f32 %v4252, %v6111
        %v6163 = vadd.f32 %v4255, %v6114
        %v6164 = vadd.f32 %v4258, %v6117
        %v6165 = vadd.f32 %v4261, %v6120
        %v6166 = vadd.f32 %v4264, %v6123
        %v6167 = vadd.f32 %v4267, %v6126
        %v6168 = vadd.f32 %v4270, %v6129
        %v6169 = vadd.f32 %v4273, %v6132
        %v6170 = vadd.f32 %v4276, %v6135
        %v6171 = vadd.f32 %v4279, %v6138
        %6172 = vrot.lane.b32.xlu0 %v445, 80
        %v6173 = vpop.permute.xlu0 %6172
        %6174 = vrot.lane.b32.xlu0 %v448, 80
        %v6175 = vpop.permute.xlu0 %6174
        %6176 = vrot.lane.b32.xlu0 %v451, 80
        %v6177 = vpop.permute.xlu0 %6176
        %6178 = vrot.lane.b32.xlu0 %v454, 80
        %v6179 = vpop.permute.xlu0 %6178
        %6180 = vrot.lane.b32.xlu0 %v445, 16
        %v6181 = vpop.permute.xlu0 %6180
        %6182 = vrot.lane.b32.xlu0 %v448, 16
        %v6183 = vpop.permute.xlu0 %6182
        %6184 = vrot.lane.b32.xlu0 %v451, 16
        %v6185 = vpop.permute.xlu0 %6184
        %6186 = vrot.lane.b32.xlu0 %v454, 16
        %v6187 = vpop.permute.xlu0 %6186
        %v6188 = vsel %vm670, %v6173, 0
        %v6190 = vsel %vm670, %v6175, 0
        %v6192 = vsel %vm670, %v6177, 0
        %v6194 = vsel %vm670, %v6179, 0
        %v6196 = vsel %vm670, %v6181, 0
        %v6198 = vsel %vm670, %v6183, 0
        %v6200 = vsel %vm670, %v6185, 0
        %v6202 = vsel %vm670, %v6187, 0
        %6204 = vmatpush.xpose.msra.mxu0 0.0
        %6205 = vmatpush.xpose.msra.mxu0 0.0
        %6206 = vmatpush.xpose.msra.mxu0 0.0
        %6207 = vmatpush.xpose.msra.mxu0 0.0
        %6208 = vmatpush.xpose.msra.mxu0 0.0
        %6209 = vmatpush.xpose.msra.mxu0 0.0
        %6210 = vmatpush.xpose.msra.mxu0 0.0
        %6211 = vmatpush.xpose.msra.mxu0 0.0
        %6212 = vmatpush.xpose.msra.mxu0 0.0
        %6213 = vmatpush.xpose.msra.mxu0 0.0
        %6214 = vmatpush.xpose.msra.mxu0 0.0
        %6215 = vmatpush.xpose.msra.mxu0 0.0
        %6216 = vmatpush.xpose.msra.mxu0 %v6202
        %6217 = vmatpush.xpose.msra.mxu0 %v6200
        %6218 = vmatpush.xpose.msra.mxu0 %v6198
        %6219 = vmatpush.xpose.msra.mxu0 %v6196
        %6220 = vmatmul.f32.gmra.mxu0 %v6188
        %v6221 = vpop.f32.mrf.mxu0
        %v6222 = vadd.f32 0.0, %v6221
        %6223 = vmatmul.f32.gmra.mxu0 %v6190
        %v6224 = vpop.f32.mrf.mxu0
        %v6225 = vadd.f32 0.0, %v6224
        %6226 = vmatmul.f32.gmra.mxu0 %v6192
        %v6227 = vpop.f32.mrf.mxu0
        %v6228 = vadd.f32 0.0, %v6227
        %6229 = vmatmul.f32.gmra.mxu0 %v6194
        %v6230 = vpop.f32.mrf.mxu0
        %v6231 = vadd.f32 0.0, %v6230
        %6232 = vdwg.mxu0
        %6233 = vrot.lane.b32.xlu0 %v457, 80
        %v6234 = vpop.permute.xlu0 %6233
        %6235 = vrot.lane.b32.xlu0 %v460, 80
        %v6236 = vpop.permute.xlu0 %6235
        %6237 = vrot.lane.b32.xlu0 %v463, 80
        %v6238 = vpop.permute.xlu0 %6237
        %6239 = vrot.lane.b32.xlu0 %v466, 80
        %v6240 = vpop.permute.xlu0 %6239
        %6241 = vrot.lane.b32.xlu0 %v457, 16
        %v6242 = vpop.permute.xlu0 %6241
        %6243 = vrot.lane.b32.xlu0 %v460, 16
        %v6244 = vpop.permute.xlu0 %6243
        %6245 = vrot.lane.b32.xlu0 %v463, 16
        %v6246 = vpop.permute.xlu0 %6245
        %6247 = vrot.lane.b32.xlu0 %v466, 16
        %v6248 = vpop.permute.xlu0 %6247
        %v6249 = vsel %vm670, %v6234, 0
        %v6251 = vsel %vm670, %v6236, 0
        %v6253 = vsel %vm670, %v6238, 0
        %v6255 = vsel %vm670, %v6240, 0
        %v6257 = vsel %vm670, %v6242, 0
        %v6259 = vsel %vm670, %v6244, 0
        %v6261 = vsel %vm670, %v6246, 0
        %v6263 = vsel %vm670, %v6248, 0
        %6265 = vmatpush.xpose.msra.mxu0 0.0
        %6266 = vmatpush.xpose.msra.mxu0 0.0
        %6267 = vmatpush.xpose.msra.mxu0 0.0
        %6268 = vmatpush.xpose.msra.mxu0 0.0
        %6269 = vmatpush.xpose.msra.mxu0 0.0
        %6270 = vmatpush.xpose.msra.mxu0 0.0
        %6271 = vmatpush.xpose.msra.mxu0 0.0
        %6272 = vmatpush.xpose.msra.mxu0 0.0
        %6273 = vmatpush.xpose.msra.mxu0 0.0
        %6274 = vmatpush.xpose.msra.mxu0 0.0
        %6275 = vmatpush.xpose.msra.mxu0 0.0
        %6276 = vmatpush.xpose.msra.mxu0 0.0
        %6277 = vmatpush.xpose.msra.mxu0 %v6263
        %6278 = vmatpush.xpose.msra.mxu0 %v6261
        %6279 = vmatpush.xpose.msra.mxu0 %v6259
        %6280 = vmatpush.xpose.msra.mxu0 %v6257
        %6281 = vmatmul.f32.gmra.mxu0 %v6249
        %v6282 = vpop.f32.mrf.mxu0
        %v6283 = vadd.f32 0.0, %v6282
        %6284 = vmatmul.f32.gmra.mxu0 %v6251
        %v6285 = vpop.f32.mrf.mxu0
        %v6286 = vadd.f32 0.0, %v6285
        %6287 = vmatmul.f32.gmra.mxu0 %v6253
        %v6288 = vpop.f32.mrf.mxu0
        %v6289 = vadd.f32 0.0, %v6288
        %6290 = vmatmul.f32.gmra.mxu0 %v6255
        %v6291 = vpop.f32.mrf.mxu0
        %v6292 = vadd.f32 0.0, %v6291
        %6293 = vdwg.mxu0
        %6294 = vrot.lane.b32.xlu0 %v469, 80
        %v6295 = vpop.permute.xlu0 %6294
        %6296 = vrot.lane.b32.xlu0 %v472, 80
        %v6297 = vpop.permute.xlu0 %6296
        %6298 = vrot.lane.b32.xlu0 %v475, 80
        %v6299 = vpop.permute.xlu0 %6298
        %6300 = vrot.lane.b32.xlu0 %v478, 80
        %v6301 = vpop.permute.xlu0 %6300
        %6302 = vrot.lane.b32.xlu0 %v469, 16
        %v6303 = vpop.permute.xlu0 %6302
        %6304 = vrot.lane.b32.xlu0 %v472, 16
        %v6305 = vpop.permute.xlu0 %6304
        %6306 = vrot.lane.b32.xlu0 %v475, 16
        %v6307 = vpop.permute.xlu0 %6306
        %6308 = vrot.lane.b32.xlu0 %v478, 16
        %v6309 = vpop.permute.xlu0 %6308
        %v6310 = vsel %vm670, %v6295, 0
        %v6312 = vsel %vm670, %v6297, 0
        %v6314 = vsel %vm670, %v6299, 0
        %v6316 = vsel %vm670, %v6301, 0
        %v6318 = vsel %vm670, %v6303, 0
        %v6320 = vsel %vm670, %v6305, 0
        %v6322 = vsel %vm670, %v6307, 0
        %v6324 = vsel %vm670, %v6309, 0
        %6326 = vmatpush.xpose.msra.mxu0 0.0
        %6327 = vmatpush.xpose.msra.mxu0 0.0
        %6328 = vmatpush.xpose.msra.mxu0 0.0
        %6329 = vmatpush.xpose.msra.mxu0 0.0
        %6330 = vmatpush.xpose.msra.mxu0 0.0
        %6331 = vmatpush.xpose.msra.mxu0 0.0
        %6332 = vmatpush.xpose.msra.mxu0 0.0
        %6333 = vmatpush.xpose.msra.mxu0 0.0
        %6334 = vmatpush.xpose.msra.mxu0 0.0
        %6335 = vmatpush.xpose.msra.mxu0 0.0
        %6336 = vmatpush.xpose.msra.mxu0 0.0
        %6337 = vmatpush.xpose.msra.mxu0 0.0
        %6338 = vmatpush.xpose.msra.mxu0 %v6324
        %6339 = vmatpush.xpose.msra.mxu0 %v6322
        %6340 = vmatpush.xpose.msra.mxu0 %v6320
        %6341 = vmatpush.xpose.msra.mxu0 %v6318
        %6342 = vmatmul.f32.gmra.mxu0 %v6310
        %v6343 = vpop.f32.mrf.mxu0
        %v6344 = vadd.f32 0.0, %v6343
        %6345 = vmatmul.f32.gmra.mxu0 %v6312
        %v6346 = vpop.f32.mrf.mxu0
        %v6347 = vadd.f32 0.0, %v6346
        %6348 = vmatmul.f32.gmra.mxu0 %v6314
        %v6349 = vpop.f32.mrf.mxu0
        %v6350 = vadd.f32 0.0, %v6349
        %6351 = vmatmul.f32.gmra.mxu0 %v6316
        %v6352 = vpop.f32.mrf.mxu0
        %v6353 = vadd.f32 0.0, %v6352
        %6354 = vdwg.mxu0
        %6355 = vrot.lane.b32.xlu0 %v481, 80
        %v6356 = vpop.permute.xlu0 %6355
        %6357 = vrot.lane.b32.xlu0 %v484, 80
        %v6358 = vpop.permute.xlu0 %6357
        %6359 = vrot.lane.b32.xlu0 %v487, 80
        %v6360 = vpop.permute.xlu0 %6359
        %6361 = vrot.lane.b32.xlu0 %v490, 80
        %v6362 = vpop.permute.xlu0 %6361
        %6363 = vrot.lane.b32.xlu0 %v481, 16
        %v6364 = vpop.permute.xlu0 %6363
        %6365 = vrot.lane.b32.xlu0 %v484, 16
        %v6366 = vpop.permute.xlu0 %6365
        %6367 = vrot.lane.b32.xlu0 %v487, 16
        %v6368 = vpop.permute.xlu0 %6367
        %6369 = vrot.lane.b32.xlu0 %v490, 16
        %v6370 = vpop.permute.xlu0 %6369
        %v6371 = vsel %vm670, %v6356, 0
        %v6373 = vsel %vm670, %v6358, 0
        %v6375 = vsel %vm670, %v6360, 0
        %v6377 = vsel %vm670, %v6362, 0
        %v6379 = vsel %vm670, %v6364, 0
        %v6381 = vsel %vm670, %v6366, 0
        %v6383 = vsel %vm670, %v6368, 0
        %v6385 = vsel %vm670, %v6370, 0
        %6387 = vmatpush.xpose.msra.mxu0 0.0
        %6388 = vmatpush.xpose.msra.mxu0 0.0
        %6389 = vmatpush.xpose.msra.mxu0 0.0
        %6390 = vmatpush.xpose.msra.mxu0 0.0
        %6391 = vmatpush.xpose.msra.mxu0 0.0
        %6392 = vmatpush.xpose.msra.mxu0 0.0
        %6393 = vmatpush.xpose.msra.mxu0 0.0
        %6394 = vmatpush.xpose.msra.mxu0 0.0
        %6395 = vmatpush.xpose.msra.mxu0 0.0
        %6396 = vmatpush.xpose.msra.mxu0 0.0
        %6397 = vmatpush.xpose.msra.mxu0 0.0
        %6398 = vmatpush.xpose.msra.mxu0 0.0
        %6399 = vmatpush.xpose.msra.mxu0 %v6385
        %6400 = vmatpush.xpose.msra.mxu0 %v6383
        %6401 = vmatpush.xpose.msra.mxu0 %v6381
        %6402 = vmatpush.xpose.msra.mxu0 %v6379
        %6403 = vmatmul.f32.gmra.mxu0 %v6371
        %v6404 = vpop.f32.mrf.mxu0
        %v6405 = vadd.f32 0.0, %v6404
        %6406 = vmatmul.f32.gmra.mxu0 %v6373
        %v6407 = vpop.f32.mrf.mxu0
        %v6408 = vadd.f32 0.0, %v6407
        %6409 = vmatmul.f32.gmra.mxu0 %v6375
        %v6410 = vpop.f32.mrf.mxu0
        %v6411 = vadd.f32 0.0, %v6410
        %6412 = vmatmul.f32.gmra.mxu0 %v6377
        %v6413 = vpop.f32.mrf.mxu0
        %v6414 = vadd.f32 0.0, %v6413
        %6415 = vdwg.mxu0
        %6416 = vrot.lane.b32.xlu0 %v493, 80
        %v6417 = vpop.permute.xlu0 %6416
        %6418 = vrot.lane.b32.xlu0 %v496, 80
        %v6419 = vpop.permute.xlu0 %6418
        %6420 = vrot.lane.b32.xlu0 %v499, 80
        %v6421 = vpop.permute.xlu0 %6420
        %6422 = vrot.lane.b32.xlu0 %v502, 80
        %v6423 = vpop.permute.xlu0 %6422
        %6424 = vrot.lane.b32.xlu0 %v493, 16
        %v6425 = vpop.permute.xlu0 %6424
        %6426 = vrot.lane.b32.xlu0 %v496, 16
        %v6427 = vpop.permute.xlu0 %6426
        %6428 = vrot.lane.b32.xlu0 %v499, 16
        %v6429 = vpop.permute.xlu0 %6428
        %6430 = vrot.lane.b32.xlu0 %v502, 16
        %v6431 = vpop.permute.xlu0 %6430
        %v6432 = vsel %vm670, %v6417, 0
        %v6434 = vsel %vm670, %v6419, 0
        %v6436 = vsel %vm670, %v6421, 0
        %v6438 = vsel %vm670, %v6423, 0
        %v6440 = vsel %vm670, %v6425, 0
        %v6442 = vsel %vm670, %v6427, 0
        %v6444 = vsel %vm670, %v6429, 0
        %v6446 = vsel %vm670, %v6431, 0
        %6448 = vmatpush.xpose.msra.mxu0 0.0
        %6449 = vmatpush.xpose.msra.mxu0 0.0
        %6450 = vmatpush.xpose.msra.mxu0 0.0
        %6451 = vmatpush.xpose.msra.mxu0 0.0
        %6452 = vmatpush.xpose.msra.mxu0 0.0
        %6453 = vmatpush.xpose.msra.mxu0 0.0
        %6454 = vmatpush.xpose.msra.mxu0 0.0
        %6455 = vmatpush.xpose.msra.mxu0 0.0
        %6456 = vmatpush.xpose.msra.mxu0 0.0
        %6457 = vmatpush.xpose.msra.mxu0 0.0
        %6458 = vmatpush.xpose.msra.mxu0 0.0
        %6459 = vmatpush.xpose.msra.mxu0 0.0
        %6460 = vmatpush.xpose.msra.mxu0 %v6446
        %6461 = vmatpush.xpose.msra.mxu0 %v6444
        %6462 = vmatpush.xpose.msra.mxu0 %v6442
        %6463 = vmatpush.xpose.msra.mxu0 %v6440
        %6464 = vmatmul.f32.gmra.mxu0 %v6432
        %v6465 = vpop.f32.mrf.mxu0
        %v6466 = vadd.f32 0.0, %v6465
        %6467 = vmatmul.f32.gmra.mxu0 %v6434
        %v6468 = vpop.f32.mrf.mxu0
        %v6469 = vadd.f32 0.0, %v6468
        %6470 = vmatmul.f32.gmra.mxu0 %v6436
        %v6471 = vpop.f32.mrf.mxu0
        %v6472 = vadd.f32 0.0, %v6471
        %6473 = vmatmul.f32.gmra.mxu0 %v6438
        %v6474 = vpop.f32.mrf.mxu0
        %v6475 = vadd.f32 0.0, %v6474
        %6476 = vdwg.mxu0
        %6477 = vrot.lane.b32.xlu0 %v505, 80
        %v6478 = vpop.permute.xlu0 %6477
        %6479 = vrot.lane.b32.xlu0 %v508, 80
        %v6480 = vpop.permute.xlu0 %6479
        %6481 = vrot.lane.b32.xlu0 %v511, 80
        %v6482 = vpop.permute.xlu0 %6481
        %6483 = vrot.lane.b32.xlu0 %v514, 80
        %v6484 = vpop.permute.xlu0 %6483
        %6485 = vrot.lane.b32.xlu0 %v505, 16
        %v6486 = vpop.permute.xlu0 %6485
        %6487 = vrot.lane.b32.xlu0 %v508, 16
        %v6488 = vpop.permute.xlu0 %6487
        %6489 = vrot.lane.b32.xlu0 %v511, 16
        %v6490 = vpop.permute.xlu0 %6489
        %6491 = vrot.lane.b32.xlu0 %v514, 16
        %v6492 = vpop.permute.xlu0 %6491
        %v6493 = vsel %vm670, %v6478, 0
        %v6495 = vsel %vm670, %v6480, 0
        %v6497 = vsel %vm670, %v6482, 0
        %v6499 = vsel %vm670, %v6484, 0
        %v6501 = vsel %vm670, %v6486, 0
        %v6503 = vsel %vm670, %v6488, 0
        %v6505 = vsel %vm670, %v6490, 0
        %v6507 = vsel %vm670, %v6492, 0
        %6509 = vmatpush.xpose.msra.mxu0 0.0
        %6510 = vmatpush.xpose.msra.mxu0 0.0
        %6511 = vmatpush.xpose.msra.mxu0 0.0
        %6512 = vmatpush.xpose.msra.mxu0 0.0
        %6513 = vmatpush.xpose.msra.mxu0 0.0
        %6514 = vmatpush.xpose.msra.mxu0 0.0
        %6515 = vmatpush.xpose.msra.mxu0 0.0
        %6516 = vmatpush.xpose.msra.mxu0 0.0
        %6517 = vmatpush.xpose.msra.mxu0 0.0
        %6518 = vmatpush.xpose.msra.mxu0 0.0
        %6519 = vmatpush.xpose.msra.mxu0 0.0
        %6520 = vmatpush.xpose.msra.mxu0 0.0
        %6521 = vmatpush.xpose.msra.mxu0 %v6507
        %6522 = vmatpush.xpose.msra.mxu0 %v6505
        %6523 = vmatpush.xpose.msra.mxu0 %v6503
        %6524 = vmatpush.xpose.msra.mxu0 %v6501
        %6525 = vmatmul.f32.gmra.mxu0 %v6493
        %v6526 = vpop.f32.mrf.mxu0
        %v6527 = vadd.f32 0.0, %v6526
        %6528 = vmatmul.f32.gmra.mxu0 %v6495
        %v6529 = vpop.f32.mrf.mxu0
        %v6530 = vadd.f32 0.0, %v6529
        %6531 = vmatmul.f32.gmra.mxu0 %v6497
        %v6532 = vpop.f32.mrf.mxu0
        %v6533 = vadd.f32 0.0, %v6532
        %6534 = vmatmul.f32.gmra.mxu0 %v6499
        %v6535 = vpop.f32.mrf.mxu0
        %v6536 = vadd.f32 0.0, %v6535
        %6537 = vdwg.mxu0
        %6538 = vrot.lane.b32.xlu0 %v517, 80
        %v6539 = vpop.permute.xlu0 %6538
        %6540 = vrot.lane.b32.xlu0 %v520, 80
        %v6541 = vpop.permute.xlu0 %6540
        %6542 = vrot.lane.b32.xlu0 %v523, 80
        %v6543 = vpop.permute.xlu0 %6542
        %6544 = vrot.lane.b32.xlu0 %v526, 80
        %v6545 = vpop.permute.xlu0 %6544
        %6546 = vrot.lane.b32.xlu0 %v517, 16
        %v6547 = vpop.permute.xlu0 %6546
        %6548 = vrot.lane.b32.xlu0 %v520, 16
        %v6549 = vpop.permute.xlu0 %6548
        %6550 = vrot.lane.b32.xlu0 %v523, 16
        %v6551 = vpop.permute.xlu0 %6550
        %6552 = vrot.lane.b32.xlu0 %v526, 16
        %v6553 = vpop.permute.xlu0 %6552
        %v6554 = vsel %vm670, %v6539, 0
        %v6556 = vsel %vm670, %v6541, 0
        %v6558 = vsel %vm670, %v6543, 0
        %v6560 = vsel %vm670, %v6545, 0
        %v6562 = vsel %vm670, %v6547, 0
        %v6564 = vsel %vm670, %v6549, 0
        %v6566 = vsel %vm670, %v6551, 0
        %v6568 = vsel %vm670, %v6553, 0
        %6570 = vmatpush.xpose.msra.mxu0 0.0
        %6571 = vmatpush.xpose.msra.mxu0 0.0
        %6572 = vmatpush.xpose.msra.mxu0 0.0
        %6573 = vmatpush.xpose.msra.mxu0 0.0
        %6574 = vmatpush.xpose.msra.mxu0 0.0
        %6575 = vmatpush.xpose.msra.mxu0 0.0
        %6576 = vmatpush.xpose.msra.mxu0 0.0
        %6577 = vmatpush.xpose.msra.mxu0 0.0
        %6578 = vmatpush.xpose.msra.mxu0 0.0
        %6579 = vmatpush.xpose.msra.mxu0 0.0
        %6580 = vmatpush.xpose.msra.mxu0 0.0
        %6581 = vmatpush.xpose.msra.mxu0 0.0
        %6582 = vmatpush.xpose.msra.mxu0 %v6568
        %6583 = vmatpush.xpose.msra.mxu0 %v6566
        %6584 = vmatpush.xpose.msra.mxu0 %v6564
        %6585 = vmatpush.xpose.msra.mxu0 %v6562
        %6586 = vmatmul.f32.gmra.mxu0 %v6554
        %v6587 = vpop.f32.mrf.mxu0
        %v6588 = vadd.f32 0.0, %v6587
        %6589 = vmatmul.f32.gmra.mxu0 %v6556
        %v6590 = vpop.f32.mrf.mxu0
        %v6591 = vadd.f32 0.0, %v6590
        %6592 = vmatmul.f32.gmra.mxu0 %v6558
        %v6593 = vpop.f32.mrf.mxu0
        %v6594 = vadd.f32 0.0, %v6593
        %6595 = vmatmul.f32.gmra.mxu0 %v6560
        %v6596 = vpop.f32.mrf.mxu0
        %v6597 = vadd.f32 0.0, %v6596
        %6598 = vdwg.mxu0
        %6599 = vrot.lane.b32.xlu0 %v529, 80
        %v6600 = vpop.permute.xlu0 %6599
        %6601 = vrot.lane.b32.xlu0 %v532, 80
        %v6602 = vpop.permute.xlu0 %6601
        %6603 = vrot.lane.b32.xlu0 %v535, 80
        %v6604 = vpop.permute.xlu0 %6603
        %6605 = vrot.lane.b32.xlu0 %v538, 80
        %v6606 = vpop.permute.xlu0 %6605
        %6607 = vrot.lane.b32.xlu0 %v529, 16
        %v6608 = vpop.permute.xlu0 %6607
        %6609 = vrot.lane.b32.xlu0 %v532, 16
        %v6610 = vpop.permute.xlu0 %6609
        %6611 = vrot.lane.b32.xlu0 %v535, 16
        %v6612 = vpop.permute.xlu0 %6611
        %6613 = vrot.lane.b32.xlu0 %v538, 16
        %v6614 = vpop.permute.xlu0 %6613
        %v6615 = vsel %vm670, %v6600, 0
        %v6617 = vsel %vm670, %v6602, 0
        %v6619 = vsel %vm670, %v6604, 0
        %v6621 = vsel %vm670, %v6606, 0
        %v6623 = vsel %vm670, %v6608, 0
        %v6625 = vsel %vm670, %v6610, 0
        %v6627 = vsel %vm670, %v6612, 0
        %v6629 = vsel %vm670, %v6614, 0
        %6631 = vmatpush.xpose.msra.mxu0 0.0
        %6632 = vmatpush.xpose.msra.mxu0 0.0
        %6633 = vmatpush.xpose.msra.mxu0 0.0
        %6634 = vmatpush.xpose.msra.mxu0 0.0
        %6635 = vmatpush.xpose.msra.mxu0 0.0
        %6636 = vmatpush.xpose.msra.mxu0 0.0
        %6637 = vmatpush.xpose.msra.mxu0 0.0
        %6638 = vmatpush.xpose.msra.mxu0 0.0
        %6639 = vmatpush.xpose.msra.mxu0 0.0
        %6640 = vmatpush.xpose.msra.mxu0 0.0
        %6641 = vmatpush.xpose.msra.mxu0 0.0
        %6642 = vmatpush.xpose.msra.mxu0 0.0
        %6643 = vmatpush.xpose.msra.mxu0 %v6629
        %6644 = vmatpush.xpose.msra.mxu0 %v6627
        %6645 = vmatpush.xpose.msra.mxu0 %v6625
        %6646 = vmatpush.xpose.msra.mxu0 %v6623
        %6647 = vmatmul.f32.gmra.mxu0 %v6615
        %v6648 = vpop.f32.mrf.mxu0
        %v6649 = vadd.f32 0.0, %v6648
        %6650 = vmatmul.f32.gmra.mxu0 %v6617
        %v6651 = vpop.f32.mrf.mxu0
        %v6652 = vadd.f32 0.0, %v6651
        %6653 = vmatmul.f32.gmra.mxu0 %v6619
        %v6654 = vpop.f32.mrf.mxu0
        %v6655 = vadd.f32 0.0, %v6654
        %6656 = vmatmul.f32.gmra.mxu0 %v6621
        %v6657 = vpop.f32.mrf.mxu0
        %v6658 = vadd.f32 0.0, %v6657
        %6659 = vdwg.mxu0
        %v6660 = vmul.f32 %v6222, 0.25
        %v6661 = vmul.f32 %v6225, 0.25
        %v6662 = vmul.f32 %v6228, 0.25
        %v6663 = vmul.f32 %v6231, 0.25
        %v6664 = vmul.f32 %v6283, 0.25
        %v6665 = vmul.f32 %v6286, 0.25
        %v6666 = vmul.f32 %v6289, 0.25
        %v6667 = vmul.f32 %v6292, 0.25
        %v6668 = vmul.f32 %v6344, 0.25
        %v6669 = vmul.f32 %v6347, 0.25
        %v6670 = vmul.f32 %v6350, 0.25
        %v6671 = vmul.f32 %v6353, 0.25
        %v6672 = vmul.f32 %v6405, 0.25
        %v6673 = vmul.f32 %v6408, 0.25
        %v6674 = vmul.f32 %v6411, 0.25
        %v6675 = vmul.f32 %v6414, 0.25
        %v6676 = vmul.f32 %v6466, 0.25
        %v6677 = vmul.f32 %v6469, 0.25
        %v6678 = vmul.f32 %v6472, 0.25
        %v6679 = vmul.f32 %v6475, 0.25
        %v6680 = vmul.f32 %v6527, 0.25
        %v6681 = vmul.f32 %v6530, 0.25
        %v6682 = vmul.f32 %v6533, 0.25
        %v6683 = vmul.f32 %v6536, 0.25
        %v6684 = vmul.f32 %v6588, 0.25
        %v6685 = vmul.f32 %v6591, 0.25
        %v6686 = vmul.f32 %v6594, 0.25
        %v6687 = vmul.f32 %v6597, 0.25
        %v6688 = vmul.f32 %v6649, 0.25
        %v6689 = vmul.f32 %v6652, 0.25
        %v6690 = vmul.f32 %v6655, 0.25
        %v6691 = vmul.f32 %v6658, 0.25
        %v6692 = vmul.f32 %v6660, 1.442695
        %v6693 = vpow.pop %v6692
        %v6694 = vmul.f32 %v6661, 1.442695
        %v6695 = vpow.pop %v6694
        %v6696 = vmul.f32 %v6662, 1.442695
        %v6697 = vpow.pop %v6696
        %v6698 = vmul.f32 %v6663, 1.442695
        %v6699 = vpow.pop %v6698
        %v6700 = vmul.f32 %v6664, 1.442695
        %v6701 = vpow.pop %v6700
        %v6702 = vmul.f32 %v6665, 1.442695
        %v6703 = vpow.pop %v6702
        %v6704 = vmul.f32 %v6666, 1.442695
        %v6705 = vpow.pop %v6704
        %v6706 = vmul.f32 %v6667, 1.442695
        %v6707 = vpow.pop %v6706
        %v6708 = vmul.f32 %v6668, 1.442695
        %v6709 = vpow.pop %v6708
        %v6710 = vmul.f32 %v6669, 1.442695
        %v6711 = vpow.pop %v6710
        %v6712 = vmul.f32 %v6670, 1.442695
        %v6713 = vpow.pop %v6712
        %v6714 = vmul.f32 %v6671, 1.442695
        %v6715 = vpow.pop %v6714
        %v6716 = vmul.f32 %v6672, 1.442695
        %v6717 = vpow.pop %v6716
        %v6718 = vmul.f32 %v6673, 1.442695
        %v6719 = vpow.pop %v6718
        %v6720 = vmul.f32 %v6674, 1.442695
        %v6721 = vpow.pop %v6720
        %v6722 = vmul.f32 %v6675, 1.442695
        %v6723 = vpow.pop %v6722
        %v6724 = vmul.f32 %v6676, 1.442695
        %v6725 = vpow.pop %v6724
        %v6726 = vmul.f32 %v6677, 1.442695
        %v6727 = vpow.pop %v6726
        %v6728 = vmul.f32 %v6678, 1.442695
        %v6729 = vpow.pop %v6728
        %v6730 = vmul.f32 %v6679, 1.442695
        %v6731 = vpow.pop %v6730
        %v6732 = vmul.f32 %v6680, 1.442695
        %v6733 = vpow.pop %v6732
        %v6734 = vmul.f32 %v6681, 1.442695
        %v6735 = vpow.pop %v6734
        %v6736 = vmul.f32 %v6682, 1.442695
        %v6737 = vpow.pop %v6736
        %v6738 = vmul.f32 %v6683, 1.442695
        %v6739 = vpow.pop %v6738
        %v6740 = vmul.f32 %v6684, 1.442695
        %v6741 = vpow.pop %v6740
        %v6742 = vmul.f32 %v6685, 1.442695
        %v6743 = vpow.pop %v6742
        %v6744 = vmul.f32 %v6686, 1.442695
        %v6745 = vpow.pop %v6744
        %v6746 = vmul.f32 %v6687, 1.442695
        %v6747 = vpow.pop %v6746
        %v6748 = vmul.f32 %v6688, 1.442695
        %v6749 = vpow.pop %v6748
        %v6750 = vmul.f32 %v6689, 1.442695
        %v6751 = vpow.pop %v6750
        %v6752 = vmul.f32 %v6690, 1.442695
        %v6753 = vpow.pop %v6752
        %v6754 = vmul.f32 %v6691, 1.442695
        %v6755 = vpow.pop %v6754
        %v6756 = vmul.f32 %v6693, %v657
        %v6757 = vmul.f32 %v6695, %v657
        %v6758 = vmul.f32 %v6697, %v657
        %v6759 = vmul.f32 %v6699, %v657
        %v6760 = vmul.f32 %v6701, %v657
        %v6761 = vmul.f32 %v6703, %v657
        %v6762 = vmul.f32 %v6705, %v657
        %v6763 = vmul.f32 %v6707, %v657
        %v6764 = vmul.f32 %v6709, %v657
        %v6765 = vmul.f32 %v6711, %v657
        %v6766 = vmul.f32 %v6713, %v657
        %v6767 = vmul.f32 %v6715, %v657
        %v6768 = vmul.f32 %v6717, %v657
        %v6769 = vmul.f32 %v6719, %v657
        %v6770 = vmul.f32 %v6721, %v657
        %v6771 = vmul.f32 %v6723, %v657
        %v6772 = vmul.f32 %v6725, %v657
        %v6773 = vmul.f32 %v6727, %v657
        %v6774 = vmul.f32 %v6729, %v657
        %v6775 = vmul.f32 %v6731, %v657
        %v6776 = vmul.f32 %v6733, %v657
        %v6777 = vmul.f32 %v6735, %v657
        %v6778 = vmul.f32 %v6737, %v657
        %v6779 = vmul.f32 %v6739, %v657
        %v6780 = vmul.f32 %v6741, %v657
        %v6781 = vmul.f32 %v6743, %v657
        %v6782 = vmul.f32 %v6745, %v657
        %v6783 = vmul.f32 %v6747, %v657
        %v6784 = vmul.f32 %v6749, %v657
        %v6785 = vmul.f32 %v6751, %v657
        %v6786 = vmul.f32 %v6753, %v657
        %v6787 = vmul.f32 %v6755, %v657
        %v6788 = vsel %vm330, %v6756, 0.0
        %6789 = vadd.xlane.f32.xlu0 %v6788
        %v6790 = vpop.xlane.xlu0 %6789
        %v6791 = vsel %vm330, %v6757, 0.0
        %6792 = vadd.xlane.f32.xlu0 %v6791
        %v6793 = vpop.xlane.xlu0 %6792
        %v6794 = vsel %vm330, %v6758, 0.0
        %6795 = vadd.xlane.f32.xlu0 %v6794
        %v6796 = vpop.xlane.xlu0 %6795
        %v6797 = vsel %vm330, %v6759, 0.0
        %6798 = vadd.xlane.f32.xlu0 %v6797
        %v6799 = vpop.xlane.xlu0 %6798
        %v6800 = vsel %vm330, %v6760, 0.0
        %6801 = vadd.xlane.f32.xlu0 %v6800
        %v6802 = vpop.xlane.xlu0 %6801
        %v6803 = vsel %vm330, %v6761, 0.0
        %6804 = vadd.xlane.f32.xlu0 %v6803
        %v6805 = vpop.xlane.xlu0 %6804
        %v6806 = vsel %vm330, %v6762, 0.0
        %6807 = vadd.xlane.f32.xlu0 %v6806
        %v6808 = vpop.xlane.xlu0 %6807
        %v6809 = vsel %vm330, %v6763, 0.0
        %6810 = vadd.xlane.f32.xlu0 %v6809
        %v6811 = vpop.xlane.xlu0 %6810
        %v6812 = vsel %vm330, %v6764, 0.0
        %6813 = vadd.xlane.f32.xlu0 %v6812
        %v6814 = vpop.xlane.xlu0 %6813
        %v6815 = vsel %vm330, %v6765, 0.0
        %6816 = vadd.xlane.f32.xlu0 %v6815
        %v6817 = vpop.xlane.xlu0 %6816
        %v6818 = vsel %vm330, %v6766, 0.0
        %6819 = vadd.xlane.f32.xlu0 %v6818
        %v6820 = vpop.xlane.xlu0 %6819
        %v6821 = vsel %vm330, %v6767, 0.0
        %6822 = vadd.xlane.f32.xlu0 %v6821
        %v6823 = vpop.xlane.xlu0 %6822
        %v6824 = vsel %vm330, %v6768, 0.0
        %6825 = vadd.xlane.f32.xlu0 %v6824
        %v6826 = vpop.xlane.xlu0 %6825
        %v6827 = vsel %vm330, %v6769, 0.0
        %6828 = vadd.xlane.f32.xlu0 %v6827
        %v6829 = vpop.xlane.xlu0 %6828
        %v6830 = vsel %vm330, %v6770, 0.0
        %6831 = vadd.xlane.f32.xlu0 %v6830
        %v6832 = vpop.xlane.xlu0 %6831
        %v6833 = vsel %vm330, %v6771, 0.0
        %6834 = vadd.xlane.f32.xlu0 %v6833
        %v6835 = vpop.xlane.xlu0 %6834
        %v6836 = vsel %vm330, %v6772, 0.0
        %6837 = vadd.xlane.f32.xlu0 %v6836
        %v6838 = vpop.xlane.xlu0 %6837
        %v6839 = vsel %vm330, %v6773, 0.0
        %6840 = vadd.xlane.f32.xlu0 %v6839
        %v6841 = vpop.xlane.xlu0 %6840
        %v6842 = vsel %vm330, %v6774, 0.0
        %6843 = vadd.xlane.f32.xlu0 %v6842
        %v6844 = vpop.xlane.xlu0 %6843
        %v6845 = vsel %vm330, %v6775, 0.0
        %6846 = vadd.xlane.f32.xlu0 %v6845
        %v6847 = vpop.xlane.xlu0 %6846
        %v6848 = vsel %vm330, %v6776, 0.0
        %6849 = vadd.xlane.f32.xlu0 %v6848
        %v6850 = vpop.xlane.xlu0 %6849
        %v6851 = vsel %vm330, %v6777, 0.0
        %6852 = vadd.xlane.f32.xlu0 %v6851
        %v6853 = vpop.xlane.xlu0 %6852
        %v6854 = vsel %vm330, %v6778, 0.0
        %6855 = vadd.xlane.f32.xlu0 %v6854
        %v6856 = vpop.xlane.xlu0 %6855
        %v6857 = vsel %vm330, %v6779, 0.0
        %6858 = vadd.xlane.f32.xlu0 %v6857
        %v6859 = vpop.xlane.xlu0 %6858
        %v6860 = vsel %vm330, %v6780, 0.0
        %6861 = vadd.xlane.f32.xlu0 %v6860
        %v6862 = vpop.xlane.xlu0 %6861
        %v6863 = vsel %vm330, %v6781, 0.0
        %6864 = vadd.xlane.f32.xlu0 %v6863
        %v6865 = vpop.xlane.xlu0 %6864
        %v6866 = vsel %vm330, %v6782, 0.0
        %6867 = vadd.xlane.f32.xlu0 %v6866
        %v6868 = vpop.xlane.xlu0 %6867
        %v6869 = vsel %vm330, %v6783, 0.0
        %6870 = vadd.xlane.f32.xlu0 %v6869
        %v6871 = vpop.xlane.xlu0 %6870
        %v6872 = vsel %vm330, %v6784, 0.0
        %6873 = vadd.xlane.f32.xlu0 %v6872
        %v6874 = vpop.xlane.xlu0 %6873
        %v6875 = vsel %vm330, %v6785, 0.0
        %6876 = vadd.xlane.f32.xlu0 %v6875
        %v6877 = vpop.xlane.xlu0 %6876
        %v6878 = vsel %vm330, %v6786, 0.0
        %6879 = vadd.xlane.f32.xlu0 %v6878
        %v6880 = vpop.xlane.xlu0 %6879
        %v6881 = vsel %vm330, %v6787, 0.0
        %6882 = vadd.xlane.f32.xlu0 %v6881
        %v6883 = vpop.xlane.xlu0 %6882
        %v6884 = vadd.f32 %v6790, 1e-08
        %v6885 = vadd.f32 %v6793, 1e-08
        %v6886 = vadd.f32 %v6796, 1e-08
        %v6887 = vadd.f32 %v6799, 1e-08
        %v6888 = vadd.f32 %v6802, 1e-08
        %v6889 = vadd.f32 %v6805, 1e-08
        %v6890 = vadd.f32 %v6808, 1e-08
        %v6891 = vadd.f32 %v6811, 1e-08
        %v6892 = vadd.f32 %v6814, 1e-08
        %v6893 = vadd.f32 %v6817, 1e-08
        %v6894 = vadd.f32 %v6820, 1e-08
        %v6895 = vadd.f32 %v6823, 1e-08
        %v6896 = vadd.f32 %v6826, 1e-08
        %v6897 = vadd.f32 %v6829, 1e-08
        %v6898 = vadd.f32 %v6832, 1e-08
        %v6899 = vadd.f32 %v6835, 1e-08
        %v6900 = vadd.f32 %v6838, 1e-08
        %v6901 = vadd.f32 %v6841, 1e-08
        %v6902 = vadd.f32 %v6844, 1e-08
        %v6903 = vadd.f32 %v6847, 1e-08
        %v6904 = vadd.f32 %v6850, 1e-08
        %v6905 = vadd.f32 %v6853, 1e-08
        %v6906 = vadd.f32 %v6856, 1e-08
        %v6907 = vadd.f32 %v6859, 1e-08
        %v6908 = vadd.f32 %v6862, 1e-08
        %v6909 = vadd.f32 %v6865, 1e-08
        %v6910 = vadd.f32 %v6868, 1e-08
        %v6911 = vadd.f32 %v6871, 1e-08
        %v6912 = vadd.f32 %v6874, 1e-08
        %v6913 = vadd.f32 %v6877, 1e-08
        %v6914 = vadd.f32 %v6880, 1e-08
        %v6915 = vadd.f32 %v6883, 1e-08
        %v6916 = vrcp.pop %v6884
        %v6917 = vmul.f32 %v6884, %v6916
        %v6918 = vsub.f32 1.0, %v6917
        %v6919 = vmul.f32 %v6916, %v6918
        %v6920 = vadd.f32 %v6916, %v6919
        %vm6921 = vweird.f32 %v6884
        %vm6922 = vweird.f32 %v6916
        %vm6923 = vmor %vm6921, %vm6922
        %v6924 = vsel %vm6923, %v6916, %v6920
        %v6925 = vand.u32 2147483647, %v6884
        %vm6926 = vcmp.eq.f32.partialorder %v6925, 8.507059e+37
        %v6927 = vand.u32 %v6884, 2147483648
        %v6928 = vor.u32 1.1754944e-38, %v6927
        %v6929 = vsel %vm6926, %v6928, %v6924
        %v6930 = vmul.f32 %v6756, %v6929
        %v6931 = vrcp.pop %v6885
        %v6932 = vmul.f32 %v6885, %v6931
        %v6933 = vsub.f32 1.0, %v6932
        %v6934 = vmul.f32 %v6931, %v6933
        %v6935 = vadd.f32 %v6931, %v6934
        %vm6936 = vweird.f32 %v6885
        %vm6937 = vweird.f32 %v6931
        %vm6938 = vmor %vm6936, %vm6937
        %v6939 = vsel %vm6938, %v6931, %v6935
        %v6940 = vand.u32 2147483647, %v6885
        %vm6941 = vcmp.eq.f32.partialorder %v6940, 8.507059e+37
        %v6942 = vand.u32 %v6885, 2147483648
        %v6943 = vor.u32 1.1754944e-38, %v6942
        %v6944 = vsel %vm6941, %v6943, %v6939
        %v6945 = vmul.f32 %v6757, %v6944
        %v6946 = vrcp.pop %v6886
        %v6947 = vmul.f32 %v6886, %v6946
        %v6948 = vsub.f32 1.0, %v6947
        %v6949 = vmul.f32 %v6946, %v6948
        %v6950 = vadd.f32 %v6946, %v6949
        %vm6951 = vweird.f32 %v6886
        %vm6952 = vweird.f32 %v6946
        %vm6953 = vmor %vm6951, %vm6952
        %v6954 = vsel %vm6953, %v6946, %v6950
        %v6955 = vand.u32 2147483647, %v6886
        %vm6956 = vcmp.eq.f32.partialorder %v6955, 8.507059e+37
        %v6957 = vand.u32 %v6886, 2147483648
        %v6958 = vor.u32 1.1754944e-38, %v6957
        %v6959 = vsel %vm6956, %v6958, %v6954
        %v6960 = vmul.f32 %v6758, %v6959
        %v6961 = vrcp.pop %v6887
        %v6962 = vmul.f32 %v6887, %v6961
        %v6963 = vsub.f32 1.0, %v6962
        %v6964 = vmul.f32 %v6961, %v6963
        %v6965 = vadd.f32 %v6961, %v6964
        %vm6966 = vweird.f32 %v6887
        %vm6967 = vweird.f32 %v6961
        %vm6968 = vmor %vm6966, %vm6967
        %v6969 = vsel %vm6968, %v6961, %v6965
        %v6970 = vand.u32 2147483647, %v6887
        %vm6971 = vcmp.eq.f32.partialorder %v6970, 8.507059e+37
        %v6972 = vand.u32 %v6887, 2147483648
        %v6973 = vor.u32 1.1754944e-38, %v6972
        %v6974 = vsel %vm6971, %v6973, %v6969
        %v6975 = vmul.f32 %v6759, %v6974
        %v6976 = vrcp.pop %v6888
        %v6977 = vmul.f32 %v6888, %v6976
        %v6978 = vsub.f32 1.0, %v6977
        %v6979 = vmul.f32 %v6976, %v6978
        %v6980 = vadd.f32 %v6976, %v6979
        %vm6981 = vweird.f32 %v6888
        %vm6982 = vweird.f32 %v6976
        %vm6983 = vmor %vm6981, %vm6982
        %v6984 = vsel %vm6983, %v6976, %v6980
        %v6985 = vand.u32 2147483647, %v6888
        %vm6986 = vcmp.eq.f32.partialorder %v6985, 8.507059e+37
        %v6987 = vand.u32 %v6888, 2147483648
        %v6988 = vor.u32 1.1754944e-38, %v6987
        %v6989 = vsel %vm6986, %v6988, %v6984
        %v6990 = vmul.f32 %v6760, %v6989
        %v6991 = vrcp.pop %v6889
        %v6992 = vmul.f32 %v6889, %v6991
        %v6993 = vsub.f32 1.0, %v6992
        %v6994 = vmul.f32 %v6991, %v6993
        %v6995 = vadd.f32 %v6991, %v6994
        %vm6996 = vweird.f32 %v6889
        %vm6997 = vweird.f32 %v6991
        %vm6998 = vmor %vm6996, %vm6997
        %v6999 = vsel %vm6998, %v6991, %v6995
        %v7000 = vand.u32 2147483647, %v6889
        %vm7001 = vcmp.eq.f32.partialorder %v7000, 8.507059e+37
        %v7002 = vand.u32 %v6889, 2147483648
        %v7003 = vor.u32 1.1754944e-38, %v7002
        %v7004 = vsel %vm7001, %v7003, %v6999
        %v7005 = vmul.f32 %v6761, %v7004
        %v7006 = vrcp.pop %v6890
        %v7007 = vmul.f32 %v6890, %v7006
        %v7008 = vsub.f32 1.0, %v7007
        %v7009 = vmul.f32 %v7006, %v7008
        %v7010 = vadd.f32 %v7006, %v7009
        %vm7011 = vweird.f32 %v6890
        %vm7012 = vweird.f32 %v7006
        %vm7013 = vmor %vm7011, %vm7012
        %v7014 = vsel %vm7013, %v7006, %v7010
        %v7015 = vand.u32 2147483647, %v6890
        %vm7016 = vcmp.eq.f32.partialorder %v7015, 8.507059e+37
        %v7017 = vand.u32 %v6890, 2147483648
        %v7018 = vor.u32 1.1754944e-38, %v7017
        %v7019 = vsel %vm7016, %v7018, %v7014
        %v7020 = vmul.f32 %v6762, %v7019
        %v7021 = vrcp.pop %v6891
        %v7022 = vmul.f32 %v6891, %v7021
        %v7023 = vsub.f32 1.0, %v7022
        %v7024 = vmul.f32 %v7021, %v7023
        %v7025 = vadd.f32 %v7021, %v7024
        %vm7026 = vweird.f32 %v6891
        %vm7027 = vweird.f32 %v7021
        %vm7028 = vmor %vm7026, %vm7027
        %v7029 = vsel %vm7028, %v7021, %v7025
        %v7030 = vand.u32 2147483647, %v6891
        %vm7031 = vcmp.eq.f32.partialorder %v7030, 8.507059e+37
        %v7032 = vand.u32 %v6891, 2147483648
        %v7033 = vor.u32 1.1754944e-38, %v7032
        %v7034 = vsel %vm7031, %v7033, %v7029
        %v7035 = vmul.f32 %v6763, %v7034
        %v7036 = vrcp.pop %v6892
        %v7037 = vmul.f32 %v6892, %v7036
        %v7038 = vsub.f32 1.0, %v7037
        %v7039 = vmul.f32 %v7036, %v7038
        %v7040 = vadd.f32 %v7036, %v7039
        %vm7041 = vweird.f32 %v6892
        %vm7042 = vweird.f32 %v7036
        %vm7043 = vmor %vm7041, %vm7042
        %v7044 = vsel %vm7043, %v7036, %v7040
        %v7045 = vand.u32 2147483647, %v6892
        %vm7046 = vcmp.eq.f32.partialorder %v7045, 8.507059e+37
        %v7047 = vand.u32 %v6892, 2147483648
        %v7048 = vor.u32 1.1754944e-38, %v7047
        %v7049 = vsel %vm7046, %v7048, %v7044
        %v7050 = vmul.f32 %v6764, %v7049
        %v7051 = vrcp.pop %v6893
        %v7052 = vmul.f32 %v6893, %v7051
        %v7053 = vsub.f32 1.0, %v7052
        %v7054 = vmul.f32 %v7051, %v7053
        %v7055 = vadd.f32 %v7051, %v7054
        %vm7056 = vweird.f32 %v6893
        %vm7057 = vweird.f32 %v7051
        %vm7058 = vmor %vm7056, %vm7057
        %v7059 = vsel %vm7058, %v7051, %v7055
        %v7060 = vand.u32 2147483647, %v6893
        %vm7061 = vcmp.eq.f32.partialorder %v7060, 8.507059e+37
        %v7062 = vand.u32 %v6893, 2147483648
        %v7063 = vor.u32 1.1754944e-38, %v7062
        %v7064 = vsel %vm7061, %v7063, %v7059
        %v7065 = vmul.f32 %v6765, %v7064
        %v7066 = vrcp.pop %v6894
        %v7067 = vmul.f32 %v6894, %v7066
        %v7068 = vsub.f32 1.0, %v7067
        %v7069 = vmul.f32 %v7066, %v7068
        %v7070 = vadd.f32 %v7066, %v7069
        %vm7071 = vweird.f32 %v6894
        %vm7072 = vweird.f32 %v7066
        %vm7073 = vmor %vm7071, %vm7072
        %v7074 = vsel %vm7073, %v7066, %v7070
        %v7075 = vand.u32 2147483647, %v6894
        %vm7076 = vcmp.eq.f32.partialorder %v7075, 8.507059e+37
        %v7077 = vand.u32 %v6894, 2147483648
        %v7078 = vor.u32 1.1754944e-38, %v7077
        %v7079 = vsel %vm7076, %v7078, %v7074
        %v7080 = vmul.f32 %v6766, %v7079
        %v7081 = vrcp.pop %v6895
        %v7082 = vmul.f32 %v6895, %v7081
        %v7083 = vsub.f32 1.0, %v7082
        %v7084 = vmul.f32 %v7081, %v7083
        %v7085 = vadd.f32 %v7081, %v7084
        %vm7086 = vweird.f32 %v6895
        %vm7087 = vweird.f32 %v7081
        %vm7088 = vmor %vm7086, %vm7087
        %v7089 = vsel %vm7088, %v7081, %v7085
        %v7090 = vand.u32 2147483647, %v6895
        %vm7091 = vcmp.eq.f32.partialorder %v7090, 8.507059e+37
        %v7092 = vand.u32 %v6895, 2147483648
        %v7093 = vor.u32 1.1754944e-38, %v7092
        %v7094 = vsel %vm7091, %v7093, %v7089
        %v7095 = vmul.f32 %v6767, %v7094
        %v7096 = vrcp.pop %v6896
        %v7097 = vmul.f32 %v6896, %v7096
        %v7098 = vsub.f32 1.0, %v7097
        %v7099 = vmul.f32 %v7096, %v7098
        %v7100 = vadd.f32 %v7096, %v7099
        %vm7101 = vweird.f32 %v6896
        %vm7102 = vweird.f32 %v7096
        %vm7103 = vmor %vm7101, %vm7102
        %v7104 = vsel %vm7103, %v7096, %v7100
        %v7105 = vand.u32 2147483647, %v6896
        %vm7106 = vcmp.eq.f32.partialorder %v7105, 8.507059e+37
        %v7107 = vand.u32 %v6896, 2147483648
        %v7108 = vor.u32 1.1754944e-38, %v7107
        %v7109 = vsel %vm7106, %v7108, %v7104
        %v7110 = vmul.f32 %v6768, %v7109
        %v7111 = vrcp.pop %v6897
        %v7112 = vmul.f32 %v6897, %v7111
        %v7113 = vsub.f32 1.0, %v7112
        %v7114 = vmul.f32 %v7111, %v7113
        %v7115 = vadd.f32 %v7111, %v7114
        %vm7116 = vweird.f32 %v6897
        %vm7117 = vweird.f32 %v7111
        %vm7118 = vmor %vm7116, %vm7117
        %v7119 = vsel %vm7118, %v7111, %v7115
        %v7120 = vand.u32 2147483647, %v6897
        %vm7121 = vcmp.eq.f32.partialorder %v7120, 8.507059e+37
        %v7122 = vand.u32 %v6897, 2147483648
        %v7123 = vor.u32 1.1754944e-38, %v7122
        %v7124 = vsel %vm7121, %v7123, %v7119
        %v7125 = vmul.f32 %v6769, %v7124
        %v7126 = vrcp.pop %v6898
        %v7127 = vmul.f32 %v6898, %v7126
        %v7128 = vsub.f32 1.0, %v7127
        %v7129 = vmul.f32 %v7126, %v7128
        %v7130 = vadd.f32 %v7126, %v7129
        %vm7131 = vweird.f32 %v6898
        %vm7132 = vweird.f32 %v7126
        %vm7133 = vmor %vm7131, %vm7132
        %v7134 = vsel %vm7133, %v7126, %v7130
        %v7135 = vand.u32 2147483647, %v6898
        %vm7136 = vcmp.eq.f32.partialorder %v7135, 8.507059e+37
        %v7137 = vand.u32 %v6898, 2147483648
        %v7138 = vor.u32 1.1754944e-38, %v7137
        %v7139 = vsel %vm7136, %v7138, %v7134
        %v7140 = vmul.f32 %v6770, %v7139
        %v7141 = vrcp.pop %v6899
        %v7142 = vmul.f32 %v6899, %v7141
        %v7143 = vsub.f32 1.0, %v7142
        %v7144 = vmul.f32 %v7141, %v7143
        %v7145 = vadd.f32 %v7141, %v7144
        %vm7146 = vweird.f32 %v6899
        %vm7147 = vweird.f32 %v7141
        %vm7148 = vmor %vm7146, %vm7147
        %v7149 = vsel %vm7148, %v7141, %v7145
        %v7150 = vand.u32 2147483647, %v6899
        %vm7151 = vcmp.eq.f32.partialorder %v7150, 8.507059e+37
        %v7152 = vand.u32 %v6899, 2147483648
        %v7153 = vor.u32 1.1754944e-38, %v7152
        %v7154 = vsel %vm7151, %v7153, %v7149
        %v7155 = vmul.f32 %v6771, %v7154
        %v7156 = vrcp.pop %v6900
        %v7157 = vmul.f32 %v6900, %v7156
        %v7158 = vsub.f32 1.0, %v7157
        %v7159 = vmul.f32 %v7156, %v7158
        %v7160 = vadd.f32 %v7156, %v7159
        %vm7161 = vweird.f32 %v6900
        %vm7162 = vweird.f32 %v7156
        %vm7163 = vmor %vm7161, %vm7162
        %v7164 = vsel %vm7163, %v7156, %v7160
        %v7165 = vand.u32 2147483647, %v6900
        %vm7166 = vcmp.eq.f32.partialorder %v7165, 8.507059e+37
        %v7167 = vand.u32 %v6900, 2147483648
        %v7168 = vor.u32 1.1754944e-38, %v7167
        %v7169 = vsel %vm7166, %v7168, %v7164
        %v7170 = vmul.f32 %v6772, %v7169
        %v7171 = vrcp.pop %v6901
        %v7172 = vmul.f32 %v6901, %v7171
        %v7173 = vsub.f32 1.0, %v7172
        %v7174 = vmul.f32 %v7171, %v7173
        %v7175 = vadd.f32 %v7171, %v7174
        %vm7176 = vweird.f32 %v6901
        %vm7177 = vweird.f32 %v7171
        %vm7178 = vmor %vm7176, %vm7177
        %v7179 = vsel %vm7178, %v7171, %v7175
        %v7180 = vand.u32 2147483647, %v6901
        %vm7181 = vcmp.eq.f32.partialorder %v7180, 8.507059e+37
        %v7182 = vand.u32 %v6901, 2147483648
        %v7183 = vor.u32 1.1754944e-38, %v7182
        %v7184 = vsel %vm7181, %v7183, %v7179
        %v7185 = vmul.f32 %v6773, %v7184
        %v7186 = vrcp.pop %v6902
        %v7187 = vmul.f32 %v6902, %v7186
        %v7188 = vsub.f32 1.0, %v7187
        %v7189 = vmul.f32 %v7186, %v7188
        %v7190 = vadd.f32 %v7186, %v7189
        %vm7191 = vweird.f32 %v6902
        %vm7192 = vweird.f32 %v7186
        %vm7193 = vmor %vm7191, %vm7192
        %v7194 = vsel %vm7193, %v7186, %v7190
        %v7195 = vand.u32 2147483647, %v6902
        %vm7196 = vcmp.eq.f32.partialorder %v7195, 8.507059e+37
        %v7197 = vand.u32 %v6902, 2147483648
        %v7198 = vor.u32 1.1754944e-38, %v7197
        %v7199 = vsel %vm7196, %v7198, %v7194
        %v7200 = vmul.f32 %v6774, %v7199
        %v7201 = vrcp.pop %v6903
        %v7202 = vmul.f32 %v6903, %v7201
        %v7203 = vsub.f32 1.0, %v7202
        %v7204 = vmul.f32 %v7201, %v7203
        %v7205 = vadd.f32 %v7201, %v7204
        %vm7206 = vweird.f32 %v6903
        %vm7207 = vweird.f32 %v7201
        %vm7208 = vmor %vm7206, %vm7207
        %v7209 = vsel %vm7208, %v7201, %v7205
        %v7210 = vand.u32 2147483647, %v6903
        %vm7211 = vcmp.eq.f32.partialorder %v7210, 8.507059e+37
        %v7212 = vand.u32 %v6903, 2147483648
        %v7213 = vor.u32 1.1754944e-38, %v7212
        %v7214 = vsel %vm7211, %v7213, %v7209
        %v7215 = vmul.f32 %v6775, %v7214
        %v7216 = vrcp.pop %v6904
        %v7217 = vmul.f32 %v6904, %v7216
        %v7218 = vsub.f32 1.0, %v7217
        %v7219 = vmul.f32 %v7216, %v7218
        %v7220 = vadd.f32 %v7216, %v7219
        %vm7221 = vweird.f32 %v6904
        %vm7222 = vweird.f32 %v7216
        %vm7223 = vmor %vm7221, %vm7222
        %v7224 = vsel %vm7223, %v7216, %v7220
        %v7225 = vand.u32 2147483647, %v6904
        %vm7226 = vcmp.eq.f32.partialorder %v7225, 8.507059e+37
        %v7227 = vand.u32 %v6904, 2147483648
        %v7228 = vor.u32 1.1754944e-38, %v7227
        %v7229 = vsel %vm7226, %v7228, %v7224
        %v7230 = vmul.f32 %v6776, %v7229
        %v7231 = vrcp.pop %v6905
        %v7232 = vmul.f32 %v6905, %v7231
        %v7233 = vsub.f32 1.0, %v7232
        %v7234 = vmul.f32 %v7231, %v7233
        %v7235 = vadd.f32 %v7231, %v7234
        %vm7236 = vweird.f32 %v6905
        %vm7237 = vweird.f32 %v7231
        %vm7238 = vmor %vm7236, %vm7237
        %v7239 = vsel %vm7238, %v7231, %v7235
        %v7240 = vand.u32 2147483647, %v6905
        %vm7241 = vcmp.eq.f32.partialorder %v7240, 8.507059e+37
        %v7242 = vand.u32 %v6905, 2147483648
        %v7243 = vor.u32 1.1754944e-38, %v7242
        %v7244 = vsel %vm7241, %v7243, %v7239
        %v7245 = vmul.f32 %v6777, %v7244
        %v7246 = vrcp.pop %v6906
        %v7247 = vmul.f32 %v6906, %v7246
        %v7248 = vsub.f32 1.0, %v7247
        %v7249 = vmul.f32 %v7246, %v7248
        %v7250 = vadd.f32 %v7246, %v7249
        %vm7251 = vweird.f32 %v6906
        %vm7252 = vweird.f32 %v7246
        %vm7253 = vmor %vm7251, %vm7252
        %v7254 = vsel %vm7253, %v7246, %v7250
        %v7255 = vand.u32 2147483647, %v6906
        %vm7256 = vcmp.eq.f32.partialorder %v7255, 8.507059e+37
        %v7257 = vand.u32 %v6906, 2147483648
        %v7258 = vor.u32 1.1754944e-38, %v7257
        %v7259 = vsel %vm7256, %v7258, %v7254
        %v7260 = vmul.f32 %v6778, %v7259
        %v7261 = vrcp.pop %v6907
        %v7262 = vmul.f32 %v6907, %v7261
        %v7263 = vsub.f32 1.0, %v7262
        %v7264 = vmul.f32 %v7261, %v7263
        %v7265 = vadd.f32 %v7261, %v7264
        %vm7266 = vweird.f32 %v6907
        %vm7267 = vweird.f32 %v7261
        %vm7268 = vmor %vm7266, %vm7267
        %v7269 = vsel %vm7268, %v7261, %v7265
        %v7270 = vand.u32 2147483647, %v6907
        %vm7271 = vcmp.eq.f32.partialorder %v7270, 8.507059e+37
        %v7272 = vand.u32 %v6907, 2147483648
        %v7273 = vor.u32 1.1754944e-38, %v7272
        %v7274 = vsel %vm7271, %v7273, %v7269
        %v7275 = vmul.f32 %v6779, %v7274
        %v7276 = vrcp.pop %v6908
        %v7277 = vmul.f32 %v6908, %v7276
        %v7278 = vsub.f32 1.0, %v7277
        %v7279 = vmul.f32 %v7276, %v7278
        %v7280 = vadd.f32 %v7276, %v7279
        %vm7281 = vweird.f32 %v6908
        %vm7282 = vweird.f32 %v7276
        %vm7283 = vmor %vm7281, %vm7282
        %v7284 = vsel %vm7283, %v7276, %v7280
        %v7285 = vand.u32 2147483647, %v6908
        %vm7286 = vcmp.eq.f32.partialorder %v7285, 8.507059e+37
        %v7287 = vand.u32 %v6908, 2147483648
        %v7288 = vor.u32 1.1754944e-38, %v7287
        %v7289 = vsel %vm7286, %v7288, %v7284
        %v7290 = vmul.f32 %v6780, %v7289
        %v7291 = vrcp.pop %v6909
        %v7292 = vmul.f32 %v6909, %v7291
        %v7293 = vsub.f32 1.0, %v7292
        %v7294 = vmul.f32 %v7291, %v7293
        %v7295 = vadd.f32 %v7291, %v7294
        %vm7296 = vweird.f32 %v6909
        %vm7297 = vweird.f32 %v7291
        %vm7298 = vmor %vm7296, %vm7297
        %v7299 = vsel %vm7298, %v7291, %v7295
        %v7300 = vand.u32 2147483647, %v6909
        %vm7301 = vcmp.eq.f32.partialorder %v7300, 8.507059e+37
        %v7302 = vand.u32 %v6909, 2147483648
        %v7303 = vor.u32 1.1754944e-38, %v7302
        %v7304 = vsel %vm7301, %v7303, %v7299
        %v7305 = vmul.f32 %v6781, %v7304
        %v7306 = vrcp.pop %v6910
        %v7307 = vmul.f32 %v6910, %v7306
        %v7308 = vsub.f32 1.0, %v7307
        %v7309 = vmul.f32 %v7306, %v7308
        %v7310 = vadd.f32 %v7306, %v7309
        %vm7311 = vweird.f32 %v6910
        %vm7312 = vweird.f32 %v7306
        %vm7313 = vmor %vm7311, %vm7312
        %v7314 = vsel %vm7313, %v7306, %v7310
        %v7315 = vand.u32 2147483647, %v6910
        %vm7316 = vcmp.eq.f32.partialorder %v7315, 8.507059e+37
        %v7317 = vand.u32 %v6910, 2147483648
        %v7318 = vor.u32 1.1754944e-38, %v7317
        %v7319 = vsel %vm7316, %v7318, %v7314
        %v7320 = vmul.f32 %v6782, %v7319
        %v7321 = vrcp.pop %v6911
        %v7322 = vmul.f32 %v6911, %v7321
        %v7323 = vsub.f32 1.0, %v7322
        %v7324 = vmul.f32 %v7321, %v7323
        %v7325 = vadd.f32 %v7321, %v7324
        %vm7326 = vweird.f32 %v6911
        %vm7327 = vweird.f32 %v7321
        %vm7328 = vmor %vm7326, %vm7327
        %v7329 = vsel %vm7328, %v7321, %v7325
        %v7330 = vand.u32 2147483647, %v6911
        %vm7331 = vcmp.eq.f32.partialorder %v7330, 8.507059e+37
        %v7332 = vand.u32 %v6911, 2147483648
        %v7333 = vor.u32 1.1754944e-38, %v7332
        %v7334 = vsel %vm7331, %v7333, %v7329
        %v7335 = vmul.f32 %v6783, %v7334
        %v7336 = vrcp.pop %v6912
        %v7337 = vmul.f32 %v6912, %v7336
        %v7338 = vsub.f32 1.0, %v7337
        %v7339 = vmul.f32 %v7336, %v7338
        %v7340 = vadd.f32 %v7336, %v7339
        %vm7341 = vweird.f32 %v6912
        %vm7342 = vweird.f32 %v7336
        %vm7343 = vmor %vm7341, %vm7342
        %v7344 = vsel %vm7343, %v7336, %v7340
        %v7345 = vand.u32 2147483647, %v6912
        %vm7346 = vcmp.eq.f32.partialorder %v7345, 8.507059e+37
        %v7347 = vand.u32 %v6912, 2147483648
        %v7348 = vor.u32 1.1754944e-38, %v7347
        %v7349 = vsel %vm7346, %v7348, %v7344
        %v7350 = vmul.f32 %v6784, %v7349
        %v7351 = vrcp.pop %v6913
        %v7352 = vmul.f32 %v6913, %v7351
        %v7353 = vsub.f32 1.0, %v7352
        %v7354 = vmul.f32 %v7351, %v7353
        %v7355 = vadd.f32 %v7351, %v7354
        %vm7356 = vweird.f32 %v6913
        %vm7357 = vweird.f32 %v7351
        %vm7358 = vmor %vm7356, %vm7357
        %v7359 = vsel %vm7358, %v7351, %v7355
        %v7360 = vand.u32 2147483647, %v6913
        %vm7361 = vcmp.eq.f32.partialorder %v7360, 8.507059e+37
        %v7362 = vand.u32 %v6913, 2147483648
        %v7363 = vor.u32 1.1754944e-38, %v7362
        %v7364 = vsel %vm7361, %v7363, %v7359
        %v7365 = vmul.f32 %v6785, %v7364
        %v7366 = vrcp.pop %v6914
        %v7367 = vmul.f32 %v6914, %v7366
        %v7368 = vsub.f32 1.0, %v7367
        %v7369 = vmul.f32 %v7366, %v7368
        %v7370 = vadd.f32 %v7366, %v7369
        %vm7371 = vweird.f32 %v6914
        %vm7372 = vweird.f32 %v7366
        %vm7373 = vmor %vm7371, %vm7372
        %v7374 = vsel %vm7373, %v7366, %v7370
        %v7375 = vand.u32 2147483647, %v6914
        %vm7376 = vcmp.eq.f32.partialorder %v7375, 8.507059e+37
        %v7377 = vand.u32 %v6914, 2147483648
        %v7378 = vor.u32 1.1754944e-38, %v7377
        %v7379 = vsel %vm7376, %v7378, %v7374
        %v7380 = vmul.f32 %v6786, %v7379
        %v7381 = vrcp.pop %v6915
        %v7382 = vmul.f32 %v6915, %v7381
        %v7383 = vsub.f32 1.0, %v7382
        %v7384 = vmul.f32 %v7381, %v7383
        %v7385 = vadd.f32 %v7381, %v7384
        %vm7386 = vweird.f32 %v6915
        %vm7387 = vweird.f32 %v7381
        %vm7388 = vmor %vm7386, %vm7387
        %v7389 = vsel %vm7388, %v7381, %v7385
        %v7390 = vand.u32 2147483647, %v6915
        %vm7391 = vcmp.eq.f32.partialorder %v7390, 8.507059e+37
        %v7392 = vand.u32 %v6915, 2147483648
        %v7393 = vor.u32 1.1754944e-38, %v7392
        %v7394 = vsel %vm7391, %v7393, %v7389
        %v7395 = vmul.f32 %v6787, %v7394
        %7396 = vrot.lane.b32.xlu0 %v558, 80
        %v7397 = vpop.permute.xlu0 %7396
        %7398 = vrot.lane.b32.xlu0 %v561, 80
        %v7399 = vpop.permute.xlu0 %7398
        %7400 = vrot.lane.b32.xlu0 %v564, 80
        %v7401 = vpop.permute.xlu0 %7400
        %7402 = vrot.lane.b32.xlu0 %v567, 80
        %v7403 = vpop.permute.xlu0 %7402
        %v7409 = vsel %vm330, %v6930, 0
        %v7412 = vsel %vm330, %v6945, 0
        %v7415 = vsel %vm330, %v6960, 0
        %v7418 = vsel %vm330, %v6975, 0
        %7420 = vmatpush.msra.mxu0 0.0
        %7421 = vmatpush.msra.mxu0 0.0
        %7422 = vmatpush.msra.mxu0 0.0
        %7423 = vmatpush.msra.mxu0 0.0
        %7424 = vmatpush.msra.mxu0 0.0
        %7425 = vmatpush.msra.mxu0 0.0
        %7426 = vmatpush.msra.mxu0 0.0
        %7427 = vmatpush.msra.mxu0 0.0
        %7428 = vmatpush.msra.mxu0 0.0
        %7429 = vmatpush.msra.mxu0 0.0
        %7430 = vmatpush.msra.mxu0 0.0
        %7431 = vmatpush.msra.mxu0 0.0
        %7432 = vmatpush.msra.mxu0 %v7403
        %7433 = vmatpush.msra.mxu0 %v7401
        %7434 = vmatpush.msra.mxu0 %v7399
        %7435 = vmatpush.msra.mxu0 %v7397
        %7436 = vmatmul.f32.gmra.mxu0 %v7409
        %v7437 = vpop.f32.mrf.mxu0
        %v7438 = vadd.f32 0.0, %v7437
        %7439 = vmatmul.f32.gmra.mxu0 %v7412
        %v7440 = vpop.f32.mrf.mxu0
        %v7441 = vadd.f32 0.0, %v7440
        %7442 = vmatmul.f32.gmra.mxu0 %v7415
        %v7443 = vpop.f32.mrf.mxu0
        %v7444 = vadd.f32 0.0, %v7443
        %7445 = vmatmul.f32.gmra.mxu0 %v7418
        %v7446 = vpop.f32.mrf.mxu0
        %v7447 = vadd.f32 0.0, %v7446
        %7448 = vdwg.mxu0
        %7449 = vrot.lane.b32.xlu0 %v570, 80
        %v7450 = vpop.permute.xlu0 %7449
        %7451 = vrot.lane.b32.xlu0 %v573, 80
        %v7452 = vpop.permute.xlu0 %7451
        %7453 = vrot.lane.b32.xlu0 %v576, 80
        %v7454 = vpop.permute.xlu0 %7453
        %7455 = vrot.lane.b32.xlu0 %v579, 80
        %v7456 = vpop.permute.xlu0 %7455
        %v7462 = vsel %vm330, %v6990, 0
        %v7465 = vsel %vm330, %v7005, 0
        %v7468 = vsel %vm330, %v7020, 0
        %v7471 = vsel %vm330, %v7035, 0
        %7473 = vmatpush.msra.mxu0 0.0
        %7474 = vmatpush.msra.mxu0 0.0
        %7475 = vmatpush.msra.mxu0 0.0
        %7476 = vmatpush.msra.mxu0 0.0
        %7477 = vmatpush.msra.mxu0 0.0
        %7478 = vmatpush.msra.mxu0 0.0
        %7479 = vmatpush.msra.mxu0 0.0
        %7480 = vmatpush.msra.mxu0 0.0
        %7481 = vmatpush.msra.mxu0 0.0
        %7482 = vmatpush.msra.mxu0 0.0
        %7483 = vmatpush.msra.mxu0 0.0
        %7484 = vmatpush.msra.mxu0 0.0
        %7485 = vmatpush.msra.mxu0 %v7456
        %7486 = vmatpush.msra.mxu0 %v7454
        %7487 = vmatpush.msra.mxu0 %v7452
        %7488 = vmatpush.msra.mxu0 %v7450
        %7489 = vmatmul.f32.gmra.mxu0 %v7462
        %v7490 = vpop.f32.mrf.mxu0
        %v7491 = vadd.f32 0.0, %v7490
        %7492 = vmatmul.f32.gmra.mxu0 %v7465
        %v7493 = vpop.f32.mrf.mxu0
        %v7494 = vadd.f32 0.0, %v7493
        %7495 = vmatmul.f32.gmra.mxu0 %v7468
        %v7496 = vpop.f32.mrf.mxu0
        %v7497 = vadd.f32 0.0, %v7496
        %7498 = vmatmul.f32.gmra.mxu0 %v7471
        %v7499 = vpop.f32.mrf.mxu0
        %v7500 = vadd.f32 0.0, %v7499
        %7501 = vdwg.mxu0
        %7502 = vrot.lane.b32.xlu0 %v582, 80
        %v7503 = vpop.permute.xlu0 %7502
        %7504 = vrot.lane.b32.xlu0 %v585, 80
        %v7505 = vpop.permute.xlu0 %7504
        %7506 = vrot.lane.b32.xlu0 %v588, 80
        %v7507 = vpop.permute.xlu0 %7506
        %7508 = vrot.lane.b32.xlu0 %v591, 80
        %v7509 = vpop.permute.xlu0 %7508
        %v7515 = vsel %vm330, %v7050, 0
        %v7518 = vsel %vm330, %v7065, 0
        %v7521 = vsel %vm330, %v7080, 0
        %v7524 = vsel %vm330, %v7095, 0
        %7526 = vmatpush.msra.mxu0 0.0
        %7527 = vmatpush.msra.mxu0 0.0
        %7528 = vmatpush.msra.mxu0 0.0
        %7529 = vmatpush.msra.mxu0 0.0
        %7530 = vmatpush.msra.mxu0 0.0
        %7531 = vmatpush.msra.mxu0 0.0
        %7532 = vmatpush.msra.mxu0 0.0
        %7533 = vmatpush.msra.mxu0 0.0
        %7534 = vmatpush.msra.mxu0 0.0
        %7535 = vmatpush.msra.mxu0 0.0
        %7536 = vmatpush.msra.mxu0 0.0
        %7537 = vmatpush.msra.mxu0 0.0
        %7538 = vmatpush.msra.mxu0 %v7509
        %7539 = vmatpush.msra.mxu0 %v7507
        %7540 = vmatpush.msra.mxu0 %v7505
        %7541 = vmatpush.msra.mxu0 %v7503
        %7542 = vmatmul.f32.gmra.mxu0 %v7515
        %v7543 = vpop.f32.mrf.mxu0
        %v7544 = vadd.f32 0.0, %v7543
        %7545 = vmatmul.f32.gmra.mxu0 %v7518
        %v7546 = vpop.f32.mrf.mxu0
        %v7547 = vadd.f32 0.0, %v7546
        %7548 = vmatmul.f32.gmra.mxu0 %v7521
        %v7549 = vpop.f32.mrf.mxu0
        %v7550 = vadd.f32 0.0, %v7549
        %7551 = vmatmul.f32.gmra.mxu0 %v7524
        %v7552 = vpop.f32.mrf.mxu0
        %v7553 = vadd.f32 0.0, %v7552
        %7554 = vdwg.mxu0
        %7555 = vrot.lane.b32.xlu0 %v594, 80
        %v7556 = vpop.permute.xlu0 %7555
        %7557 = vrot.lane.b32.xlu0 %v597, 80
        %v7558 = vpop.permute.xlu0 %7557
        %7559 = vrot.lane.b32.xlu0 %v600, 80
        %v7560 = vpop.permute.xlu0 %7559
        %7561 = vrot.lane.b32.xlu0 %v603, 80
        %v7562 = vpop.permute.xlu0 %7561
        %v7568 = vsel %vm330, %v7110, 0
        %v7571 = vsel %vm330, %v7125, 0
        %v7574 = vsel %vm330, %v7140, 0
        %v7577 = vsel %vm330, %v7155, 0
        %7579 = vmatpush.msra.mxu0 0.0
        %7580 = vmatpush.msra.mxu0 0.0
        %7581 = vmatpush.msra.mxu0 0.0
        %7582 = vmatpush.msra.mxu0 0.0
        %7583 = vmatpush.msra.mxu0 0.0
        %7584 = vmatpush.msra.mxu0 0.0
        %7585 = vmatpush.msra.mxu0 0.0
        %7586 = vmatpush.msra.mxu0 0.0
        %7587 = vmatpush.msra.mxu0 0.0
        %7588 = vmatpush.msra.mxu0 0.0
        %7589 = vmatpush.msra.mxu0 0.0
        %7590 = vmatpush.msra.mxu0 0.0
        %7591 = vmatpush.msra.mxu0 %v7562
        %7592 = vmatpush.msra.mxu0 %v7560
        %7593 = vmatpush.msra.mxu0 %v7558
        %7594 = vmatpush.msra.mxu0 %v7556
        %7595 = vmatmul.f32.gmra.mxu0 %v7568
        %v7596 = vpop.f32.mrf.mxu0
        %v7597 = vadd.f32 0.0, %v7596
        %7598 = vmatmul.f32.gmra.mxu0 %v7571
        %v7599 = vpop.f32.mrf.mxu0
        %v7600 = vadd.f32 0.0, %v7599
        %7601 = vmatmul.f32.gmra.mxu0 %v7574
        %v7602 = vpop.f32.mrf.mxu0
        %v7603 = vadd.f32 0.0, %v7602
        %7604 = vmatmul.f32.gmra.mxu0 %v7577
        %v7605 = vpop.f32.mrf.mxu0
        %v7606 = vadd.f32 0.0, %v7605
        %7607 = vdwg.mxu0
        %7608 = vrot.lane.b32.xlu0 %v606, 80
        %v7609 = vpop.permute.xlu0 %7608
        %7610 = vrot.lane.b32.xlu0 %v609, 80
        %v7611 = vpop.permute.xlu0 %7610
        %7612 = vrot.lane.b32.xlu0 %v612, 80
        %v7613 = vpop.permute.xlu0 %7612
        %7614 = vrot.lane.b32.xlu0 %v615, 80
        %v7615 = vpop.permute.xlu0 %7614
        %v7621 = vsel %vm330, %v7170, 0
        %v7624 = vsel %vm330, %v7185, 0
        %v7627 = vsel %vm330, %v7200, 0
        %v7630 = vsel %vm330, %v7215, 0
        %7632 = vmatpush.msra.mxu0 0.0
        %7633 = vmatpush.msra.mxu0 0.0
        %7634 = vmatpush.msra.mxu0 0.0
        %7635 = vmatpush.msra.mxu0 0.0
        %7636 = vmatpush.msra.mxu0 0.0
        %7637 = vmatpush.msra.mxu0 0.0
        %7638 = vmatpush.msra.mxu0 0.0
        %7639 = vmatpush.msra.mxu0 0.0
        %7640 = vmatpush.msra.mxu0 0.0
        %7641 = vmatpush.msra.mxu0 0.0
        %7642 = vmatpush.msra.mxu0 0.0
        %7643 = vmatpush.msra.mxu0 0.0
        %7644 = vmatpush.msra.mxu0 %v7615
        %7645 = vmatpush.msra.mxu0 %v7613
        %7646 = vmatpush.msra.mxu0 %v7611
        %7647 = vmatpush.msra.mxu0 %v7609
        %7648 = vmatmul.f32.gmra.mxu0 %v7621
        %v7649 = vpop.f32.mrf.mxu0
        %v7650 = vadd.f32 0.0, %v7649
        %7651 = vmatmul.f32.gmra.mxu0 %v7624
        %v7652 = vpop.f32.mrf.mxu0
        %v7653 = vadd.f32 0.0, %v7652
        %7654 = vmatmul.f32.gmra.mxu0 %v7627
        %v7655 = vpop.f32.mrf.mxu0
        %v7656 = vadd.f32 0.0, %v7655
        %7657 = vmatmul.f32.gmra.mxu0 %v7630
        %v7658 = vpop.f32.mrf.mxu0
        %v7659 = vadd.f32 0.0, %v7658
        %7660 = vdwg.mxu0
        %7661 = vrot.lane.b32.xlu0 %v618, 80
        %v7662 = vpop.permute.xlu0 %7661
        %7663 = vrot.lane.b32.xlu0 %v621, 80
        %v7664 = vpop.permute.xlu0 %7663
        %7665 = vrot.lane.b32.xlu0 %v624, 80
        %v7666 = vpop.permute.xlu0 %7665
        %7667 = vrot.lane.b32.xlu0 %v627, 80
        %v7668 = vpop.permute.xlu0 %7667
        %v7674 = vsel %vm330, %v7230, 0
        %v7677 = vsel %vm330, %v7245, 0
        %v7680 = vsel %vm330, %v7260, 0
        %v7683 = vsel %vm330, %v7275, 0
        %7685 = vmatpush.msra.mxu0 0.0
        %7686 = vmatpush.msra.mxu0 0.0
        %7687 = vmatpush.msra.mxu0 0.0
        %7688 = vmatpush.msra.mxu0 0.0
        %7689 = vmatpush.msra.mxu0 0.0
        %7690 = vmatpush.msra.mxu0 0.0
        %7691 = vmatpush.msra.mxu0 0.0
        %7692 = vmatpush.msra.mxu0 0.0
        %7693 = vmatpush.msra.mxu0 0.0
        %7694 = vmatpush.msra.mxu0 0.0
        %7695 = vmatpush.msra.mxu0 0.0
        %7696 = vmatpush.msra.mxu0 0.0
        %7697 = vmatpush.msra.mxu0 %v7668
        %7698 = vmatpush.msra.mxu0 %v7666
        %7699 = vmatpush.msra.mxu0 %v7664
        %7700 = vmatpush.msra.mxu0 %v7662
        %7701 = vmatmul.f32.gmra.mxu0 %v7674
        %v7702 = vpop.f32.mrf.mxu0
        %v7703 = vadd.f32 0.0, %v7702
        %7704 = vmatmul.f32.gmra.mxu0 %v7677
        %v7705 = vpop.f32.mrf.mxu0
        %v7706 = vadd.f32 0.0, %v7705
        %7707 = vmatmul.f32.gmra.mxu0 %v7680
        %v7708 = vpop.f32.mrf.mxu0
        %v7709 = vadd.f32 0.0, %v7708
        %7710 = vmatmul.f32.gmra.mxu0 %v7683
        %v7711 = vpop.f32.mrf.mxu0
        %v7712 = vadd.f32 0.0, %v7711
        %7713 = vdwg.mxu0
        %7714 = vrot.lane.b32.xlu0 %v630, 80
        %v7715 = vpop.permute.xlu0 %7714
        %7716 = vrot.lane.b32.xlu0 %v633, 80
        %v7717 = vpop.permute.xlu0 %7716
        %7718 = vrot.lane.b32.xlu0 %v636, 80
        %v7719 = vpop.permute.xlu0 %7718
        %7720 = vrot.lane.b32.xlu0 %v639, 80
        %v7721 = vpop.permute.xlu0 %7720
        %v7727 = vsel %vm330, %v7290, 0
        %v7730 = vsel %vm330, %v7305, 0
        %v7733 = vsel %vm330, %v7320, 0
        %v7736 = vsel %vm330, %v7335, 0
        %7738 = vmatpush.msra.mxu0 0.0
        %7739 = vmatpush.msra.mxu0 0.0
        %7740 = vmatpush.msra.mxu0 0.0
        %7741 = vmatpush.msra.mxu0 0.0
        %7742 = vmatpush.msra.mxu0 0.0
        %7743 = vmatpush.msra.mxu0 0.0
        %7744 = vmatpush.msra.mxu0 0.0
        %7745 = vmatpush.msra.mxu0 0.0
        %7746 = vmatpush.msra.mxu0 0.0
        %7747 = vmatpush.msra.mxu0 0.0
        %7748 = vmatpush.msra.mxu0 0.0
        %7749 = vmatpush.msra.mxu0 0.0
        %7750 = vmatpush.msra.mxu0 %v7721
        %7751 = vmatpush.msra.mxu0 %v7719
        %7752 = vmatpush.msra.mxu0 %v7717
        %7753 = vmatpush.msra.mxu0 %v7715
        %7754 = vmatmul.f32.gmra.mxu0 %v7727
        %v7755 = vpop.f32.mrf.mxu0
        %v7756 = vadd.f32 0.0, %v7755
        %7757 = vmatmul.f32.gmra.mxu0 %v7730
        %v7758 = vpop.f32.mrf.mxu0
        %v7759 = vadd.f32 0.0, %v7758
        %7760 = vmatmul.f32.gmra.mxu0 %v7733
        %v7761 = vpop.f32.mrf.mxu0
        %v7762 = vadd.f32 0.0, %v7761
        %7763 = vmatmul.f32.gmra.mxu0 %v7736
        %v7764 = vpop.f32.mrf.mxu0
        %v7765 = vadd.f32 0.0, %v7764
        %7766 = vdwg.mxu0
        %7767 = vrot.lane.b32.xlu0 %v642, 80
        %v7768 = vpop.permute.xlu0 %7767
        %7769 = vrot.lane.b32.xlu0 %v645, 80
        %v7770 = vpop.permute.xlu0 %7769
        %7771 = vrot.lane.b32.xlu0 %v648, 80
        %v7772 = vpop.permute.xlu0 %7771
        %7773 = vrot.lane.b32.xlu0 %v651, 80
        %v7774 = vpop.permute.xlu0 %7773
        %v7780 = vsel %vm330, %v7350, 0
        %v7783 = vsel %vm330, %v7365, 0
        %v7786 = vsel %vm330, %v7380, 0
        %v7789 = vsel %vm330, %v7395, 0
        %7791 = vmatpush.msra.mxu0 0.0
        %7792 = vmatpush.msra.mxu0 0.0
        %7793 = vmatpush.msra.mxu0 0.0
        %7794 = vmatpush.msra.mxu0 0.0
        %7795 = vmatpush.msra.mxu0 0.0
        %7796 = vmatpush.msra.mxu0 0.0
        %7797 = vmatpush.msra.mxu0 0.0
        %7798 = vmatpush.msra.mxu0 0.0
        %7799 = vmatpush.msra.mxu0 0.0
        %7800 = vmatpush.msra.mxu0 0.0
        %7801 = vmatpush.msra.mxu0 0.0
        %7802 = vmatpush.msra.mxu0 0.0
        %7803 = vmatpush.msra.mxu0 %v7774
        %7804 = vmatpush.msra.mxu0 %v7772
        %7805 = vmatpush.msra.mxu0 %v7770
        %7806 = vmatpush.msra.mxu0 %v7768
        %7807 = vmatmul.f32.gmra.mxu0 %v7780
        %v7808 = vpop.f32.mrf.mxu0
        %v7809 = vadd.f32 0.0, %v7808
        %7810 = vmatmul.f32.gmra.mxu0 %v7783
        %v7811 = vpop.f32.mrf.mxu0
        %v7812 = vadd.f32 0.0, %v7811
        %7813 = vmatmul.f32.gmra.mxu0 %v7786
        %v7814 = vpop.f32.mrf.mxu0
        %v7815 = vadd.f32 0.0, %v7814
        %7816 = vmatmul.f32.gmra.mxu0 %v7789
        %v7817 = vpop.f32.mrf.mxu0
        %v7818 = vadd.f32 0.0, %v7817
        %7819 = vdwg.mxu0
        %v7820 = vld [vmem:[%s3 + $0x30] sm:$0xff]
        %v7821 = vld [vmem:[%s3 + $0x38] sm:$0xff]
        %v7823 = vsel %vm670, %v7438, 0
        %v7826 = vsel %vm670, %v7441, 0
        %v7829 = vsel %vm670, %v7444, 0
        %v7832 = vsel %vm670, %v7447, 0
        %v7835 = vsel %vm670, %v7491, 0
        %v7838 = vsel %vm670, %v7494, 0
        %v7841 = vsel %vm670, %v7497, 0
        %v7844 = vsel %vm670, %v7500, 0
        %v7847 = vsel %vm670, %v7544, 0
        %v7850 = vsel %vm670, %v7547, 0
        %v7853 = vsel %vm670, %v7550, 0
        %v7856 = vsel %vm670, %v7553, 0
        %v7859 = vsel %vm670, %v7597, 0
        %v7862 = vsel %vm670, %v7600, 0
        %v7865 = vsel %vm670, %v7603, 0
        %v7868 = vsel %vm670, %v7606, 0
        %v7871 = vsel %vm670, %v7650, 0
        %v7874 = vsel %vm670, %v7653, 0
        %v7877 = vsel %vm670, %v7656, 0
        %v7880 = vsel %vm670, %v7659, 0
        %v7883 = vsel %vm670, %v7703, 0
        %v7886 = vsel %vm670, %v7706, 0
        %v7889 = vsel %vm670, %v7709, 0
        %v7892 = vsel %vm670, %v7712, 0
        %v7895 = vsel %vm670, %v7756, 0
        %v7898 = vsel %vm670, %v7759, 0
        %v7901 = vsel %vm670, %v7762, 0
        %v7904 = vsel %vm670, %v7765, 0
        %v7907 = vsel %vm670, %v7809, 0
        %v7910 = vsel %vm670, %v7812, 0
        %v7913 = vsel %vm670, %v7815, 0
        %v7916 = vsel %vm670, %v7818, 0
        %7918 = vmatpush.msra.mxu0 0.0
        %7919 = vmatpush.msra.mxu0 0.0
        %7920 = vmatpush.msra.mxu0 0.0
        %7921 = vmatpush.msra.mxu0 0.0
        %7922 = vmatpush.msra.mxu0 0.0
        %7923 = vmatpush.msra.mxu0 0.0
        %7924 = vmatpush.msra.mxu0 0.0
        %7925 = vmatpush.msra.mxu0 0.0
        %7926 = vmatpush.msra.mxu0 0.0
        %7927 = vmatpush.msra.mxu0 0.0
        %7928 = vmatpush.msra.mxu0 0.0
        %7929 = vmatpush.msra.mxu0 0.0
        %7930 = vmatpush.msra.mxu0 0.0
        %7931 = vmatpush.msra.mxu0 0.0
        %7932 = vmatpush.msra.mxu0 %v7821
        %7933 = vmatpush.msra.mxu0 %v7820
        %7934 = vmatmul.f32.gmra.mxu0 %v7823
        %v7935 = vpop.f32.mrf.mxu0
        %v7936 = vadd.f32 0.0, %v7935
        %7937 = vmatmul.f32.gmra.mxu0 %v7826
        %v7938 = vpop.f32.mrf.mxu0
        %v7939 = vadd.f32 0.0, %v7938
        %7940 = vmatmul.f32.gmra.mxu0 %v7829
        %v7941 = vpop.f32.mrf.mxu0
        %v7942 = vadd.f32 0.0, %v7941
        %7943 = vmatmul.f32.gmra.mxu0 %v7832
        %v7944 = vpop.f32.mrf.mxu0
        %v7945 = vadd.f32 0.0, %v7944
        %7946 = vmatmul.f32.gmra.mxu0 %v7835
        %v7947 = vpop.f32.mrf.mxu0
        %v7948 = vadd.f32 0.0, %v7947
        %7949 = vmatmul.f32.gmra.mxu0 %v7838
        %v7950 = vpop.f32.mrf.mxu0
        %v7951 = vadd.f32 0.0, %v7950
        %7952 = vmatmul.f32.gmra.mxu0 %v7841
        %v7953 = vpop.f32.mrf.mxu0
        %v7954 = vadd.f32 0.0, %v7953
        %7955 = vmatmul.f32.gmra.mxu0 %v7844
        %v7956 = vpop.f32.mrf.mxu0
        %v7957 = vadd.f32 0.0, %v7956
        %7958 = vmatmul.f32.gmra.mxu0 %v7847
        %v7959 = vpop.f32.mrf.mxu0
        %v7960 = vadd.f32 0.0, %v7959
        %7961 = vmatmul.f32.gmra.mxu0 %v7850
        %v7962 = vpop.f32.mrf.mxu0
        %v7963 = vadd.f32 0.0, %v7962
        %7964 = vmatmul.f32.gmra.mxu0 %v7853
        %v7965 = vpop.f32.mrf.mxu0
        %v7966 = vadd.f32 0.0, %v7965
        %7967 = vmatmul.f32.gmra.mxu0 %v7856
        %v7968 = vpop.f32.mrf.mxu0
        %v7969 = vadd.f32 0.0, %v7968
        %7970 = vmatmul.f32.gmra.mxu0 %v7859
        %v7971 = vpop.f32.mrf.mxu0
        %v7972 = vadd.f32 0.0, %v7971
        %7973 = vmatmul.f32.gmra.mxu0 %v7862
        %v7974 = vpop.f32.mrf.mxu0
        %v7975 = vadd.f32 0.0, %v7974
        %7976 = vmatmul.f32.gmra.mxu0 %v7865
        %v7977 = vpop.f32.mrf.mxu0
        %v7978 = vadd.f32 0.0, %v7977
        %7979 = vmatmul.f32.gmra.mxu0 %v7868
        %v7980 = vpop.f32.mrf.mxu0
        %v7981 = vadd.f32 0.0, %v7980
        %7982 = vmatmul.f32.gmra.mxu0 %v7871
        %v7983 = vpop.f32.mrf.mxu0
        %v7984 = vadd.f32 0.0, %v7983
        %7985 = vmatmul.f32.gmra.mxu0 %v7874
        %v7986 = vpop.f32.mrf.mxu0
        %v7987 = vadd.f32 0.0, %v7986
        %7988 = vmatmul.f32.gmra.mxu0 %v7877
        %v7989 = vpop.f32.mrf.mxu0
        %v7990 = vadd.f32 0.0, %v7989
        %7991 = vmatmul.f32.gmra.mxu0 %v7880
        %v7992 = vpop.f32.mrf.mxu0
        %v7993 = vadd.f32 0.0, %v7992
        %7994 = vmatmul.f32.gmra.mxu0 %v7883
        %v7995 = vpop.f32.mrf.mxu0
        %v7996 = vadd.f32 0.0, %v7995
        %7997 = vmatmul.f32.gmra.mxu0 %v7886
        %v7998 = vpop.f32.mrf.mxu0
        %v7999 = vadd.f32 0.0, %v7998
        %8000 = vmatmul.f32.gmra.mxu0 %v7889
        %v8001 = vpop.f32.mrf.mxu0
        %v8002 = vadd.f32 0.0, %v8001
        %8003 = vmatmul.f32.gmra.mxu0 %v7892
        %v8004 = vpop.f32.mrf.mxu0
        %v8005 = vadd.f32 0.0, %v8004
        %8006 = vmatmul.f32.gmra.mxu0 %v7895
        %v8007 = vpop.f32.mrf.mxu0
        %v8008 = vadd.f32 0.0, %v8007
        %8009 = vmatmul.f32.gmra.mxu0 %v7898
        %v8010 = vpop.f32.mrf.mxu0
        %v8011 = vadd.f32 0.0, %v8010
        %8012 = vmatmul.f32.gmra.mxu0 %v7901
        %v8013 = vpop.f32.mrf.mxu0
        %v8014 = vadd.f32 0.0, %v8013
        %8015 = vmatmul.f32.gmra.mxu0 %v7904
        %v8016 = vpop.f32.mrf.mxu0
        %v8017 = vadd.f32 0.0, %v8016
        %8018 = vmatmul.f32.gmra.mxu0 %v7907
        %v8019 = vpop.f32.mrf.mxu0
        %v8020 = vadd.f32 0.0, %v8019
        %8021 = vmatmul.f32.gmra.mxu0 %v7910
        %v8022 = vpop.f32.mrf.mxu0
        %v8023 = vadd.f32 0.0, %v8022
        %8024 = vmatmul.f32.gmra.mxu0 %v7913
        %v8025 = vpop.f32.mrf.mxu0
        %v8026 = vadd.f32 0.0, %v8025
        %8027 = vmatmul.f32.gmra.mxu0 %v7916
        %v8028 = vpop.f32.mrf.mxu0
        %v8029 = vadd.f32 0.0, %v8028
        %8030 = vdwg.mxu0
        %v8031 = vadd.f32 %v6140, %v7936
        %v8032 = vadd.f32 %v6141, %v7939
        %v8033 = vadd.f32 %v6142, %v7942
        %v8034 = vadd.f32 %v6143, %v7945
        %v8035 = vadd.f32 %v6144, %v7948
        %v8036 = vadd.f32 %v6145, %v7951
        %v8037 = vadd.f32 %v6146, %v7954
        %v8038 = vadd.f32 %v6147, %v7957
        %v8039 = vadd.f32 %v6148, %v7960
        %v8040 = vadd.f32 %v6149, %v7963
        %v8041 = vadd.f32 %v6150, %v7966
        %v8042 = vadd.f32 %v6151, %v7969
        %v8043 = vadd.f32 %v6152, %v7972
        %v8044 = vadd.f32 %v6153, %v7975
        %v8045 = vadd.f32 %v6154, %v7978
        %v8046 = vadd.f32 %v6155, %v7981
        %v8047 = vadd.f32 %v6156, %v7984
        %v8048 = vadd.f32 %v6157, %v7987
        %v8049 = vadd.f32 %v6158, %v7990
        %v8050 = vadd.f32 %v6159, %v7993
        %v8051 = vadd.f32 %v6160, %v7996
        %v8052 = vadd.f32 %v6161, %v7999
        %v8053 = vadd.f32 %v6162, %v8002
        %v8054 = vadd.f32 %v6163, %v8005
        %v8055 = vadd.f32 %v6164, %v8008
        %v8056 = vadd.f32 %v6165, %v8011
        %v8057 = vadd.f32 %v6166, %v8014
        %v8058 = vadd.f32 %v6167, %v8017
        %v8059 = vadd.f32 %v6168, %v8020
        %v8060 = vadd.f32 %v6169, %v8023
        %v8061 = vadd.f32 %v6170, %v8026
        %v8062 = vadd.f32 %v6171, %v8029
        %v8063 = vld [vmem:[%s4] sm:$0x1]
        %v8065 = vperm.slane %v8063, 0
        %v8067 = vadd.f32 %v8031, %v8065
        %v8068 = vadd.f32 %v8032, %v8065
        %v8069 = vadd.f32 %v8033, %v8065
        %v8070 = vadd.f32 %v8034, %v8065
        %v8071 = vadd.f32 %v8035, %v8065
        %v8072 = vadd.f32 %v8036, %v8065
        %v8073 = vadd.f32 %v8037, %v8065
        %v8074 = vadd.f32 %v8038, %v8065
        %v8075 = vadd.f32 %v8039, %v8065
        %v8076 = vadd.f32 %v8040, %v8065
        %v8077 = vadd.f32 %v8041, %v8065
        %v8078 = vadd.f32 %v8042, %v8065
        %v8079 = vadd.f32 %v8043, %v8065
        %v8080 = vadd.f32 %v8044, %v8065
        %v8081 = vadd.f32 %v8045, %v8065
        %v8082 = vadd.f32 %v8046, %v8065
        %v8083 = vadd.f32 %v8047, %v8065
        %v8084 = vadd.f32 %v8048, %v8065
        %v8085 = vadd.f32 %v8049, %v8065
        %v8086 = vadd.f32 %v8050, %v8065
        %v8087 = vadd.f32 %v8051, %v8065
        %v8088 = vadd.f32 %v8052, %v8065
        %v8089 = vadd.f32 %v8053, %v8065
        %v8090 = vadd.f32 %v8054, %v8065
        %v8091 = vadd.f32 %v8055, %v8065
        %v8092 = vadd.f32 %v8056, %v8065
        %v8093 = vadd.f32 %v8057, %v8065
        %v8094 = vadd.f32 %v8058, %v8065
        %v8095 = vadd.f32 %v8059, %v8065
        %v8096 = vadd.f32 %v8060, %v8065
        %v8097 = vadd.f32 %v8061, %v8065
        %v8098 = vadd.f32 %v8062, %v8065
        %v8099 = vtanh.pop %v8067
        %v8100 = vtanh.pop %v8068
        %v8101 = vtanh.pop %v8069
        %v8102 = vtanh.pop %v8070
        %v8103 = vtanh.pop %v8071
        %v8104 = vtanh.pop %v8072
        %v8105 = vtanh.pop %v8073
        %v8106 = vtanh.pop %v8074
        %v8107 = vtanh.pop %v8075
        %v8108 = vtanh.pop %v8076
        %v8109 = vtanh.pop %v8077
        %v8110 = vtanh.pop %v8078
        %v8111 = vtanh.pop %v8079
        %v8112 = vtanh.pop %v8080
        %v8113 = vtanh.pop %v8081
        %v8114 = vtanh.pop %v8082
        %v8115 = vtanh.pop %v8083
        %v8116 = vtanh.pop %v8084
        %v8117 = vtanh.pop %v8085
        %v8118 = vtanh.pop %v8086
        %v8119 = vtanh.pop %v8087
        %v8120 = vtanh.pop %v8088
        %v8121 = vtanh.pop %v8089
        %v8122 = vtanh.pop %v8090
        %v8123 = vtanh.pop %v8091
        %v8124 = vtanh.pop %v8092
        %v8125 = vtanh.pop %v8093
        %v8126 = vtanh.pop %v8094
        %v8127 = vtanh.pop %v8095
        %v8128 = vtanh.pop %v8096
        %v8129 = vtanh.pop %v8097
        %v8130 = vtanh.pop %v8098
        %v8131 = vld [vmem:[%s5] sm:$0x1]
        %v8133 = vperm.slane %v8131, 0
        %v8135 = vmul.f32 %v8099, %v8133
        %v8136 = vmul.f32 %v8100, %v8133
        %v8137 = vmul.f32 %v8101, %v8133
        %v8138 = vmul.f32 %v8102, %v8133
        %v8139 = vmul.f32 %v8103, %v8133
        %v8140 = vmul.f32 %v8104, %v8133
        %v8141 = vmul.f32 %v8105, %v8133
        %v8142 = vmul.f32 %v8106, %v8133
        %v8143 = vmul.f32 %v8107, %v8133
        %v8144 = vmul.f32 %v8108, %v8133
        %v8145 = vmul.f32 %v8109, %v8133
        %v8146 = vmul.f32 %v8110, %v8133
        %v8147 = vmul.f32 %v8111, %v8133
        %v8148 = vmul.f32 %v8112, %v8133
        %v8149 = vmul.f32 %v8113, %v8133
        %v8150 = vmul.f32 %v8114, %v8133
        %v8151 = vmul.f32 %v8115, %v8133
        %v8152 = vmul.f32 %v8116, %v8133
        %v8153 = vmul.f32 %v8117, %v8133
        %v8154 = vmul.f32 %v8118, %v8133
        %v8155 = vmul.f32 %v8119, %v8133
        %v8156 = vmul.f32 %v8120, %v8133
        %v8157 = vmul.f32 %v8121, %v8133
        %v8158 = vmul.f32 %v8122, %v8133
        %v8159 = vmul.f32 %v8123, %v8133
        %v8160 = vmul.f32 %v8124, %v8133
        %v8161 = vmul.f32 %v8125, %v8133
        %v8162 = vmul.f32 %v8126, %v8133
        %v8163 = vmul.f32 %v8127, %v8133
        %v8164 = vmul.f32 %v8128, %v8133
        %v8165 = vmul.f32 %v8129, %v8133
        %v8166 = vmul.f32 %v8130, %v8133
        %v8167 = vsel %vm330, %v8135, 0.0
        %8168 = vadd.xlane.f32.xlu0 %v8167
        %v8169 = vpop.xlane.xlu0 %8168
        %v8170 = vsel %vm330, %v8136, 0.0
        %8171 = vadd.xlane.f32.xlu0 %v8170
        %v8172 = vpop.xlane.xlu0 %8171
        %v8173 = vsel %vm330, %v8137, 0.0
        %8174 = vadd.xlane.f32.xlu0 %v8173
        %v8175 = vpop.xlane.xlu0 %8174
        %v8176 = vsel %vm330, %v8138, 0.0
        %8177 = vadd.xlane.f32.xlu0 %v8176
        %v8178 = vpop.xlane.xlu0 %8177
        %v8179 = vsel %vm330, %v8139, 0.0
        %8180 = vadd.xlane.f32.xlu0 %v8179
        %v8181 = vpop.xlane.xlu0 %8180
        %v8182 = vsel %vm330, %v8140, 0.0
        %8183 = vadd.xlane.f32.xlu0 %v8182
        %v8184 = vpop.xlane.xlu0 %8183
        %v8185 = vsel %vm330, %v8141, 0.0
        %8186 = vadd.xlane.f32.xlu0 %v8185
        %v8187 = vpop.xlane.xlu0 %8186
        %v8188 = vsel %vm330, %v8142, 0.0
        %8189 = vadd.xlane.f32.xlu0 %v8188
        %v8190 = vpop.xlane.xlu0 %8189
        %v8191 = vsel %vm330, %v8143, 0.0
        %8192 = vadd.xlane.f32.xlu0 %v8191
        %v8193 = vpop.xlane.xlu0 %8192
        %v8194 = vsel %vm330, %v8144, 0.0
        %8195 = vadd.xlane.f32.xlu0 %v8194
        %v8196 = vpop.xlane.xlu0 %8195
        %v8197 = vsel %vm330, %v8145, 0.0
        %8198 = vadd.xlane.f32.xlu0 %v8197
        %v8199 = vpop.xlane.xlu0 %8198
        %v8200 = vsel %vm330, %v8146, 0.0
        %8201 = vadd.xlane.f32.xlu0 %v8200
        %v8202 = vpop.xlane.xlu0 %8201
        %v8203 = vsel %vm330, %v8147, 0.0
        %8204 = vadd.xlane.f32.xlu0 %v8203
        %v8205 = vpop.xlane.xlu0 %8204
        %v8206 = vsel %vm330, %v8148, 0.0
        %8207 = vadd.xlane.f32.xlu0 %v8206
        %v8208 = vpop.xlane.xlu0 %8207
        %v8209 = vsel %vm330, %v8149, 0.0
        %8210 = vadd.xlane.f32.xlu0 %v8209
        %v8211 = vpop.xlane.xlu0 %8210
        %v8212 = vsel %vm330, %v8150, 0.0
        %8213 = vadd.xlane.f32.xlu0 %v8212
        %v8214 = vpop.xlane.xlu0 %8213
        %v8215 = vsel %vm330, %v8151, 0.0
        %8216 = vadd.xlane.f32.xlu0 %v8215
        %v8217 = vpop.xlane.xlu0 %8216
        %v8218 = vsel %vm330, %v8152, 0.0
        %8219 = vadd.xlane.f32.xlu0 %v8218
        %v8220 = vpop.xlane.xlu0 %8219
        %v8221 = vsel %vm330, %v8153, 0.0
        %8222 = vadd.xlane.f32.xlu0 %v8221
        %v8223 = vpop.xlane.xlu0 %8222
        %v8224 = vsel %vm330, %v8154, 0.0
        %8225 = vadd.xlane.f32.xlu0 %v8224
        %v8226 = vpop.xlane.xlu0 %8225
        %v8227 = vsel %vm330, %v8155, 0.0
        %8228 = vadd.xlane.f32.xlu0 %v8227
        %v8229 = vpop.xlane.xlu0 %8228
        %v8230 = vsel %vm330, %v8156, 0.0
        %8231 = vadd.xlane.f32.xlu0 %v8230
        %v8232 = vpop.xlane.xlu0 %8231
        %v8233 = vsel %vm330, %v8157, 0.0
        %8234 = vadd.xlane.f32.xlu0 %v8233
        %v8235 = vpop.xlane.xlu0 %8234
        %v8236 = vsel %vm330, %v8158, 0.0
        %8237 = vadd.xlane.f32.xlu0 %v8236
        %v8238 = vpop.xlane.xlu0 %8237
        %v8239 = vsel %vm330, %v8159, 0.0
        %8240 = vadd.xlane.f32.xlu0 %v8239
        %v8241 = vpop.xlane.xlu0 %8240
        %v8242 = vsel %vm330, %v8160, 0.0
        %8243 = vadd.xlane.f32.xlu0 %v8242
        %v8244 = vpop.xlane.xlu0 %8243
        %v8245 = vsel %vm330, %v8161, 0.0
        %8246 = vadd.xlane.f32.xlu0 %v8245
        %v8247 = vpop.xlane.xlu0 %8246
        %v8248 = vsel %vm330, %v8162, 0.0
        %8249 = vadd.xlane.f32.xlu0 %v8248
        %v8250 = vpop.xlane.xlu0 %8249
        %v8251 = vsel %vm330, %v8163, 0.0
        %8252 = vadd.xlane.f32.xlu0 %v8251
        %v8253 = vpop.xlane.xlu0 %8252
        %v8254 = vsel %vm330, %v8164, 0.0
        %8255 = vadd.xlane.f32.xlu0 %v8254
        %v8256 = vpop.xlane.xlu0 %8255
        %v8257 = vsel %vm330, %v8165, 0.0
        %8258 = vadd.xlane.f32.xlu0 %v8257
        %v8259 = vpop.xlane.xlu0 %8258
        %v8260 = vsel %vm330, %v8166, 0.0
        %8261 = vadd.xlane.f32.xlu0 %v8260
        %v8262 = vpop.xlane.xlu0 %8261
        %v8263 = vld [vmem:[#allocation2] sm:$0x1]
        %v8265 = vperm.slane %v8263, 0
        %v8267 = vadd.f32 %v8169, %v8265
        %v8268 = vadd.f32 %v8172, %v8265
        %v8269 = vadd.f32 %v8175, %v8265
        %v8270 = vadd.f32 %v8178, %v8265
        %v8271 = vadd.f32 %v8181, %v8265
        %v8272 = vadd.f32 %v8184, %v8265
        %v8273 = vadd.f32 %v8187, %v8265
        %v8274 = vadd.f32 %v8190, %v8265
        %v8275 = vadd.f32 %v8193, %v8265
        %v8276 = vadd.f32 %v8196, %v8265
        %v8277 = vadd.f32 %v8199, %v8265
        %v8278 = vadd.f32 %v8202, %v8265
        %v8279 = vadd.f32 %v8205, %v8265
        %v8280 = vadd.f32 %v8208, %v8265
        %v8281 = vadd.f32 %v8211, %v8265
        %v8282 = vadd.f32 %v8214, %v8265
        %v8283 = vadd.f32 %v8217, %v8265
        %v8284 = vadd.f32 %v8220, %v8265
        %v8285 = vadd.f32 %v8223, %v8265
        %v8286 = vadd.f32 %v8226, %v8265
        %v8287 = vadd.f32 %v8229, %v8265
        %v8288 = vadd.f32 %v8232, %v8265
        %v8289 = vadd.f32 %v8235, %v8265
        %v8290 = vadd.f32 %v8238, %v8265
        %v8291 = vadd.f32 %v8241, %v8265
        %v8292 = vadd.f32 %v8244, %v8265
        %v8293 = vadd.f32 %v8247, %v8265
        %v8294 = vadd.f32 %v8250, %v8265
        %v8295 = vadd.f32 %v8253, %v8265
        %v8296 = vadd.f32 %v8256, %v8265
        %v8297 = vadd.f32 %v8259, %v8265
        %v8298 = vadd.f32 %v8262, %v8265
        %v8299 = vlaneseq
        %v8300 = vshrl.u32 %v8299, 7
        %v8301 = vadd.s32 %v8300, 8
        %v8302 = vadd.s32 %v8300, 16
        %v8303 = vadd.s32 %v8300, 24
        %vm8304 = vcmp.lt.s32.totalorder %v8300, 30
        %vm8305 = vcmp.lt.s32.totalorder %v8301, 30
        %vm8306 = vcmp.lt.s32.totalorder %v8302, 30
        %vm8307 = vcmp.lt.s32.totalorder %v8303, 30
        %v8308 = vsel %vm8304, 1, 0
        %v8309 = vsel %vm8305, 1, 0
        %v8310 = vsel %vm8306, 1, 0
        %v8311 = vsel %vm8307, 1, 0
        %vm8312 = vcmp.eq.s32.totalorder %v8308, 1
        %vm8313 = vcmp.eq.s32.totalorder %v8309, 1
        %vm8314 = vcmp.eq.s32.totalorder %v8310, 1
        %vm8315 = vcmp.eq.s32.totalorder %v8311, 1
        %v8316 = vsel %vm8312, %v8267, -1e+09
        %v8317 = vsel %vm8313, %v8268, -1e+09
        %v8318 = vsel %vm8314, %v8269, -1e+09
        %v8319 = vsel %vm8315, %v8270, -1e+09
        %v8320 = vsel %vm8312, %v8271, -1e+09
        %v8321 = vsel %vm8313, %v8272, -1e+09
        %v8322 = vsel %vm8314, %v8273, -1e+09
        %v8323 = vsel %vm8315, %v8274, -1e+09
        %v8324 = vsel %vm8312, %v8275, -1e+09
        %v8325 = vsel %vm8313, %v8276, -1e+09
        %v8326 = vsel %vm8314, %v8277, -1e+09
        %v8327 = vsel %vm8315, %v8278, -1e+09
        %v8328 = vsel %vm8312, %v8279, -1e+09
        %v8329 = vsel %vm8313, %v8280, -1e+09
        %v8330 = vsel %vm8314, %v8281, -1e+09
        %v8331 = vsel %vm8315, %v8282, -1e+09
        %v8332 = vsel %vm8312, %v8283, -1e+09
        %v8333 = vsel %vm8313, %v8284, -1e+09
        %v8334 = vsel %vm8314, %v8285, -1e+09
        %v8335 = vsel %vm8315, %v8286, -1e+09
        %v8336 = vsel %vm8312, %v8287, -1e+09
        %v8337 = vsel %vm8313, %v8288, -1e+09
        %v8338 = vsel %vm8314, %v8289, -1e+09
        %v8339 = vsel %vm8315, %v8290, -1e+09
        %v8340 = vsel %vm8312, %v8291, -1e+09
        %v8341 = vsel %vm8313, %v8292, -1e+09
        %v8342 = vsel %vm8314, %v8293, -1e+09
        %v8343 = vsel %vm8315, %v8294, -1e+09
        %v8344 = vsel %vm8312, %v8295, -1e+09
        %v8345 = vsel %vm8313, %v8296, -1e+09
        %v8346 = vsel %vm8314, %v8297, -1e+09
        %v8347 = vsel %vm8315, %v8298, -1e+09
        %vm8348 = vcmask 7168
        %v8349 = vsel %vm8348, %v8316, -inf
        %v8350 = vsel %vm8348, %v8317, -inf
        %v8351 = vmax.f32 %v8349, %v8350
        %v8352 = vsel %vm8348, %v8318, -inf
        %v8353 = vmax.f32 %v8351, %v8352
        %v8354 = vsel %vm8348, %v8319, -inf
        %v8355 = vmax.f32 %v8353, %v8354
        %v8356 = vrot.slane %v8355, 4
        %v8357 = vmax.f32 %v8355, %v8356
        %v8358 = vrot.slane %v8357, 2
        %v8359 = vmax.f32 %v8357, %v8358
        %v8360 = vrot.slane %v8359, 1
        %v8361 = vmax.f32 %v8359, %v8360
        %v8362 = vsel %vm8348, %v8320, -inf
        %v8363 = vsel %vm8348, %v8321, -inf
        %v8364 = vmax.f32 %v8362, %v8363
        %v8365 = vsel %vm8348, %v8322, -inf
        %v8366 = vmax.f32 %v8364, %v8365
        %v8367 = vsel %vm8348, %v8323, -inf
        %v8368 = vmax.f32 %v8366, %v8367
        %v8369 = vrot.slane %v8368, 4
        %v8370 = vmax.f32 %v8368, %v8369
        %v8371 = vrot.slane %v8370, 2
        %v8372 = vmax.f32 %v8370, %v8371
        %v8373 = vrot.slane %v8372, 1
        %v8374 = vmax.f32 %v8372, %v8373
        %v8375 = vsel %vm8348, %v8324, -inf
        %v8376 = vsel %vm8348, %v8325, -inf
        %v8377 = vmax.f32 %v8375, %v8376
        %v8378 = vsel %vm8348, %v8326, -inf
        %v8379 = vmax.f32 %v8377, %v8378
        %v8380 = vsel %vm8348, %v8327, -inf
        %v8381 = vmax.f32 %v8379, %v8380
        %v8382 = vrot.slane %v8381, 4
        %v8383 = vmax.f32 %v8381, %v8382
        %v8384 = vrot.slane %v8383, 2
        %v8385 = vmax.f32 %v8383, %v8384
        %v8386 = vrot.slane %v8385, 1
        %v8387 = vmax.f32 %v8385, %v8386
        %v8388 = vsel %vm8348, %v8328, -inf
        %v8389 = vsel %vm8348, %v8329, -inf
        %v8390 = vmax.f32 %v8388, %v8389
        %v8391 = vsel %vm8348, %v8330, -inf
        %v8392 = vmax.f32 %v8390, %v8391
        %v8393 = vsel %vm8348, %v8331, -inf
        %v8394 = vmax.f32 %v8392, %v8393
        %v8395 = vrot.slane %v8394, 4
        %v8396 = vmax.f32 %v8394, %v8395
        %v8397 = vrot.slane %v8396, 2
        %v8398 = vmax.f32 %v8396, %v8397
        %v8399 = vrot.slane %v8398, 1
        %v8400 = vmax.f32 %v8398, %v8399
        %v8401 = vsel %vm8348, %v8332, -inf
        %v8402 = vsel %vm8348, %v8333, -inf
        %v8403 = vmax.f32 %v8401, %v8402
        %v8404 = vsel %vm8348, %v8334, -inf
        %v8405 = vmax.f32 %v8403, %v8404
        %v8406 = vsel %vm8348, %v8335, -inf
        %v8407 = vmax.f32 %v8405, %v8406
        %v8408 = vrot.slane %v8407, 4
        %v8409 = vmax.f32 %v8407, %v8408
        %v8410 = vrot.slane %v8409, 2
        %v8411 = vmax.f32 %v8409, %v8410
        %v8412 = vrot.slane %v8411, 1
        %v8413 = vmax.f32 %v8411, %v8412
        %v8414 = vsel %vm8348, %v8336, -inf
        %v8415 = vsel %vm8348, %v8337, -inf
        %v8416 = vmax.f32 %v8414, %v8415
        %v8417 = vsel %vm8348, %v8338, -inf
        %v8418 = vmax.f32 %v8416, %v8417
        %v8419 = vsel %vm8348, %v8339, -inf
        %v8420 = vmax.f32 %v8418, %v8419
        %v8421 = vrot.slane %v8420, 4
        %v8422 = vmax.f32 %v8420, %v8421
        %v8423 = vrot.slane %v8422, 2
        %v8424 = vmax.f32 %v8422, %v8423
        %v8425 = vrot.slane %v8424, 1
        %v8426 = vmax.f32 %v8424, %v8425
        %v8427 = vsel %vm8348, %v8340, -inf
        %v8428 = vsel %vm8348, %v8341, -inf
        %v8429 = vmax.f32 %v8427, %v8428
        %v8430 = vsel %vm8348, %v8342, -inf
        %v8431 = vmax.f32 %v8429, %v8430
        %v8432 = vsel %vm8348, %v8343, -inf
        %v8433 = vmax.f32 %v8431, %v8432
        %v8434 = vrot.slane %v8433, 4
        %v8435 = vmax.f32 %v8433, %v8434
        %v8436 = vrot.slane %v8435, 2
        %v8437 = vmax.f32 %v8435, %v8436
        %v8438 = vrot.slane %v8437, 1
        %v8439 = vmax.f32 %v8437, %v8438
        %v8440 = vsel %vm8348, %v8344, -inf
        %v8441 = vsel %vm8348, %v8345, -inf
        %v8442 = vmax.f32 %v8440, %v8441
        %v8443 = vsel %vm8348, %v8346, -inf
        %v8444 = vmax.f32 %v8442, %v8443
        %v8445 = vsel %vm8348, %v8347, -inf
        %v8446 = vmax.f32 %v8444, %v8445
        %v8447 = vrot.slane %v8446, 4
        %v8448 = vmax.f32 %v8446, %v8447
        %v8449 = vrot.slane %v8448, 2
        %v8450 = vmax.f32 %v8448, %v8449
        %v8451 = vrot.slane %v8450, 1
        %v8452 = vmax.f32 %v8450, %v8451
        %v8453 = vsub.f32 %v8316, %v8361
        %v8454 = vsub.f32 %v8317, %v8361
        %v8455 = vsub.f32 %v8318, %v8361
        %v8456 = vsub.f32 %v8319, %v8361
        %v8457 = vsub.f32 %v8320, %v8374
        %v8458 = vsub.f32 %v8321, %v8374
        %v8459 = vsub.f32 %v8322, %v8374
        %v8460 = vsub.f32 %v8323, %v8374
        %v8461 = vsub.f32 %v8324, %v8387
        %v8462 = vsub.f32 %v8325, %v8387
        %v8463 = vsub.f32 %v8326, %v8387
        %v8464 = vsub.f32 %v8327, %v8387
        %v8465 = vsub.f32 %v8328, %v8400
        %v8466 = vsub.f32 %v8329, %v8400
        %v8467 = vsub.f32 %v8330, %v8400
        %v8468 = vsub.f32 %v8331, %v8400
        %v8469 = vsub.f32 %v8332, %v8413
        %v8470 = vsub.f32 %v8333, %v8413
        %v8471 = vsub.f32 %v8334, %v8413
        %v8472 = vsub.f32 %v8335, %v8413
        %v8473 = vsub.f32 %v8336, %v8426
        %v8474 = vsub.f32 %v8337, %v8426
        %v8475 = vsub.f32 %v8338, %v8426
        %v8476 = vsub.f32 %v8339, %v8426
        %v8477 = vsub.f32 %v8340, %v8439
        %v8478 = vsub.f32 %v8341, %v8439
        %v8479 = vsub.f32 %v8342, %v8439
        %v8480 = vsub.f32 %v8343, %v8439
        %v8481 = vsub.f32 %v8344, %v8452
        %v8482 = vsub.f32 %v8345, %v8452
        %v8483 = vsub.f32 %v8346, %v8452
        %v8484 = vsub.f32 %v8347, %v8452
        %v8485 = vmul.f32 %v8453, 1.442695
        %v8486 = vpow.pop %v8485
        %v8487 = vmul.f32 %v8454, 1.442695
        %v8488 = vpow.pop %v8487
        %v8489 = vmul.f32 %v8455, 1.442695
        %v8490 = vpow.pop %v8489
        %v8491 = vmul.f32 %v8456, 1.442695
        %v8492 = vpow.pop %v8491
        %v8493 = vmul.f32 %v8457, 1.442695
        %v8494 = vpow.pop %v8493
        %v8495 = vmul.f32 %v8458, 1.442695
        %v8496 = vpow.pop %v8495
        %v8497 = vmul.f32 %v8459, 1.442695
        %v8498 = vpow.pop %v8497
        %v8499 = vmul.f32 %v8460, 1.442695
        %v8500 = vpow.pop %v8499
        %v8501 = vmul.f32 %v8461, 1.442695
        %v8502 = vpow.pop %v8501
        %v8503 = vmul.f32 %v8462, 1.442695
        %v8504 = vpow.pop %v8503
        %v8505 = vmul.f32 %v8463, 1.442695
        %v8506 = vpow.pop %v8505
        %v8507 = vmul.f32 %v8464, 1.442695
        %v8508 = vpow.pop %v8507
        %v8509 = vmul.f32 %v8465, 1.442695
        %v8510 = vpow.pop %v8509
        %v8511 = vmul.f32 %v8466, 1.442695
        %v8512 = vpow.pop %v8511
        %v8513 = vmul.f32 %v8467, 1.442695
        %v8514 = vpow.pop %v8513
        %v8515 = vmul.f32 %v8468, 1.442695
        %v8516 = vpow.pop %v8515
        %v8517 = vmul.f32 %v8469, 1.442695
        %v8518 = vpow.pop %v8517
        %v8519 = vmul.f32 %v8470, 1.442695
        %v8520 = vpow.pop %v8519
        %v8521 = vmul.f32 %v8471, 1.442695
        %v8522 = vpow.pop %v8521
        %v8523 = vmul.f32 %v8472, 1.442695
        %v8524 = vpow.pop %v8523
        %v8525 = vmul.f32 %v8473, 1.442695
        %v8526 = vpow.pop %v8525
        %v8527 = vmul.f32 %v8474, 1.442695
        %v8528 = vpow.pop %v8527
        %v8529 = vmul.f32 %v8475, 1.442695
        %v8530 = vpow.pop %v8529
        %v8531 = vmul.f32 %v8476, 1.442695
        %v8532 = vpow.pop %v8531
        %v8533 = vmul.f32 %v8477, 1.442695
        %v8534 = vpow.pop %v8533
        %v8535 = vmul.f32 %v8478, 1.442695
        %v8536 = vpow.pop %v8535
        %v8537 = vmul.f32 %v8479, 1.442695
        %v8538 = vpow.pop %v8537
        %v8539 = vmul.f32 %v8480, 1.442695
        %v8540 = vpow.pop %v8539
        %v8541 = vmul.f32 %v8481, 1.442695
        %v8542 = vpow.pop %v8541
        %v8543 = vmul.f32 %v8482, 1.442695
        %v8544 = vpow.pop %v8543
        %v8545 = vmul.f32 %v8483, 1.442695
        %v8546 = vpow.pop %v8545
        %v8547 = vmul.f32 %v8484, 1.442695
        %v8548 = vpow.pop %v8547
        %v8549 = vsel %vm8348, %v8486, 0.0
        %v8550 = vsel %vm8348, %v8488, 0.0
        %v8551 = vadd.f32 %v8549, %v8550
        %v8552 = vsel %vm8348, %v8490, 0.0
        %v8553 = vadd.f32 %v8551, %v8552
        %v8554 = vsel %vm8348, %v8492, 0.0
        %v8555 = vadd.f32 %v8553, %v8554
        %v8556 = vrot.slane %v8555, 4
        %v8557 = vadd.f32 %v8555, %v8556
        %v8558 = vrot.slane %v8557, 2
        %v8559 = vadd.f32 %v8557, %v8558
        %v8560 = vrot.slane %v8559, 1
        %v8561 = vadd.f32 %v8559, %v8560
        %v8562 = vsel %vm8348, %v8494, 0.0
        %v8563 = vsel %vm8348, %v8496, 0.0
        %v8564 = vadd.f32 %v8562, %v8563
        %v8565 = vsel %vm8348, %v8498, 0.0
        %v8566 = vadd.f32 %v8564, %v8565
        %v8567 = vsel %vm8348, %v8500, 0.0
        %v8568 = vadd.f32 %v8566, %v8567
        %v8569 = vrot.slane %v8568, 4
        %v8570 = vadd.f32 %v8568, %v8569
        %v8571 = vrot.slane %v8570, 2
        %v8572 = vadd.f32 %v8570, %v8571
        %v8573 = vrot.slane %v8572, 1
        %v8574 = vadd.f32 %v8572, %v8573
        %v8575 = vsel %vm8348, %v8502, 0.0
        %v8576 = vsel %vm8348, %v8504, 0.0
        %v8577 = vadd.f32 %v8575, %v8576
        %v8578 = vsel %vm8348, %v8506, 0.0
        %v8579 = vadd.f32 %v8577, %v8578
        %v8580 = vsel %vm8348, %v8508, 0.0
        %v8581 = vadd.f32 %v8579, %v8580
        %v8582 = vrot.slane %v8581, 4
        %v8583 = vadd.f32 %v8581, %v8582
        %v8584 = vrot.slane %v8583, 2
        %v8585 = vadd.f32 %v8583, %v8584
        %v8586 = vrot.slane %v8585, 1
        %v8587 = vadd.f32 %v8585, %v8586
        %v8588 = vsel %vm8348, %v8510, 0.0
        %v8589 = vsel %vm8348, %v8512, 0.0
        %v8590 = vadd.f32 %v8588, %v8589
        %v8591 = vsel %vm8348, %v8514, 0.0
        %v8592 = vadd.f32 %v8590, %v8591
        %v8593 = vsel %vm8348, %v8516, 0.0
        %v8594 = vadd.f32 %v8592, %v8593
        %v8595 = vrot.slane %v8594, 4
        %v8596 = vadd.f32 %v8594, %v8595
        %v8597 = vrot.slane %v8596, 2
        %v8598 = vadd.f32 %v8596, %v8597
        %v8599 = vrot.slane %v8598, 1
        %v8600 = vadd.f32 %v8598, %v8599
        %v8601 = vsel %vm8348, %v8518, 0.0
        %v8602 = vsel %vm8348, %v8520, 0.0
        %v8603 = vadd.f32 %v8601, %v8602
        %v8604 = vsel %vm8348, %v8522, 0.0
        %v8605 = vadd.f32 %v8603, %v8604
        %v8606 = vsel %vm8348, %v8524, 0.0
        %v8607 = vadd.f32 %v8605, %v8606
        %v8608 = vrot.slane %v8607, 4
        %v8609 = vadd.f32 %v8607, %v8608
        %v8610 = vrot.slane %v8609, 2
        %v8611 = vadd.f32 %v8609, %v8610
        %v8612 = vrot.slane %v8611, 1
        %v8613 = vadd.f32 %v8611, %v8612
        %v8614 = vsel %vm8348, %v8526, 0.0
        %v8615 = vsel %vm8348, %v8528, 0.0
        %v8616 = vadd.f32 %v8614, %v8615
        %v8617 = vsel %vm8348, %v8530, 0.0
        %v8618 = vadd.f32 %v8616, %v8617
        %v8619 = vsel %vm8348, %v8532, 0.0
        %v8620 = vadd.f32 %v8618, %v8619
        %v8621 = vrot.slane %v8620, 4
        %v8622 = vadd.f32 %v8620, %v8621
        %v8623 = vrot.slane %v8622, 2
        %v8624 = vadd.f32 %v8622, %v8623
        %v8625 = vrot.slane %v8624, 1
        %v8626 = vadd.f32 %v8624, %v8625
        %v8627 = vsel %vm8348, %v8534, 0.0
        %v8628 = vsel %vm8348, %v8536, 0.0
        %v8629 = vadd.f32 %v8627, %v8628
        %v8630 = vsel %vm8348, %v8538, 0.0
        %v8631 = vadd.f32 %v8629, %v8630
        %v8632 = vsel %vm8348, %v8540, 0.0
        %v8633 = vadd.f32 %v8631, %v8632
        %v8634 = vrot.slane %v8633, 4
        %v8635 = vadd.f32 %v8633, %v8634
        %v8636 = vrot.slane %v8635, 2
        %v8637 = vadd.f32 %v8635, %v8636
        %v8638 = vrot.slane %v8637, 1
        %v8639 = vadd.f32 %v8637, %v8638
        %v8640 = vsel %vm8348, %v8542, 0.0
        %v8641 = vsel %vm8348, %v8544, 0.0
        %v8642 = vadd.f32 %v8640, %v8641
        %v8643 = vsel %vm8348, %v8546, 0.0
        %v8644 = vadd.f32 %v8642, %v8643
        %v8645 = vsel %vm8348, %v8548, 0.0
        %v8646 = vadd.f32 %v8644, %v8645
        %v8647 = vrot.slane %v8646, 4
        %v8648 = vadd.f32 %v8646, %v8647
        %v8649 = vrot.slane %v8648, 2
        %v8650 = vadd.f32 %v8648, %v8649
        %v8651 = vrot.slane %v8650, 1
        %v8652 = vadd.f32 %v8650, %v8651
        %v8653 = vrcp.pop %v8561
        %v8654 = vmul.f32 %v8561, %v8653
        %v8655 = vsub.f32 1.0, %v8654
        %v8656 = vmul.f32 %v8653, %v8655
        %v8657 = vadd.f32 %v8653, %v8656
        %vm8658 = vweird.f32 %v8561
        %vm8659 = vweird.f32 %v8653
        %vm8660 = vmor %vm8658, %vm8659
        %v8661 = vsel %vm8660, %v8653, %v8657
        %v8662 = vand.u32 2147483647, %v8561
        %vm8663 = vcmp.eq.f32.partialorder %v8662, 8.507059e+37
        %v8664 = vand.u32 %v8561, 2147483648
        %v8665 = vor.u32 1.1754944e-38, %v8664
        %v8666 = vsel %vm8663, %v8665, %v8661
        %v8667 = vmul.f32 %v8486, %v8666
        %v8668 = vmul.f32 %v8488, %v8666
        %v8669 = vmul.f32 %v8490, %v8666
        %v8670 = vmul.f32 %v8492, %v8666
        %v8671 = vrcp.pop %v8574
        %v8672 = vmul.f32 %v8574, %v8671
        %v8673 = vsub.f32 1.0, %v8672
        %v8674 = vmul.f32 %v8671, %v8673
        %v8675 = vadd.f32 %v8671, %v8674
        %vm8676 = vweird.f32 %v8574
        %vm8677 = vweird.f32 %v8671
        %vm8678 = vmor %vm8676, %vm8677
        %v8679 = vsel %vm8678, %v8671, %v8675
        %v8680 = vand.u32 2147483647, %v8574
        %vm8681 = vcmp.eq.f32.partialorder %v8680, 8.507059e+37
        %v8682 = vand.u32 %v8574, 2147483648
        %v8683 = vor.u32 1.1754944e-38, %v8682
        %v8684 = vsel %vm8681, %v8683, %v8679
        %v8685 = vmul.f32 %v8494, %v8684
        %v8686 = vmul.f32 %v8496, %v8684
        %v8687 = vmul.f32 %v8498, %v8684
        %v8688 = vmul.f32 %v8500, %v8684
        %v8689 = vrcp.pop %v8587
        %v8690 = vmul.f32 %v8587, %v8689
        %v8691 = vsub.f32 1.0, %v8690
        %v8692 = vmul.f32 %v8689, %v8691
        %v8693 = vadd.f32 %v8689, %v8692
        %vm8694 = vweird.f32 %v8587
        %vm8695 = vweird.f32 %v8689
        %vm8696 = vmor %vm8694, %vm8695
        %v8697 = vsel %vm8696, %v8689, %v8693
        %v8698 = vand.u32 2147483647, %v8587
        %vm8699 = vcmp.eq.f32.partialorder %v8698, 8.507059e+37
        %v8700 = vand.u32 %v8587, 2147483648
        %v8701 = vor.u32 1.1754944e-38, %v8700
        %v8702 = vsel %vm8699, %v8701, %v8697
        %v8703 = vmul.f32 %v8502, %v8702
        %v8704 = vmul.f32 %v8504, %v8702
        %v8705 = vmul.f32 %v8506, %v8702
        %v8706 = vmul.f32 %v8508, %v8702
        %v8707 = vrcp.pop %v8600
        %v8708 = vmul.f32 %v8600, %v8707
        %v8709 = vsub.f32 1.0, %v8708
        %v8710 = vmul.f32 %v8707, %v8709
        %v8711 = vadd.f32 %v8707, %v8710
        %vm8712 = vweird.f32 %v8600
        %vm8713 = vweird.f32 %v8707
        %vm8714 = vmor %vm8712, %vm8713
        %v8715 = vsel %vm8714, %v8707, %v8711
        %v8716 = vand.u32 2147483647, %v8600
        %vm8717 = vcmp.eq.f32.partialorder %v8716, 8.507059e+37
        %v8718 = vand.u32 %v8600, 2147483648
        %v8719 = vor.u32 1.1754944e-38, %v8718
        %v8720 = vsel %vm8717, %v8719, %v8715
        %v8721 = vmul.f32 %v8510, %v8720
        %v8722 = vmul.f32 %v8512, %v8720
        %v8723 = vmul.f32 %v8514, %v8720
        %v8724 = vmul.f32 %v8516, %v8720
        %v8725 = vrcp.pop %v8613
        %v8726 = vmul.f32 %v8613, %v8725
        %v8727 = vsub.f32 1.0, %v8726
        %v8728 = vmul.f32 %v8725, %v8727
        %v8729 = vadd.f32 %v8725, %v8728
        %vm8730 = vweird.f32 %v8613
        %vm8731 = vweird.f32 %v8725
        %vm8732 = vmor %vm8730, %vm8731
        %v8733 = vsel %vm8732, %v8725, %v8729
        %v8734 = vand.u32 2147483647, %v8613
        %vm8735 = vcmp.eq.f32.partialorder %v8734, 8.507059e+37
        %v8736 = vand.u32 %v8613, 2147483648
        %v8737 = vor.u32 1.1754944e-38, %v8736
        %v8738 = vsel %vm8735, %v8737, %v8733
        %v8739 = vmul.f32 %v8518, %v8738
        %v8740 = vmul.f32 %v8520, %v8738
        %v8741 = vmul.f32 %v8522, %v8738
        %v8742 = vmul.f32 %v8524, %v8738
        %v8743 = vrcp.pop %v8626
        %v8744 = vmul.f32 %v8626, %v8743
        %v8745 = vsub.f32 1.0, %v8744
        %v8746 = vmul.f32 %v8743, %v8745
        %v8747 = vadd.f32 %v8743, %v8746
        %vm8748 = vweird.f32 %v8626
        %vm8749 = vweird.f32 %v8743
        %vm8750 = vmor %vm8748, %vm8749
        %v8751 = vsel %vm8750, %v8743, %v8747
        %v8752 = vand.u32 2147483647, %v8626
        %vm8753 = vcmp.eq.f32.partialorder %v8752, 8.507059e+37
        %v8754 = vand.u32 %v8626, 2147483648
        %v8755 = vor.u32 1.1754944e-38, %v8754
        %v8756 = vsel %vm8753, %v8755, %v8751
        %v8757 = vmul.f32 %v8526, %v8756
        %v8758 = vmul.f32 %v8528, %v8756
        %v8759 = vmul.f32 %v8530, %v8756
        %v8760 = vmul.f32 %v8532, %v8756
        %v8761 = vrcp.pop %v8639
        %v8762 = vmul.f32 %v8639, %v8761
        %v8763 = vsub.f32 1.0, %v8762
        %v8764 = vmul.f32 %v8761, %v8763
        %v8765 = vadd.f32 %v8761, %v8764
        %vm8766 = vweird.f32 %v8639
        %vm8767 = vweird.f32 %v8761
        %vm8768 = vmor %vm8766, %vm8767
        %v8769 = vsel %vm8768, %v8761, %v8765
        %v8770 = vand.u32 2147483647, %v8639
        %vm8771 = vcmp.eq.f32.partialorder %v8770, 8.507059e+37
        %v8772 = vand.u32 %v8639, 2147483648
        %v8773 = vor.u32 1.1754944e-38, %v8772
        %v8774 = vsel %vm8771, %v8773, %v8769
        %v8775 = vmul.f32 %v8534, %v8774
        %v8776 = vmul.f32 %v8536, %v8774
        %v8777 = vmul.f32 %v8538, %v8774
        %v8778 = vmul.f32 %v8540, %v8774
        %v8779 = vrcp.pop %v8652
        %v8780 = vmul.f32 %v8652, %v8779
        %v8781 = vsub.f32 1.0, %v8780
        %v8782 = vmul.f32 %v8779, %v8781
        %v8783 = vadd.f32 %v8779, %v8782
        %vm8784 = vweird.f32 %v8652
        %vm8785 = vweird.f32 %v8779
        %vm8786 = vmor %vm8784, %vm8785
        %v8787 = vsel %vm8786, %v8779, %v8783
        %v8788 = vand.u32 2147483647, %v8652
        %vm8789 = vcmp.eq.f32.partialorder %v8788, 8.507059e+37
        %v8790 = vand.u32 %v8652, 2147483648
        %v8791 = vor.u32 1.1754944e-38, %v8790
        %v8792 = vsel %vm8789, %v8791, %v8787
        %v8793 = vmul.f32 %v8542, %v8792
        %v8794 = vmul.f32 %v8544, %v8792
        %v8795 = vmul.f32 %v8546, %v8792
        %v8796 = vmul.f32 %v8548, %v8792
        %8798 = vset.pattern.permute.xlu0 0
        %8799 = vperm.xlu0 %8798, %v8667
        %v8800 = vpop.permute.xlu0 %8799
        %8803 = vset.pattern.permute.xlu0 0
        %8804 = vperm.xlu0 %8803, %v8668
        %v8805 = vpop.permute.xlu0 %8804
        %8808 = vset.pattern.permute.xlu0 0
        %8809 = vperm.xlu0 %8808, %v8669
        %v8810 = vpop.permute.xlu0 %8809
        %8813 = vset.pattern.permute.xlu0 0
        %8814 = vperm.xlu0 %8813, %v8670
        %v8815 = vpop.permute.xlu0 %8814
        %8818 = vset.pattern.permute.xlu0 0
        %8819 = vperm.xlu0 %8818, %v8685
        %v8820 = vpop.permute.xlu0 %8819
        %8823 = vset.pattern.permute.xlu0 0
        %8824 = vperm.xlu0 %8823, %v8686
        %v8825 = vpop.permute.xlu0 %8824
        %8828 = vset.pattern.permute.xlu0 0
        %8829 = vperm.xlu0 %8828, %v8687
        %v8830 = vpop.permute.xlu0 %8829
        %8833 = vset.pattern.permute.xlu0 0
        %8834 = vperm.xlu0 %8833, %v8688
        %v8835 = vpop.permute.xlu0 %8834
        %8838 = vset.pattern.permute.xlu0 0
        %8839 = vperm.xlu0 %8838, %v8703
        %v8840 = vpop.permute.xlu0 %8839
        %8843 = vset.pattern.permute.xlu0 0
        %8844 = vperm.xlu0 %8843, %v8704
        %v8845 = vpop.permute.xlu0 %8844
        %8848 = vset.pattern.permute.xlu0 0
        %8849 = vperm.xlu0 %8848, %v8705
        %v8850 = vpop.permute.xlu0 %8849
        %8853 = vset.pattern.permute.xlu0 0
        %8854 = vperm.xlu0 %8853, %v8706
        %v8855 = vpop.permute.xlu0 %8854
        %8858 = vset.pattern.permute.xlu0 0
        %8859 = vperm.xlu0 %8858, %v8721
        %v8860 = vpop.permute.xlu0 %8859
        %8863 = vset.pattern.permute.xlu0 0
        %8864 = vperm.xlu0 %8863, %v8722
        %v8865 = vpop.permute.xlu0 %8864
        %8868 = vset.pattern.permute.xlu0 0
        %8869 = vperm.xlu0 %8868, %v8723
        %v8870 = vpop.permute.xlu0 %8869
        %8873 = vset.pattern.permute.xlu0 0
        %8874 = vperm.xlu0 %8873, %v8724
        %v8875 = vpop.permute.xlu0 %8874
        %8878 = vset.pattern.permute.xlu0 0
        %8879 = vperm.xlu0 %8878, %v8739
        %v8880 = vpop.permute.xlu0 %8879
        %8883 = vset.pattern.permute.xlu0 0
        %8884 = vperm.xlu0 %8883, %v8740
        %v8885 = vpop.permute.xlu0 %8884
        %8888 = vset.pattern.permute.xlu0 0
        %8889 = vperm.xlu0 %8888, %v8741
        %v8890 = vpop.permute.xlu0 %8889
        %8893 = vset.pattern.permute.xlu0 0
        %8894 = vperm.xlu0 %8893, %v8742
        %v8895 = vpop.permute.xlu0 %8894
        %8898 = vset.pattern.permute.xlu0 0
        %8899 = vperm.xlu0 %8898, %v8757
        %v8900 = vpop.permute.xlu0 %8899
        %8903 = vset.pattern.permute.xlu0 0
        %8904 = vperm.xlu0 %8903, %v8758
        %v8905 = vpop.permute.xlu0 %8904
        %8908 = vset.pattern.permute.xlu0 0
        %8909 = vperm.xlu0 %8908, %v8759
        %v8910 = vpop.permute.xlu0 %8909
        %8913 = vset.pattern.permute.xlu0 0
        %8914 = vperm.xlu0 %8913, %v8760
        %v8915 = vpop.permute.xlu0 %8914
        %8918 = vset.pattern.permute.xlu0 0
        %8919 = vperm.xlu0 %8918, %v8775
        %v8920 = vpop.permute.xlu0 %8919
        %8923 = vset.pattern.permute.xlu0 0
        %8924 = vperm.xlu0 %8923, %v8776
        %v8925 = vpop.permute.xlu0 %8924
        %8928 = vset.pattern.permute.xlu0 0
        %8929 = vperm.xlu0 %8928, %v8777
        %v8930 = vpop.permute.xlu0 %8929
        %8933 = vset.pattern.permute.xlu0 0
        %8934 = vperm.xlu0 %8933, %v8778
        %v8935 = vpop.permute.xlu0 %8934
        %8938 = vset.pattern.permute.xlu0 0
        %8939 = vperm.xlu0 %8938, %v8793
        %v8940 = vpop.permute.xlu0 %8939
        %8943 = vset.pattern.permute.xlu0 0
        %8944 = vperm.xlu0 %8943, %v8794
        %v8945 = vpop.permute.xlu0 %8944
        %8948 = vset.pattern.permute.xlu0 0
        %8949 = vperm.xlu0 %8948, %v8795
        %v8950 = vpop.permute.xlu0 %8949
        %8953 = vset.pattern.permute.xlu0 0
        %8954 = vperm.xlu0 %8953, %v8796
        %v8955 = vpop.permute.xlu0 %8954
        %v8957 = vmul.f32 %v8800, %v1881
        %v8958 = vmul.f32 %v8805, %v1884
        %v8959 = vmul.f32 %v8810, %v1887
        %v8960 = vmul.f32 %v8815, %v1890
        %v8961 = vmul.f32 %v8820, %v1922
        %v8962 = vmul.f32 %v8825, %v1925
        %v8963 = vmul.f32 %v8830, %v1928
        %v8964 = vmul.f32 %v8835, %v1931
        %v8965 = vmul.f32 %v8840, %v1963
        %v8966 = vmul.f32 %v8845, %v1966
        %v8967 = vmul.f32 %v8850, %v1969
        %v8968 = vmul.f32 %v8855, %v1972
        %v8969 = vmul.f32 %v8860, %v2004
        %v8970 = vmul.f32 %v8865, %v2007
        %v8971 = vmul.f32 %v8870, %v2010
        %v8972 = vmul.f32 %v8875, %v2013
        %v8973 = vmul.f32 %v8880, %v2045
        %v8974 = vmul.f32 %v8885, %v2048
        %v8975 = vmul.f32 %v8890, %v2051
        %v8976 = vmul.f32 %v8895, %v2054
        %v8977 = vmul.f32 %v8900, %v2086
        %v8978 = vmul.f32 %v8905, %v2089
        %v8979 = vmul.f32 %v8910, %v2092
        %v8980 = vmul.f32 %v8915, %v2095
        %v8981 = vmul.f32 %v8920, %v2127
        %v8982 = vmul.f32 %v8925, %v2130
        %v8983 = vmul.f32 %v8930, %v2133
        %v8984 = vmul.f32 %v8935, %v2136
        %v8985 = vmul.f32 %v8940, %v2168
        %v8986 = vmul.f32 %v8945, %v2171
        %v8987 = vmul.f32 %v8950, %v2174
        %v8988 = vmul.f32 %v8955, %v2177
        %v8989 = vsel %vm670, %v8957, 0.0
        %v8990 = vsel %vm670, %v8958, 0.0
        %v8991 = vadd.f32 %v8989, %v8990
        %v8992 = vsel %vm670, %v8959, 0.0
        %v8993 = vadd.f32 %v8991, %v8992
        %v8994 = vsel %vm670, %v8960, 0.0
        %v8995 = vadd.f32 %v8993, %v8994
        %v8996 = vrot.slane %v8995, 4
        %v8997 = vadd.f32 %v8995, %v8996
        %v8998 = vrot.slane %v8997, 2
        %v8999 = vadd.f32 %v8997, %v8998
        %v9000 = vrot.slane %v8999, 1
        %v9001 = vadd.f32 %v8999, %v9000
        %v9002 = vsel %vm670, %v8961, 0.0
        %v9003 = vsel %vm670, %v8962, 0.0
        %v9004 = vadd.f32 %v9002, %v9003
        %v9005 = vsel %vm670, %v8963, 0.0
        %v9006 = vadd.f32 %v9004, %v9005
        %v9007 = vsel %vm670, %v8964, 0.0
        %v9008 = vadd.f32 %v9006, %v9007
        %v9009 = vrot.slane %v9008, 4
        %v9010 = vadd.f32 %v9008, %v9009
        %v9011 = vrot.slane %v9010, 2
        %v9012 = vadd.f32 %v9010, %v9011
        %v9013 = vrot.slane %v9012, 1
        %v9014 = vadd.f32 %v9012, %v9013
        %v9015 = vsel %vm670, %v8965, 0.0
        %v9016 = vsel %vm670, %v8966, 0.0
        %v9017 = vadd.f32 %v9015, %v9016
        %v9018 = vsel %vm670, %v8967, 0.0
        %v9019 = vadd.f32 %v9017, %v9018
        %v9020 = vsel %vm670, %v8968, 0.0
        %v9021 = vadd.f32 %v9019, %v9020
        %v9022 = vrot.slane %v9021, 4
        %v9023 = vadd.f32 %v9021, %v9022
        %v9024 = vrot.slane %v9023, 2
        %v9025 = vadd.f32 %v9023, %v9024
        %v9026 = vrot.slane %v9025, 1
        %v9027 = vadd.f32 %v9025, %v9026
        %v9028 = vsel %vm670, %v8969, 0.0
        %v9029 = vsel %vm670, %v8970, 0.0
        %v9030 = vadd.f32 %v9028, %v9029
        %v9031 = vsel %vm670, %v8971, 0.0
        %v9032 = vadd.f32 %v9030, %v9031
        %v9033 = vsel %vm670, %v8972, 0.0
        %v9034 = vadd.f32 %v9032, %v9033
        %v9035 = vrot.slane %v9034, 4
        %v9036 = vadd.f32 %v9034, %v9035
        %v9037 = vrot.slane %v9036, 2
        %v9038 = vadd.f32 %v9036, %v9037
        %v9039 = vrot.slane %v9038, 1
        %v9040 = vadd.f32 %v9038, %v9039
        %v9041 = vsel %vm670, %v8973, 0.0
        %v9042 = vsel %vm670, %v8974, 0.0
        %v9043 = vadd.f32 %v9041, %v9042
        %v9044 = vsel %vm670, %v8975, 0.0
        %v9045 = vadd.f32 %v9043, %v9044
        %v9046 = vsel %vm670, %v8976, 0.0
        %v9047 = vadd.f32 %v9045, %v9046
        %v9048 = vrot.slane %v9047, 4
        %v9049 = vadd.f32 %v9047, %v9048
        %v9050 = vrot.slane %v9049, 2
        %v9051 = vadd.f32 %v9049, %v9050
        %v9052 = vrot.slane %v9051, 1
        %v9053 = vadd.f32 %v9051, %v9052
        %v9054 = vsel %vm670, %v8977, 0.0
        %v9055 = vsel %vm670, %v8978, 0.0
        %v9056 = vadd.f32 %v9054, %v9055
        %v9057 = vsel %vm670, %v8979, 0.0
        %v9058 = vadd.f32 %v9056, %v9057
        %v9059 = vsel %vm670, %v8980, 0.0
        %v9060 = vadd.f32 %v9058, %v9059
        %v9061 = vrot.slane %v9060, 4
        %v9062 = vadd.f32 %v9060, %v9061
        %v9063 = vrot.slane %v9062, 2
        %v9064 = vadd.f32 %v9062, %v9063
        %v9065 = vrot.slane %v9064, 1
        %v9066 = vadd.f32 %v9064, %v9065
        %v9067 = vsel %vm670, %v8981, 0.0
        %v9068 = vsel %vm670, %v8982, 0.0
        %v9069 = vadd.f32 %v9067, %v9068
        %v9070 = vsel %vm670, %v8983, 0.0
        %v9071 = vadd.f32 %v9069, %v9070
        %v9072 = vsel %vm670, %v8984, 0.0
        %v9073 = vadd.f32 %v9071, %v9072
        %v9074 = vrot.slane %v9073, 4
        %v9075 = vadd.f32 %v9073, %v9074
        %v9076 = vrot.slane %v9075, 2
        %v9077 = vadd.f32 %v9075, %v9076
        %v9078 = vrot.slane %v9077, 1
        %v9079 = vadd.f32 %v9077, %v9078
        %v9080 = vsel %vm670, %v8985, 0.0
        %v9081 = vsel %vm670, %v8986, 0.0
        %v9082 = vadd.f32 %v9080, %v9081
        %v9083 = vsel %vm670, %v8987, 0.0
        %v9084 = vadd.f32 %v9082, %v9083
        %v9085 = vsel %vm670, %v8988, 0.0
        %v9086 = vadd.f32 %v9084, %v9085
        %v9087 = vrot.slane %v9086, 4
        %v9088 = vadd.f32 %v9086, %v9087
        %v9089 = vrot.slane %v9088, 2
        %v9090 = vadd.f32 %v9088, %v9089
        %v9091 = vrot.slane %v9090, 1
        %v9092 = vadd.f32 %v9090, %v9091
        %v9093 = vmul.f32 %v8800, %v3451
        %v9094 = vmul.f32 %v8805, %v3454
        %v9095 = vmul.f32 %v8810, %v3457
        %v9096 = vmul.f32 %v8815, %v3460
        %v9097 = vmul.f32 %v8820, %v3508
        %v9098 = vmul.f32 %v8825, %v3511
        %v9099 = vmul.f32 %v8830, %v3514
        %v9100 = vmul.f32 %v8835, %v3517
        %v9101 = vmul.f32 %v8840, %v3565
        %v9102 = vmul.f32 %v8845, %v3568
        %v9103 = vmul.f32 %v8850, %v3571
        %v9104 = vmul.f32 %v8855, %v3574
        %v9105 = vmul.f32 %v8860, %v3622
        %v9106 = vmul.f32 %v8865, %v3625
        %v9107 = vmul.f32 %v8870, %v3628
        %v9108 = vmul.f32 %v8875, %v3631
        %v9109 = vmul.f32 %v8880, %v3679
        %v9110 = vmul.f32 %v8885, %v3682
        %v9111 = vmul.f32 %v8890, %v3685
        %v9112 = vmul.f32 %v8895, %v3688
        %v9113 = vmul.f32 %v8900, %v3736
        %v9114 = vmul.f32 %v8905, %v3739
        %v9115 = vmul.f32 %v8910, %v3742
        %v9116 = vmul.f32 %v8915, %v3745
        %v9117 = vmul.f32 %v8920, %v3793
        %v9118 = vmul.f32 %v8925, %v3796
        %v9119 = vmul.f32 %v8930, %v3799
        %v9120 = vmul.f32 %v8935, %v3802
        %v9121 = vmul.f32 %v8940, %v3850
        %v9122 = vmul.f32 %v8945, %v3853
        %v9123 = vmul.f32 %v8950, %v3856
        %v9124 = vmul.f32 %v8955, %v3859
        %v9125 = vsel %vm670, %v9093, 0.0
        %v9126 = vsel %vm670, %v9094, 0.0
        %v9127 = vadd.f32 %v9125, %v9126
        %v9128 = vsel %vm670, %v9095, 0.0
        %v9129 = vadd.f32 %v9127, %v9128
        %v9130 = vsel %vm670, %v9096, 0.0
        %v9131 = vadd.f32 %v9129, %v9130
        %v9132 = vrot.slane %v9131, 4
        %v9133 = vadd.f32 %v9131, %v9132
        %v9134 = vrot.slane %v9133, 2
        %v9135 = vadd.f32 %v9133, %v9134
        %v9136 = vrot.slane %v9135, 1
        %v9137 = vadd.f32 %v9135, %v9136
        %v9138 = vsel %vm670, %v9097, 0.0
        %v9139 = vsel %vm670, %v9098, 0.0
        %v9140 = vadd.f32 %v9138, %v9139
        %v9141 = vsel %vm670, %v9099, 0.0
        %v9142 = vadd.f32 %v9140, %v9141
        %v9143 = vsel %vm670, %v9100, 0.0
        %v9144 = vadd.f32 %v9142, %v9143
        %v9145 = vrot.slane %v9144, 4
        %v9146 = vadd.f32 %v9144, %v9145
        %v9147 = vrot.slane %v9146, 2
        %v9148 = vadd.f32 %v9146, %v9147
        %v9149 = vrot.slane %v9148, 1
        %v9150 = vadd.f32 %v9148, %v9149
        %v9151 = vsel %vm670, %v9101, 0.0
        %v9152 = vsel %vm670, %v9102, 0.0
        %v9153 = vadd.f32 %v9151, %v9152
        %v9154 = vsel %vm670, %v9103, 0.0
        %v9155 = vadd.f32 %v9153, %v9154
        %v9156 = vsel %vm670, %v9104, 0.0
        %v9157 = vadd.f32 %v9155, %v9156
        %v9158 = vrot.slane %v9157, 4
        %v9159 = vadd.f32 %v9157, %v9158
        %v9160 = vrot.slane %v9159, 2
        %v9161 = vadd.f32 %v9159, %v9160
        %v9162 = vrot.slane %v9161, 1
        %v9163 = vadd.f32 %v9161, %v9162
        %v9164 = vsel %vm670, %v9105, 0.0
        %v9165 = vsel %vm670, %v9106, 0.0
        %v9166 = vadd.f32 %v9164, %v9165
        %v9167 = vsel %vm670, %v9107, 0.0
        %v9168 = vadd.f32 %v9166, %v9167
        %v9169 = vsel %vm670, %v9108, 0.0
        %v9170 = vadd.f32 %v9168, %v9169
        %v9171 = vrot.slane %v9170, 4
        %v9172 = vadd.f32 %v9170, %v9171
        %v9173 = vrot.slane %v9172, 2
        %v9174 = vadd.f32 %v9172, %v9173
        %v9175 = vrot.slane %v9174, 1
        %v9176 = vadd.f32 %v9174, %v9175
        %v9177 = vsel %vm670, %v9109, 0.0
        %v9178 = vsel %vm670, %v9110, 0.0
        %v9179 = vadd.f32 %v9177, %v9178
        %v9180 = vsel %vm670, %v9111, 0.0
        %v9181 = vadd.f32 %v9179, %v9180
        %v9182 = vsel %vm670, %v9112, 0.0
        %v9183 = vadd.f32 %v9181, %v9182
        %v9184 = vrot.slane %v9183, 4
        %v9185 = vadd.f32 %v9183, %v9184
        %v9186 = vrot.slane %v9185, 2
        %v9187 = vadd.f32 %v9185, %v9186
        %v9188 = vrot.slane %v9187, 1
        %v9189 = vadd.f32 %v9187, %v9188
        %v9190 = vsel %vm670, %v9113, 0.0
        %v9191 = vsel %vm670, %v9114, 0.0
        %v9192 = vadd.f32 %v9190, %v9191
        %v9193 = vsel %vm670, %v9115, 0.0
        %v9194 = vadd.f32 %v9192, %v9193
        %v9195 = vsel %vm670, %v9116, 0.0
        %v9196 = vadd.f32 %v9194, %v9195
        %v9197 = vrot.slane %v9196, 4
        %v9198 = vadd.f32 %v9196, %v9197
        %v9199 = vrot.slane %v9198, 2
        %v9200 = vadd.f32 %v9198, %v9199
        %v9201 = vrot.slane %v9200, 1
        %v9202 = vadd.f32 %v9200, %v9201
        %v9203 = vsel %vm670, %v9117, 0.0
        %v9204 = vsel %vm670, %v9118, 0.0
        %v9205 = vadd.f32 %v9203, %v9204
        %v9206 = vsel %vm670, %v9119, 0.0
        %v9207 = vadd.f32 %v9205, %v9206
        %v9208 = vsel %vm670, %v9120, 0.0
        %v9209 = vadd.f32 %v9207, %v9208
        %v9210 = vrot.slane %v9209, 4
        %v9211 = vadd.f32 %v9209, %v9210
        %v9212 = vrot.slane %v9211, 2
        %v9213 = vadd.f32 %v9211, %v9212
        %v9214 = vrot.slane %v9213, 1
        %v9215 = vadd.f32 %v9213, %v9214
        %v9216 = vsel %vm670, %v9121, 0.0
        %v9217 = vsel %vm670, %v9122, 0.0
        %v9218 = vadd.f32 %v9216, %v9217
        %v9219 = vsel %vm670, %v9123, 0.0
        %v9220 = vadd.f32 %v9218, %v9219
        %v9221 = vsel %vm670, %v9124, 0.0
        %v9222 = vadd.f32 %v9220, %v9221
        %v9223 = vrot.slane %v9222, 4
        %v9224 = vadd.f32 %v9222, %v9223
        %v9225 = vrot.slane %v9224, 2
        %v9226 = vadd.f32 %v9224, %v9225
        %v9227 = vrot.slane %v9226, 1
        %v9228 = vadd.f32 %v9226, %v9227
        %v9229 = vmul.f32 %v8800, %v5547
        %v9230 = vmul.f32 %v8805, %v5550
        %v9231 = vmul.f32 %v8810, %v5553
        %v9232 = vmul.f32 %v8815, %v5556
        %v9233 = vmul.f32 %v8820, %v5600
        %v9234 = vmul.f32 %v8825, %v5603
        %v9235 = vmul.f32 %v8830, %v5606
        %v9236 = vmul.f32 %v8835, %v5609
        %v9237 = vmul.f32 %v8840, %v5653
        %v9238 = vmul.f32 %v8845, %v5656
        %v9239 = vmul.f32 %v8850, %v5659
        %v9240 = vmul.f32 %v8855, %v5662
        %v9241 = vmul.f32 %v8860, %v5706
        %v9242 = vmul.f32 %v8865, %v5709
        %v9243 = vmul.f32 %v8870, %v5712
        %v9244 = vmul.f32 %v8875, %v5715
        %v9245 = vmul.f32 %v8880, %v5759
        %v9246 = vmul.f32 %v8885, %v5762
        %v9247 = vmul.f32 %v8890, %v5765
        %v9248 = vmul.f32 %v8895, %v5768
        %v9249 = vmul.f32 %v8900, %v5812
        %v9250 = vmul.f32 %v8905, %v5815
        %v9251 = vmul.f32 %v8910, %v5818
        %v9252 = vmul.f32 %v8915, %v5821
        %v9253 = vmul.f32 %v8920, %v5865
        %v9254 = vmul.f32 %v8925, %v5868
        %v9255 = vmul.f32 %v8930, %v5871
        %v9256 = vmul.f32 %v8935, %v5874
        %v9257 = vmul.f32 %v8940, %v5918
        %v9258 = vmul.f32 %v8945, %v5921
        %v9259 = vmul.f32 %v8950, %v5924
        %v9260 = vmul.f32 %v8955, %v5927
        %v9261 = vsel %vm670, %v9229, 0.0
        %v9262 = vsel %vm670, %v9230, 0.0
        %v9263 = vadd.f32 %v9261, %v9262
        %v9264 = vsel %vm670, %v9231, 0.0
        %v9265 = vadd.f32 %v9263, %v9264
        %v9266 = vsel %vm670, %v9232, 0.0
        %v9267 = vadd.f32 %v9265, %v9266
        %v9268 = vrot.slane %v9267, 4
        %v9269 = vadd.f32 %v9267, %v9268
        %v9270 = vrot.slane %v9269, 2
        %v9271 = vadd.f32 %v9269, %v9270
        %v9272 = vrot.slane %v9271, 1
        %v9273 = vadd.f32 %v9271, %v9272
        %v9274 = vsel %vm670, %v9233, 0.0
        %v9275 = vsel %vm670, %v9234, 0.0
        %v9276 = vadd.f32 %v9274, %v9275
        %v9277 = vsel %vm670, %v9235, 0.0
        %v9278 = vadd.f32 %v9276, %v9277
        %v9279 = vsel %vm670, %v9236, 0.0
        %v9280 = vadd.f32 %v9278, %v9279
        %v9281 = vrot.slane %v9280, 4
        %v9282 = vadd.f32 %v9280, %v9281
        %v9283 = vrot.slane %v9282, 2
        %v9284 = vadd.f32 %v9282, %v9283
        %v9285 = vrot.slane %v9284, 1
        %v9286 = vadd.f32 %v9284, %v9285
        %v9287 = vsel %vm670, %v9237, 0.0
        %v9288 = vsel %vm670, %v9238, 0.0
        %v9289 = vadd.f32 %v9287, %v9288
        %v9290 = vsel %vm670, %v9239, 0.0
        %v9291 = vadd.f32 %v9289, %v9290
        %v9292 = vsel %vm670, %v9240, 0.0
        %v9293 = vadd.f32 %v9291, %v9292
        %v9294 = vrot.slane %v9293, 4
        %v9295 = vadd.f32 %v9293, %v9294
        %v9296 = vrot.slane %v9295, 2
        %v9297 = vadd.f32 %v9295, %v9296
        %v9298 = vrot.slane %v9297, 1
        %v9299 = vadd.f32 %v9297, %v9298
        %v9300 = vsel %vm670, %v9241, 0.0
        %v9301 = vsel %vm670, %v9242, 0.0
        %v9302 = vadd.f32 %v9300, %v9301
        %v9303 = vsel %vm670, %v9243, 0.0
        %v9304 = vadd.f32 %v9302, %v9303
        %v9305 = vsel %vm670, %v9244, 0.0
        %v9306 = vadd.f32 %v9304, %v9305
        %v9307 = vrot.slane %v9306, 4
        %v9308 = vadd.f32 %v9306, %v9307
        %v9309 = vrot.slane %v9308, 2
        %v9310 = vadd.f32 %v9308, %v9309
        %v9311 = vrot.slane %v9310, 1
        %v9312 = vadd.f32 %v9310, %v9311
        %v9313 = vsel %vm670, %v9245, 0.0
        %v9314 = vsel %vm670, %v9246, 0.0
        %v9315 = vadd.f32 %v9313, %v9314
        %v9316 = vsel %vm670, %v9247, 0.0
        %v9317 = vadd.f32 %v9315, %v9316
        %v9318 = vsel %vm670, %v9248, 0.0
        %v9319 = vadd.f32 %v9317, %v9318
        %v9320 = vrot.slane %v9319, 4
        %v9321 = vadd.f32 %v9319, %v9320
        %v9322 = vrot.slane %v9321, 2
        %v9323 = vadd.f32 %v9321, %v9322
        %v9324 = vrot.slane %v9323, 1
        %v9325 = vadd.f32 %v9323, %v9324
        %v9326 = vsel %vm670, %v9249, 0.0
        %v9327 = vsel %vm670, %v9250, 0.0
        %v9328 = vadd.f32 %v9326, %v9327
        %v9329 = vsel %vm670, %v9251, 0.0
        %v9330 = vadd.f32 %v9328, %v9329
        %v9331 = vsel %vm670, %v9252, 0.0
        %v9332 = vadd.f32 %v9330, %v9331
        %v9333 = vrot.slane %v9332, 4
        %v9334 = vadd.f32 %v9332, %v9333
        %v9335 = vrot.slane %v9334, 2
        %v9336 = vadd.f32 %v9334, %v9335
        %v9337 = vrot.slane %v9336, 1
        %v9338 = vadd.f32 %v9336, %v9337
        %v9339 = vsel %vm670, %v9253, 0.0
        %v9340 = vsel %vm670, %v9254, 0.0
        %v9341 = vadd.f32 %v9339, %v9340
        %v9342 = vsel %vm670, %v9255, 0.0
        %v9343 = vadd.f32 %v9341, %v9342
        %v9344 = vsel %vm670, %v9256, 0.0
        %v9345 = vadd.f32 %v9343, %v9344
        %v9346 = vrot.slane %v9345, 4
        %v9347 = vadd.f32 %v9345, %v9346
        %v9348 = vrot.slane %v9347, 2
        %v9349 = vadd.f32 %v9347, %v9348
        %v9350 = vrot.slane %v9349, 1
        %v9351 = vadd.f32 %v9349, %v9350
        %v9352 = vsel %vm670, %v9257, 0.0
        %v9353 = vsel %vm670, %v9258, 0.0
        %v9354 = vadd.f32 %v9352, %v9353
        %v9355 = vsel %vm670, %v9259, 0.0
        %v9356 = vadd.f32 %v9354, %v9355
        %v9357 = vsel %vm670, %v9260, 0.0
        %v9358 = vadd.f32 %v9356, %v9357
        %v9359 = vrot.slane %v9358, 4
        %v9360 = vadd.f32 %v9358, %v9359
        %v9361 = vrot.slane %v9360, 2
        %v9362 = vadd.f32 %v9360, %v9361
        %v9363 = vrot.slane %v9362, 1
        %v9364 = vadd.f32 %v9362, %v9363
        %v9365 = vmul.f32 %v8800, %v7438
        %v9366 = vmul.f32 %v8805, %v7441
        %v9367 = vmul.f32 %v8810, %v7444
        %v9368 = vmul.f32 %v8815, %v7447
        %v9369 = vmul.f32 %v8820, %v7491
        %v9370 = vmul.f32 %v8825, %v7494
        %v9371 = vmul.f32 %v8830, %v7497
        %v9372 = vmul.f32 %v8835, %v7500
        %v9373 = vmul.f32 %v8840, %v7544
        %v9374 = vmul.f32 %v8845, %v7547
        %v9375 = vmul.f32 %v8850, %v7550
        %v9376 = vmul.f32 %v8855, %v7553
        %v9377 = vmul.f32 %v8860, %v7597
        %v9378 = vmul.f32 %v8865, %v7600
        %v9379 = vmul.f32 %v8870, %v7603
        %v9380 = vmul.f32 %v8875, %v7606
        %v9381 = vmul.f32 %v8880, %v7650
        %v9382 = vmul.f32 %v8885, %v7653
        %v9383 = vmul.f32 %v8890, %v7656
        %v9384 = vmul.f32 %v8895, %v7659
        %v9385 = vmul.f32 %v8900, %v7703
        %v9386 = vmul.f32 %v8905, %v7706
        %v9387 = vmul.f32 %v8910, %v7709
        %v9388 = vmul.f32 %v8915, %v7712
        %v9389 = vmul.f32 %v8920, %v7756
        %v9390 = vmul.f32 %v8925, %v7759
        %v9391 = vmul.f32 %v8930, %v7762
        %v9392 = vmul.f32 %v8935, %v7765
        %v9393 = vmul.f32 %v8940, %v7809
        %v9394 = vmul.f32 %v8945, %v7812
        %v9395 = vmul.f32 %v8950, %v7815
        %v9396 = vmul.f32 %v8955, %v7818
        %v9397 = vsel %vm670, %v9365, 0.0
        %v9398 = vsel %vm670, %v9366, 0.0
        %v9399 = vadd.f32 %v9397, %v9398
        %v9400 = vsel %vm670, %v9367, 0.0
        %v9401 = vadd.f32 %v9399, %v9400
        %v9402 = vsel %vm670, %v9368, 0.0
        %v9403 = vadd.f32 %v9401, %v9402
        %v9404 = vrot.slane %v9403, 4
        %v9405 = vadd.f32 %v9403, %v9404
        %v9406 = vrot.slane %v9405, 2
        %v9407 = vadd.f32 %v9405, %v9406
        %v9408 = vrot.slane %v9407, 1
        %v9409 = vadd.f32 %v9407, %v9408
        %v9410 = vsel %vm670, %v9369, 0.0
        %v9411 = vsel %vm670, %v9370, 0.0
        %v9412 = vadd.f32 %v9410, %v9411
        %v9413 = vsel %vm670, %v9371, 0.0
        %v9414 = vadd.f32 %v9412, %v9413
        %v9415 = vsel %vm670, %v9372, 0.0
        %v9416 = vadd.f32 %v9414, %v9415
        %v9417 = vrot.slane %v9416, 4
        %v9418 = vadd.f32 %v9416, %v9417
        %v9419 = vrot.slane %v9418, 2
        %v9420 = vadd.f32 %v9418, %v9419
        %v9421 = vrot.slane %v9420, 1
        %v9422 = vadd.f32 %v9420, %v9421
        %v9423 = vsel %vm670, %v9373, 0.0
        %v9424 = vsel %vm670, %v9374, 0.0
        %v9425 = vadd.f32 %v9423, %v9424
        %v9426 = vsel %vm670, %v9375, 0.0
        %v9427 = vadd.f32 %v9425, %v9426
        %v9428 = vsel %vm670, %v9376, 0.0
        %v9429 = vadd.f32 %v9427, %v9428
        %v9430 = vrot.slane %v9429, 4
        %v9431 = vadd.f32 %v9429, %v9430
        %v9432 = vrot.slane %v9431, 2
        %v9433 = vadd.f32 %v9431, %v9432
        %v9434 = vrot.slane %v9433, 1
        %v9435 = vadd.f32 %v9433, %v9434
        %v9436 = vsel %vm670, %v9377, 0.0
        %v9437 = vsel %vm670, %v9378, 0.0
        %v9438 = vadd.f32 %v9436, %v9437
        %v9439 = vsel %vm670, %v9379, 0.0
        %v9440 = vadd.f32 %v9438, %v9439
        %v9441 = vsel %vm670, %v9380, 0.0
        %v9442 = vadd.f32 %v9440, %v9441
        %v9443 = vrot.slane %v9442, 4
        %v9444 = vadd.f32 %v9442, %v9443
        %v9445 = vrot.slane %v9444, 2
        %v9446 = vadd.f32 %v9444, %v9445
        %v9447 = vrot.slane %v9446, 1
        %v9448 = vadd.f32 %v9446, %v9447
        %v9449 = vsel %vm670, %v9381, 0.0
        %v9450 = vsel %vm670, %v9382, 0.0
        %v9451 = vadd.f32 %v9449, %v9450
        %v9452 = vsel %vm670, %v9383, 0.0
        %v9453 = vadd.f32 %v9451, %v9452
        %v9454 = vsel %vm670, %v9384, 0.0
        %v9455 = vadd.f32 %v9453, %v9454
        %v9456 = vrot.slane %v9455, 4
        %v9457 = vadd.f32 %v9455, %v9456
        %v9458 = vrot.slane %v9457, 2
        %v9459 = vadd.f32 %v9457, %v9458
        %v9460 = vrot.slane %v9459, 1
        %v9461 = vadd.f32 %v9459, %v9460
        %v9462 = vsel %vm670, %v9385, 0.0
        %v9463 = vsel %vm670, %v9386, 0.0
        %v9464 = vadd.f32 %v9462, %v9463
        %v9465 = vsel %vm670, %v9387, 0.0
        %v9466 = vadd.f32 %v9464, %v9465
        %v9467 = vsel %vm670, %v9388, 0.0
        %v9468 = vadd.f32 %v9466, %v9467
        %v9469 = vrot.slane %v9468, 4
        %v9470 = vadd.f32 %v9468, %v9469
        %v9471 = vrot.slane %v9470, 2
        %v9472 = vadd.f32 %v9470, %v9471
        %v9473 = vrot.slane %v9472, 1
        %v9474 = vadd.f32 %v9472, %v9473
        %v9475 = vsel %vm670, %v9389, 0.0
        %v9476 = vsel %vm670, %v9390, 0.0
        %v9477 = vadd.f32 %v9475, %v9476
        %v9478 = vsel %vm670, %v9391, 0.0
        %v9479 = vadd.f32 %v9477, %v9478
        %v9480 = vsel %vm670, %v9392, 0.0
        %v9481 = vadd.f32 %v9479, %v9480
        %v9482 = vrot.slane %v9481, 4
        %v9483 = vadd.f32 %v9481, %v9482
        %v9484 = vrot.slane %v9483, 2
        %v9485 = vadd.f32 %v9483, %v9484
        %v9486 = vrot.slane %v9485, 1
        %v9487 = vadd.f32 %v9485, %v9486
        %v9488 = vsel %vm670, %v9393, 0.0
        %v9489 = vsel %vm670, %v9394, 0.0
        %v9490 = vadd.f32 %v9488, %v9489
        %v9491 = vsel %vm670, %v9395, 0.0
        %v9492 = vadd.f32 %v9490, %v9491
        %v9493 = vsel %vm670, %v9396, 0.0
        %v9494 = vadd.f32 %v9492, %v9493
        %v9495 = vrot.slane %v9494, 4
        %v9496 = vadd.f32 %v9494, %v9495
        %v9497 = vrot.slane %v9496, 2
        %v9498 = vadd.f32 %v9496, %v9497
        %v9499 = vrot.slane %v9498, 1
        %v9500 = vadd.f32 %v9498, %v9499
        %vm9509 = vcmask 1041409
        %v9510 = vsel %vm9509, %v9014, %v9001
        %vm9511 = vcmask 1042434
        %v9512 = vsel %vm9511, %v9027, %v9510
        %vm9513 = vcmask 1043459
        %v9514 = vsel %vm9513, %v9040, %v9512
        %vm9515 = vcmask 1044484
        %v9516 = vsel %vm9515, %v9053, %v9514
        %vm9517 = vcmask 1045509
        %v9518 = vsel %vm9517, %v9066, %v9516
        %vm9519 = vcmask 1046534
        %v9520 = vsel %vm9519, %v9079, %v9518
        %vm9521 = vcmask 1047559
        %v9522 = vsel %vm9521, %v9092, %v9520
        %v9532 = vsel %vm9509, %v9150, %v9137
        %v9533 = vsel %vm9511, %v9163, %v9532
        %v9534 = vsel %vm9513, %v9176, %v9533
        %v9535 = vsel %vm9515, %v9189, %v9534
        %v9536 = vsel %vm9517, %v9202, %v9535
        %v9537 = vsel %vm9519, %v9215, %v9536
        %v9538 = vsel %vm9521, %v9228, %v9537
        %9539 = vrot.lane.b32.xlu0 %v9538, 16
        %v9540 = vpop.permute.xlu0 %9539
        %v9550 = vsel %vm9509, %v9286, %v9273
        %v9551 = vsel %vm9511, %v9299, %v9550
        %v9552 = vsel %vm9513, %v9312, %v9551
        %v9553 = vsel %vm9515, %v9325, %v9552
        %v9554 = vsel %vm9517, %v9338, %v9553
        %v9555 = vsel %vm9519, %v9351, %v9554
        %v9556 = vsel %vm9521, %v9364, %v9555
        %9557 = vrot.lane.b32.xlu0 %v9556, 32
        %v9558 = vpop.permute.xlu0 %9557
        %v9568 = vsel %vm9509, %v9422, %v9409
        %v9569 = vsel %vm9511, %v9435, %v9568
        %v9570 = vsel %vm9513, %v9448, %v9569
        %v9571 = vsel %vm9515, %v9461, %v9570
        %v9572 = vsel %vm9517, %v9474, %v9571
        %v9573 = vsel %vm9519, %v9487, %v9572
        %v9574 = vsel %vm9521, %v9500, %v9573
        %9575 = vrot.lane.b32.xlu0 %v9574, 48
        %v9576 = vpop.permute.xlu0 %9575
        %v9578 = vsel %vm670, %v9522, %v9540
        %v9579 = vsel %vm330, %v9578, %v9558
        %vm9580 = vcmask 392192
        %v9581 = vsel %vm9580, %v9579, %v9576
        %vm9582 = vcmask 523264
        %9583 = vst.msk [vmem:[%s276] sm:$0xff] %vm9582, %v9581
        %s9584 = sand.u32 %s183, 1
        %s9585 = scalar_lea.sflag [#allocation4], %s9584
        %s9586 = sand.u32 %s183, 1
        %s9587 = smul.addr %s9586, 8
        %s9588 = scalar_lea.vmem [#allocation3], %s9587
        // Predicated region
        $region49: #{attn_news_encoder.1} parent=47 // pred_check
          %p9589 = pneg %p193
        $region50: #{attn_news_encoder.1} parent=47 // pred_check_branch
          %9591 = sbr.rel (%p9589) target = $region52
        $region51: #{attn_news_encoder.1} parent=47 // pred_region
          %9593 = vsyncadd %s9585, 0
          %s9594 = smul.addr %s23, 8
          %s9595 = scalar_lea.hbm %s7, %s9594
          %s9597 = sshll.u32 %s9588, 4
          %s9598 = int_to_ptr.vmem [resolvable:$true] %s9597
          %s9599 = sshll.u32 %s9595, 4
          %s9600 = int_to_ptr.hbm [resolvable:$true] %s9599
          %9602 = dma.vmem_to_hbm [thread:$0]  %s9598, 128, %s9600, %s9585
        $region52: #{attn_news_encoder.1} parent=47 // pred_fallthru
          _
      $region48: #{attn_news_encoder.1} parent=5 // pred_fallthru
        _
      %p9603 = scmp.le.s32.totalorder 2, %s18
      // Predicated region
      $region53: #{attn_news_encoder.1} parent=5 // pred_check
        %p9604 = pneg %p9603
      $region54: #{attn_news_encoder.1} parent=5 // pred_check_branch
        %9606 = sbr.rel (%p9604) target = $region56
      $region55: #{attn_news_encoder.1} parent=5 // pred_region
        %s9607 = ssub.s32 %s18, 2
        // Predicated region
        $region57: #{attn_news_encoder.1} parent=55 // pred_check
          %p9608 = pneg %p199
        $region58: #{attn_news_encoder.1} parent=55 // pred_check_branch
          %9610 = sbr.rel (%p9608) target = $region60
        $region59: #{attn_news_encoder.1} parent=55 // pred_region
          %s9611 = sand.u32 %s184, 1
          %s9612 = scalar_lea.sflag [#allocation4], %s9611
          %s9613 = sand.u32 %s184, 1
          %s9614 = smul.addr %s9613, 8
          %s9615 = scalar_lea.vmem [#allocation3], %s9614
          %9617 = dma.done %s9612, 128
        $region60: #{attn_news_encoder.1} parent=55 // pred_fallthru
          _
      $region56: #{attn_news_encoder.1} parent=5 // pred_fallthru
        _
    $region6: #{attn_news_encoder.1} parent=1 // loop_footer
      %s22 = sadd.s32 1, %s18
    $region7: #{attn_news_encoder.1} parent=1 // loop_footer_branch
      %17 = sbr.rel target = $region3
    $region8: #{attn_news_encoder.1} parent=1 // loop_exit
      _
    %9618 = vsyncpa [#allocation4], 1
    %s9619 = scalar_lea.sflag [#allocation4], 1
    %9620 = vsyncpa %s9619, 1

</llo_original>
